<compile_context>
chip_gen: v7x
topology: tpu7x:2x2x1
jax: 0.10.0
libtpu: 0.0.40
codegen_flags: <defaults>
</compile_context>

<pallas_src>
import jax
import jax.numpy as jnp
from jax import lax
from jax.experimental import pallas as pl
from jax.experimental.pallas import tpu as pltpu

EPS = 1e-5


# ------------------------------- kernel -------------------------------------

def make_wasp_kernel(H, W, Cin, C, dils, dmax):
    """Fully fused WASP forward for one image, NHWC compute layout."""

    def dilated_branch(xin, xp_ref, w_ref, dil, s, b):
        # In-kernel zero padding: write the interior of the (pre-zeroed halo)
        # shared scratch, then read shifted taps straight from the ref.
        xp_ref[dmax:dmax + H, dmax:dmax + W, :] = xin
        acc = None
        for kh in range(3):
            if kh != 1 and dil >= H:
                continue          # tap reads only zero padding -> exact skip
            for kw in range(3):
                if kw != 1 and dil >= W:
                    continue
                r0 = dmax + (kh - 1) * dil
                c0 = dmax + (kw - 1) * dil
                tap = xp_ref[r0:r0 + H, c0:c0 + W, :]
                p = jnp.einsum('hwc,cf->hwf', tap, w_ref[kh, kw],
                               preferred_element_type=jnp.float32)
                acc = p if acc is None else acc + p
        return jnp.maximum(acc * s + b, 0.0)

    def kernel(x_ref, wa1_ref, wa2_ref, wa3_ref, wa4_ref, wg_ref,
               weff_ref, w5_ref, s_ref, b_ref, o_ref, xp_ref):
        # Zero the padded scratch every step (halo must be zero; interior is
        # always overwritten).  Unconditional so it stays correct when the
        # "parallel" batch axis is sharded across TensorCores.
        xp_ref[...] = jnp.zeros_like(xp_ref)

        s = s_ref[0]
        b = b_ref[0]
        x = x_ref[0]                                       # (H, W, Cin)

        # aspp1: 1x1 conv + BN + ReLU
        x1 = jnp.maximum(
            jnp.einsum('hwc,cf->hwf', x, wa1_ref[...],
                       preferred_element_type=jnp.float32) * s + b, 0.0)

        # chained atrous branches (BN + ReLU folded in)
        x2 = dilated_branch(x1, xp_ref, wa2_ref, dils[0], s, b)
        x3 = dilated_branch(x2, xp_ref, wa3_ref, dils[1], s, b)
        x4 = dilated_branch(x3, xp_ref, wa4_ref, dils[2], s, b)

        # global-average-pool branch (x5): constant over (H, W)
        gap = jnp.mean(x, axis=(0, 1))[None, :]            # (1, Cin)
        x5 = jnp.maximum(
            jnp.dot(gap, wg_ref[...],
                    preferred_element_type=jnp.float32) * s + b, 0.0)
        g5 = jnp.dot(x5, w5_ref[...],
                     preferred_element_type=jnp.float32)   # (1, C)

        # conv1 over the 5-branch concat; conv2@conv2 already folded into weff
        acc = jnp.einsum('hwc,cf->hwf', x1, weff_ref[0 * C:1 * C],
                         preferred_element_type=jnp.float32)
        acc = acc + jnp.einsum('hwc,cf->hwf', x2, weff_ref[1 * C:2 * C],
                               preferred_element_type=jnp.float32)
        acc = acc + jnp.einsum('hwc,cf->hwf', x3, weff_ref[2 * C:3 * C],
                               preferred_element_type=jnp.float32)
        acc = acc + jnp.einsum('hwc,cf->hwf', x4, weff_ref[3 * C:4 * C],
                               preferred_element_type=jnp.float32)
        acc = acc + g5[0]                                  # broadcast (H, W)

        out = jnp.maximum(acc * s + b, 0.0)                # (H, W, C)
        # lane-dense store: (H, W, C) -> (H*W, C) -> (C, H*W); lane dim = H*W
        o_ref[0] = jnp.reshape(out, (H * W, C)).T

    return kernel


# ------------------------------ wrapper --------------------------------------

def wasp_forward(x_nchw, p):
    N, Cin, H, W = x_nchw.shape
    C = p['w_a1'].shape[1]
    dils = (12, 18, 24)
    dmax = max(dils)

    x = jnp.transpose(x_nchw, (0, 2, 3, 1)).astype(jnp.float32)   # -> NHWC

    # Fold conv2∘conv2∘conv1 into one (C,C) weight per branch (tiny matmuls,
    # done once outside the kernel).
    w22 = p['w_c2'] @ p['w_c2']
    w_eff = jnp.concatenate(
        [w22 @ p['w_c1'][k * C:(k + 1) * C] for k in range(4)], axis=0)  # (4C,C)
    w5 = p['w_c1'][4 * C:5 * C]                                          # (C,C)

    def full(a):
        nd = a.ndim
        return pl.BlockSpec(a.shape, lambda n, _nd=nd: (0,) * _nd)

    out_flat = pl.pallas_call(
        make_wasp_kernel(H, W, Cin, C, dils, dmax),
        out_shape=jax.ShapeDtypeStruct((N, C, H * W), jnp.float32),
        grid=(N,),
        in_specs=[pl.BlockSpec((1, H, W, Cin), lambda n: (n, 0, 0, 0)),
                  full(p['w_a1']), full(p['w_a2']), full(p['w_a3']),
                  full(p['w_a4']), full(p['w_g']), full(w_eff), full(w5),
                  full(p['bn_scale']), full(p['bn_bias'])],
        out_specs=pl.BlockSpec((1, C, H * W), lambda n: (n, 0, 0)),
        scratch_shapes=[pltpu.VMEM((H + 2 * dmax, W + 2 * dmax, C),
                                   jnp.float32)],
        compiler_params=pltpu.CompilerParams(
            dimension_semantics=("parallel",),
            vmem_limit_bytes=32 * 1024 * 1024),
    )(x, p['w_a1'], p['w_a2'], p['w_a3'], p['w_a4'], p['w_g'], w_eff, w5,
      p['bn_scale'], p['bn_bias'])

    return out_flat.reshape(N, C, H, W)   # metadata-only reshape -> NCHW


# ------------------------------ model glue -----------------------------------

def _bn_fold(planes):
    # gamma=1, beta=0, running_mean=0, running_var=1 (fresh BN, eval mode)
    gamma = jnp.ones((planes,), jnp.float32)
    beta = jnp.zeros((planes,), jnp.float32)
    mean = jnp.zeros((planes,), jnp.float32)
    var = jnp.ones((planes,), jnp.float32)
    scale = gamma / jnp.sqrt(var + EPS)
    bias = beta - mean * scale
    return scale[None, :], bias[None, :]


def init_params(key, inplanes, planes):
    def kaiming(key, shape, fan_in):
        return (jnp.sqrt(2.0 / fan_in)
                * jax.random.normal(key, shape, jnp.float32))
    ks = jax.random.split(key, 8)
    p = {
        'w_a1': kaiming(ks[0], (inplanes, planes), inplanes),        # aspp1 1x1
        'w_a2': kaiming(ks[1], (3, 3, planes, planes), planes * 9),  # aspp2 d12
        'w_a3': kaiming(ks[2], (3, 3, planes, planes), planes * 9),  # aspp3 d18
        'w_a4': kaiming(ks[3], (3, 3, planes, planes), planes * 9),  # aspp4 d24
        'w_c2': kaiming(ks[4], (planes, planes), planes),            # conv2 1x1
        'w_g':  kaiming(ks[5], (inplanes, planes), inplanes),        # GAP conv
        'w_c1': kaiming(ks[6], (5 * planes, planes), 5 * planes),    # conv1 1x1
    }
    p['bn_scale'], p['bn_bias'] = _bn_fold(planes)
    return p


# --------------------------- pure-JAX reference ------------------------------

def _conv_ref(x_nhwc, w_hwio, dil=1, pad=0):
    return lax.conv_general_dilated(
        x_nhwc, w_hwio, window_strides=(1, 1),
        padding=[(pad, pad), (pad, pad)], rhs_dilation=(dil, dil),
        dimension_numbers=('NHWC', 'HWIO', 'NHWC'))


def wasp_reference(x_nchw, p):
    x = jnp.transpose(x_nchw, (0, 2, 3, 1)).astype(jnp.float32)
    N, H, W, _ = x.shape
    s, b = p['bn_scale'][0], p['bn_bias'][0]
    bnrelu = lambda y: jnp.maximum(y * s + b, 0.0)
    c1x1 = lambda y, w: _conv_ref(y, w[None, None])

    x1 = bnrelu(c1x1(x, p['w_a1']))
    x2 = bnrelu(_conv_ref(x1, p['w_a2'], dil=12, pad=12))
    x3 = bnrelu(_conv_ref(x2, p['w_a3'], dil=18, pad=18))
    x4 = bnrelu(_conv_ref(x3, p['w_a4'], dil=24, pad=24))
    x1 = c1x1(c1x1(x1, p['w_c2']), p['w_c2'])
    x2 = c1x1(c1x1(x2, p['w_c2']), p['w_c2'])
    x3 = c1x1(c1x1(x3, p['w_c2']), p['w_c2'])
    x4 = c1x1(c1x1(x4, p['w_c2']), p['w_c2'])

    gap = jnp.mean(x, axis=(1, 2), keepdims=True)             # (N,1,1,Cin)
    x5 = bnrelu(c1x1(gap, p['w_g']))
    x5 = jnp.broadcast_to(x5, (N, H, W, x5.shape[-1]))        # bilinear of 1x1

    cat = jnp.concatenate([x1, x2, x3, x4, x5], axis=-1)
    out = bnrelu(c1x1(cat, p['w_c1']))
    return jnp.transpose(out, (0, 3, 1, 2))


# --------------------------------- main ---------------------------------------

if __name__ == "__main__":
    N, inplanes, planes, H, W = 2, 4, 8, 16, 16
    key = jax.random.PRNGKey(0)
    kx, kp = jax.random.split(key)
    x = jax.random.normal(kx, (N, inplanes, H, W), jnp.float32)  # NCHW like torch
    params = init_params(kp, inplanes, planes)

    out = wasp_forward(x, params)
    out = jax.block_until_ready(out)

    ref = jax.block_until_ready(wasp_reference(x, params))
    assert out.shape == (N, planes, H, W), out.shape
    assert jnp.allclose(out, ref, atol=1e-4, rtol=1e-4), float(
        jnp.max(jnp.abs(out - ref)))
    print("KERNEL_OK")
</pallas_src>

<mosaic_0001>
module attributes {stable_mosaic.version = 11 : i64} {
  func.func @kernel(%arg0: i32, %arg1: memref<1x16x16x4xf32, #tpu.memory_space<vmem>>, %arg2: memref<4x8xf32, #tpu.memory_space<vmem>>, %arg3: memref<3x3x8x8xf32, #tpu.memory_space<vmem>>, %arg4: memref<3x3x8x8xf32, #tpu.memory_space<vmem>>, %arg5: memref<3x3x8x8xf32, #tpu.memory_space<vmem>>, %arg6: memref<4x8xf32, #tpu.memory_space<vmem>>, %arg7: memref<32x8xf32, #tpu.memory_space<vmem>>, %arg8: memref<8x8xf32, #tpu.memory_space<vmem>>, %arg9: memref<1x8xf32, #tpu.memory_space<vmem>>, %arg10: memref<1x8xf32, #tpu.memory_space<vmem>>, %arg11: memref<1x8x256xf32, #tpu.memory_space<vmem>>, %arg12: memref<64x64x8xf32, #tpu.memory_space<vmem>>) attributes {dimension_semantics = [#tpu.dimension_semantics<parallel>], iteration_bounds = array<i64: 2>, scalar_prefetch = 0 : i64, scratch_operands = 1 : i64, tpu.core_type = #tpu.core_type<tc>, window_params = [{transform_indices = @transform_0, window_bounds = array<i64: 1, 16, 16, 4>}, {pipeline_mode = #tpu.pipeline_mode<synchronous>, transform_indices = @transform_1, window_bounds = array<i64: 4, 8>}, {pipeline_mode = #tpu.pipeline_mode<synchronous>, transform_indices = @transform_2, window_bounds = array<i64: 3, 3, 8, 8>}, {pipeline_mode = #tpu.pipeline_mode<synchronous>, transform_indices = @transform_3, window_bounds = array<i64: 3, 3, 8, 8>}, {pipeline_mode = #tpu.pipeline_mode<synchronous>, transform_indices = @transform_4, window_bounds = array<i64: 3, 3, 8, 8>}, {pipeline_mode = #tpu.pipeline_mode<synchronous>, transform_indices = @transform_5, window_bounds = array<i64: 4, 8>}, {pipeline_mode = #tpu.pipeline_mode<synchronous>, transform_indices = @transform_6, window_bounds = array<i64: 32, 8>}, {pipeline_mode = #tpu.pipeline_mode<synchronous>, transform_indices = @transform_7, window_bounds = array<i64: 8, 8>}, {pipeline_mode = #tpu.pipeline_mode<synchronous>, transform_indices = @transform_8, window_bounds = array<i64: 1, 8>}, {pipeline_mode = #tpu.pipeline_mode<synchronous>, transform_indices = @transform_9, window_bounds = array<i64: 1, 8>}, {transform_indices = @transform_10, window_bounds = array<i64: 1, 8, 256>}]} {
    %cst = arith.constant 0.000000e+00 : f32
    %0 = vector.broadcast %cst : f32 to vector<64x64x8xf32>
    %c0 = arith.constant 0 : index
    %c0_0 = arith.constant 0 : index
    %c0_1 = arith.constant 0 : index
    %1 = vector.load %arg12[%c0, %c0_0, %c0_1] : memref<64x64x8xf32, #tpu.memory_space<vmem>>, vector<64x64x8xf32>
    tpu.vector_store %arg12[%c0, %c0_0, %c0_1], %0 {strides = array<i32>} : memref<64x64x8xf32, #tpu.memory_space<vmem>>, vector<64x64x8xf32>,
    %c0_2 = arith.constant 0 : index
    %c0_3 = arith.constant 0 : index
    %2 = vector.load %arg9[%c0_2, %c0_3] : memref<1x8xf32, #tpu.memory_space<vmem>>, vector<1x8xf32>
    %3 = vector.shape_cast %2 : vector<1x8xf32> to vector<8xf32>
    %c0_4 = arith.constant 0 : index
    %c0_5 = arith.constant 0 : index
    %4 = vector.load %arg10[%c0_4, %c0_5] : memref<1x8xf32, #tpu.memory_space<vmem>>, vector<1x8xf32>
    %5 = vector.shape_cast %4 : vector<1x8xf32> to vector<8xf32>
    %c0_6 = arith.constant 0 : index
    %c0_7 = arith.constant 0 : index
    %c0_8 = arith.constant 0 : index
    %c0_9 = arith.constant 0 : index
    %6 = vector.load %arg1[%c0_6, %c0_7, %c0_8, %c0_9] : memref<1x16x16x4xf32, #tpu.memory_space<vmem>>, vector<1x16x16x4xf32>
    %7 = vector.shape_cast %6 : vector<1x16x16x4xf32> to vector<16x16x4xf32>
    %c0_10 = arith.constant 0 : index
    %c0_11 = arith.constant 0 : index
    %8 = vector.load %arg2[%c0_10, %c0_11] : memref<4x8xf32, #tpu.memory_space<vmem>>, vector<4x8xf32>
    "tpu.trace_start"() <{level = 10 : i32, message = "hwc,cf->hwf"}> : () -> ()
    %cst_12 = arith.constant dense<0.000000e+00> : vector<16x16x8xf32>
    %9 = tpu.matmul %7, %8, %cst_12 {dimension_numbers = #tpu.dot_dimension_numbers<[2], [0], [0, 1], [1], [0, 0, 0, 1, 1, 1], [], []>} : vector<16x16x4xf32>, vector<4x8xf32>, vector<16x16x8xf32> -> vector<16x16x8xf32>
    "tpu.trace_stop"() : () -> ()
    %10 = vector.shape_cast %3 : vector<8xf32> to vector<1x1x8xf32>
    %11 = vector.broadcast %10 : vector<1x1x8xf32> to vector<16x16x8xf32>
    %12 = arith.mulf %9, %11 : vector<16x16x8xf32>
    %13 = vector.shape_cast %5 : vector<8xf32> to vector<1x1x8xf32>
    %14 = vector.broadcast %13 : vector<1x1x8xf32> to vector<16x16x8xf32>
    %15 = arith.addf %12, %14 : vector<16x16x8xf32>
    %cst_13 = arith.constant 0.000000e+00 : f32
    %16 = vector.broadcast %cst_13 : f32 to vector<16x16x8xf32>
    %17 = arith.maximumf %15, %16 : vector<16x16x8xf32>
    %c24 = arith.constant 24 : index
    %c24_14 = arith.constant 24 : index
    %c0_15 = arith.constant 0 : index
    %18 = vector.load %arg12[%c24, %c24_14, %c0_15] : memref<64x64x8xf32, #tpu.memory_space<vmem>>, vector<16x16x8xf32>
    tpu.vector_store %arg12[%c24, %c24_14, %c0_15], %17 {strides = array<i32>} : memref<64x64x8xf32, #tpu.memory_space<vmem>>, vector<16x16x8xf32>,
    %c12 = arith.constant 12 : index
    %c12_16 = arith.constant 12 : index
    %c0_17 = arith.constant 0 : index
    %19 = vector.load %arg12[%c12, %c12_16, %c0_17] : memref<64x64x8xf32, #tpu.memory_space<vmem>>, vector<16x16x8xf32>
    %c0_18 = arith.constant 0 : index
    %c0_19 = arith.constant 0 : index
    %c0_20 = arith.constant 0 : index
    %c0_21 = arith.constant 0 : index
    %20 = vector.load %arg3[%c0_18, %c0_19, %c0_20, %c0_21] : memref<3x3x8x8xf32, #tpu.memory_space<vmem>>, vector<1x1x8x8xf32>
    %21 = vector.shape_cast %20 : vector<1x1x8x8xf32> to vector<8x8xf32>
    "tpu.trace_start"() <{level = 10 : i32, message = "hwc,cf->hwf"}> : () -> ()
    %cst_22 = arith.constant dense<0.000000e+00> : vector<16x16x8xf32>
    %22 = tpu.matmul %19, %21, %cst_22 {dimension_numbers = #tpu.dot_dimension_numbers<[2], [0], [0, 1], [1], [0, 0, 0, 1, 1, 1], [], []>} : vector<16x16x8xf32>, vector<8x8xf32>, vector<16x16x8xf32> -> vector<16x16x8xf32>
    "tpu.trace_stop"() : () -> ()
    %c12_23 = arith.constant 12 : index
    %c24_24 = arith.constant 24 : index
    %c0_25 = arith.constant 0 : index
    %23 = vector.load %arg12[%c12_23, %c24_24, %c0_25] : memref<64x64x8xf32, #tpu.memory_space<vmem>>, vector<16x16x8xf32>
    %c0_26 = arith.constant 0 : index
    %c1 = arith.constant 1 : index
    %c0_27 = arith.constant 0 : index
    %c0_28 = arith.constant 0 : index
    %24 = vector.load %arg3[%c0_26, %c1, %c0_27, %c0_28] : memref<3x3x8x8xf32, #tpu.memory_space<vmem>>, vector<1x1x8x8xf32>
    %25 = vector.shape_cast %24 : vector<1x1x8x8xf32> to vector<8x8xf32>
    "tpu.trace_start"() <{level = 10 : i32, message = "hwc,cf->hwf"}> : () -> ()
    %cst_29 = arith.constant dense<0.000000e+00> : vector<16x16x8xf32>
    %26 = tpu.matmul %23, %25, %cst_29 {dimension_numbers = #tpu.dot_dimension_numbers<[2], [0], [0, 1], [1], [0, 0, 0, 1, 1, 1], [], []>} : vector<16x16x8xf32>, vector<8x8xf32>, vector<16x16x8xf32> -> vector<16x16x8xf32>
    "tpu.trace_stop"() : () -> ()
    %27 = arith.addf %22, %26 : vector<16x16x8xf32>
    %c12_30 = arith.constant 12 : index
    %c36 = arith.constant 36 : index
    %c0_31 = arith.constant 0 : index
    %28 = vector.load %arg12[%c12_30, %c36, %c0_31] : memref<64x64x8xf32, #tpu.memory_space<vmem>>, vector<16x16x8xf32>
    %c0_32 = arith.constant 0 : index
    %c2 = arith.constant 2 : index
    %c0_33 = arith.constant 0 : index
    %c0_34 = arith.constant 0 : index
    %29 = vector.load %arg3[%c0_32, %c2, %c0_33, %c0_34] : memref<3x3x8x8xf32, #tpu.memory_space<vmem>>, vector<1x1x8x8xf32>
    %30 = vector.shape_cast %29 : vector<1x1x8x8xf32> to vector<8x8xf32>
    "tpu.trace_start"() <{level = 10 : i32, message = "hwc,cf->hwf"}> : () -> ()
    %cst_35 = arith.constant dense<0.000000e+00> : vector<16x16x8xf32>
    %31 = tpu.matmul %28, %30, %cst_35 {dimension_numbers = #tpu.dot_dimension_numbers<[2], [0], [0, 1], [1], [0, 0, 0, 1, 1, 1], [], []>} : vector<16x16x8xf32>, vector<8x8xf32>, vector<16x16x8xf32> -> vector<16x16x8xf32>
    "tpu.trace_stop"() : () -> ()
    %32 = arith.addf %27, %31 : vector<16x16x8xf32>
    %c24_36 = arith.constant 24 : index
    %c12_37 = arith.constant 12 : index
    %c0_38 = arith.constant 0 : index
    %33 = vector.load %arg12[%c24_36, %c12_37, %c0_38] : memref<64x64x8xf32, #tpu.memory_space<vmem>>, vector<16x16x8xf32>
    %c1_39 = arith.constant 1 : index
    %c0_40 = arith.constant 0 : index
    %c0_41 = arith.constant 0 : index
    %c0_42 = arith.constant 0 : index
    %34 = vector.load %arg3[%c1_39, %c0_40, %c0_41, %c0_42] : memref<3x3x8x8xf32, #tpu.memory_space<vmem>>, vector<1x1x8x8xf32>
    %35 = vector.shape_cast %34 : vector<1x1x8x8xf32> to vector<8x8xf32>
    "tpu.trace_start"() <{level = 10 : i32, message = "hwc,cf->hwf"}> : () -> ()
    %cst_43 = arith.constant dense<0.000000e+00> : vector<16x16x8xf32>
    %36 = tpu.matmul %33, %35, %cst_43 {dimension_numbers = #tpu.dot_dimension_numbers<[2], [0], [0, 1], [1], [0, 0, 0, 1, 1, 1], [], []>} : vector<16x16x8xf32>, vector<8x8xf32>, vector<16x16x8xf32> -> vector<16x16x8xf32>
    "tpu.trace_stop"() : () -> ()
    %37 = arith.addf %32, %36 : vector<16x16x8xf32>
    %c24_44 = arith.constant 24 : index
    %c24_45 = arith.constant 24 : index
    %c0_46 = arith.constant 0 : index
    %38 = vector.load %arg12[%c24_44, %c24_45, %c0_46] : memref<64x64x8xf32, #tpu.memory_space<vmem>>, vector<16x16x8xf32>
    %c1_47 = arith.constant 1 : index
    %c1_48 = arith.constant 1 : index
    %c0_49 = arith.constant 0 : index
    %c0_50 = arith.constant 0 : index
    %39 = vector.load %arg3[%c1_47, %c1_48, %c0_49, %c0_50] : memref<3x3x8x8xf32, #tpu.memory_space<vmem>>, vector<1x1x8x8xf32>
    %40 = vector.shape_cast %39 : vector<1x1x8x8xf32> to vector<8x8xf32>
    "tpu.trace_start"() <{level = 10 : i32, message = "hwc,cf->hwf"}> : () -> ()
    %cst_51 = arith.constant dense<0.000000e+00> : vector<16x16x8xf32>
    %41 = tpu.matmul %38, %40, %cst_51 {dimension_numbers = #tpu.dot_dimension_numbers<[2], [0], [0, 1], [1], [0, 0, 0, 1, 1, 1], [], []>} : vector<16x16x8xf32>, vector<8x8xf32>, vector<16x16x8xf32> -> vector<16x16x8xf32>
    "tpu.trace_stop"() : () -> ()
    %42 = arith.addf %37, %41 : vector<16x16x8xf32>
    %c24_52 = arith.constant 24 : index
    %c36_53 = arith.constant 36 : index
    %c0_54 = arith.constant 0 : index
    %43 = vector.load %arg12[%c24_52, %c36_53, %c0_54] : memref<64x64x8xf32, #tpu.memory_space<vmem>>, vector<16x16x8xf32>
    %c1_55 = arith.constant 1 : index
    %c2_56 = arith.constant 2 : index
    %c0_57 = arith.constant 0 : index
    %c0_58 = arith.constant 0 : index
    %44 = vector.load %arg3[%c1_55, %c2_56, %c0_57, %c0_58] : memref<3x3x8x8xf32, #tpu.memory_space<vmem>>, vector<1x1x8x8xf32>
    %45 = vector.shape_cast %44 : vector<1x1x8x8xf32> to vector<8x8xf32>
    "tpu.trace_start"() <{level = 10 : i32, message = "hwc,cf->hwf"}> : () -> ()
    %cst_59 = arith.constant dense<0.000000e+00> : vector<16x16x8xf32>
    %46 = tpu.matmul %43, %45, %cst_59 {dimension_numbers = #tpu.dot_dimension_numbers<[2], [0], [0, 1], [1], [0, 0, 0, 1, 1, 1], [], []>} : vector<16x16x8xf32>, vector<8x8xf32>, vector<16x16x8xf32> -> vector<16x16x8xf32>
    "tpu.trace_stop"() : () -> ()
    %47 = arith.addf %42, %46 : vector<16x16x8xf32>
    %c36_60 = arith.constant 36 : index
    %c12_61 = arith.constant 12 : index
    %c0_62 = arith.constant 0 : index
    %48 = vector.load %arg12[%c36_60, %c12_61, %c0_62] : memref<64x64x8xf32, #tpu.memory_space<vmem>>, vector<16x16x8xf32>
    %c2_63 = arith.constant 2 : index
    %c0_64 = arith.constant 0 : index
    %c0_65 = arith.constant 0 : index
    %c0_66 = arith.constant 0 : index
    %49 = vector.load %arg3[%c2_63, %c0_64, %c0_65, %c0_66] : memref<3x3x8x8xf32, #tpu.memory_space<vmem>>, vector<1x1x8x8xf32>
    %50 = vector.shape_cast %49 : vector<1x1x8x8xf32> to vector<8x8xf32>
    "tpu.trace_start"() <{level = 10 : i32, message = "hwc,cf->hwf"}> : () -> ()
    %cst_67 = arith.constant dense<0.000000e+00> : vector<16x16x8xf32>
    %51 = tpu.matmul %48, %50, %cst_67 {dimension_numbers = #tpu.dot_dimension_numbers<[2], [0], [0, 1], [1], [0, 0, 0, 1, 1, 1], [], []>} : vector<16x16x8xf32>, vector<8x8xf32>, vector<16x16x8xf32> -> vector<16x16x8xf32>
    "tpu.trace_stop"() : () -> ()
    %52 = arith.addf %47, %51 : vector<16x16x8xf32>
    %c36_68 = arith.constant 36 : index
    %c24_69 = arith.constant 24 : index
    %c0_70 = arith.constant 0 : index
    %53 = vector.load %arg12[%c36_68, %c24_69, %c0_70] : memref<64x64x8xf32, #tpu.memory_space<vmem>>, vector<16x16x8xf32>
    %c2_71 = arith.constant 2 : index
    %c1_72 = arith.constant 1 : index
    %c0_73 = arith.constant 0 : index
    %c0_74 = arith.constant 0 : index
    %54 = vector.load %arg3[%c2_71, %c1_72, %c0_73, %c0_74] : memref<3x3x8x8xf32, #tpu.memory_space<vmem>>, vector<1x1x8x8xf32>
    %55 = vector.shape_cast %54 : vector<1x1x8x8xf32> to vector<8x8xf32>
    "tpu.trace_start"() <{level = 10 : i32, message = "hwc,cf->hwf"}> : () -> ()
    %cst_75 = arith.constant dense<0.000000e+00> : vector<16x16x8xf32>
    %56 = tpu.matmul %53, %55, %cst_75 {dimension_numbers = #tpu.dot_dimension_numbers<[2], [0], [0, 1], [1], [0, 0, 0, 1, 1, 1], [], []>} : vector<16x16x8xf32>, vector<8x8xf32>, vector<16x16x8xf32> -> vector<16x16x8xf32>
    "tpu.trace_stop"() : () -> ()
    %57 = arith.addf %52, %56 : vector<16x16x8xf32>
    %c36_76 = arith.constant 36 : index
    %c36_77 = arith.constant 36 : index
    %c0_78 = arith.constant 0 : index
    %58 = vector.load %arg12[%c36_76, %c36_77, %c0_78] : memref<64x64x8xf32, #tpu.memory_space<vmem>>, vector<16x16x8xf32>
    %c2_79 = arith.constant 2 : index
    %c2_80 = arith.constant 2 : index
    %c0_81 = arith.constant 0 : index
    %c0_82 = arith.constant 0 : index
    %59 = vector.load %arg3[%c2_79, %c2_80, %c0_81, %c0_82] : memref<3x3x8x8xf32, #tpu.memory_space<vmem>>, vector<1x1x8x8xf32>
    %60 = vector.shape_cast %59 : vector<1x1x8x8xf32> to vector<8x8xf32>
    "tpu.trace_start"() <{level = 10 : i32, message = "hwc,cf->hwf"}> : () -> ()
    %cst_83 = arith.constant dense<0.000000e+00> : vector<16x16x8xf32>
    %61 = tpu.matmul %58, %60, %cst_83 {dimension_numbers = #tpu.dot_dimension_numbers<[2], [0], [0, 1], [1], [0, 0, 0, 1, 1, 1], [], []>} : vector<16x16x8xf32>, vector<8x8xf32>, vector<16x16x8xf32> -> vector<16x16x8xf32>
    "tpu.trace_stop"() : () -> ()
    %62 = arith.addf %57, %61 : vector<16x16x8xf32>
    %63 = vector.shape_cast %3 : vector<8xf32> to vector<1x1x8xf32>
    %64 = vector.broadcast %63 : vector<1x1x8xf32> to vector<16x16x8xf32>
    %65 = arith.mulf %62, %64 : vector<16x16x8xf32>
    %66 = vector.shape_cast %5 : vector<8xf32> to vector<1x1x8xf32>
    %67 = vector.broadcast %66 : vector<1x1x8xf32> to vector<16x16x8xf32>
    %68 = arith.addf %65, %67 : vector<16x16x8xf32>
    %cst_84 = arith.constant 0.000000e+00 : f32
    %69 = vector.broadcast %cst_84 : f32 to vector<16x16x8xf32>
    %70 = arith.maximumf %68, %69 : vector<16x16x8xf32>
    %c24_85 = arith.constant 24 : index
    %c24_86 = arith.constant 24 : index
    %c0_87 = arith.constant 0 : index
    %71 = vector.load %arg12[%c24_85, %c24_86, %c0_87] : memref<64x64x8xf32, #tpu.memory_space<vmem>>, vector<16x16x8xf32>
    tpu.vector_store %arg12[%c24_85, %c24_86, %c0_87], %70 {strides = array<i32>} : memref<64x64x8xf32, #tpu.memory_space<vmem>>, vector<16x16x8xf32>,
    %c24_88 = arith.constant 24 : index
    %c24_89 = arith.constant 24 : index
    %c0_90 = arith.constant 0 : index
    %72 = vector.load %arg12[%c24_88, %c24_89, %c0_90] : memref<64x64x8xf32, #tpu.memory_space<vmem>>, vector<16x16x8xf32>
    %c1_91 = arith.constant 1 : index
    %c1_92 = arith.constant 1 : index
    %c0_93 = arith.constant 0 : index
    %c0_94 = arith.constant 0 : index
    %73 = vector.load %arg4[%c1_91, %c1_92, %c0_93, %c0_94] : memref<3x3x8x8xf32, #tpu.memory_space<vmem>>, vector<1x1x8x8xf32>
    %74 = vector.shape_cast %73 : vector<1x1x8x8xf32> to vector<8x8xf32>
    "tpu.trace_start"() <{level = 10 : i32, message = "hwc,cf->hwf"}> : () -> ()
    %cst_95 = arith.constant dense<0.000000e+00> : vector<16x16x8xf32>
    %75 = tpu.matmul %72, %74, %cst_95 {dimension_numbers = #tpu.dot_dimension_numbers<[2], [0], [0, 1], [1], [0, 0, 0, 1, 1, 1], [], []>} : vector<16x16x8xf32>, vector<8x8xf32>, vector<16x16x8xf32> -> vector<16x16x8xf32>
    "tpu.trace_stop"() : () -> ()
    %76 = vector.shape_cast %3 : vector<8xf32> to vector<1x1x8xf32>
    %77 = vector.broadcast %76 : vector<1x1x8xf32> to vector<16x16x8xf32>
    %78 = arith.mulf %75, %77 : vector<16x16x8xf32>
    %79 = vector.shape_cast %5 : vector<8xf32> to vector<1x1x8xf32>
    %80 = vector.broadcast %79 : vector<1x1x8xf32> to vector<16x16x8xf32>
    %81 = arith.addf %78, %80 : vector<16x16x8xf32>
    %cst_96 = arith.constant 0.000000e+00 : f32
    %82 = vector.broadcast %cst_96 : f32 to vector<16x16x8xf32>
    %83 = arith.maximumf %81, %82 : vector<16x16x8xf32>
    %c24_97 = arith.constant 24 : index
    %c24_98 = arith.constant 24 : index
    %c0_99 = arith.constant 0 : index
    %84 = vector.load %arg12[%c24_97, %c24_98, %c0_99] : memref<64x64x8xf32, #tpu.memory_space<vmem>>, vector<16x16x8xf32>
    tpu.vector_store %arg12[%c24_97, %c24_98, %c0_99], %83 {strides = array<i32>} : memref<64x64x8xf32, #tpu.memory_space<vmem>>, vector<16x16x8xf32>,
    %c24_100 = arith.constant 24 : index
    %c24_101 = arith.constant 24 : index
    %c0_102 = arith.constant 0 : index
    %85 = vector.load %arg12[%c24_100, %c24_101, %c0_102] : memref<64x64x8xf32, #tpu.memory_space<vmem>>, vector<16x16x8xf32>
    %c1_103 = arith.constant 1 : index
    %c1_104 = arith.constant 1 : index
    %c0_105 = arith.constant 0 : index
    %c0_106 = arith.constant 0 : index
    %86 = vector.load %arg5[%c1_103, %c1_104, %c0_105, %c0_106] : memref<3x3x8x8xf32, #tpu.memory_space<vmem>>, vector<1x1x8x8xf32>
    %87 = vector.shape_cast %86 : vector<1x1x8x8xf32> to vector<8x8xf32>
    "tpu.trace_start"() <{level = 10 : i32, message = "hwc,cf->hwf"}> : () -> ()
    %cst_107 = arith.constant dense<0.000000e+00> : vector<16x16x8xf32>
    %88 = tpu.matmul %85, %87, %cst_107 {dimension_numbers = #tpu.dot_dimension_numbers<[2], [0], [0, 1], [1], [0, 0, 0, 1, 1, 1], [], []>} : vector<16x16x8xf32>, vector<8x8xf32>, vector<16x16x8xf32> -> vector<16x16x8xf32>
    "tpu.trace_stop"() : () -> ()
    %89 = vector.shape_cast %3 : vector<8xf32> to vector<1x1x8xf32>
    %90 = vector.broadcast %89 : vector<1x1x8xf32> to vector<16x16x8xf32>
    %91 = arith.mulf %88, %90 : vector<16x16x8xf32>
    %92 = vector.shape_cast %5 : vector<8xf32> to vector<1x1x8xf32>
    %93 = vector.broadcast %92 : vector<1x1x8xf32> to vector<16x16x8xf32>
    %94 = arith.addf %91, %93 : vector<16x16x8xf32>
    %cst_108 = arith.constant 0.000000e+00 : f32
    %95 = vector.broadcast %cst_108 : f32 to vector<16x16x8xf32>
    %96 = arith.maximumf %94, %95 : vector<16x16x8xf32>
    %cst_109 = arith.constant dense<0.000000e+00> : vector<4xf32>
    %97 = vector.multi_reduction <add>, %7, %cst_109 [0, 1] : vector<16x16x4xf32> to vector<4xf32>
    %cst_110 = arith.constant 2.560000e+02 : f32
    %98 = vector.broadcast %cst_110 : f32 to vector<4xf32>
    %99 = arith.divf %97, %98 : vector<4xf32>
    %100 = vector.shape_cast %99 : vector<4xf32> to vector<1x4xf32>
    %c0_111 = arith.constant 0 : index
    %c0_112 = arith.constant 0 : index
    %101 = vector.load %arg6[%c0_111, %c0_112] : memref<4x8xf32, #tpu.memory_space<vmem>>, vector<4x8xf32>
    %cst_113 = arith.constant dense<0.000000e+00> : vector<1x8xf32>
    %102 = tpu.matmul %100, %101, %cst_113 {dimension_numbers = #tpu.dot_dimension_numbers<[1], [0], [0], [1], [0, 0, 1, 1], [], []>} : vector<1x4xf32>, vector<4x8xf32>, vector<1x8xf32> -> vector<1x8xf32>
    %103 = vector.shape_cast %3 : vector<8xf32> to vector<1x8xf32>
    %104 = arith.mulf %102, %103 : vector<1x8xf32>
    %105 = vector.shape_cast %5 : vector<8xf32> to vector<1x8xf32>
    %106 = arith.addf %104, %105 : vector<1x8xf32>
    %cst_114 = arith.constant 0.000000e+00 : f32
    %107 = vector.broadcast %cst_114 : f32 to vector<1x8xf32>
    %108 = arith.maximumf %106, %107 : vector<1x8xf32>
    %c0_115 = arith.constant 0 : index
    %c0_116 = arith.constant 0 : index
    %109 = vector.load %arg8[%c0_115, %c0_116] : memref<8x8xf32, #tpu.memory_space<vmem>>, vector<8x8xf32>
    %cst_117 = arith.constant dense<0.000000e+00> : vector<1x8xf32>
    %110 = tpu.matmul %108, %109, %cst_117 {dimension_numbers = #tpu.dot_dimension_numbers<[1], [0], [0], [1], [0, 0, 1, 1], [], []>} : vector<1x8xf32>, vector<8x8xf32>, vector<1x8xf32> -> vector<1x8xf32>
    %c0_118 = arith.constant 0 : index
    %c0_119 = arith.constant 0 : index
    %111 = vector.load %arg7[%c0_118, %c0_119] : memref<32x8xf32, #tpu.memory_space<vmem>>, vector<8x8xf32>
    "tpu.trace_start"() <{level = 10 : i32, message = "hwc,cf->hwf"}> : () -> ()
    %cst_120 = arith.constant dense<0.000000e+00> : vector<16x16x8xf32>
    %112 = tpu.matmul %17, %111, %cst_120 {dimension_numbers = #tpu.dot_dimension_numbers<[2], [0], [0, 1], [1], [0, 0, 0, 1, 1, 1], [], []>} : vector<16x16x8xf32>, vector<8x8xf32>, vector<16x16x8xf32> -> vector<16x16x8xf32>
    "tpu.trace_stop"() : () -> ()
    %c8 = arith.constant 8 : index
    %c0_121 = arith.constant 0 : index
    %113 = vector.load %arg7[%c8, %c0_121] : memref<32x8xf32, #tpu.memory_space<vmem>>, vector<8x8xf32>
    "tpu.trace_start"() <{level = 10 : i32, message = "hwc,cf->hwf"}> : () -> ()
    %cst_122 = arith.constant dense<0.000000e+00> : vector<16x16x8xf32>
    %114 = tpu.matmul %70, %113, %cst_122 {dimension_numbers = #tpu.dot_dimension_numbers<[2], [0], [0, 1], [1], [0, 0, 0, 1, 1, 1], [], []>} : vector<16x16x8xf32>, vector<8x8xf32>, vector<16x16x8xf32> -> vector<16x16x8xf32>
    "tpu.trace_stop"() : () -> ()
    %115 = arith.addf %112, %114 : vector<16x16x8xf32>
    %c16 = arith.constant 16 : index
    %c0_123 = arith.constant 0 : index
    %116 = vector.load %arg7[%c16, %c0_123] : memref<32x8xf32, #tpu.memory_space<vmem>>, vector<8x8xf32>
    "tpu.trace_start"() <{level = 10 : i32, message = "hwc,cf->hwf"}> : () -> ()
    %cst_124 = arith.constant dense<0.000000e+00> : vector<16x16x8xf32>
    %117 = tpu.matmul %83, %116, %cst_124 {dimension_numbers = #tpu.dot_dimension_numbers<[2], [0], [0, 1], [1], [0, 0, 0, 1, 1, 1], [], []>} : vector<16x16x8xf32>, vector<8x8xf32>, vector<16x16x8xf32> -> vector<16x16x8xf32>
    "tpu.trace_stop"() : () -> ()
    %118 = arith.addf %115, %117 : vector<16x16x8xf32>
    %c24_125 = arith.constant 24 : index
    %c0_126 = arith.constant 0 : index
    %119 = vector.load %arg7[%c24_125, %c0_126] : memref<32x8xf32, #tpu.memory_space<vmem>>, vector<8x8xf32>
    "tpu.trace_start"() <{level = 10 : i32, message = "hwc,cf->hwf"}> : () -> ()
    %cst_127 = arith.constant dense<0.000000e+00> : vector<16x16x8xf32>
    %120 = tpu.matmul %96, %119, %cst_127 {dimension_numbers = #tpu.dot_dimension_numbers<[2], [0], [0, 1], [1], [0, 0, 0, 1, 1, 1], [], []>} : vector<16x16x8xf32>, vector<8x8xf32>, vector<16x16x8xf32> -> vector<16x16x8xf32>
    "tpu.trace_stop"() : () -> ()
    %121 = arith.addf %118, %120 : vector<16x16x8xf32>
    %122 = vector.shape_cast %110 : vector<1x8xf32> to vector<8xf32>
    %123 = vector.shape_cast %122 : vector<8xf32> to vector<1x1x8xf32>
    %124 = vector.broadcast %123 : vector<1x1x8xf32> to vector<16x16x8xf32>
    %125 = arith.addf %121, %124 : vector<16x16x8xf32>
    %126 = vector.shape_cast %3 : vector<8xf32> to vector<1x1x8xf32>
    %127 = vector.broadcast %126 : vector<1x1x8xf32> to vector<16x16x8xf32>
    %128 = arith.mulf %125, %127 : vector<16x16x8xf32>
    %129 = vector.shape_cast %5 : vector<8xf32> to vector<1x1x8xf32>
    %130 = vector.broadcast %129 : vector<1x1x8xf32> to vector<16x16x8xf32>
    %131 = arith.addf %128, %130 : vector<16x16x8xf32>
    %cst_128 = arith.constant 0.000000e+00 : f32
    %132 = vector.broadcast %cst_128 : f32 to vector<16x16x8xf32>
    %133 = arith.maximumf %131, %132 : vector<16x16x8xf32>
    %134 = vector.shape_cast %133 : vector<16x16x8xf32> to vector<256x8xf32>
    %135 = tpu.transpose %134, [1, 0] : vector<256x8xf32> -> vector<8x256xf32>
    %c0_129 = arith.constant 0 : index
    %c0_130 = arith.constant 0 : index
    %c0_131 = arith.constant 0 : index
    %136 = vector.load %arg11[%c0_129, %c0_130, %c0_131] : memref<1x8x256xf32, #tpu.memory_space<vmem>>, vector<1x8x256xf32>
    %137 = vector.shape_cast %136 : vector<1x8x256xf32> to vector<8x256xf32>
    %138 = vector.shape_cast %135 : vector<8x256xf32> to vector<1x8x256xf32>
    tpu.vector_store %arg11[%c0_129, %c0_130, %c0_131], %138 {strides = array<i32>} : memref<1x8x256xf32, #tpu.memory_space<vmem>>, vector<1x8x256xf32>,
    return
  }
  func.func @transform_0(%arg0: i32) -> (i32, i32, i32, i32) {
    %c0_i32 = arith.constant 0 : i32
    %c0_i32_0 = arith.constant 0 : i32
    %c0_i32_1 = arith.constant 0 : i32
    %c0_i32_2 = arith.constant 0 : i32
    return %arg0, %c0_i32, %c0_i32_0, %c0_i32_1 : i32, i32, i32, i32
  }
  func.func @transform_1(%arg0: i32) -> (i32, i32) {
    %c0_i32 = arith.constant 0 : i32
    %c0_i32_0 = arith.constant 0 : i32
    %c0_i32_1 = arith.constant 0 : i32
    return %c0_i32, %c0_i32_0 : i32, i32
  }
  func.func @transform_2(%arg0: i32) -> (i32, i32, i32, i32) {
    %c0_i32 = arith.constant 0 : i32
    %c0_i32_0 = arith.constant 0 : i32
    %c0_i32_1 = arith.constant 0 : i32
    %c0_i32_2 = arith.constant 0 : i32
    %c0_i32_3 = arith.constant 0 : i32
    return %c0_i32, %c0_i32_0, %c0_i32_1, %c0_i32_2 : i32, i32, i32, i32
  }
  func.func @transform_3(%arg0: i32) -> (i32, i32, i32, i32) {
    %c0_i32 = arith.constant 0 : i32
    %c0_i32_0 = arith.constant 0 : i32
    %c0_i32_1 = arith.constant 0 : i32
    %c0_i32_2 = arith.constant 0 : i32
    %c0_i32_3 = arith.constant 0 : i32
    return %c0_i32, %c0_i32_0, %c0_i32_1, %c0_i32_2 : i32, i32, i32, i32
  }
  func.func @transform_4(%arg0: i32) -> (i32, i32, i32, i32) {
    %c0_i32 = arith.constant 0 : i32
    %c0_i32_0 = arith.constant 0 : i32
    %c0_i32_1 = arith.constant 0 : i32
    %c0_i32_2 = arith.constant 0 : i32
    %c0_i32_3 = arith.constant 0 : i32
    return %c0_i32, %c0_i32_0, %c0_i32_1, %c0_i32_2 : i32, i32, i32, i32
  }
  func.func @transform_5(%arg0: i32) -> (i32, i32) {
    %c0_i32 = arith.constant 0 : i32
    %c0_i32_0 = arith.constant 0 : i32
    %c0_i32_1 = arith.constant 0 : i32
    return %c0_i32, %c0_i32_0 : i32, i32
  }
  func.func @transform_6(%arg0: i32) -> (i32, i32) {
    %c0_i32 = arith.constant 0 : i32
    %c0_i32_0 = arith.constant 0 : i32
    %c0_i32_1 = arith.constant 0 : i32
    return %c0_i32, %c0_i32_0 : i32, i32
  }
  func.func @transform_7(%arg0: i32) -> (i32, i32) {
    %c0_i32 = arith.constant 0 : i32
    %c0_i32_0 = arith.constant 0 : i32
    %c0_i32_1 = arith.constant 0 : i32
    return %c0_i32, %c0_i32_0 : i32, i32
  }
  func.func @transform_8(%arg0: i32) -> (i32, i32) {
    %c0_i32 = arith.constant 0 : i32
    %c0_i32_0 = arith.constant 0 : i32
    %c0_i32_1 = arith.constant 0 : i32
    return %c0_i32, %c0_i32_0 : i32, i32
  }
  func.func @transform_9(%arg0: i32) -> (i32, i32) {
    %c0_i32 = arith.constant 0 : i32
    %c0_i32_0 = arith.constant 0 : i32
    %c0_i32_1 = arith.constant 0 : i32
    return %c0_i32, %c0_i32_0 : i32, i32
  }
  func.func @transform_10(%arg0: i32) -> (i32, i32, i32) {
    %c0_i32 = arith.constant 0 : i32
    %c0_i32_0 = arith.constant 0 : i32
    %c0_i32_1 = arith.constant 0 : i32
    return %arg0, %c0_i32, %c0_i32_0 : i32, i32, i32
  }
}

</mosaic_0001>

<llo_original>
// kernel: tpu_custom_call.1
$region0: #{tpu_custom_call.1}
  #allocation0 [shape = 'u32[]', space=smem, size = 0x4, offset = 0x4, fixed_abs, tag = 'smem constant byte address 0x4 - core index']
  #allocation1 [shape = 'u32[144,128]{1,0:T(1,128)}', space=vmem, size = 0x12000, scoped, tag = 'internal scratch']
  #allocation2 [shape = 'f32[64,64,8]{2,1,0:T(8,128)}', space=vmem, size = 0x200000, scoped, tag = 'scratch operand']
  %s0 = inlined_call_operand.vmem [shape: f32[2,16,16,4], index: 0, kind: input, shape index: {}]
  %s1 = inlined_call_operand.vmem [shape: f32[4,8], index: 1, kind: input, shape index: {}]
  %s2 = inlined_call_operand.vmem [shape: f32[3,3,8,8], index: 2, kind: input, shape index: {}]
  %s3 = inlined_call_operand.vmem [shape: f32[3,3,8,8], index: 3, kind: input, shape index: {}]
  %s4 = inlined_call_operand.vmem [shape: f32[3,3,8,8], index: 4, kind: input, shape index: {}]
  %s5 = inlined_call_operand.vmem [shape: f32[4,8], index: 5, kind: input, shape index: {}]
  %s6 = inlined_call_operand.vmem [shape: f32[32,8], index: 6, kind: input, shape index: {}]
  %s7 = inlined_call_operand.vmem [shape: f32[8,8], index: 7, kind: input, shape index: {}]
  %s8 = inlined_call_operand.vmem [shape: f32[1,8], index: 8, kind: input, shape index: {}]
  %s9 = inlined_call_operand.vmem [shape: f32[1,8], index: 9, kind: input, shape index: {}]
  %s10 = inlined_call_operand.hbm [shape: f32[2,8,256], index: 10, kind: output, shape index: {}]
  %s11 = sld [smem:[#allocation0]]
  $region73: #{tpu_custom_call.1} parent=0
    _
  %s13 = ssub.s32 1, %s11
  %s14 = scalar_select 0, %s13, %s11
  $region1: #{tpu_custom_call.1} parent=0
    #allocation3 [shape = 'u8[16384]{0}', space=vmem, size = 0x4000, scoped, tag = 'output window, operand 0']
    #allocation4 [shape = 's32[2]{0}', space=sflag, size = 0x8, scoped, tag = 'scoped memory for tpu_custom_call.1']
    %15 = vsyncpa [#allocation4], 0
    %s16 = scalar_lea.sflag [#allocation4], 1
    %17 = vsyncpa %s16, 0
    loop: start=0, step=1, limit=4
    $region2: #{tpu_custom_call.1} parent=1 // loop_pre_header
      _
    $region3: #{tpu_custom_call.1} parent=1 // loop_header
      %s19 = sphi 0, %s23
      %p20 = scmp.ge.s32.totalorder %s19, 4
      %s29 = sphi 0, %s31
      %s32 = sphi 0, %s29
      %s33 = sphi 0, %s32
      %s49 = sphi 0, %s33
      %s53 = sphi 0, %s53
      %s55 = sphi 0, %s53
      %s56 = sphi 0, %s55
      %s70 = sphi 0, %s56
      %s74 = sphi 0, %s74
      %s76 = sphi 0, %s74
      %s77 = sphi 0, %s76
      %s91 = sphi 0, %s77
      %s95 = sphi 0, %s95
      %s97 = sphi 0, %s95
      %s98 = sphi 0, %s97
      %s112 = sphi 0, %s98
      %s116 = sphi 0, %s116
      %s118 = sphi 0, %s116
      %s119 = sphi 0, %s118
      %s133 = sphi 0, %s119
      %s137 = sphi 0, %s137
      %s139 = sphi 0, %s137
      %s140 = sphi 0, %s139
      %s154 = sphi 0, %s140
      %s158 = sphi 0, %s158
      %s160 = sphi 0, %s158
      %s161 = sphi 0, %s160
      %s175 = sphi 0, %s161
      %s179 = sphi 0, %s179
      %s181 = sphi 0, %s179
      %s182 = sphi 0, %s181
      %s196 = sphi 0, %s182
      %s200 = sphi 0, %s200
      %s202 = sphi 0, %s200
      %s203 = sphi 0, %s202
      %s217 = sphi 0, %s203
      %s221 = sphi 0, %s221
      %s223 = sphi 0, %s221
      %s224 = sphi 0, %s223
      %s238 = sphi 0, %s224
      %s244 = sphi 0, %s246
      %s247 = sphi 0, %s244
      %s248 = sphi 0, %s247
      %s264 = sphi 0, %s248
    $region4: #{tpu_custom_call.1} parent=1 // loop_header_branch
      %22 = sbr.rel (%p20) target = $region8
    $region5: #{tpu_custom_call.1} parent=1 // loop_body
      %s24 = ssub.s32 %s19, 1
      %s25 = ssub.s32 %s19, 2
      %s26 = sadd.s32 %s19, 1
      %s27 = ssub.s32 %s19, %s26
      %p28 = scmp.eq.s32.totalorder %s27, 0
      %s30 = sadd.s32 %s29, 1
      %s31 = scalar_select %p28, %s29, %s30
      %p34 = pneg %p28
      %p35 = scmp.eq.s32.totalorder %s19, 1
      %p36 = por %p34, %p35
      %p37 = scmp.ne.s32.totalorder %s29, %s32
      %p38 = scmp.eq.s32.totalorder %s19, 0
      %p39 = por %p37, %p38
      %p40 = scmp.ne.s32.totalorder %s29, %s32
      %p41 = scmp.eq.s32.totalorder %s24, 1
      %p42 = por %p40, %p41
      %p43 = scmp.ne.s32.totalorder %s32, %s33
      %p44 = scmp.eq.s32.totalorder %s24, 0
      %p45 = por %p43, %p44
      %p46 = scmp.ne.s32.totalorder %s32, %s33
      %p47 = scmp.eq.s32.totalorder %s25, 1
      %p48 = por %p46, %p47
      %p50 = scmp.ne.s32.totalorder %s33, %s49
      %p51 = scmp.eq.s32.totalorder %s25, 0
      %p52 = por %p50, %p51
      %s54 = sadd.s32 %s53, 1
      %p57 = scmp.eq.s32.totalorder %s19, 1
      %p58 = scmp.ne.s32.totalorder %s53, %s55
      %p59 = scmp.eq.s32.totalorder %s19, 0
      %p60 = por %p58, %p59
      %p61 = scmp.ne.s32.totalorder %s53, %s55
      %p62 = scmp.eq.s32.totalorder %s24, 1
      %p63 = por %p61, %p62
      %p64 = scmp.ne.s32.totalorder %s55, %s56
      %p65 = scmp.eq.s32.totalorder %s24, 0
      %p66 = por %p64, %p65
      %p67 = scmp.ne.s32.totalorder %s55, %s56
      %p68 = scmp.eq.s32.totalorder %s25, 1
      %p69 = por %p67, %p68
      %p71 = scmp.ne.s32.totalorder %s56, %s70
      %p72 = scmp.eq.s32.totalorder %s25, 0
      %p73 = por %p71, %p72
      %s75 = sadd.s32 %s74, 1
      %p78 = scmp.eq.s32.totalorder %s19, 1
      %p79 = scmp.ne.s32.totalorder %s74, %s76
      %p80 = scmp.eq.s32.totalorder %s19, 0
      %p81 = por %p79, %p80
      %p82 = scmp.ne.s32.totalorder %s74, %s76
      %p83 = scmp.eq.s32.totalorder %s24, 1
      %p84 = por %p82, %p83
      %p85 = scmp.ne.s32.totalorder %s76, %s77
      %p86 = scmp.eq.s32.totalorder %s24, 0
      %p87 = por %p85, %p86
      %p88 = scmp.ne.s32.totalorder %s76, %s77
      %p89 = scmp.eq.s32.totalorder %s25, 1
      %p90 = por %p88, %p89
      %p92 = scmp.ne.s32.totalorder %s77, %s91
      %p93 = scmp.eq.s32.totalorder %s25, 0
      %p94 = por %p92, %p93
      %s96 = sadd.s32 %s95, 1
      %p99 = scmp.eq.s32.totalorder %s19, 1
      %p100 = scmp.ne.s32.totalorder %s95, %s97
      %p101 = scmp.eq.s32.totalorder %s19, 0
      %p102 = por %p100, %p101
      %p103 = scmp.ne.s32.totalorder %s95, %s97
      %p104 = scmp.eq.s32.totalorder %s24, 1
      %p105 = por %p103, %p104
      %p106 = scmp.ne.s32.totalorder %s97, %s98
      %p107 = scmp.eq.s32.totalorder %s24, 0
      %p108 = por %p106, %p107
      %p109 = scmp.ne.s32.totalorder %s97, %s98
      %p110 = scmp.eq.s32.totalorder %s25, 1
      %p111 = por %p109, %p110
      %p113 = scmp.ne.s32.totalorder %s98, %s112
      %p114 = scmp.eq.s32.totalorder %s25, 0
      %p115 = por %p113, %p114
      %s117 = sadd.s32 %s116, 1
      %p120 = scmp.eq.s32.totalorder %s19, 1
      %p121 = scmp.ne.s32.totalorder %s116, %s118
      %p122 = scmp.eq.s32.totalorder %s19, 0
      %p123 = por %p121, %p122
      %p124 = scmp.ne.s32.totalorder %s116, %s118
      %p125 = scmp.eq.s32.totalorder %s24, 1
      %p126 = por %p124, %p125
      %p127 = scmp.ne.s32.totalorder %s118, %s119
      %p128 = scmp.eq.s32.totalorder %s24, 0
      %p129 = por %p127, %p128
      %p130 = scmp.ne.s32.totalorder %s118, %s119
      %p131 = scmp.eq.s32.totalorder %s25, 1
      %p132 = por %p130, %p131
      %p134 = scmp.ne.s32.totalorder %s119, %s133
      %p135 = scmp.eq.s32.totalorder %s25, 0
      %p136 = por %p134, %p135
      %s138 = sadd.s32 %s137, 1
      %p141 = scmp.eq.s32.totalorder %s19, 1
      %p142 = scmp.ne.s32.totalorder %s137, %s139
      %p143 = scmp.eq.s32.totalorder %s19, 0
      %p144 = por %p142, %p143
      %p145 = scmp.ne.s32.totalorder %s137, %s139
      %p146 = scmp.eq.s32.totalorder %s24, 1
      %p147 = por %p145, %p146
      %p148 = scmp.ne.s32.totalorder %s139, %s140
      %p149 = scmp.eq.s32.totalorder %s24, 0
      %p150 = por %p148, %p149
      %p151 = scmp.ne.s32.totalorder %s139, %s140
      %p152 = scmp.eq.s32.totalorder %s25, 1
      %p153 = por %p151, %p152
      %p155 = scmp.ne.s32.totalorder %s140, %s154
      %p156 = scmp.eq.s32.totalorder %s25, 0
      %p157 = por %p155, %p156
      %s159 = sadd.s32 %s158, 1
      %p162 = scmp.eq.s32.totalorder %s19, 1
      %p163 = scmp.ne.s32.totalorder %s158, %s160
      %p164 = scmp.eq.s32.totalorder %s19, 0
      %p165 = por %p163, %p164
      %p166 = scmp.ne.s32.totalorder %s158, %s160
      %p167 = scmp.eq.s32.totalorder %s24, 1
      %p168 = por %p166, %p167
      %p169 = scmp.ne.s32.totalorder %s160, %s161
      %p170 = scmp.eq.s32.totalorder %s24, 0
      %p171 = por %p169, %p170
      %p172 = scmp.ne.s32.totalorder %s160, %s161
      %p173 = scmp.eq.s32.totalorder %s25, 1
      %p174 = por %p172, %p173
      %p176 = scmp.ne.s32.totalorder %s161, %s175
      %p177 = scmp.eq.s32.totalorder %s25, 0
      %p178 = por %p176, %p177
      %s180 = sadd.s32 %s179, 1
      %p183 = scmp.eq.s32.totalorder %s19, 1
      %p184 = scmp.ne.s32.totalorder %s179, %s181
      %p185 = scmp.eq.s32.totalorder %s19, 0
      %p186 = por %p184, %p185
      %p187 = scmp.ne.s32.totalorder %s179, %s181
      %p188 = scmp.eq.s32.totalorder %s24, 1
      %p189 = por %p187, %p188
      %p190 = scmp.ne.s32.totalorder %s181, %s182
      %p191 = scmp.eq.s32.totalorder %s24, 0
      %p192 = por %p190, %p191
      %p193 = scmp.ne.s32.totalorder %s181, %s182
      %p194 = scmp.eq.s32.totalorder %s25, 1
      %p195 = por %p193, %p194
      %p197 = scmp.ne.s32.totalorder %s182, %s196
      %p198 = scmp.eq.s32.totalorder %s25, 0
      %p199 = por %p197, %p198
      %s201 = sadd.s32 %s200, 1
      %p204 = scmp.eq.s32.totalorder %s19, 1
      %p205 = scmp.ne.s32.totalorder %s200, %s202
      %p206 = scmp.eq.s32.totalorder %s19, 0
      %p207 = por %p205, %p206
      %p208 = scmp.ne.s32.totalorder %s200, %s202
      %p209 = scmp.eq.s32.totalorder %s24, 1
      %p210 = por %p208, %p209
      %p211 = scmp.ne.s32.totalorder %s202, %s203
      %p212 = scmp.eq.s32.totalorder %s24, 0
      %p213 = por %p211, %p212
      %p214 = scmp.ne.s32.totalorder %s202, %s203
      %p215 = scmp.eq.s32.totalorder %s25, 1
      %p216 = por %p214, %p215
      %p218 = scmp.ne.s32.totalorder %s203, %s217
      %p219 = scmp.eq.s32.totalorder %s25, 0
      %p220 = por %p218, %p219
      %s222 = sadd.s32 %s221, 1
      %p225 = scmp.eq.s32.totalorder %s19, 1
      %p226 = scmp.ne.s32.totalorder %s221, %s223
      %p227 = scmp.eq.s32.totalorder %s19, 0
      %p228 = por %p226, %p227
      %p229 = scmp.ne.s32.totalorder %s221, %s223
      %p230 = scmp.eq.s32.totalorder %s24, 1
      %p231 = por %p229, %p230
      %p232 = scmp.ne.s32.totalorder %s223, %s224
      %p233 = scmp.eq.s32.totalorder %s24, 0
      %p234 = por %p232, %p233
      %p235 = scmp.ne.s32.totalorder %s223, %s224
      %p236 = scmp.eq.s32.totalorder %s25, 1
      %p237 = por %p235, %p236
      %p239 = scmp.ne.s32.totalorder %s224, %s238
      %p240 = scmp.eq.s32.totalorder %s25, 0
      %p241 = por %p239, %p240
      %s242 = ssub.s32 %s19, %s26
      %p243 = scmp.eq.s32.totalorder %s242, 0
      %s245 = sadd.s32 %s244, 1
      %s246 = scalar_select %p243, %s244, %s245
      %p249 = pneg %p243
      %p250 = scmp.eq.s32.totalorder %s19, 1
      %p251 = por %p249, %p250
      %p252 = scmp.ne.s32.totalorder %s244, %s247
      %p253 = scmp.eq.s32.totalorder %s19, 0
      %p254 = por %p252, %p253
      %p255 = scmp.ne.s32.totalorder %s244, %s247
      %p256 = scmp.eq.s32.totalorder %s24, 1
      %p257 = por %p255, %p256
      %p258 = scmp.ne.s32.totalorder %s247, %s248
      %p259 = scmp.eq.s32.totalorder %s24, 0
      %p260 = por %p258, %p259
      %p261 = scmp.ne.s32.totalorder %s247, %s248
      %p262 = scmp.eq.s32.totalorder %s25, 1
      %p263 = por %p261, %p262
      %p265 = scmp.ne.s32.totalorder %s248, %s264
      %p266 = scmp.eq.s32.totalorder %s25, 0
      %p267 = por %p265, %p266
      %p268 = scmp.le.s32.totalorder 1, %s19
      %p269 = scmp.lt.s32.totalorder %s19, 3
      %p270 = pnand %p268, %p269
      %p271 = pneg %p270
      // Predicated region
      $region9: #{tpu_custom_call.1} parent=5 // pred_check
        _
      $region10: #{tpu_custom_call.1} parent=5 // pred_check_branch
        %273 = sbr.rel (%p270) target = $region12
      $region11: #{tpu_custom_call.1} parent=5 // pred_region
        %s274 = ssub.s32 %s19, 1
        // Predicated region
        $region13: #{tpu_custom_call.1} parent=11 // pred_check
          %p275 = pneg %p66
        $region14: #{tpu_custom_call.1} parent=11 // pred_check_branch
          %277 = sbr.rel (%p275) target = $region16
        $region15: #{tpu_custom_call.1} parent=11 // pred_region
          _
        $region16: #{tpu_custom_call.1} parent=11 // pred_fallthru
          _
        // Predicated region
        $region17: #{tpu_custom_call.1} parent=11 // pred_check
          %p278 = pneg %p87
        $region18: #{tpu_custom_call.1} parent=11 // pred_check_branch
          %280 = sbr.rel (%p278) target = $region20
        $region19: #{tpu_custom_call.1} parent=11 // pred_region
          _
        $region20: #{tpu_custom_call.1} parent=11 // pred_fallthru
          _
        // Predicated region
        $region21: #{tpu_custom_call.1} parent=11 // pred_check
          %p281 = pneg %p108
        $region22: #{tpu_custom_call.1} parent=11 // pred_check_branch
          %283 = sbr.rel (%p281) target = $region24
        $region23: #{tpu_custom_call.1} parent=11 // pred_region
          _
        $region24: #{tpu_custom_call.1} parent=11 // pred_fallthru
          _
        // Predicated region
        $region25: #{tpu_custom_call.1} parent=11 // pred_check
          %p284 = pneg %p129
        $region26: #{tpu_custom_call.1} parent=11 // pred_check_branch
          %286 = sbr.rel (%p284) target = $region28
        $region27: #{tpu_custom_call.1} parent=11 // pred_region
          _
        $region28: #{tpu_custom_call.1} parent=11 // pred_fallthru
          _
        // Predicated region
        $region29: #{tpu_custom_call.1} parent=11 // pred_check
          %p287 = pneg %p150
        $region30: #{tpu_custom_call.1} parent=11 // pred_check_branch
          %289 = sbr.rel (%p287) target = $region32
        $region31: #{tpu_custom_call.1} parent=11 // pred_region
          _
        $region32: #{tpu_custom_call.1} parent=11 // pred_fallthru
          _
        // Predicated region
        $region33: #{tpu_custom_call.1} parent=11 // pred_check
          %p290 = pneg %p171
        $region34: #{tpu_custom_call.1} parent=11 // pred_check_branch
          %292 = sbr.rel (%p290) target = $region36
        $region35: #{tpu_custom_call.1} parent=11 // pred_region
          _
        $region36: #{tpu_custom_call.1} parent=11 // pred_fallthru
          _
        // Predicated region
        $region37: #{tpu_custom_call.1} parent=11 // pred_check
          %p293 = pneg %p192
        $region38: #{tpu_custom_call.1} parent=11 // pred_check_branch
          %295 = sbr.rel (%p293) target = $region40
        $region39: #{tpu_custom_call.1} parent=11 // pred_region
          _
        $region40: #{tpu_custom_call.1} parent=11 // pred_fallthru
          _
        // Predicated region
        $region41: #{tpu_custom_call.1} parent=11 // pred_check
          %p296 = pneg %p213
        $region42: #{tpu_custom_call.1} parent=11 // pred_check_branch
          %298 = sbr.rel (%p296) target = $region44
        $region43: #{tpu_custom_call.1} parent=11 // pred_region
          _
        $region44: #{tpu_custom_call.1} parent=11 // pred_fallthru
          _
        // Predicated region
        $region45: #{tpu_custom_call.1} parent=11 // pred_check
          %p299 = pneg %p234
        $region46: #{tpu_custom_call.1} parent=11 // pred_check_branch
          %301 = sbr.rel (%p299) target = $region48
        $region47: #{tpu_custom_call.1} parent=11 // pred_region
          _
        $region48: #{tpu_custom_call.1} parent=11 // pred_fallthru
          _
      $region12: #{tpu_custom_call.1} parent=5 // pred_fallthru
        _
      %p302 = scmp.lt.s32.totalorder %s19, 2
      // Predicated region
      $region49: #{tpu_custom_call.1} parent=5 // pred_check
        %p303 = pneg %p302
      $region50: #{tpu_custom_call.1} parent=5 // pred_check_branch
        %305 = sbr.rel (%p303) target = $region52
      $region51: #{tpu_custom_call.1} parent=5 // pred_region
        // Predicated region
        $region53: #{tpu_custom_call.1} parent=51 // pred_check
          %p306 = pneg %p39
        $region54: #{tpu_custom_call.1} parent=51 // pred_check_branch
          %308 = sbr.rel (%p306) target = $region56
        $region55: #{tpu_custom_call.1} parent=51 // pred_region
          %p309 = scmp.lt.s32.totalorder %s19, 1
          %s310 = scalar_select %p309, %s19, 1
          %s311 = smul.addr %s310, 32
          %s312 = smul.addr %s311, 8
          %s313 = scalar_lea.vmem %s0, %s312
        $region56: #{tpu_custom_call.1} parent=51 // pred_fallthru
          _
      $region52: #{tpu_custom_call.1} parent=5 // pred_fallthru
        _
      %p314 = scmp.le.s32.totalorder 1, %s19
      %p315 = scmp.lt.s32.totalorder %s19, 3
      %p316 = pnand %p314, %p315
      %p317 = pneg %p316
      // Predicated region
      $region57: #{tpu_custom_call.1} parent=5 // pred_check
        _
      $region58: #{tpu_custom_call.1} parent=5 // pred_check_branch
        %319 = sbr.rel (%p316) target = $region60
      $region59: #{tpu_custom_call.1} parent=5 // pred_region
        %s320 = ssub.s32 %s19, 1
        %p321 = scmp.lt.s32.totalorder %s24, 1
        %s322 = scalar_select %p321, %s24, 1
        %s323 = smul.addr %s322, 32
        %s324 = smul.addr %s323, 8
        %s325 = scalar_lea.vmem %s0, %s324
        %p326 = pneg %p45
        %p327 = pneg %p42
        %p328 = pneg %p66
        %p329 = pneg %p63
        %p330 = pneg %p87
        %p331 = pneg %p84
        %p332 = pneg %p108
        %p333 = pneg %p105
        %p334 = pneg %p129
        %p335 = pneg %p126
        %p336 = pneg %p150
        %p337 = pneg %p147
        %p338 = pneg %p171
        %p339 = pneg %p168
        %p340 = pneg %p192
        %p341 = pneg %p189
        %p342 = pneg %p213
        %p343 = pneg %p210
        %p344 = pneg %p234
        %p345 = pneg %p231
        %p346 = pneg %p260
        %p347 = pneg %p257
        %s348 = sand.u32 %s247, 1
        %s349 = scalar_lea.sflag [#allocation4], %s348
        %s350 = sand.u32 %s247, 1
        %s351 = smul.addr %s350, 16
        %s352 = scalar_lea.vmem [#allocation3], %s351
        %p353 = scmp.lt.s32.totalorder %s24, 1
        %s354 = scalar_select %p353, %s24, 1
        %s355 = smul.addr %s354, 32
        %s356 = smul.addr %s355, 8
        %s357 = scalar_lea.vmem %s0, %s356
        %vm358 = vcmask 64512
        %359 = vst.msk [vmem:[#allocation2] sm:$0xff] %vm358, 0.0
        %360 = vst.msk [vmem:[#allocation2 + $0x8] sm:$0xff] %vm358, 0.0
        %361 = vst.msk [vmem:[#allocation2 + $0x10] sm:$0xff] %vm358, 0.0
        %362 = vst.msk [vmem:[#allocation2 + $0x18] sm:$0xff] %vm358, 0.0
        %363 = vst.msk [vmem:[#allocation2 + $0x20] sm:$0xff] %vm358, 0.0
        %364 = vst.msk [vmem:[#allocation2 + $0x28] sm:$0xff] %vm358, 0.0
        %365 = vst.msk [vmem:[#allocation2 + $0x30] sm:$0xff] %vm358, 0.0
        %366 = vst.msk [vmem:[#allocation2 + $0x38] sm:$0xff] %vm358, 0.0
        %367 = vst.msk [vmem:[#allocation2 + $0x40] sm:$0xff] %vm358, 0.0
        %368 = vst.msk [vmem:[#allocation2 + $0x48] sm:$0xff] %vm358, 0.0
        %369 = vst.msk [vmem:[#allocation2 + $0x50] sm:$0xff] %vm358, 0.0
        %370 = vst.msk [vmem:[#allocation2 + $0x58] sm:$0xff] %vm358, 0.0
        %371 = vst.msk [vmem:[#allocation2 + $0x60] sm:$0xff] %vm358, 0.0
        %372 = vst.msk [vmem:[#allocation2 + $0x68] sm:$0xff] %vm358, 0.0
        %373 = vst.msk [vmem:[#allocation2 + $0x70] sm:$0xff] %vm358, 0.0
        %374 = vst.msk [vmem:[#allocation2 + $0x78] sm:$0xff] %vm358, 0.0
        %375 = vst.msk [vmem:[#allocation2 + $0x80] sm:$0xff] %vm358, 0.0
        %376 = vst.msk [vmem:[#allocation2 + $0x88] sm:$0xff] %vm358, 0.0
        %377 = vst.msk [vmem:[#allocation2 + $0x90] sm:$0xff] %vm358, 0.0
        %378 = vst.msk [vmem:[#allocation2 + $0x98] sm:$0xff] %vm358, 0.0
        %379 = vst.msk [vmem:[#allocation2 + $0xa0] sm:$0xff] %vm358, 0.0
        %380 = vst.msk [vmem:[#allocation2 + $0xa8] sm:$0xff] %vm358, 0.0
        %381 = vst.msk [vmem:[#allocation2 + $0xb0] sm:$0xff] %vm358, 0.0
        %382 = vst.msk [vmem:[#allocation2 + $0xb8] sm:$0xff] %vm358, 0.0
        %383 = vst.msk [vmem:[#allocation2 + $0xc0] sm:$0xff] %vm358, 0.0
        %384 = vst.msk [vmem:[#allocation2 + $0xc8] sm:$0xff] %vm358, 0.0
        %385 = vst.msk [vmem:[#allocation2 + $0xd0] sm:$0xff] %vm358, 0.0
        %386 = vst.msk [vmem:[#allocation2 + $0xd8] sm:$0xff] %vm358, 0.0
        %387 = vst.msk [vmem:[#allocation2 + $0xe0] sm:$0xff] %vm358, 0.0
        %388 = vst.msk [vmem:[#allocation2 + $0xe8] sm:$0xff] %vm358, 0.0
        %389 = vst.msk [vmem:[#allocation2 + $0xf0] sm:$0xff] %vm358, 0.0
        %390 = vst.msk [vmem:[#allocation2 + $0xf8] sm:$0xff] %vm358, 0.0
        %391 = vst.msk [vmem:[#allocation2 + $0x100] sm:$0xff] %vm358, 0.0
        %392 = vst.msk [vmem:[#allocation2 + $0x108] sm:$0xff] %vm358, 0.0
        %393 = vst.msk [vmem:[#allocation2 + $0x110] sm:$0xff] %vm358, 0.0
        %394 = vst.msk [vmem:[#allocation2 + $0x118] sm:$0xff] %vm358, 0.0
        %395 = vst.msk [vmem:[#allocation2 + $0x120] sm:$0xff] %vm358, 0.0
        %396 = vst.msk [vmem:[#allocation2 + $0x128] sm:$0xff] %vm358, 0.0
        %397 = vst.msk [vmem:[#allocation2 + $0x130] sm:$0xff] %vm358, 0.0
        %398 = vst.msk [vmem:[#allocation2 + $0x138] sm:$0xff] %vm358, 0.0
        %399 = vst.msk [vmem:[#allocation2 + $0x140] sm:$0xff] %vm358, 0.0
        %400 = vst.msk [vmem:[#allocation2 + $0x148] sm:$0xff] %vm358, 0.0
        %401 = vst.msk [vmem:[#allocation2 + $0x150] sm:$0xff] %vm358, 0.0
        %402 = vst.msk [vmem:[#allocation2 + $0x158] sm:$0xff] %vm358, 0.0
        %403 = vst.msk [vmem:[#allocation2 + $0x160] sm:$0xff] %vm358, 0.0
        %404 = vst.msk [vmem:[#allocation2 + $0x168] sm:$0xff] %vm358, 0.0
        %405 = vst.msk [vmem:[#allocation2 + $0x170] sm:$0xff] %vm358, 0.0
        %406 = vst.msk [vmem:[#allocation2 + $0x178] sm:$0xff] %vm358, 0.0
        %407 = vst.msk [vmem:[#allocation2 + $0x180] sm:$0xff] %vm358, 0.0
        %408 = vst.msk [vmem:[#allocation2 + $0x188] sm:$0xff] %vm358, 0.0
        %409 = vst.msk [vmem:[#allocation2 + $0x190] sm:$0xff] %vm358, 0.0
        %410 = vst.msk [vmem:[#allocation2 + $0x198] sm:$0xff] %vm358, 0.0
        %411 = vst.msk [vmem:[#allocation2 + $0x1a0] sm:$0xff] %vm358, 0.0
        %412 = vst.msk [vmem:[#allocation2 + $0x1a8] sm:$0xff] %vm358, 0.0
        %413 = vst.msk [vmem:[#allocation2 + $0x1b0] sm:$0xff] %vm358, 0.0
        %414 = vst.msk [vmem:[#allocation2 + $0x1b8] sm:$0xff] %vm358, 0.0
        %415 = vst.msk [vmem:[#allocation2 + $0x1c0] sm:$0xff] %vm358, 0.0
        %416 = vst.msk [vmem:[#allocation2 + $0x1c8] sm:$0xff] %vm358, 0.0
        %417 = vst.msk [vmem:[#allocation2 + $0x1d0] sm:$0xff] %vm358, 0.0
        %418 = vst.msk [vmem:[#allocation2 + $0x1d8] sm:$0xff] %vm358, 0.0
        %419 = vst.msk [vmem:[#allocation2 + $0x1e0] sm:$0xff] %vm358, 0.0
        %420 = vst.msk [vmem:[#allocation2 + $0x1e8] sm:$0xff] %vm358, 0.0
        %421 = vst.msk [vmem:[#allocation2 + $0x1f0] sm:$0xff] %vm358, 0.0
        %422 = vst.msk [vmem:[#allocation2 + $0x1f8] sm:$0xff] %vm358, 0.0
        %423 = vst.msk [vmem:[#allocation2 + $0x200] sm:$0xff] %vm358, 0.0
        %424 = vst.msk [vmem:[#allocation2 + $0x208] sm:$0xff] %vm358, 0.0
        %425 = vst.msk [vmem:[#allocation2 + $0x210] sm:$0xff] %vm358, 0.0
        %426 = vst.msk [vmem:[#allocation2 + $0x218] sm:$0xff] %vm358, 0.0
        %427 = vst.msk [vmem:[#allocation2 + $0x220] sm:$0xff] %vm358, 0.0
        %428 = vst.msk [vmem:[#allocation2 + $0x228] sm:$0xff] %vm358, 0.0
        %429 = vst.msk [vmem:[#allocation2 + $0x230] sm:$0xff] %vm358, 0.0
        %430 = vst.msk [vmem:[#allocation2 + $0x238] sm:$0xff] %vm358, 0.0
        %431 = vst.msk [vmem:[#allocation2 + $0x240] sm:$0xff] %vm358, 0.0
        %432 = vst.msk [vmem:[#allocation2 + $0x248] sm:$0xff] %vm358, 0.0
        %433 = vst.msk [vmem:[#allocation2 + $0x250] sm:$0xff] %vm358, 0.0
        %434 = vst.msk [vmem:[#allocation2 + $0x258] sm:$0xff] %vm358, 0.0
        %435 = vst.msk [vmem:[#allocation2 + $0x260] sm:$0xff] %vm358, 0.0
        %436 = vst.msk [vmem:[#allocation2 + $0x268] sm:$0xff] %vm358, 0.0
        %437 = vst.msk [vmem:[#allocation2 + $0x270] sm:$0xff] %vm358, 0.0
        %438 = vst.msk [vmem:[#allocation2 + $0x278] sm:$0xff] %vm358, 0.0
        %439 = vst.msk [vmem:[#allocation2 + $0x280] sm:$0xff] %vm358, 0.0
        %440 = vst.msk [vmem:[#allocation2 + $0x288] sm:$0xff] %vm358, 0.0
        %441 = vst.msk [vmem:[#allocation2 + $0x290] sm:$0xff] %vm358, 0.0
        %442 = vst.msk [vmem:[#allocation2 + $0x298] sm:$0xff] %vm358, 0.0
        %443 = vst.msk [vmem:[#allocation2 + $0x2a0] sm:$0xff] %vm358, 0.0
        %444 = vst.msk [vmem:[#allocation2 + $0x2a8] sm:$0xff] %vm358, 0.0
        %445 = vst.msk [vmem:[#allocation2 + $0x2b0] sm:$0xff] %vm358, 0.0
        %446 = vst.msk [vmem:[#allocation2 + $0x2b8] sm:$0xff] %vm358, 0.0
        %447 = vst.msk [vmem:[#allocation2 + $0x2c0] sm:$0xff] %vm358, 0.0
        %448 = vst.msk [vmem:[#allocation2 + $0x2c8] sm:$0xff] %vm358, 0.0
        %449 = vst.msk [vmem:[#allocation2 + $0x2d0] sm:$0xff] %vm358, 0.0
        %450 = vst.msk [vmem:[#allocation2 + $0x2d8] sm:$0xff] %vm358, 0.0
        %451 = vst.msk [vmem:[#allocation2 + $0x2e0] sm:$0xff] %vm358, 0.0
        %452 = vst.msk [vmem:[#allocation2 + $0x2e8] sm:$0xff] %vm358, 0.0
        %453 = vst.msk [vmem:[#allocation2 + $0x2f0] sm:$0xff] %vm358, 0.0
        %454 = vst.msk [vmem:[#allocation2 + $0x2f8] sm:$0xff] %vm358, 0.0
        %455 = vst.msk [vmem:[#allocation2 + $0x300] sm:$0xff] %vm358, 0.0
        %456 = vst.msk [vmem:[#allocation2 + $0x308] sm:$0xff] %vm358, 0.0
        %457 = vst.msk [vmem:[#allocation2 + $0x310] sm:$0xff] %vm358, 0.0
        %458 = vst.msk [vmem:[#allocation2 + $0x318] sm:$0xff] %vm358, 0.0
        %459 = vst.msk [vmem:[#allocation2 + $0x320] sm:$0xff] %vm358, 0.0
        %460 = vst.msk [vmem:[#allocation2 + $0x328] sm:$0xff] %vm358, 0.0
        %461 = vst.msk [vmem:[#allocation2 + $0x330] sm:$0xff] %vm358, 0.0
        %462 = vst.msk [vmem:[#allocation2 + $0x338] sm:$0xff] %vm358, 0.0
        %463 = vst.msk [vmem:[#allocation2 + $0x340] sm:$0xff] %vm358, 0.0
        %464 = vst.msk [vmem:[#allocation2 + $0x348] sm:$0xff] %vm358, 0.0
        %465 = vst.msk [vmem:[#allocation2 + $0x350] sm:$0xff] %vm358, 0.0
        %466 = vst.msk [vmem:[#allocation2 + $0x358] sm:$0xff] %vm358, 0.0
        %467 = vst.msk [vmem:[#allocation2 + $0x360] sm:$0xff] %vm358, 0.0
        %468 = vst.msk [vmem:[#allocation2 + $0x368] sm:$0xff] %vm358, 0.0
        %469 = vst.msk [vmem:[#allocation2 + $0x370] sm:$0xff] %vm358, 0.0
        %470 = vst.msk [vmem:[#allocation2 + $0x378] sm:$0xff] %vm358, 0.0
        %471 = vst.msk [vmem:[#allocation2 + $0x380] sm:$0xff] %vm358, 0.0
        %472 = vst.msk [vmem:[#allocation2 + $0x388] sm:$0xff] %vm358, 0.0
        %473 = vst.msk [vmem:[#allocation2 + $0x390] sm:$0xff] %vm358, 0.0
        %474 = vst.msk [vmem:[#allocation2 + $0x398] sm:$0xff] %vm358, 0.0
        %475 = vst.msk [vmem:[#allocation2 + $0x3a0] sm:$0xff] %vm358, 0.0
        %476 = vst.msk [vmem:[#allocation2 + $0x3a8] sm:$0xff] %vm358, 0.0
        %477 = vst.msk [vmem:[#allocation2 + $0x3b0] sm:$0xff] %vm358, 0.0
        %478 = vst.msk [vmem:[#allocation2 + $0x3b8] sm:$0xff] %vm358, 0.0
        %479 = vst.msk [vmem:[#allocation2 + $0x3c0] sm:$0xff] %vm358, 0.0
        %480 = vst.msk [vmem:[#allocation2 + $0x3c8] sm:$0xff] %vm358, 0.0
        %481 = vst.msk [vmem:[#allocation2 + $0x3d0] sm:$0xff] %vm358, 0.0
        %482 = vst.msk [vmem:[#allocation2 + $0x3d8] sm:$0xff] %vm358, 0.0
        %483 = vst.msk [vmem:[#allocation2 + $0x3e0] sm:$0xff] %vm358, 0.0
        %484 = vst.msk [vmem:[#allocation2 + $0x3e8] sm:$0xff] %vm358, 0.0
        %485 = vst.msk [vmem:[#allocation2 + $0x3f0] sm:$0xff] %vm358, 0.0
        %486 = vst.msk [vmem:[#allocation2 + $0x3f8] sm:$0xff] %vm358, 0.0
        %487 = vst.msk [vmem:[#allocation2 + $0x400] sm:$0xff] %vm358, 0.0
        %488 = vst.msk [vmem:[#allocation2 + $0x408] sm:$0xff] %vm358, 0.0
        %489 = vst.msk [vmem:[#allocation2 + $0x410] sm:$0xff] %vm358, 0.0
        %490 = vst.msk [vmem:[#allocation2 + $0x418] sm:$0xff] %vm358, 0.0
        %491 = vst.msk [vmem:[#allocation2 + $0x420] sm:$0xff] %vm358, 0.0
        %492 = vst.msk [vmem:[#allocation2 + $0x428] sm:$0xff] %vm358, 0.0
        %493 = vst.msk [vmem:[#allocation2 + $0x430] sm:$0xff] %vm358, 0.0
        %494 = vst.msk [vmem:[#allocation2 + $0x438] sm:$0xff] %vm358, 0.0
        %495 = vst.msk [vmem:[#allocation2 + $0x440] sm:$0xff] %vm358, 0.0
        %496 = vst.msk [vmem:[#allocation2 + $0x448] sm:$0xff] %vm358, 0.0
        %497 = vst.msk [vmem:[#allocation2 + $0x450] sm:$0xff] %vm358, 0.0
        %498 = vst.msk [vmem:[#allocation2 + $0x458] sm:$0xff] %vm358, 0.0
        %499 = vst.msk [vmem:[#allocation2 + $0x460] sm:$0xff] %vm358, 0.0
        %500 = vst.msk [vmem:[#allocation2 + $0x468] sm:$0xff] %vm358, 0.0
        %501 = vst.msk [vmem:[#allocation2 + $0x470] sm:$0xff] %vm358, 0.0
        %502 = vst.msk [vmem:[#allocation2 + $0x478] sm:$0xff] %vm358, 0.0
        %503 = vst.msk [vmem:[#allocation2 + $0x480] sm:$0xff] %vm358, 0.0
        %504 = vst.msk [vmem:[#allocation2 + $0x488] sm:$0xff] %vm358, 0.0
        %505 = vst.msk [vmem:[#allocation2 + $0x490] sm:$0xff] %vm358, 0.0
        %506 = vst.msk [vmem:[#allocation2 + $0x498] sm:$0xff] %vm358, 0.0
        %507 = vst.msk [vmem:[#allocation2 + $0x4a0] sm:$0xff] %vm358, 0.0
        %508 = vst.msk [vmem:[#allocation2 + $0x4a8] sm:$0xff] %vm358, 0.0
        %509 = vst.msk [vmem:[#allocation2 + $0x4b0] sm:$0xff] %vm358, 0.0
        %510 = vst.msk [vmem:[#allocation2 + $0x4b8] sm:$0xff] %vm358, 0.0
        %511 = vst.msk [vmem:[#allocation2 + $0x4c0] sm:$0xff] %vm358, 0.0
        %512 = vst.msk [vmem:[#allocation2 + $0x4c8] sm:$0xff] %vm358, 0.0
        %513 = vst.msk [vmem:[#allocation2 + $0x4d0] sm:$0xff] %vm358, 0.0
        %514 = vst.msk [vmem:[#allocation2 + $0x4d8] sm:$0xff] %vm358, 0.0
        %515 = vst.msk [vmem:[#allocation2 + $0x4e0] sm:$0xff] %vm358, 0.0
        %516 = vst.msk [vmem:[#allocation2 + $0x4e8] sm:$0xff] %vm358, 0.0
        %517 = vst.msk [vmem:[#allocation2 + $0x4f0] sm:$0xff] %vm358, 0.0
        %518 = vst.msk [vmem:[#allocation2 + $0x4f8] sm:$0xff] %vm358, 0.0
        %519 = vst.msk [vmem:[#allocation2 + $0x500] sm:$0xff] %vm358, 0.0
        %520 = vst.msk [vmem:[#allocation2 + $0x508] sm:$0xff] %vm358, 0.0
        %521 = vst.msk [vmem:[#allocation2 + $0x510] sm:$0xff] %vm358, 0.0
        %522 = vst.msk [vmem:[#allocation2 + $0x518] sm:$0xff] %vm358, 0.0
        %523 = vst.msk [vmem:[#allocation2 + $0x520] sm:$0xff] %vm358, 0.0
        %524 = vst.msk [vmem:[#allocation2 + $0x528] sm:$0xff] %vm358, 0.0
        %525 = vst.msk [vmem:[#allocation2 + $0x530] sm:$0xff] %vm358, 0.0
        %526 = vst.msk [vmem:[#allocation2 + $0x538] sm:$0xff] %vm358, 0.0
        %527 = vst.msk [vmem:[#allocation2 + $0x540] sm:$0xff] %vm358, 0.0
        %528 = vst.msk [vmem:[#allocation2 + $0x548] sm:$0xff] %vm358, 0.0
        %529 = vst.msk [vmem:[#allocation2 + $0x550] sm:$0xff] %vm358, 0.0
        %530 = vst.msk [vmem:[#allocation2 + $0x558] sm:$0xff] %vm358, 0.0
        %531 = vst.msk [vmem:[#allocation2 + $0x560] sm:$0xff] %vm358, 0.0
        %532 = vst.msk [vmem:[#allocation2 + $0x568] sm:$0xff] %vm358, 0.0
        %533 = vst.msk [vmem:[#allocation2 + $0x570] sm:$0xff] %vm358, 0.0
        %534 = vst.msk [vmem:[#allocation2 + $0x578] sm:$0xff] %vm358, 0.0
        %535 = vst.msk [vmem:[#allocation2 + $0x580] sm:$0xff] %vm358, 0.0
        %536 = vst.msk [vmem:[#allocation2 + $0x588] sm:$0xff] %vm358, 0.0
        %537 = vst.msk [vmem:[#allocation2 + $0x590] sm:$0xff] %vm358, 0.0
        %538 = vst.msk [vmem:[#allocation2 + $0x598] sm:$0xff] %vm358, 0.0
        %539 = vst.msk [vmem:[#allocation2 + $0x5a0] sm:$0xff] %vm358, 0.0
        %540 = vst.msk [vmem:[#allocation2 + $0x5a8] sm:$0xff] %vm358, 0.0
        %541 = vst.msk [vmem:[#allocation2 + $0x5b0] sm:$0xff] %vm358, 0.0
        %542 = vst.msk [vmem:[#allocation2 + $0x5b8] sm:$0xff] %vm358, 0.0
        %543 = vst.msk [vmem:[#allocation2 + $0x5c0] sm:$0xff] %vm358, 0.0
        %544 = vst.msk [vmem:[#allocation2 + $0x5c8] sm:$0xff] %vm358, 0.0
        %545 = vst.msk [vmem:[#allocation2 + $0x5d0] sm:$0xff] %vm358, 0.0
        %546 = vst.msk [vmem:[#allocation2 + $0x5d8] sm:$0xff] %vm358, 0.0
        %547 = vst.msk [vmem:[#allocation2 + $0x5e0] sm:$0xff] %vm358, 0.0
        %548 = vst.msk [vmem:[#allocation2 + $0x5e8] sm:$0xff] %vm358, 0.0
        %549 = vst.msk [vmem:[#allocation2 + $0x5f0] sm:$0xff] %vm358, 0.0
        %550 = vst.msk [vmem:[#allocation2 + $0x5f8] sm:$0xff] %vm358, 0.0
        %551 = vst.msk [vmem:[#allocation2 + $0x600] sm:$0xff] %vm358, 0.0
        %552 = vst.msk [vmem:[#allocation2 + $0x608] sm:$0xff] %vm358, 0.0
        %553 = vst.msk [vmem:[#allocation2 + $0x610] sm:$0xff] %vm358, 0.0
        %554 = vst.msk [vmem:[#allocation2 + $0x618] sm:$0xff] %vm358, 0.0
        %555 = vst.msk [vmem:[#allocation2 + $0x620] sm:$0xff] %vm358, 0.0
        %556 = vst.msk [vmem:[#allocation2 + $0x628] sm:$0xff] %vm358, 0.0
        %557 = vst.msk [vmem:[#allocation2 + $0x630] sm:$0xff] %vm358, 0.0
        %558 = vst.msk [vmem:[#allocation2 + $0x638] sm:$0xff] %vm358, 0.0
        %559 = vst.msk [vmem:[#allocation2 + $0x640] sm:$0xff] %vm358, 0.0
        %560 = vst.msk [vmem:[#allocation2 + $0x648] sm:$0xff] %vm358, 0.0
        %561 = vst.msk [vmem:[#allocation2 + $0x650] sm:$0xff] %vm358, 0.0
        %562 = vst.msk [vmem:[#allocation2 + $0x658] sm:$0xff] %vm358, 0.0
        %563 = vst.msk [vmem:[#allocation2 + $0x660] sm:$0xff] %vm358, 0.0
        %564 = vst.msk [vmem:[#allocation2 + $0x668] sm:$0xff] %vm358, 0.0
        %565 = vst.msk [vmem:[#allocation2 + $0x670] sm:$0xff] %vm358, 0.0
        %566 = vst.msk [vmem:[#allocation2 + $0x678] sm:$0xff] %vm358, 0.0
        %567 = vst.msk [vmem:[#allocation2 + $0x680] sm:$0xff] %vm358, 0.0
        %568 = vst.msk [vmem:[#allocation2 + $0x688] sm:$0xff] %vm358, 0.0
        %569 = vst.msk [vmem:[#allocation2 + $0x690] sm:$0xff] %vm358, 0.0
        %570 = vst.msk [vmem:[#allocation2 + $0x698] sm:$0xff] %vm358, 0.0
        %571 = vst.msk [vmem:[#allocation2 + $0x6a0] sm:$0xff] %vm358, 0.0
        %572 = vst.msk [vmem:[#allocation2 + $0x6a8] sm:$0xff] %vm358, 0.0
        %573 = vst.msk [vmem:[#allocation2 + $0x6b0] sm:$0xff] %vm358, 0.0
        %574 = vst.msk [vmem:[#allocation2 + $0x6b8] sm:$0xff] %vm358, 0.0
        %575 = vst.msk [vmem:[#allocation2 + $0x6c0] sm:$0xff] %vm358, 0.0
        %576 = vst.msk [vmem:[#allocation2 + $0x6c8] sm:$0xff] %vm358, 0.0
        %577 = vst.msk [vmem:[#allocation2 + $0x6d0] sm:$0xff] %vm358, 0.0
        %578 = vst.msk [vmem:[#allocation2 + $0x6d8] sm:$0xff] %vm358, 0.0
        %579 = vst.msk [vmem:[#allocation2 + $0x6e0] sm:$0xff] %vm358, 0.0
        %580 = vst.msk [vmem:[#allocation2 + $0x6e8] sm:$0xff] %vm358, 0.0
        %581 = vst.msk [vmem:[#allocation2 + $0x6f0] sm:$0xff] %vm358, 0.0
        %582 = vst.msk [vmem:[#allocation2 + $0x6f8] sm:$0xff] %vm358, 0.0
        %583 = vst.msk [vmem:[#allocation2 + $0x700] sm:$0xff] %vm358, 0.0
        %584 = vst.msk [vmem:[#allocation2 + $0x708] sm:$0xff] %vm358, 0.0
        %585 = vst.msk [vmem:[#allocation2 + $0x710] sm:$0xff] %vm358, 0.0
        %586 = vst.msk [vmem:[#allocation2 + $0x718] sm:$0xff] %vm358, 0.0
        %587 = vst.msk [vmem:[#allocation2 + $0x720] sm:$0xff] %vm358, 0.0
        %588 = vst.msk [vmem:[#allocation2 + $0x728] sm:$0xff] %vm358, 0.0
        %589 = vst.msk [vmem:[#allocation2 + $0x730] sm:$0xff] %vm358, 0.0
        %590 = vst.msk [vmem:[#allocation2 + $0x738] sm:$0xff] %vm358, 0.0
        %591 = vst.msk [vmem:[#allocation2 + $0x740] sm:$0xff] %vm358, 0.0
        %592 = vst.msk [vmem:[#allocation2 + $0x748] sm:$0xff] %vm358, 0.0
        %593 = vst.msk [vmem:[#allocation2 + $0x750] sm:$0xff] %vm358, 0.0
        %594 = vst.msk [vmem:[#allocation2 + $0x758] sm:$0xff] %vm358, 0.0
        %595 = vst.msk [vmem:[#allocation2 + $0x760] sm:$0xff] %vm358, 0.0
        %596 = vst.msk [vmem:[#allocation2 + $0x768] sm:$0xff] %vm358, 0.0
        %597 = vst.msk [vmem:[#allocation2 + $0x770] sm:$0xff] %vm358, 0.0
        %598 = vst.msk [vmem:[#allocation2 + $0x778] sm:$0xff] %vm358, 0.0
        %599 = vst.msk [vmem:[#allocation2 + $0x780] sm:$0xff] %vm358, 0.0
        %600 = vst.msk [vmem:[#allocation2 + $0x788] sm:$0xff] %vm358, 0.0
        %601 = vst.msk [vmem:[#allocation2 + $0x790] sm:$0xff] %vm358, 0.0
        %602 = vst.msk [vmem:[#allocation2 + $0x798] sm:$0xff] %vm358, 0.0
        %603 = vst.msk [vmem:[#allocation2 + $0x7a0] sm:$0xff] %vm358, 0.0
        %604 = vst.msk [vmem:[#allocation2 + $0x7a8] sm:$0xff] %vm358, 0.0
        %605 = vst.msk [vmem:[#allocation2 + $0x7b0] sm:$0xff] %vm358, 0.0
        %606 = vst.msk [vmem:[#allocation2 + $0x7b8] sm:$0xff] %vm358, 0.0
        %607 = vst.msk [vmem:[#allocation2 + $0x7c0] sm:$0xff] %vm358, 0.0
        %608 = vst.msk [vmem:[#allocation2 + $0x7c8] sm:$0xff] %vm358, 0.0
        %609 = vst.msk [vmem:[#allocation2 + $0x7d0] sm:$0xff] %vm358, 0.0
        %610 = vst.msk [vmem:[#allocation2 + $0x7d8] sm:$0xff] %vm358, 0.0
        %611 = vst.msk [vmem:[#allocation2 + $0x7e0] sm:$0xff] %vm358, 0.0
        %612 = vst.msk [vmem:[#allocation2 + $0x7e8] sm:$0xff] %vm358, 0.0
        %613 = vst.msk [vmem:[#allocation2 + $0x7f0] sm:$0xff] %vm358, 0.0
        %614 = vst.msk [vmem:[#allocation2 + $0x7f8] sm:$0xff] %vm358, 0.0
        %615 = vst.msk [vmem:[#allocation2 + $0x800] sm:$0xff] %vm358, 0.0
        %616 = vst.msk [vmem:[#allocation2 + $0x808] sm:$0xff] %vm358, 0.0
        %617 = vst.msk [vmem:[#allocation2 + $0x810] sm:$0xff] %vm358, 0.0
        %618 = vst.msk [vmem:[#allocation2 + $0x818] sm:$0xff] %vm358, 0.0
        %619 = vst.msk [vmem:[#allocation2 + $0x820] sm:$0xff] %vm358, 0.0
        %620 = vst.msk [vmem:[#allocation2 + $0x828] sm:$0xff] %vm358, 0.0
        %621 = vst.msk [vmem:[#allocation2 + $0x830] sm:$0xff] %vm358, 0.0
        %622 = vst.msk [vmem:[#allocation2 + $0x838] sm:$0xff] %vm358, 0.0
        %623 = vst.msk [vmem:[#allocation2 + $0x840] sm:$0xff] %vm358, 0.0
        %624 = vst.msk [vmem:[#allocation2 + $0x848] sm:$0xff] %vm358, 0.0
        %625 = vst.msk [vmem:[#allocation2 + $0x850] sm:$0xff] %vm358, 0.0
        %626 = vst.msk [vmem:[#allocation2 + $0x858] sm:$0xff] %vm358, 0.0
        %627 = vst.msk [vmem:[#allocation2 + $0x860] sm:$0xff] %vm358, 0.0
        %628 = vst.msk [vmem:[#allocation2 + $0x868] sm:$0xff] %vm358, 0.0
        %629 = vst.msk [vmem:[#allocation2 + $0x870] sm:$0xff] %vm358, 0.0
        %630 = vst.msk [vmem:[#allocation2 + $0x878] sm:$0xff] %vm358, 0.0
        %631 = vst.msk [vmem:[#allocation2 + $0x880] sm:$0xff] %vm358, 0.0
        %632 = vst.msk [vmem:[#allocation2 + $0x888] sm:$0xff] %vm358, 0.0
        %633 = vst.msk [vmem:[#allocation2 + $0x890] sm:$0xff] %vm358, 0.0
        %634 = vst.msk [vmem:[#allocation2 + $0x898] sm:$0xff] %vm358, 0.0
        %635 = vst.msk [vmem:[#allocation2 + $0x8a0] sm:$0xff] %vm358, 0.0
        %636 = vst.msk [vmem:[#allocation2 + $0x8a8] sm:$0xff] %vm358, 0.0
        %637 = vst.msk [vmem:[#allocation2 + $0x8b0] sm:$0xff] %vm358, 0.0
        %638 = vst.msk [vmem:[#allocation2 + $0x8b8] sm:$0xff] %vm358, 0.0
        %639 = vst.msk [vmem:[#allocation2 + $0x8c0] sm:$0xff] %vm358, 0.0
        %640 = vst.msk [vmem:[#allocation2 + $0x8c8] sm:$0xff] %vm358, 0.0
        %641 = vst.msk [vmem:[#allocation2 + $0x8d0] sm:$0xff] %vm358, 0.0
        %642 = vst.msk [vmem:[#allocation2 + $0x8d8] sm:$0xff] %vm358, 0.0
        %643 = vst.msk [vmem:[#allocation2 + $0x8e0] sm:$0xff] %vm358, 0.0
        %644 = vst.msk [vmem:[#allocation2 + $0x8e8] sm:$0xff] %vm358, 0.0
        %645 = vst.msk [vmem:[#allocation2 + $0x8f0] sm:$0xff] %vm358, 0.0
        %646 = vst.msk [vmem:[#allocation2 + $0x8f8] sm:$0xff] %vm358, 0.0
        %647 = vst.msk [vmem:[#allocation2 + $0x900] sm:$0xff] %vm358, 0.0
        %648 = vst.msk [vmem:[#allocation2 + $0x908] sm:$0xff] %vm358, 0.0
        %649 = vst.msk [vmem:[#allocation2 + $0x910] sm:$0xff] %vm358, 0.0
        %650 = vst.msk [vmem:[#allocation2 + $0x918] sm:$0xff] %vm358, 0.0
        %651 = vst.msk [vmem:[#allocation2 + $0x920] sm:$0xff] %vm358, 0.0
        %652 = vst.msk [vmem:[#allocation2 + $0x928] sm:$0xff] %vm358, 0.0
        %653 = vst.msk [vmem:[#allocation2 + $0x930] sm:$0xff] %vm358, 0.0
        %654 = vst.msk [vmem:[#allocation2 + $0x938] sm:$0xff] %vm358, 0.0
        %655 = vst.msk [vmem:[#allocation2 + $0x940] sm:$0xff] %vm358, 0.0
        %656 = vst.msk [vmem:[#allocation2 + $0x948] sm:$0xff] %vm358, 0.0
        %657 = vst.msk [vmem:[#allocation2 + $0x950] sm:$0xff] %vm358, 0.0
        %658 = vst.msk [vmem:[#allocation2 + $0x958] sm:$0xff] %vm358, 0.0
        %659 = vst.msk [vmem:[#allocation2 + $0x960] sm:$0xff] %vm358, 0.0
        %660 = vst.msk [vmem:[#allocation2 + $0x968] sm:$0xff] %vm358, 0.0
        %661 = vst.msk [vmem:[#allocation2 + $0x970] sm:$0xff] %vm358, 0.0
        %662 = vst.msk [vmem:[#allocation2 + $0x978] sm:$0xff] %vm358, 0.0
        %663 = vst.msk [vmem:[#allocation2 + $0x980] sm:$0xff] %vm358, 0.0
        %664 = vst.msk [vmem:[#allocation2 + $0x988] sm:$0xff] %vm358, 0.0
        %665 = vst.msk [vmem:[#allocation2 + $0x990] sm:$0xff] %vm358, 0.0
        %666 = vst.msk [vmem:[#allocation2 + $0x998] sm:$0xff] %vm358, 0.0
        %667 = vst.msk [vmem:[#allocation2 + $0x9a0] sm:$0xff] %vm358, 0.0
        %668 = vst.msk [vmem:[#allocation2 + $0x9a8] sm:$0xff] %vm358, 0.0
        %669 = vst.msk [vmem:[#allocation2 + $0x9b0] sm:$0xff] %vm358, 0.0
        %670 = vst.msk [vmem:[#allocation2 + $0x9b8] sm:$0xff] %vm358, 0.0
        %671 = vst.msk [vmem:[#allocation2 + $0x9c0] sm:$0xff] %vm358, 0.0
        %672 = vst.msk [vmem:[#allocation2 + $0x9c8] sm:$0xff] %vm358, 0.0
        %673 = vst.msk [vmem:[#allocation2 + $0x9d0] sm:$0xff] %vm358, 0.0
        %674 = vst.msk [vmem:[#allocation2 + $0x9d8] sm:$0xff] %vm358, 0.0
        %675 = vst.msk [vmem:[#allocation2 + $0x9e0] sm:$0xff] %vm358, 0.0
        %676 = vst.msk [vmem:[#allocation2 + $0x9e8] sm:$0xff] %vm358, 0.0
        %677 = vst.msk [vmem:[#allocation2 + $0x9f0] sm:$0xff] %vm358, 0.0
        %678 = vst.msk [vmem:[#allocation2 + $0x9f8] sm:$0xff] %vm358, 0.0
        %679 = vst.msk [vmem:[#allocation2 + $0xa00] sm:$0xff] %vm358, 0.0
        %680 = vst.msk [vmem:[#allocation2 + $0xa08] sm:$0xff] %vm358, 0.0
        %681 = vst.msk [vmem:[#allocation2 + $0xa10] sm:$0xff] %vm358, 0.0
        %682 = vst.msk [vmem:[#allocation2 + $0xa18] sm:$0xff] %vm358, 0.0
        %683 = vst.msk [vmem:[#allocation2 + $0xa20] sm:$0xff] %vm358, 0.0
        %684 = vst.msk [vmem:[#allocation2 + $0xa28] sm:$0xff] %vm358, 0.0
        %685 = vst.msk [vmem:[#allocation2 + $0xa30] sm:$0xff] %vm358, 0.0
        %686 = vst.msk [vmem:[#allocation2 + $0xa38] sm:$0xff] %vm358, 0.0
        %687 = vst.msk [vmem:[#allocation2 + $0xa40] sm:$0xff] %vm358, 0.0
        %688 = vst.msk [vmem:[#allocation2 + $0xa48] sm:$0xff] %vm358, 0.0
        %689 = vst.msk [vmem:[#allocation2 + $0xa50] sm:$0xff] %vm358, 0.0
        %690 = vst.msk [vmem:[#allocation2 + $0xa58] sm:$0xff] %vm358, 0.0
        %691 = vst.msk [vmem:[#allocation2 + $0xa60] sm:$0xff] %vm358, 0.0
        %692 = vst.msk [vmem:[#allocation2 + $0xa68] sm:$0xff] %vm358, 0.0
        %693 = vst.msk [vmem:[#allocation2 + $0xa70] sm:$0xff] %vm358, 0.0
        %694 = vst.msk [vmem:[#allocation2 + $0xa78] sm:$0xff] %vm358, 0.0
        %695 = vst.msk [vmem:[#allocation2 + $0xa80] sm:$0xff] %vm358, 0.0
        %696 = vst.msk [vmem:[#allocation2 + $0xa88] sm:$0xff] %vm358, 0.0
        %697 = vst.msk [vmem:[#allocation2 + $0xa90] sm:$0xff] %vm358, 0.0
        %698 = vst.msk [vmem:[#allocation2 + $0xa98] sm:$0xff] %vm358, 0.0
        %699 = vst.msk [vmem:[#allocation2 + $0xaa0] sm:$0xff] %vm358, 0.0
        %700 = vst.msk [vmem:[#allocation2 + $0xaa8] sm:$0xff] %vm358, 0.0
        %701 = vst.msk [vmem:[#allocation2 + $0xab0] sm:$0xff] %vm358, 0.0
        %702 = vst.msk [vmem:[#allocation2 + $0xab8] sm:$0xff] %vm358, 0.0
        %703 = vst.msk [vmem:[#allocation2 + $0xac0] sm:$0xff] %vm358, 0.0
        %704 = vst.msk [vmem:[#allocation2 + $0xac8] sm:$0xff] %vm358, 0.0
        %705 = vst.msk [vmem:[#allocation2 + $0xad0] sm:$0xff] %vm358, 0.0
        %706 = vst.msk [vmem:[#allocation2 + $0xad8] sm:$0xff] %vm358, 0.0
        %707 = vst.msk [vmem:[#allocation2 + $0xae0] sm:$0xff] %vm358, 0.0
        %708 = vst.msk [vmem:[#allocation2 + $0xae8] sm:$0xff] %vm358, 0.0
        %709 = vst.msk [vmem:[#allocation2 + $0xaf0] sm:$0xff] %vm358, 0.0
        %710 = vst.msk [vmem:[#allocation2 + $0xaf8] sm:$0xff] %vm358, 0.0
        %711 = vst.msk [vmem:[#allocation2 + $0xb00] sm:$0xff] %vm358, 0.0
        %712 = vst.msk [vmem:[#allocation2 + $0xb08] sm:$0xff] %vm358, 0.0
        %713 = vst.msk [vmem:[#allocation2 + $0xb10] sm:$0xff] %vm358, 0.0
        %714 = vst.msk [vmem:[#allocation2 + $0xb18] sm:$0xff] %vm358, 0.0
        %715 = vst.msk [vmem:[#allocation2 + $0xb20] sm:$0xff] %vm358, 0.0
        %716 = vst.msk [vmem:[#allocation2 + $0xb28] sm:$0xff] %vm358, 0.0
        %717 = vst.msk [vmem:[#allocation2 + $0xb30] sm:$0xff] %vm358, 0.0
        %718 = vst.msk [vmem:[#allocation2 + $0xb38] sm:$0xff] %vm358, 0.0
        %719 = vst.msk [vmem:[#allocation2 + $0xb40] sm:$0xff] %vm358, 0.0
        %720 = vst.msk [vmem:[#allocation2 + $0xb48] sm:$0xff] %vm358, 0.0
        %721 = vst.msk [vmem:[#allocation2 + $0xb50] sm:$0xff] %vm358, 0.0
        %722 = vst.msk [vmem:[#allocation2 + $0xb58] sm:$0xff] %vm358, 0.0
        %723 = vst.msk [vmem:[#allocation2 + $0xb60] sm:$0xff] %vm358, 0.0
        %724 = vst.msk [vmem:[#allocation2 + $0xb68] sm:$0xff] %vm358, 0.0
        %725 = vst.msk [vmem:[#allocation2 + $0xb70] sm:$0xff] %vm358, 0.0
        %726 = vst.msk [vmem:[#allocation2 + $0xb78] sm:$0xff] %vm358, 0.0
        %727 = vst.msk [vmem:[#allocation2 + $0xb80] sm:$0xff] %vm358, 0.0
        %728 = vst.msk [vmem:[#allocation2 + $0xb88] sm:$0xff] %vm358, 0.0
        %729 = vst.msk [vmem:[#allocation2 + $0xb90] sm:$0xff] %vm358, 0.0
        %730 = vst.msk [vmem:[#allocation2 + $0xb98] sm:$0xff] %vm358, 0.0
        %731 = vst.msk [vmem:[#allocation2 + $0xba0] sm:$0xff] %vm358, 0.0
        %732 = vst.msk [vmem:[#allocation2 + $0xba8] sm:$0xff] %vm358, 0.0
        %733 = vst.msk [vmem:[#allocation2 + $0xbb0] sm:$0xff] %vm358, 0.0
        %734 = vst.msk [vmem:[#allocation2 + $0xbb8] sm:$0xff] %vm358, 0.0
        %735 = vst.msk [vmem:[#allocation2 + $0xbc0] sm:$0xff] %vm358, 0.0
        %736 = vst.msk [vmem:[#allocation2 + $0xbc8] sm:$0xff] %vm358, 0.0
        %737 = vst.msk [vmem:[#allocation2 + $0xbd0] sm:$0xff] %vm358, 0.0
        %738 = vst.msk [vmem:[#allocation2 + $0xbd8] sm:$0xff] %vm358, 0.0
        %739 = vst.msk [vmem:[#allocation2 + $0xbe0] sm:$0xff] %vm358, 0.0
        %740 = vst.msk [vmem:[#allocation2 + $0xbe8] sm:$0xff] %vm358, 0.0
        %741 = vst.msk [vmem:[#allocation2 + $0xbf0] sm:$0xff] %vm358, 0.0
        %742 = vst.msk [vmem:[#allocation2 + $0xbf8] sm:$0xff] %vm358, 0.0
        %743 = vst.msk [vmem:[#allocation2 + $0xc00] sm:$0xff] %vm358, 0.0
        %744 = vst.msk [vmem:[#allocation2 + $0xc08] sm:$0xff] %vm358, 0.0
        %745 = vst.msk [vmem:[#allocation2 + $0xc10] sm:$0xff] %vm358, 0.0
        %746 = vst.msk [vmem:[#allocation2 + $0xc18] sm:$0xff] %vm358, 0.0
        %747 = vst.msk [vmem:[#allocation2 + $0xc20] sm:$0xff] %vm358, 0.0
        %748 = vst.msk [vmem:[#allocation2 + $0xc28] sm:$0xff] %vm358, 0.0
        %749 = vst.msk [vmem:[#allocation2 + $0xc30] sm:$0xff] %vm358, 0.0
        %750 = vst.msk [vmem:[#allocation2 + $0xc38] sm:$0xff] %vm358, 0.0
        %751 = vst.msk [vmem:[#allocation2 + $0xc40] sm:$0xff] %vm358, 0.0
        %752 = vst.msk [vmem:[#allocation2 + $0xc48] sm:$0xff] %vm358, 0.0
        %753 = vst.msk [vmem:[#allocation2 + $0xc50] sm:$0xff] %vm358, 0.0
        %754 = vst.msk [vmem:[#allocation2 + $0xc58] sm:$0xff] %vm358, 0.0
        %755 = vst.msk [vmem:[#allocation2 + $0xc60] sm:$0xff] %vm358, 0.0
        %756 = vst.msk [vmem:[#allocation2 + $0xc68] sm:$0xff] %vm358, 0.0
        %757 = vst.msk [vmem:[#allocation2 + $0xc70] sm:$0xff] %vm358, 0.0
        %758 = vst.msk [vmem:[#allocation2 + $0xc78] sm:$0xff] %vm358, 0.0
        %759 = vst.msk [vmem:[#allocation2 + $0xc80] sm:$0xff] %vm358, 0.0
        %760 = vst.msk [vmem:[#allocation2 + $0xc88] sm:$0xff] %vm358, 0.0
        %761 = vst.msk [vmem:[#allocation2 + $0xc90] sm:$0xff] %vm358, 0.0
        %762 = vst.msk [vmem:[#allocation2 + $0xc98] sm:$0xff] %vm358, 0.0
        %763 = vst.msk [vmem:[#allocation2 + $0xca0] sm:$0xff] %vm358, 0.0
        %764 = vst.msk [vmem:[#allocation2 + $0xca8] sm:$0xff] %vm358, 0.0
        %765 = vst.msk [vmem:[#allocation2 + $0xcb0] sm:$0xff] %vm358, 0.0
        %766 = vst.msk [vmem:[#allocation2 + $0xcb8] sm:$0xff] %vm358, 0.0
        %767 = vst.msk [vmem:[#allocation2 + $0xcc0] sm:$0xff] %vm358, 0.0
        %768 = vst.msk [vmem:[#allocation2 + $0xcc8] sm:$0xff] %vm358, 0.0
        %769 = vst.msk [vmem:[#allocation2 + $0xcd0] sm:$0xff] %vm358, 0.0
        %770 = vst.msk [vmem:[#allocation2 + $0xcd8] sm:$0xff] %vm358, 0.0
        %771 = vst.msk [vmem:[#allocation2 + $0xce0] sm:$0xff] %vm358, 0.0
        %772 = vst.msk [vmem:[#allocation2 + $0xce8] sm:$0xff] %vm358, 0.0
        %773 = vst.msk [vmem:[#allocation2 + $0xcf0] sm:$0xff] %vm358, 0.0
        %774 = vst.msk [vmem:[#allocation2 + $0xcf8] sm:$0xff] %vm358, 0.0
        %775 = vst.msk [vmem:[#allocation2 + $0xd00] sm:$0xff] %vm358, 0.0
        %776 = vst.msk [vmem:[#allocation2 + $0xd08] sm:$0xff] %vm358, 0.0
        %777 = vst.msk [vmem:[#allocation2 + $0xd10] sm:$0xff] %vm358, 0.0
        %778 = vst.msk [vmem:[#allocation2 + $0xd18] sm:$0xff] %vm358, 0.0
        %779 = vst.msk [vmem:[#allocation2 + $0xd20] sm:$0xff] %vm358, 0.0
        %780 = vst.msk [vmem:[#allocation2 + $0xd28] sm:$0xff] %vm358, 0.0
        %781 = vst.msk [vmem:[#allocation2 + $0xd30] sm:$0xff] %vm358, 0.0
        %782 = vst.msk [vmem:[#allocation2 + $0xd38] sm:$0xff] %vm358, 0.0
        %783 = vst.msk [vmem:[#allocation2 + $0xd40] sm:$0xff] %vm358, 0.0
        %784 = vst.msk [vmem:[#allocation2 + $0xd48] sm:$0xff] %vm358, 0.0
        %785 = vst.msk [vmem:[#allocation2 + $0xd50] sm:$0xff] %vm358, 0.0
        %786 = vst.msk [vmem:[#allocation2 + $0xd58] sm:$0xff] %vm358, 0.0
        %787 = vst.msk [vmem:[#allocation2 + $0xd60] sm:$0xff] %vm358, 0.0
        %788 = vst.msk [vmem:[#allocation2 + $0xd68] sm:$0xff] %vm358, 0.0
        %789 = vst.msk [vmem:[#allocation2 + $0xd70] sm:$0xff] %vm358, 0.0
        %790 = vst.msk [vmem:[#allocation2 + $0xd78] sm:$0xff] %vm358, 0.0
        %791 = vst.msk [vmem:[#allocation2 + $0xd80] sm:$0xff] %vm358, 0.0
        %792 = vst.msk [vmem:[#allocation2 + $0xd88] sm:$0xff] %vm358, 0.0
        %793 = vst.msk [vmem:[#allocation2 + $0xd90] sm:$0xff] %vm358, 0.0
        %794 = vst.msk [vmem:[#allocation2 + $0xd98] sm:$0xff] %vm358, 0.0
        %795 = vst.msk [vmem:[#allocation2 + $0xda0] sm:$0xff] %vm358, 0.0
        %796 = vst.msk [vmem:[#allocation2 + $0xda8] sm:$0xff] %vm358, 0.0
        %797 = vst.msk [vmem:[#allocation2 + $0xdb0] sm:$0xff] %vm358, 0.0
        %798 = vst.msk [vmem:[#allocation2 + $0xdb8] sm:$0xff] %vm358, 0.0
        %799 = vst.msk [vmem:[#allocation2 + $0xdc0] sm:$0xff] %vm358, 0.0
        %800 = vst.msk [vmem:[#allocation2 + $0xdc8] sm:$0xff] %vm358, 0.0
        %801 = vst.msk [vmem:[#allocation2 + $0xdd0] sm:$0xff] %vm358, 0.0
        %802 = vst.msk [vmem:[#allocation2 + $0xdd8] sm:$0xff] %vm358, 0.0
        %803 = vst.msk [vmem:[#allocation2 + $0xde0] sm:$0xff] %vm358, 0.0
        %804 = vst.msk [vmem:[#allocation2 + $0xde8] sm:$0xff] %vm358, 0.0
        %805 = vst.msk [vmem:[#allocation2 + $0xdf0] sm:$0xff] %vm358, 0.0
        %806 = vst.msk [vmem:[#allocation2 + $0xdf8] sm:$0xff] %vm358, 0.0
        %807 = vst.msk [vmem:[#allocation2 + $0xe00] sm:$0xff] %vm358, 0.0
        %808 = vst.msk [vmem:[#allocation2 + $0xe08] sm:$0xff] %vm358, 0.0
        %809 = vst.msk [vmem:[#allocation2 + $0xe10] sm:$0xff] %vm358, 0.0
        %810 = vst.msk [vmem:[#allocation2 + $0xe18] sm:$0xff] %vm358, 0.0
        %811 = vst.msk [vmem:[#allocation2 + $0xe20] sm:$0xff] %vm358, 0.0
        %812 = vst.msk [vmem:[#allocation2 + $0xe28] sm:$0xff] %vm358, 0.0
        %813 = vst.msk [vmem:[#allocation2 + $0xe30] sm:$0xff] %vm358, 0.0
        %814 = vst.msk [vmem:[#allocation2 + $0xe38] sm:$0xff] %vm358, 0.0
        %815 = vst.msk [vmem:[#allocation2 + $0xe40] sm:$0xff] %vm358, 0.0
        %816 = vst.msk [vmem:[#allocation2 + $0xe48] sm:$0xff] %vm358, 0.0
        %817 = vst.msk [vmem:[#allocation2 + $0xe50] sm:$0xff] %vm358, 0.0
        %818 = vst.msk [vmem:[#allocation2 + $0xe58] sm:$0xff] %vm358, 0.0
        %819 = vst.msk [vmem:[#allocation2 + $0xe60] sm:$0xff] %vm358, 0.0
        %820 = vst.msk [vmem:[#allocation2 + $0xe68] sm:$0xff] %vm358, 0.0
        %821 = vst.msk [vmem:[#allocation2 + $0xe70] sm:$0xff] %vm358, 0.0
        %822 = vst.msk [vmem:[#allocation2 + $0xe78] sm:$0xff] %vm358, 0.0
        %823 = vst.msk [vmem:[#allocation2 + $0xe80] sm:$0xff] %vm358, 0.0
        %824 = vst.msk [vmem:[#allocation2 + $0xe88] sm:$0xff] %vm358, 0.0
        %825 = vst.msk [vmem:[#allocation2 + $0xe90] sm:$0xff] %vm358, 0.0
        %826 = vst.msk [vmem:[#allocation2 + $0xe98] sm:$0xff] %vm358, 0.0
        %827 = vst.msk [vmem:[#allocation2 + $0xea0] sm:$0xff] %vm358, 0.0
        %828 = vst.msk [vmem:[#allocation2 + $0xea8] sm:$0xff] %vm358, 0.0
        %829 = vst.msk [vmem:[#allocation2 + $0xeb0] sm:$0xff] %vm358, 0.0
        %830 = vst.msk [vmem:[#allocation2 + $0xeb8] sm:$0xff] %vm358, 0.0
        %831 = vst.msk [vmem:[#allocation2 + $0xec0] sm:$0xff] %vm358, 0.0
        %832 = vst.msk [vmem:[#allocation2 + $0xec8] sm:$0xff] %vm358, 0.0
        %833 = vst.msk [vmem:[#allocation2 + $0xed0] sm:$0xff] %vm358, 0.0
        %834 = vst.msk [vmem:[#allocation2 + $0xed8] sm:$0xff] %vm358, 0.0
        %835 = vst.msk [vmem:[#allocation2 + $0xee0] sm:$0xff] %vm358, 0.0
        %836 = vst.msk [vmem:[#allocation2 + $0xee8] sm:$0xff] %vm358, 0.0
        %837 = vst.msk [vmem:[#allocation2 + $0xef0] sm:$0xff] %vm358, 0.0
        %838 = vst.msk [vmem:[#allocation2 + $0xef8] sm:$0xff] %vm358, 0.0
        %839 = vst.msk [vmem:[#allocation2 + $0xf00] sm:$0xff] %vm358, 0.0
        %840 = vst.msk [vmem:[#allocation2 + $0xf08] sm:$0xff] %vm358, 0.0
        %841 = vst.msk [vmem:[#allocation2 + $0xf10] sm:$0xff] %vm358, 0.0
        %842 = vst.msk [vmem:[#allocation2 + $0xf18] sm:$0xff] %vm358, 0.0
        %843 = vst.msk [vmem:[#allocation2 + $0xf20] sm:$0xff] %vm358, 0.0
        %844 = vst.msk [vmem:[#allocation2 + $0xf28] sm:$0xff] %vm358, 0.0
        %845 = vst.msk [vmem:[#allocation2 + $0xf30] sm:$0xff] %vm358, 0.0
        %846 = vst.msk [vmem:[#allocation2 + $0xf38] sm:$0xff] %vm358, 0.0
        %847 = vst.msk [vmem:[#allocation2 + $0xf40] sm:$0xff] %vm358, 0.0
        %848 = vst.msk [vmem:[#allocation2 + $0xf48] sm:$0xff] %vm358, 0.0
        %849 = vst.msk [vmem:[#allocation2 + $0xf50] sm:$0xff] %vm358, 0.0
        %850 = vst.msk [vmem:[#allocation2 + $0xf58] sm:$0xff] %vm358, 0.0
        %851 = vst.msk [vmem:[#allocation2 + $0xf60] sm:$0xff] %vm358, 0.0
        %852 = vst.msk [vmem:[#allocation2 + $0xf68] sm:$0xff] %vm358, 0.0
        %853 = vst.msk [vmem:[#allocation2 + $0xf70] sm:$0xff] %vm358, 0.0
        %854 = vst.msk [vmem:[#allocation2 + $0xf78] sm:$0xff] %vm358, 0.0
        %855 = vst.msk [vmem:[#allocation2 + $0xf80] sm:$0xff] %vm358, 0.0
        %856 = vst.msk [vmem:[#allocation2 + $0xf88] sm:$0xff] %vm358, 0.0
        %857 = vst.msk [vmem:[#allocation2 + $0xf90] sm:$0xff] %vm358, 0.0
        %858 = vst.msk [vmem:[#allocation2 + $0xf98] sm:$0xff] %vm358, 0.0
        %859 = vst.msk [vmem:[#allocation2 + $0xfa0] sm:$0xff] %vm358, 0.0
        %860 = vst.msk [vmem:[#allocation2 + $0xfa8] sm:$0xff] %vm358, 0.0
        %861 = vst.msk [vmem:[#allocation2 + $0xfb0] sm:$0xff] %vm358, 0.0
        %862 = vst.msk [vmem:[#allocation2 + $0xfb8] sm:$0xff] %vm358, 0.0
        %863 = vst.msk [vmem:[#allocation2 + $0xfc0] sm:$0xff] %vm358, 0.0
        %864 = vst.msk [vmem:[#allocation2 + $0xfc8] sm:$0xff] %vm358, 0.0
        %865 = vst.msk [vmem:[#allocation2 + $0xfd0] sm:$0xff] %vm358, 0.0
        %866 = vst.msk [vmem:[#allocation2 + $0xfd8] sm:$0xff] %vm358, 0.0
        %867 = vst.msk [vmem:[#allocation2 + $0xfe0] sm:$0xff] %vm358, 0.0
        %868 = vst.msk [vmem:[#allocation2 + $0xfe8] sm:$0xff] %vm358, 0.0
        %869 = vst.msk [vmem:[#allocation2 + $0xff0] sm:$0xff] %vm358, 0.0
        %870 = vst.msk [vmem:[#allocation2 + $0xff8] sm:$0xff] %vm358, 0.0
        %v871 = vld [vmem:[%s8] sm:$0x1]
        %v872 = vld [vmem:[%s9] sm:$0x1]
        %v873 = vld [vmem:[%s357] sm:$0xff]
        %v874 = vld [vmem:[%s357 + $0x8] sm:$0xff]
        %v875 = vld [vmem:[%s357 + $0x10] sm:$0xff]
        %v876 = vld [vmem:[%s357 + $0x18] sm:$0xff]
        %v877 = vld [vmem:[%s357 + $0x20] sm:$0xff]
        %v878 = vld [vmem:[%s357 + $0x28] sm:$0xff]
        %v879 = vld [vmem:[%s357 + $0x30] sm:$0xff]
        %v880 = vld [vmem:[%s357 + $0x38] sm:$0xff]
        %v881 = vld [vmem:[%s357 + $0x40] sm:$0xff]
        %v882 = vld [vmem:[%s357 + $0x48] sm:$0xff]
        %v883 = vld [vmem:[%s357 + $0x50] sm:$0xff]
        %v884 = vld [vmem:[%s357 + $0x58] sm:$0xff]
        %v885 = vld [vmem:[%s357 + $0x60] sm:$0xff]
        %v886 = vld [vmem:[%s357 + $0x68] sm:$0xff]
        %v887 = vld [vmem:[%s357 + $0x70] sm:$0xff]
        %v888 = vld [vmem:[%s357 + $0x78] sm:$0xff]
        %v889 = vld [vmem:[%s357 + $0x80] sm:$0xff]
        %v890 = vld [vmem:[%s357 + $0x88] sm:$0xff]
        %v891 = vld [vmem:[%s357 + $0x90] sm:$0xff]
        %v892 = vld [vmem:[%s357 + $0x98] sm:$0xff]
        %v893 = vld [vmem:[%s357 + $0xa0] sm:$0xff]
        %v894 = vld [vmem:[%s357 + $0xa8] sm:$0xff]
        %v895 = vld [vmem:[%s357 + $0xb0] sm:$0xff]
        %v896 = vld [vmem:[%s357 + $0xb8] sm:$0xff]
        %v897 = vld [vmem:[%s357 + $0xc0] sm:$0xff]
        %v898 = vld [vmem:[%s357 + $0xc8] sm:$0xff]
        %v899 = vld [vmem:[%s357 + $0xd0] sm:$0xff]
        %v900 = vld [vmem:[%s357 + $0xd8] sm:$0xff]
        %v901 = vld [vmem:[%s357 + $0xe0] sm:$0xff]
        %v902 = vld [vmem:[%s357 + $0xe8] sm:$0xff]
        %v903 = vld [vmem:[%s357 + $0xf0] sm:$0xff]
        %v904 = vld [vmem:[%s357 + $0xf8] sm:$0xff]
        %v905 = vld [vmem:[%s1] sm:$0xf]
        %vm906 = vcmask 31744
        %v908 = vsel %vm906, %v873, 0
        %v911 = vsel %vm906, %v874, 0
        %v914 = vsel %vm906, %v875, 0
        %v917 = vsel %vm906, %v876, 0
        %v920 = vsel %vm906, %v877, 0
        %v923 = vsel %vm906, %v878, 0
        %v926 = vsel %vm906, %v879, 0
        %v929 = vsel %vm906, %v880, 0
        %v932 = vsel %vm906, %v881, 0
        %v935 = vsel %vm906, %v882, 0
        %v938 = vsel %vm906, %v883, 0
        %v941 = vsel %vm906, %v884, 0
        %v944 = vsel %vm906, %v885, 0
        %v947 = vsel %vm906, %v886, 0
        %v950 = vsel %vm906, %v887, 0
        %v953 = vsel %vm906, %v888, 0
        %v956 = vsel %vm906, %v889, 0
        %v959 = vsel %vm906, %v890, 0
        %v962 = vsel %vm906, %v891, 0
        %v965 = vsel %vm906, %v892, 0
        %v968 = vsel %vm906, %v893, 0
        %v971 = vsel %vm906, %v894, 0
        %v974 = vsel %vm906, %v895, 0
        %v977 = vsel %vm906, %v896, 0
        %v980 = vsel %vm906, %v897, 0
        %v983 = vsel %vm906, %v898, 0
        %v986 = vsel %vm906, %v899, 0
        %v989 = vsel %vm906, %v900, 0
        %v992 = vsel %vm906, %v901, 0
        %v995 = vsel %vm906, %v902, 0
        %v998 = vsel %vm906, %v903, 0
        %v1001 = vsel %vm906, %v904, 0
        %vm1003 = vcmask 1043456
        %v1005 = vsel %vm1003, %v905, 0
        %1007 = vmatprep.subr.mxu0 0.0
        %1008 = vmatpush1.msra.mxu0 %v1005
        %1009 = vmatprep.subr.mxu0 0.0
        %1010 = vmatpush1.msra.mxu0 0.0
        %1011 = vmatprep.subr.mxu0 0.0
        %1012 = vmatpush1.msra.mxu0 0.0
        %1013 = vmatprep.subr.mxu0 0.0
        %1014 = vmatpush1.msra.mxu0 0.0
        %1015 = vmatprep.subr.mxu0 0.0
        %1016 = vmatpush1.msra.mxu0 0.0
        %1017 = vmatprep.subr.mxu0 0.0
        %1018 = vmatpush1.msra.mxu0 0.0
        %1019 = vmatprep.subr.mxu0 0.0
        %1020 = vmatpush1.msra.mxu0 0.0
        %1021 = vmatprep.subr.mxu0 0.0
        %1022 = vmatpush1.msra.mxu0 0.0
        %1023 = vmatprep.subr.mxu0 0.0
        %1024 = vmatpush1.msra.mxu0 0.0
        %1025 = vmatprep.subr.mxu0 0.0
        %1026 = vmatpush1.msra.mxu0 0.0
        %1027 = vmatprep.subr.mxu0 0.0
        %1028 = vmatpush1.msra.mxu0 0.0
        %1029 = vmatprep.subr.mxu0 0.0
        %1030 = vmatpush1.msra.mxu0 0.0
        %1031 = vmatprep.subr.mxu0 0.0
        %1032 = vmatpush1.msra.mxu0 0.0
        %1033 = vmatprep.subr.mxu0 0.0
        %1034 = vmatpush1.msra.mxu0 0.0
        %1035 = vmatprep.subr.mxu0 0.0
        %1036 = vmatpush1.msra.mxu0 0.0
        %1037 = vmatprep.subr.mxu0 0.0
        %1038 = vmatpush1.msra.mxu0 0.0
        %1039 = vmatprep.subr.mxu0 0.0
        %1040 = vmatpush1.msra.mxu0 0.0
        %1041 = vmatprep.subr.mxu0 0.0
        %1042 = vmatpush1.msra.mxu0 0.0
        %1043 = vmatprep.subr.mxu0 0.0
        %1044 = vmatpush1.msra.mxu0 0.0
        %1045 = vmatprep.subr.mxu0 0.0
        %1046 = vmatpush1.msra.mxu0 0.0
        %1047 = vmatprep.subr.mxu0 0.0
        %1048 = vmatpush1.msra.mxu0 0.0
        %1049 = vmatprep.subr.mxu0 0.0
        %1050 = vmatpush1.msra.mxu0 0.0
        %1051 = vmatprep.subr.mxu0 0.0
        %1052 = vmatpush1.msra.mxu0 0.0
        %1053 = vmatprep.subr.mxu0 0.0
        %1054 = vmatpush1.msra.mxu0 0.0
        %1055 = vmatprep.subr.mxu0 0.0
        %1056 = vmatpush1.msra.mxu0 0.0
        %1057 = vmatprep.subr.mxu0 0.0
        %1058 = vmatpush1.msra.mxu0 0.0
        %1059 = vmatprep.subr.mxu0 0.0
        %1060 = vmatpush1.msra.mxu0 0.0
        %1061 = vmatprep.subr.mxu0 0.0
        %1062 = vmatpush1.msra.mxu0 0.0
        %1063 = vmatprep.subr.mxu0 0.0
        %1064 = vmatpush1.msra.mxu0 0.0
        %1065 = vmatprep.subr.mxu0 0.0
        %1066 = vmatpush1.msra.mxu0 0.0
        %1067 = vmatprep.subr.mxu0 0.0
        %1068 = vmatpush1.msra.mxu0 0.0
        %1069 = vmatprep.subr.mxu0 0.0
        %1070 = vmatpush1.msra.mxu0 0.0
        %1071 = vmatprep.mubr.f32.mxu0 0.0
        %1072 = vmatmul.mubr.f32.gmra.mrb[0].mxu0 %v908
        %v1073 = vpop.f32.mrb[0].mxu0
        %v1074 = vadd.f32 0.0, %v1073
        %v1075 = vpop.f32.mrb[0].mxu0
        %1076 = vmatprep.mubr.f32.mxu0 0.0
        %1077 = vmatmul.mubr.f32.gmra.mrb[0].mxu0 %v911
        %v1078 = vpop.f32.mrb[0].mxu0
        %v1079 = vadd.f32 0.0, %v1078
        %v1080 = vpop.f32.mrb[0].mxu0
        %1081 = vmatprep.mubr.f32.mxu0 0.0
        %1082 = vmatmul.mubr.f32.gmra.mrb[0].mxu0 %v914
        %v1083 = vpop.f32.mrb[0].mxu0
        %v1084 = vadd.f32 0.0, %v1083
        %v1085 = vpop.f32.mrb[0].mxu0
        %1086 = vmatprep.mubr.f32.mxu0 0.0
        %1087 = vmatmul.mubr.f32.gmra.mrb[0].mxu0 %v917
        %v1088 = vpop.f32.mrb[0].mxu0
        %v1089 = vadd.f32 0.0, %v1088
        %v1090 = vpop.f32.mrb[0].mxu0
        %1091 = vmatprep.mubr.f32.mxu0 0.0
        %1092 = vmatmul.mubr.f32.gmra.mrb[0].mxu0 %v920
        %v1093 = vpop.f32.mrb[0].mxu0
        %v1094 = vadd.f32 0.0, %v1093
        %v1095 = vpop.f32.mrb[0].mxu0
        %1096 = vmatprep.mubr.f32.mxu0 0.0
        %1097 = vmatmul.mubr.f32.gmra.mrb[0].mxu0 %v923
        %v1098 = vpop.f32.mrb[0].mxu0
        %v1099 = vadd.f32 0.0, %v1098
        %v1100 = vpop.f32.mrb[0].mxu0
        %1101 = vmatprep.mubr.f32.mxu0 0.0
        %1102 = vmatmul.mubr.f32.gmra.mrb[0].mxu0 %v926
        %v1103 = vpop.f32.mrb[0].mxu0
        %v1104 = vadd.f32 0.0, %v1103
        %v1105 = vpop.f32.mrb[0].mxu0
        %1106 = vmatprep.mubr.f32.mxu0 0.0
        %1107 = vmatmul.mubr.f32.gmra.mrb[0].mxu0 %v929
        %v1108 = vpop.f32.mrb[0].mxu0
        %v1109 = vadd.f32 0.0, %v1108
        %v1110 = vpop.f32.mrb[0].mxu0
        %1111 = vmatprep.mubr.f32.mxu0 0.0
        %1112 = vmatmul.mubr.f32.gmra.mrb[0].mxu0 %v932
        %v1113 = vpop.f32.mrb[0].mxu0
        %v1114 = vadd.f32 0.0, %v1113
        %v1115 = vpop.f32.mrb[0].mxu0
        %1116 = vmatprep.mubr.f32.mxu0 0.0
        %1117 = vmatmul.mubr.f32.gmra.mrb[0].mxu0 %v935
        %v1118 = vpop.f32.mrb[0].mxu0
        %v1119 = vadd.f32 0.0, %v1118
        %v1120 = vpop.f32.mrb[0].mxu0
        %1121 = vmatprep.mubr.f32.mxu0 0.0
        %1122 = vmatmul.mubr.f32.gmra.mrb[0].mxu0 %v938
        %v1123 = vpop.f32.mrb[0].mxu0
        %v1124 = vadd.f32 0.0, %v1123
        %v1125 = vpop.f32.mrb[0].mxu0
        %1126 = vmatprep.mubr.f32.mxu0 0.0
        %1127 = vmatmul.mubr.f32.gmra.mrb[0].mxu0 %v941
        %v1128 = vpop.f32.mrb[0].mxu0
        %v1129 = vadd.f32 0.0, %v1128
        %v1130 = vpop.f32.mrb[0].mxu0
        %1131 = vmatprep.mubr.f32.mxu0 0.0
        %1132 = vmatmul.mubr.f32.gmra.mrb[0].mxu0 %v944
        %v1133 = vpop.f32.mrb[0].mxu0
        %v1134 = vadd.f32 0.0, %v1133
        %v1135 = vpop.f32.mrb[0].mxu0
        %1136 = vmatprep.mubr.f32.mxu0 0.0
        %1137 = vmatmul.mubr.f32.gmra.mrb[0].mxu0 %v947
        %v1138 = vpop.f32.mrb[0].mxu0
        %v1139 = vadd.f32 0.0, %v1138
        %v1140 = vpop.f32.mrb[0].mxu0
        %1141 = vmatprep.mubr.f32.mxu0 0.0
        %1142 = vmatmul.mubr.f32.gmra.mrb[0].mxu0 %v950
        %v1143 = vpop.f32.mrb[0].mxu0
        %v1144 = vadd.f32 0.0, %v1143
        %v1145 = vpop.f32.mrb[0].mxu0
        %1146 = vmatprep.mubr.f32.mxu0 0.0
        %1147 = vmatmul.mubr.f32.gmra.mrb[0].mxu0 %v953
        %v1148 = vpop.f32.mrb[0].mxu0
        %v1149 = vadd.f32 0.0, %v1148
        %v1150 = vpop.f32.mrb[0].mxu0
        %1151 = vmatprep.mubr.f32.mxu0 0.0
        %1152 = vmatmul.mubr.f32.gmra.mrb[0].mxu0 %v956
        %v1153 = vpop.f32.mrb[0].mxu0
        %v1154 = vadd.f32 0.0, %v1153
        %v1155 = vpop.f32.mrb[0].mxu0
        %1156 = vmatprep.mubr.f32.mxu0 0.0
        %1157 = vmatmul.mubr.f32.gmra.mrb[0].mxu0 %v959
        %v1158 = vpop.f32.mrb[0].mxu0
        %v1159 = vadd.f32 0.0, %v1158
        %v1160 = vpop.f32.mrb[0].mxu0
        %1161 = vmatprep.mubr.f32.mxu0 0.0
        %1162 = vmatmul.mubr.f32.gmra.mrb[0].mxu0 %v962
        %v1163 = vpop.f32.mrb[0].mxu0
        %v1164 = vadd.f32 0.0, %v1163
        %v1165 = vpop.f32.mrb[0].mxu0
        %1166 = vmatprep.mubr.f32.mxu0 0.0
        %1167 = vmatmul.mubr.f32.gmra.mrb[0].mxu0 %v965
        %v1168 = vpop.f32.mrb[0].mxu0
        %v1169 = vadd.f32 0.0, %v1168
        %v1170 = vpop.f32.mrb[0].mxu0
        %1171 = vmatprep.mubr.f32.mxu0 0.0
        %1172 = vmatmul.mubr.f32.gmra.mrb[0].mxu0 %v968
        %v1173 = vpop.f32.mrb[0].mxu0
        %v1174 = vadd.f32 0.0, %v1173
        %v1175 = vpop.f32.mrb[0].mxu0
        %1176 = vmatprep.mubr.f32.mxu0 0.0
        %1177 = vmatmul.mubr.f32.gmra.mrb[0].mxu0 %v971
        %v1178 = vpop.f32.mrb[0].mxu0
        %v1179 = vadd.f32 0.0, %v1178
        %v1180 = vpop.f32.mrb[0].mxu0
        %1181 = vmatprep.mubr.f32.mxu0 0.0
        %1182 = vmatmul.mubr.f32.gmra.mrb[0].mxu0 %v974
        %v1183 = vpop.f32.mrb[0].mxu0
        %v1184 = vadd.f32 0.0, %v1183
        %v1185 = vpop.f32.mrb[0].mxu0
        %1186 = vmatprep.mubr.f32.mxu0 0.0
        %1187 = vmatmul.mubr.f32.gmra.mrb[0].mxu0 %v977
        %v1188 = vpop.f32.mrb[0].mxu0
        %v1189 = vadd.f32 0.0, %v1188
        %v1190 = vpop.f32.mrb[0].mxu0
        %1191 = vmatprep.mubr.f32.mxu0 0.0
        %1192 = vmatmul.mubr.f32.gmra.mrb[0].mxu0 %v980
        %v1193 = vpop.f32.mrb[0].mxu0
        %v1194 = vadd.f32 0.0, %v1193
        %v1195 = vpop.f32.mrb[0].mxu0
        %1196 = vmatprep.mubr.f32.mxu0 0.0
        %1197 = vmatmul.mubr.f32.gmra.mrb[0].mxu0 %v983
        %v1198 = vpop.f32.mrb[0].mxu0
        %v1199 = vadd.f32 0.0, %v1198
        %v1200 = vpop.f32.mrb[0].mxu0
        %1201 = vmatprep.mubr.f32.mxu0 0.0
        %1202 = vmatmul.mubr.f32.gmra.mrb[0].mxu0 %v986
        %v1203 = vpop.f32.mrb[0].mxu0
        %v1204 = vadd.f32 0.0, %v1203
        %v1205 = vpop.f32.mrb[0].mxu0
        %1206 = vmatprep.mubr.f32.mxu0 0.0
        %1207 = vmatmul.mubr.f32.gmra.mrb[0].mxu0 %v989
        %v1208 = vpop.f32.mrb[0].mxu0
        %v1209 = vadd.f32 0.0, %v1208
        %v1210 = vpop.f32.mrb[0].mxu0
        %1211 = vmatprep.mubr.f32.mxu0 0.0
        %1212 = vmatmul.mubr.f32.gmra.mrb[0].mxu0 %v992
        %v1213 = vpop.f32.mrb[0].mxu0
        %v1214 = vadd.f32 0.0, %v1213
        %v1215 = vpop.f32.mrb[0].mxu0
        %1216 = vmatprep.mubr.f32.mxu0 0.0
        %1217 = vmatmul.mubr.f32.gmra.mrb[0].mxu0 %v995
        %v1218 = vpop.f32.mrb[0].mxu0
        %v1219 = vadd.f32 0.0, %v1218
        %v1220 = vpop.f32.mrb[0].mxu0
        %1221 = vmatprep.mubr.f32.mxu0 0.0
        %1222 = vmatmul.mubr.f32.gmra.mrb[0].mxu0 %v998
        %v1223 = vpop.f32.mrb[0].mxu0
        %v1224 = vadd.f32 0.0, %v1223
        %v1225 = vpop.f32.mrb[0].mxu0
        %1226 = vmatprep.mubr.f32.mxu0 0.0
        %1227 = vmatmul.mubr.f32.gmra.mrb[0].mxu0 %v1001
        %v1228 = vpop.f32.mrb[0].mxu0
        %v1229 = vadd.f32 0.0, %v1228
        %v1230 = vpop.f32.mrb[0].mxu0
        %1231 = vdwg.mxu0
        %v1233 = vlaneseq
        %v1234 = vshrl.u32 %v1233, 7
        %v1235 = vsub.s32 0, %v1234
        %v1236 = vrot.slane %v871, %v1235
        %v1238 = vmul.f32 %v1074, %v1236
        %v1239 = vmul.f32 %v1079, %v1236
        %v1240 = vmul.f32 %v1084, %v1236
        %v1241 = vmul.f32 %v1089, %v1236
        %v1242 = vmul.f32 %v1094, %v1236
        %v1243 = vmul.f32 %v1099, %v1236
        %v1244 = vmul.f32 %v1104, %v1236
        %v1245 = vmul.f32 %v1109, %v1236
        %v1246 = vmul.f32 %v1114, %v1236
        %v1247 = vmul.f32 %v1119, %v1236
        %v1248 = vmul.f32 %v1124, %v1236
        %v1249 = vmul.f32 %v1129, %v1236
        %v1250 = vmul.f32 %v1134, %v1236
        %v1251 = vmul.f32 %v1139, %v1236
        %v1252 = vmul.f32 %v1144, %v1236
        %v1253 = vmul.f32 %v1149, %v1236
        %v1254 = vmul.f32 %v1154, %v1236
        %v1255 = vmul.f32 %v1159, %v1236
        %v1256 = vmul.f32 %v1164, %v1236
        %v1257 = vmul.f32 %v1169, %v1236
        %v1258 = vmul.f32 %v1174, %v1236
        %v1259 = vmul.f32 %v1179, %v1236
        %v1260 = vmul.f32 %v1184, %v1236
        %v1261 = vmul.f32 %v1189, %v1236
        %v1262 = vmul.f32 %v1194, %v1236
        %v1263 = vmul.f32 %v1199, %v1236
        %v1264 = vmul.f32 %v1204, %v1236
        %v1265 = vmul.f32 %v1209, %v1236
        %v1266 = vmul.f32 %v1214, %v1236
        %v1267 = vmul.f32 %v1219, %v1236
        %v1268 = vmul.f32 %v1224, %v1236
        %v1269 = vmul.f32 %v1229, %v1236
        %v1271 = vlaneseq
        %v1272 = vshrl.u32 %v1271, 7
        %v1273 = vsub.s32 0, %v1272
        %v1274 = vrot.slane %v872, %v1273
        %v1276 = vadd.f32 %v1238, %v1274
        %v1277 = vadd.f32 %v1239, %v1274
        %v1278 = vadd.f32 %v1240, %v1274
        %v1279 = vadd.f32 %v1241, %v1274
        %v1280 = vadd.f32 %v1242, %v1274
        %v1281 = vadd.f32 %v1243, %v1274
        %v1282 = vadd.f32 %v1244, %v1274
        %v1283 = vadd.f32 %v1245, %v1274
        %v1284 = vadd.f32 %v1246, %v1274
        %v1285 = vadd.f32 %v1247, %v1274
        %v1286 = vadd.f32 %v1248, %v1274
        %v1287 = vadd.f32 %v1249, %v1274
        %v1288 = vadd.f32 %v1250, %v1274
        %v1289 = vadd.f32 %v1251, %v1274
        %v1290 = vadd.f32 %v1252, %v1274
        %v1291 = vadd.f32 %v1253, %v1274
        %v1292 = vadd.f32 %v1254, %v1274
        %v1293 = vadd.f32 %v1255, %v1274
        %v1294 = vadd.f32 %v1256, %v1274
        %v1295 = vadd.f32 %v1257, %v1274
        %v1296 = vadd.f32 %v1258, %v1274
        %v1297 = vadd.f32 %v1259, %v1274
        %v1298 = vadd.f32 %v1260, %v1274
        %v1299 = vadd.f32 %v1261, %v1274
        %v1300 = vadd.f32 %v1262, %v1274
        %v1301 = vadd.f32 %v1263, %v1274
        %v1302 = vadd.f32 %v1264, %v1274
        %v1303 = vadd.f32 %v1265, %v1274
        %v1304 = vadd.f32 %v1266, %v1274
        %v1305 = vadd.f32 %v1267, %v1274
        %v1306 = vadd.f32 %v1268, %v1274
        %v1307 = vadd.f32 %v1269, %v1274
        %v1308 = vmax.f32 %v1276, 0.0
        %v1309 = vmax.f32 %v1277, 0.0
        %v1310 = vmax.f32 %v1278, 0.0
        %v1311 = vmax.f32 %v1279, 0.0
        %v1312 = vmax.f32 %v1280, 0.0
        %v1313 = vmax.f32 %v1281, 0.0
        %v1314 = vmax.f32 %v1282, 0.0
        %v1315 = vmax.f32 %v1283, 0.0
        %v1316 = vmax.f32 %v1284, 0.0
        %v1317 = vmax.f32 %v1285, 0.0
        %v1318 = vmax.f32 %v1286, 0.0
        %v1319 = vmax.f32 %v1287, 0.0
        %v1320 = vmax.f32 %v1288, 0.0
        %v1321 = vmax.f32 %v1289, 0.0
        %v1322 = vmax.f32 %v1290, 0.0
        %v1323 = vmax.f32 %v1291, 0.0
        %v1324 = vmax.f32 %v1292, 0.0
        %v1325 = vmax.f32 %v1293, 0.0
        %v1326 = vmax.f32 %v1294, 0.0
        %v1327 = vmax.f32 %v1295, 0.0
        %v1328 = vmax.f32 %v1296, 0.0
        %v1329 = vmax.f32 %v1297, 0.0
        %v1330 = vmax.f32 %v1298, 0.0
        %v1331 = vmax.f32 %v1299, 0.0
        %v1332 = vmax.f32 %v1300, 0.0
        %v1333 = vmax.f32 %v1301, 0.0
        %v1334 = vmax.f32 %v1302, 0.0
        %v1335 = vmax.f32 %v1303, 0.0
        %v1336 = vmax.f32 %v1304, 0.0
        %v1337 = vmax.f32 %v1305, 0.0
        %v1338 = vmax.f32 %v1306, 0.0
        %v1339 = vmax.f32 %v1307, 0.0
        %s1340 = scalar_lea.vmem [#allocation2], 1536
        %1341 = vst.msk [vmem:[%s1340 + $0x18] sm:$0xff] %vm358, %v1308
        %1342 = vst.msk [vmem:[%s1340 + $0x20] sm:$0xff] %vm358, %v1309
        %1343 = vst.msk [vmem:[%s1340 + $0x58] sm:$0xff] %vm358, %v1310
        %1344 = vst.msk [vmem:[%s1340 + $0x60] sm:$0xff] %vm358, %v1311
        %1345 = vst.msk [vmem:[%s1340 + $0x98] sm:$0xff] %vm358, %v1312
        %1346 = vst.msk [vmem:[%s1340 + $0xa0] sm:$0xff] %vm358, %v1313
        %1347 = vst.msk [vmem:[%s1340 + $0xd8] sm:$0xff] %vm358, %v1314
        %1348 = vst.msk [vmem:[%s1340 + $0xe0] sm:$0xff] %vm358, %v1315
        %1349 = vst.msk [vmem:[%s1340 + $0x118] sm:$0xff] %vm358, %v1316
        %1350 = vst.msk [vmem:[%s1340 + $0x120] sm:$0xff] %vm358, %v1317
        %1351 = vst.msk [vmem:[%s1340 + $0x158] sm:$0xff] %vm358, %v1318
        %1352 = vst.msk [vmem:[%s1340 + $0x160] sm:$0xff] %vm358, %v1319
        %1353 = vst.msk [vmem:[%s1340 + $0x198] sm:$0xff] %vm358, %v1320
        %1354 = vst.msk [vmem:[%s1340 + $0x1a0] sm:$0xff] %vm358, %v1321
        %1355 = vst.msk [vmem:[%s1340 + $0x1d8] sm:$0xff] %vm358, %v1322
        %1356 = vst.msk [vmem:[%s1340 + $0x1e0] sm:$0xff] %vm358, %v1323
        %1357 = vst.msk [vmem:[%s1340 + $0x218] sm:$0xff] %vm358, %v1324
        %1358 = vst.msk [vmem:[%s1340 + $0x220] sm:$0xff] %vm358, %v1325
        %1359 = vst.msk [vmem:[%s1340 + $0x258] sm:$0xff] %vm358, %v1326
        %1360 = vst.msk [vmem:[%s1340 + $0x260] sm:$0xff] %vm358, %v1327
        %1361 = vst.msk [vmem:[%s1340 + $0x298] sm:$0xff] %vm358, %v1328
        %1362 = vst.msk [vmem:[%s1340 + $0x2a0] sm:$0xff] %vm358, %v1329
        %1363 = vst.msk [vmem:[%s1340 + $0x2d8] sm:$0xff] %vm358, %v1330
        %1364 = vst.msk [vmem:[%s1340 + $0x2e0] sm:$0xff] %vm358, %v1331
        %1365 = vst.msk [vmem:[%s1340 + $0x318] sm:$0xff] %vm358, %v1332
        %1366 = vst.msk [vmem:[%s1340 + $0x320] sm:$0xff] %vm358, %v1333
        %1367 = vst.msk [vmem:[%s1340 + $0x358] sm:$0xff] %vm358, %v1334
        %1368 = vst.msk [vmem:[%s1340 + $0x360] sm:$0xff] %vm358, %v1335
        %1369 = vst.msk [vmem:[%s1340 + $0x398] sm:$0xff] %vm358, %v1336
        %1370 = vst.msk [vmem:[%s1340 + $0x3a0] sm:$0xff] %vm358, %v1337
        %1371 = vst.msk [vmem:[%s1340 + $0x3d8] sm:$0xff] %vm358, %v1338
        %1372 = vst.msk [vmem:[%s1340 + $0x3e0] sm:$0xff] %vm358, %v1339
        %s1373 = scalar_lea.vmem [#allocation2], 768
        %v1374 = vld [vmem:[%s1373 + $0xc] sm:$0xff]
        %v1375 = vld [vmem:[%s1373 + $0x14] sm:$0xff]
        %v1376 = vld [vmem:[%s1373 + $0x4c] sm:$0xff]
        %v1377 = vld [vmem:[%s1373 + $0x54] sm:$0xff]
        %v1378 = vld [vmem:[%s1373 + $0x8c] sm:$0xff]
        %v1379 = vld [vmem:[%s1373 + $0x94] sm:$0xff]
        %v1380 = vld [vmem:[%s1373 + $0xcc] sm:$0xff]
        %v1381 = vld [vmem:[%s1373 + $0xd4] sm:$0xff]
        %v1382 = vld [vmem:[%s1373 + $0x10c] sm:$0xff]
        %v1383 = vld [vmem:[%s1373 + $0x114] sm:$0xff]
        %v1384 = vld [vmem:[%s1373 + $0x14c] sm:$0xff]
        %v1385 = vld [vmem:[%s1373 + $0x154] sm:$0xff]
        %v1386 = vld [vmem:[%s1373 + $0x18c] sm:$0xff]
        %v1387 = vld [vmem:[%s1373 + $0x194] sm:$0xff]
        %v1388 = vld [vmem:[%s1373 + $0x1cc] sm:$0xff]
        %v1389 = vld [vmem:[%s1373 + $0x1d4] sm:$0xff]
        %v1390 = vld [vmem:[%s1373 + $0x20c] sm:$0xff]
        %v1391 = vld [vmem:[%s1373 + $0x214] sm:$0xff]
        %v1392 = vld [vmem:[%s1373 + $0x24c] sm:$0xff]
        %v1393 = vld [vmem:[%s1373 + $0x254] sm:$0xff]
        %v1394 = vld [vmem:[%s1373 + $0x28c] sm:$0xff]
        %v1395 = vld [vmem:[%s1373 + $0x294] sm:$0xff]
        %v1396 = vld [vmem:[%s1373 + $0x2cc] sm:$0xff]
        %v1397 = vld [vmem:[%s1373 + $0x2d4] sm:$0xff]
        %v1398 = vld [vmem:[%s1373 + $0x30c] sm:$0xff]
        %v1399 = vld [vmem:[%s1373 + $0x314] sm:$0xff]
        %v1400 = vld [vmem:[%s1373 + $0x34c] sm:$0xff]
        %v1401 = vld [vmem:[%s1373 + $0x354] sm:$0xff]
        %v1402 = vld [vmem:[%s1373 + $0x38c] sm:$0xff]
        %v1403 = vld [vmem:[%s1373 + $0x394] sm:$0xff]
        %v1404 = vld [vmem:[%s1373 + $0x3cc] sm:$0xff]
        %v1405 = vld [vmem:[%s1373 + $0x3d4] sm:$0xff]
        %v1406 = vld [vmem:[%s2] sm:$0xff]
        %v1407 = vld [vmem:[%s1373 + $0x18] sm:$0xff]
        %v1408 = vld [vmem:[%s1373 + $0x20] sm:$0xff]
        %v1409 = vld [vmem:[%s1373 + $0x58] sm:$0xff]
        %v1410 = vld [vmem:[%s1373 + $0x60] sm:$0xff]
        %v1411 = vld [vmem:[%s1373 + $0x98] sm:$0xff]
        %v1412 = vld [vmem:[%s1373 + $0xa0] sm:$0xff]
        %v1413 = vld [vmem:[%s1373 + $0xd8] sm:$0xff]
        %v1414 = vld [vmem:[%s1373 + $0xe0] sm:$0xff]
        %v1415 = vld [vmem:[%s1373 + $0x118] sm:$0xff]
        %v1416 = vld [vmem:[%s1373 + $0x120] sm:$0xff]
        %v1417 = vld [vmem:[%s1373 + $0x158] sm:$0xff]
        %v1418 = vld [vmem:[%s1373 + $0x160] sm:$0xff]
        %v1419 = vld [vmem:[%s1373 + $0x198] sm:$0xff]
        %v1420 = vld [vmem:[%s1373 + $0x1a0] sm:$0xff]
        %v1421 = vld [vmem:[%s1373 + $0x1d8] sm:$0xff]
        %v1422 = vld [vmem:[%s1373 + $0x1e0] sm:$0xff]
        %v1423 = vld [vmem:[%s1373 + $0x218] sm:$0xff]
        %v1424 = vld [vmem:[%s1373 + $0x220] sm:$0xff]
        %v1425 = vld [vmem:[%s1373 + $0x258] sm:$0xff]
        %v1426 = vld [vmem:[%s1373 + $0x260] sm:$0xff]
        %v1427 = vld [vmem:[%s1373 + $0x298] sm:$0xff]
        %v1428 = vld [vmem:[%s1373 + $0x2a0] sm:$0xff]
        %v1429 = vld [vmem:[%s1373 + $0x2d8] sm:$0xff]
        %v1430 = vld [vmem:[%s1373 + $0x2e0] sm:$0xff]
        %v1431 = vld [vmem:[%s1373 + $0x318] sm:$0xff]
        %v1432 = vld [vmem:[%s1373 + $0x320] sm:$0xff]
        %v1433 = vld [vmem:[%s1373 + $0x358] sm:$0xff]
        %v1434 = vld [vmem:[%s1373 + $0x360] sm:$0xff]
        %v1435 = vld [vmem:[%s1373 + $0x398] sm:$0xff]
        %v1436 = vld [vmem:[%s1373 + $0x3a0] sm:$0xff]
        %v1437 = vld [vmem:[%s1373 + $0x3d8] sm:$0xff]
        %v1438 = vld [vmem:[%s1373 + $0x3e0] sm:$0xff]
        %s1439 = scalar_lea.vmem %s2, 8
        %v1440 = vld [vmem:[%s1439] sm:$0xff]
        %v1442 = vsel %vm358, %v1407, 0
        %v1445 = vsel %vm358, %v1408, 0
        %v1448 = vsel %vm358, %v1409, 0
        %v1451 = vsel %vm358, %v1410, 0
        %v1454 = vsel %vm358, %v1411, 0
        %v1457 = vsel %vm358, %v1412, 0
        %v1460 = vsel %vm358, %v1413, 0
        %v1463 = vsel %vm358, %v1414, 0
        %v1466 = vsel %vm358, %v1415, 0
        %v1469 = vsel %vm358, %v1416, 0
        %v1472 = vsel %vm358, %v1417, 0
        %v1475 = vsel %vm358, %v1418, 0
        %v1478 = vsel %vm358, %v1419, 0
        %v1481 = vsel %vm358, %v1420, 0
        %v1484 = vsel %vm358, %v1421, 0
        %v1487 = vsel %vm358, %v1422, 0
        %v1490 = vsel %vm358, %v1423, 0
        %v1493 = vsel %vm358, %v1424, 0
        %v1496 = vsel %vm358, %v1425, 0
        %v1499 = vsel %vm358, %v1426, 0
        %v1502 = vsel %vm358, %v1427, 0
        %v1505 = vsel %vm358, %v1428, 0
        %v1508 = vsel %vm358, %v1429, 0
        %v1511 = vsel %vm358, %v1430, 0
        %v1514 = vsel %vm358, %v1431, 0
        %v1517 = vsel %vm358, %v1432, 0
        %v1520 = vsel %vm358, %v1433, 0
        %v1523 = vsel %vm358, %v1434, 0
        %v1526 = vsel %vm358, %v1435, 0
        %v1529 = vsel %vm358, %v1436, 0
        %v1532 = vsel %vm358, %v1437, 0
        %v1535 = vsel %vm358, %v1438, 0
        %1537 = vmatprep.subr.mxu0 0.0
        %1538 = vmatpush1.msra.mxu0 %v1440
        %1539 = vmatprep.subr.mxu0 0.0
        %1540 = vmatpush1.msra.mxu0 0.0
        %1541 = vmatprep.subr.mxu0 0.0
        %1542 = vmatpush1.msra.mxu0 0.0
        %1543 = vmatprep.subr.mxu0 0.0
        %1544 = vmatpush1.msra.mxu0 0.0
        %1545 = vmatprep.subr.mxu0 0.0
        %1546 = vmatpush1.msra.mxu0 0.0
        %1547 = vmatprep.subr.mxu0 0.0
        %1548 = vmatpush1.msra.mxu0 0.0
        %1549 = vmatprep.subr.mxu0 0.0
        %1550 = vmatpush1.msra.mxu0 0.0
        %1551 = vmatprep.subr.mxu0 0.0
        %1552 = vmatpush1.msra.mxu0 0.0
        %1553 = vmatprep.subr.mxu0 0.0
        %1554 = vmatpush1.msra.mxu0 0.0
        %1555 = vmatprep.subr.mxu0 0.0
        %1556 = vmatpush1.msra.mxu0 0.0
        %1557 = vmatprep.subr.mxu0 0.0
        %1558 = vmatpush1.msra.mxu0 0.0
        %1559 = vmatprep.subr.mxu0 0.0
        %1560 = vmatpush1.msra.mxu0 0.0
        %1561 = vmatprep.subr.mxu0 0.0
        %1562 = vmatpush1.msra.mxu0 0.0
        %1563 = vmatprep.subr.mxu0 0.0
        %1564 = vmatpush1.msra.mxu0 0.0
        %1565 = vmatprep.subr.mxu0 0.0
        %1566 = vmatpush1.msra.mxu0 0.0
        %1567 = vmatprep.subr.mxu0 0.0
        %1568 = vmatpush1.msra.mxu0 0.0
        %1569 = vmatprep.subr.mxu0 0.0
        %1570 = vmatpush1.msra.mxu0 0.0
        %1571 = vmatprep.subr.mxu0 0.0
        %1572 = vmatpush1.msra.mxu0 0.0
        %1573 = vmatprep.subr.mxu0 0.0
        %1574 = vmatpush1.msra.mxu0 0.0
        %1575 = vmatprep.subr.mxu0 0.0
        %1576 = vmatpush1.msra.mxu0 0.0
        %1577 = vmatprep.subr.mxu0 0.0
        %1578 = vmatpush1.msra.mxu0 0.0
        %1579 = vmatprep.subr.mxu0 0.0
        %1580 = vmatpush1.msra.mxu0 0.0
        %1581 = vmatprep.subr.mxu0 0.0
        %1582 = vmatpush1.msra.mxu0 0.0
        %1583 = vmatprep.subr.mxu0 0.0
        %1584 = vmatpush1.msra.mxu0 0.0
        %1585 = vmatprep.subr.mxu0 0.0
        %1586 = vmatpush1.msra.mxu0 0.0
        %1587 = vmatprep.subr.mxu0 0.0
        %1588 = vmatpush1.msra.mxu0 0.0
        %1589 = vmatprep.subr.mxu0 0.0
        %1590 = vmatpush1.msra.mxu0 0.0
        %1591 = vmatprep.subr.mxu0 0.0
        %1592 = vmatpush1.msra.mxu0 0.0
        %1593 = vmatprep.subr.mxu0 0.0
        %1594 = vmatpush1.msra.mxu0 0.0
        %1595 = vmatprep.subr.mxu0 0.0
        %1596 = vmatpush1.msra.mxu0 0.0
        %1597 = vmatprep.subr.mxu0 0.0
        %1598 = vmatpush1.msra.mxu0 0.0
        %1599 = vmatprep.subr.mxu0 0.0
        %1600 = vmatpush1.msra.mxu0 0.0
        %1601 = vmatprep.mubr.f32.mxu0 0.0
        %1602 = vmatmul.mubr.f32.gmra.mrb[0].mxu0 %v1442
        %v1603 = vpop.f32.mrb[0].mxu0
        %v1604 = vadd.f32 0.0, %v1603
        %v1605 = vpop.f32.mrb[0].mxu0
        %1606 = vmatprep.mubr.f32.mxu0 0.0
        %1607 = vmatmul.mubr.f32.gmra.mrb[0].mxu0 %v1445
        %v1608 = vpop.f32.mrb[0].mxu0
        %v1609 = vadd.f32 0.0, %v1608
        %v1610 = vpop.f32.mrb[0].mxu0
        %1611 = vmatprep.mubr.f32.mxu0 0.0
        %1612 = vmatmul.mubr.f32.gmra.mrb[0].mxu0 %v1448
        %v1613 = vpop.f32.mrb[0].mxu0
        %v1614 = vadd.f32 0.0, %v1613
        %v1615 = vpop.f32.mrb[0].mxu0
        %1616 = vmatprep.mubr.f32.mxu0 0.0
        %1617 = vmatmul.mubr.f32.gmra.mrb[0].mxu0 %v1451
        %v1618 = vpop.f32.mrb[0].mxu0
        %v1619 = vadd.f32 0.0, %v1618
        %v1620 = vpop.f32.mrb[0].mxu0
        %1621 = vmatprep.mubr.f32.mxu0 0.0
        %1622 = vmatmul.mubr.f32.gmra.mrb[0].mxu0 %v1454
        %v1623 = vpop.f32.mrb[0].mxu0
        %v1624 = vadd.f32 0.0, %v1623
        %v1625 = vpop.f32.mrb[0].mxu0
        %1626 = vmatprep.mubr.f32.mxu0 0.0
        %1627 = vmatmul.mubr.f32.gmra.mrb[0].mxu0 %v1457
        %v1628 = vpop.f32.mrb[0].mxu0
        %v1629 = vadd.f32 0.0, %v1628
        %v1630 = vpop.f32.mrb[0].mxu0
        %1631 = vmatprep.mubr.f32.mxu0 0.0
        %1632 = vmatmul.mubr.f32.gmra.mrb[0].mxu0 %v1460
        %v1633 = vpop.f32.mrb[0].mxu0
        %v1634 = vadd.f32 0.0, %v1633
        %v1635 = vpop.f32.mrb[0].mxu0
        %1636 = vmatprep.mubr.f32.mxu0 0.0
        %1637 = vmatmul.mubr.f32.gmra.mrb[0].mxu0 %v1463
        %v1638 = vpop.f32.mrb[0].mxu0
        %v1639 = vadd.f32 0.0, %v1638
        %v1640 = vpop.f32.mrb[0].mxu0
        %1641 = vmatprep.mubr.f32.mxu0 0.0
        %1642 = vmatmul.mubr.f32.gmra.mrb[0].mxu0 %v1466
        %v1643 = vpop.f32.mrb[0].mxu0
        %v1644 = vadd.f32 0.0, %v1643
        %v1645 = vpop.f32.mrb[0].mxu0
        %1646 = vmatprep.mubr.f32.mxu0 0.0
        %1647 = vmatmul.mubr.f32.gmra.mrb[0].mxu0 %v1469
        %v1648 = vpop.f32.mrb[0].mxu0
        %v1649 = vadd.f32 0.0, %v1648
        %v1650 = vpop.f32.mrb[0].mxu0
        %1651 = vmatprep.mubr.f32.mxu0 0.0
        %1652 = vmatmul.mubr.f32.gmra.mrb[0].mxu0 %v1472
        %v1653 = vpop.f32.mrb[0].mxu0
        %v1654 = vadd.f32 0.0, %v1653
        %v1655 = vpop.f32.mrb[0].mxu0
        %1656 = vmatprep.mubr.f32.mxu0 0.0
        %1657 = vmatmul.mubr.f32.gmra.mrb[0].mxu0 %v1475
        %v1658 = vpop.f32.mrb[0].mxu0
        %v1659 = vadd.f32 0.0, %v1658
        %v1660 = vpop.f32.mrb[0].mxu0
        %1661 = vmatprep.mubr.f32.mxu0 0.0
        %1662 = vmatmul.mubr.f32.gmra.mrb[0].mxu0 %v1478
        %v1663 = vpop.f32.mrb[0].mxu0
        %v1664 = vadd.f32 0.0, %v1663
        %v1665 = vpop.f32.mrb[0].mxu0
        %1666 = vmatprep.mubr.f32.mxu0 0.0
        %1667 = vmatmul.mubr.f32.gmra.mrb[0].mxu0 %v1481
        %v1668 = vpop.f32.mrb[0].mxu0
        %v1669 = vadd.f32 0.0, %v1668
        %v1670 = vpop.f32.mrb[0].mxu0
        %1671 = vmatprep.mubr.f32.mxu0 0.0
        %1672 = vmatmul.mubr.f32.gmra.mrb[0].mxu0 %v1484
        %v1673 = vpop.f32.mrb[0].mxu0
        %v1674 = vadd.f32 0.0, %v1673
        %v1675 = vpop.f32.mrb[0].mxu0
        %1676 = vmatprep.mubr.f32.mxu0 0.0
        %1677 = vmatmul.mubr.f32.gmra.mrb[0].mxu0 %v1487
        %v1678 = vpop.f32.mrb[0].mxu0
        %v1679 = vadd.f32 0.0, %v1678
        %v1680 = vpop.f32.mrb[0].mxu0
        %1681 = vmatprep.mubr.f32.mxu0 0.0
        %1682 = vmatmul.mubr.f32.gmra.mrb[0].mxu0 %v1490
        %v1683 = vpop.f32.mrb[0].mxu0
        %v1684 = vadd.f32 0.0, %v1683
        %v1685 = vpop.f32.mrb[0].mxu0
        %1686 = vmatprep.mubr.f32.mxu0 0.0
        %1687 = vmatmul.mubr.f32.gmra.mrb[0].mxu0 %v1493
        %v1688 = vpop.f32.mrb[0].mxu0
        %v1689 = vadd.f32 0.0, %v1688
        %v1690 = vpop.f32.mrb[0].mxu0
        %1691 = vmatprep.mubr.f32.mxu0 0.0
        %1692 = vmatmul.mubr.f32.gmra.mrb[0].mxu0 %v1496
        %v1693 = vpop.f32.mrb[0].mxu0
        %v1694 = vadd.f32 0.0, %v1693
        %v1695 = vpop.f32.mrb[0].mxu0
        %1696 = vmatprep.mubr.f32.mxu0 0.0
        %1697 = vmatmul.mubr.f32.gmra.mrb[0].mxu0 %v1499
        %v1698 = vpop.f32.mrb[0].mxu0
        %v1699 = vadd.f32 0.0, %v1698
        %v1700 = vpop.f32.mrb[0].mxu0
        %1701 = vmatprep.mubr.f32.mxu0 0.0
        %1702 = vmatmul.mubr.f32.gmra.mrb[0].mxu0 %v1502
        %v1703 = vpop.f32.mrb[0].mxu0
        %v1704 = vadd.f32 0.0, %v1703
        %v1705 = vpop.f32.mrb[0].mxu0
        %1706 = vmatprep.mubr.f32.mxu0 0.0
        %1707 = vmatmul.mubr.f32.gmra.mrb[0].mxu0 %v1505
        %v1708 = vpop.f32.mrb[0].mxu0
        %v1709 = vadd.f32 0.0, %v1708
        %v1710 = vpop.f32.mrb[0].mxu0
        %1711 = vmatprep.mubr.f32.mxu0 0.0
        %1712 = vmatmul.mubr.f32.gmra.mrb[0].mxu0 %v1508
        %v1713 = vpop.f32.mrb[0].mxu0
        %v1714 = vadd.f32 0.0, %v1713
        %v1715 = vpop.f32.mrb[0].mxu0
        %1716 = vmatprep.mubr.f32.mxu0 0.0
        %1717 = vmatmul.mubr.f32.gmra.mrb[0].mxu0 %v1511
        %v1718 = vpop.f32.mrb[0].mxu0
        %v1719 = vadd.f32 0.0, %v1718
        %v1720 = vpop.f32.mrb[0].mxu0
        %1721 = vmatprep.mubr.f32.mxu0 0.0
        %1722 = vmatmul.mubr.f32.gmra.mrb[0].mxu0 %v1514
        %v1723 = vpop.f32.mrb[0].mxu0
        %v1724 = vadd.f32 0.0, %v1723
        %v1725 = vpop.f32.mrb[0].mxu0
        %1726 = vmatprep.mubr.f32.mxu0 0.0
        %1727 = vmatmul.mubr.f32.gmra.mrb[0].mxu0 %v1517
        %v1728 = vpop.f32.mrb[0].mxu0
        %v1729 = vadd.f32 0.0, %v1728
        %v1730 = vpop.f32.mrb[0].mxu0
        %1731 = vmatprep.mubr.f32.mxu0 0.0
        %1732 = vmatmul.mubr.f32.gmra.mrb[0].mxu0 %v1520
        %v1733 = vpop.f32.mrb[0].mxu0
        %v1734 = vadd.f32 0.0, %v1733
        %v1735 = vpop.f32.mrb[0].mxu0
        %1736 = vmatprep.mubr.f32.mxu0 0.0
        %1737 = vmatmul.mubr.f32.gmra.mrb[0].mxu0 %v1523
        %v1738 = vpop.f32.mrb[0].mxu0
        %v1739 = vadd.f32 0.0, %v1738
        %v1740 = vpop.f32.mrb[0].mxu0
        %1741 = vmatprep.mubr.f32.mxu0 0.0
        %1742 = vmatmul.mubr.f32.gmra.mrb[0].mxu0 %v1526
        %v1743 = vpop.f32.mrb[0].mxu0
        %v1744 = vadd.f32 0.0, %v1743
        %v1745 = vpop.f32.mrb[0].mxu0
        %1746 = vmatprep.mubr.f32.mxu0 0.0
        %1747 = vmatmul.mubr.f32.gmra.mrb[0].mxu0 %v1529
        %v1748 = vpop.f32.mrb[0].mxu0
        %v1749 = vadd.f32 0.0, %v1748
        %v1750 = vpop.f32.mrb[0].mxu0
        %1751 = vmatprep.mubr.f32.mxu0 0.0
        %1752 = vmatmul.mubr.f32.gmra.mrb[0].mxu0 %v1532
        %v1753 = vpop.f32.mrb[0].mxu0
        %v1754 = vadd.f32 0.0, %v1753
        %v1755 = vpop.f32.mrb[0].mxu0
        %1756 = vmatprep.mubr.f32.mxu0 0.0
        %1757 = vmatmul.mubr.f32.gmra.mrb[0].mxu0 %v1535
        %v1758 = vpop.f32.mrb[0].mxu0
        %v1759 = vadd.f32 0.0, %v1758
        %v1760 = vpop.f32.mrb[0].mxu0
        %1761 = vdwg.mxu0
        %v1763 = vsel %vm358, %v1374, 0
        %v1766 = vsel %vm358, %v1375, 0
        %v1769 = vsel %vm358, %v1376, 0
        %v1772 = vsel %vm358, %v1377, 0
        %v1775 = vsel %vm358, %v1378, 0
        %v1778 = vsel %vm358, %v1379, 0
        %v1781 = vsel %vm358, %v1380, 0
        %v1784 = vsel %vm358, %v1381, 0
        %v1787 = vsel %vm358, %v1382, 0
        %v1790 = vsel %vm358, %v1383, 0
        %v1793 = vsel %vm358, %v1384, 0
        %v1796 = vsel %vm358, %v1385, 0
        %v1799 = vsel %vm358, %v1386, 0
        %v1802 = vsel %vm358, %v1387, 0
        %v1805 = vsel %vm358, %v1388, 0
        %v1808 = vsel %vm358, %v1389, 0
        %v1811 = vsel %vm358, %v1390, 0
        %v1814 = vsel %vm358, %v1391, 0
        %v1817 = vsel %vm358, %v1392, 0
        %v1820 = vsel %vm358, %v1393, 0
        %v1823 = vsel %vm358, %v1394, 0
        %v1826 = vsel %vm358, %v1395, 0
        %v1829 = vsel %vm358, %v1396, 0
        %v1832 = vsel %vm358, %v1397, 0
        %v1835 = vsel %vm358, %v1398, 0
        %v1838 = vsel %vm358, %v1399, 0
        %v1841 = vsel %vm358, %v1400, 0
        %v1844 = vsel %vm358, %v1401, 0
        %v1847 = vsel %vm358, %v1402, 0
        %v1850 = vsel %vm358, %v1403, 0
        %v1853 = vsel %vm358, %v1404, 0
        %v1856 = vsel %vm358, %v1405, 0
        %1858 = vmatprep.subr.mxu0 0.0
        %1859 = vmatpush1.msra.mxu0 %v1406
        %1860 = vmatprep.subr.mxu0 0.0
        %1861 = vmatpush1.msra.mxu0 0.0
        %1862 = vmatprep.subr.mxu0 0.0
        %1863 = vmatpush1.msra.mxu0 0.0
        %1864 = vmatprep.subr.mxu0 0.0
        %1865 = vmatpush1.msra.mxu0 0.0
        %1866 = vmatprep.subr.mxu0 0.0
        %1867 = vmatpush1.msra.mxu0 0.0
        %1868 = vmatprep.subr.mxu0 0.0
        %1869 = vmatpush1.msra.mxu0 0.0
        %1870 = vmatprep.subr.mxu0 0.0
        %1871 = vmatpush1.msra.mxu0 0.0
        %1872 = vmatprep.subr.mxu0 0.0
        %1873 = vmatpush1.msra.mxu0 0.0
        %1874 = vmatprep.subr.mxu0 0.0
        %1875 = vmatpush1.msra.mxu0 0.0
        %1876 = vmatprep.subr.mxu0 0.0
        %1877 = vmatpush1.msra.mxu0 0.0
        %1878 = vmatprep.subr.mxu0 0.0
        %1879 = vmatpush1.msra.mxu0 0.0
        %1880 = vmatprep.subr.mxu0 0.0
        %1881 = vmatpush1.msra.mxu0 0.0
        %1882 = vmatprep.subr.mxu0 0.0
        %1883 = vmatpush1.msra.mxu0 0.0
        %1884 = vmatprep.subr.mxu0 0.0
        %1885 = vmatpush1.msra.mxu0 0.0
        %1886 = vmatprep.subr.mxu0 0.0
        %1887 = vmatpush1.msra.mxu0 0.0
        %1888 = vmatprep.subr.mxu0 0.0
        %1889 = vmatpush1.msra.mxu0 0.0
        %1890 = vmatprep.subr.mxu0 0.0
        %1891 = vmatpush1.msra.mxu0 0.0
        %1892 = vmatprep.subr.mxu0 0.0
        %1893 = vmatpush1.msra.mxu0 0.0
        %1894 = vmatprep.subr.mxu0 0.0
        %1895 = vmatpush1.msra.mxu0 0.0
        %1896 = vmatprep.subr.mxu0 0.0
        %1897 = vmatpush1.msra.mxu0 0.0
        %1898 = vmatprep.subr.mxu0 0.0
        %1899 = vmatpush1.msra.mxu0 0.0
        %1900 = vmatprep.subr.mxu0 0.0
        %1901 = vmatpush1.msra.mxu0 0.0
        %1902 = vmatprep.subr.mxu0 0.0
        %1903 = vmatpush1.msra.mxu0 0.0
        %1904 = vmatprep.subr.mxu0 0.0
        %1905 = vmatpush1.msra.mxu0 0.0
        %1906 = vmatprep.subr.mxu0 0.0
        %1907 = vmatpush1.msra.mxu0 0.0
        %1908 = vmatprep.subr.mxu0 0.0
        %1909 = vmatpush1.msra.mxu0 0.0
        %1910 = vmatprep.subr.mxu0 0.0
        %1911 = vmatpush1.msra.mxu0 0.0
        %1912 = vmatprep.subr.mxu0 0.0
        %1913 = vmatpush1.msra.mxu0 0.0
        %1914 = vmatprep.subr.mxu0 0.0
        %1915 = vmatpush1.msra.mxu0 0.0
        %1916 = vmatprep.subr.mxu0 0.0
        %1917 = vmatpush1.msra.mxu0 0.0
        %1918 = vmatprep.subr.mxu0 0.0
        %1919 = vmatpush1.msra.mxu0 0.0
        %1920 = vmatprep.subr.mxu0 0.0
        %1921 = vmatpush1.msra.mxu0 0.0
        %1922 = vmatprep.mubr.f32.mxu0 0.0
        %1923 = vmatmul.mubr.f32.gmra.mrb[0].mxu0 %v1763
        %v1924 = vpop.f32.mrb[0].mxu0
        %v1925 = vadd.f32 %v1604, %v1924
        %v1926 = vpop.f32.mrb[0].mxu0
        %1927 = vmatprep.mubr.f32.mxu0 0.0
        %1928 = vmatmul.mubr.f32.gmra.mrb[0].mxu0 %v1766
        %v1929 = vpop.f32.mrb[0].mxu0
        %v1930 = vadd.f32 %v1609, %v1929
        %v1931 = vpop.f32.mrb[0].mxu0
        %1932 = vmatprep.mubr.f32.mxu0 0.0
        %1933 = vmatmul.mubr.f32.gmra.mrb[0].mxu0 %v1769
        %v1934 = vpop.f32.mrb[0].mxu0
        %v1935 = vadd.f32 %v1614, %v1934
        %v1936 = vpop.f32.mrb[0].mxu0
        %1937 = vmatprep.mubr.f32.mxu0 0.0
        %1938 = vmatmul.mubr.f32.gmra.mrb[0].mxu0 %v1772
        %v1939 = vpop.f32.mrb[0].mxu0
        %v1940 = vadd.f32 %v1619, %v1939
        %v1941 = vpop.f32.mrb[0].mxu0
        %1942 = vmatprep.mubr.f32.mxu0 0.0
        %1943 = vmatmul.mubr.f32.gmra.mrb[0].mxu0 %v1775
        %v1944 = vpop.f32.mrb[0].mxu0
        %v1945 = vadd.f32 %v1624, %v1944
        %v1946 = vpop.f32.mrb[0].mxu0
        %1947 = vmatprep.mubr.f32.mxu0 0.0
        %1948 = vmatmul.mubr.f32.gmra.mrb[0].mxu0 %v1778
        %v1949 = vpop.f32.mrb[0].mxu0
        %v1950 = vadd.f32 %v1629, %v1949
        %v1951 = vpop.f32.mrb[0].mxu0
        %1952 = vmatprep.mubr.f32.mxu0 0.0
        %1953 = vmatmul.mubr.f32.gmra.mrb[0].mxu0 %v1781
        %v1954 = vpop.f32.mrb[0].mxu0
        %v1955 = vadd.f32 %v1634, %v1954
        %v1956 = vpop.f32.mrb[0].mxu0
        %1957 = vmatprep.mubr.f32.mxu0 0.0
        %1958 = vmatmul.mubr.f32.gmra.mrb[0].mxu0 %v1784
        %v1959 = vpop.f32.mrb[0].mxu0
        %v1960 = vadd.f32 %v1639, %v1959
        %v1961 = vpop.f32.mrb[0].mxu0
        %1962 = vmatprep.mubr.f32.mxu0 0.0
        %1963 = vmatmul.mubr.f32.gmra.mrb[0].mxu0 %v1787
        %v1964 = vpop.f32.mrb[0].mxu0
        %v1965 = vadd.f32 %v1644, %v1964
        %v1966 = vpop.f32.mrb[0].mxu0
        %1967 = vmatprep.mubr.f32.mxu0 0.0
        %1968 = vmatmul.mubr.f32.gmra.mrb[0].mxu0 %v1790
        %v1969 = vpop.f32.mrb[0].mxu0
        %v1970 = vadd.f32 %v1649, %v1969
        %v1971 = vpop.f32.mrb[0].mxu0
        %1972 = vmatprep.mubr.f32.mxu0 0.0
        %1973 = vmatmul.mubr.f32.gmra.mrb[0].mxu0 %v1793
        %v1974 = vpop.f32.mrb[0].mxu0
        %v1975 = vadd.f32 %v1654, %v1974
        %v1976 = vpop.f32.mrb[0].mxu0
        %1977 = vmatprep.mubr.f32.mxu0 0.0
        %1978 = vmatmul.mubr.f32.gmra.mrb[0].mxu0 %v1796
        %v1979 = vpop.f32.mrb[0].mxu0
        %v1980 = vadd.f32 %v1659, %v1979
        %v1981 = vpop.f32.mrb[0].mxu0
        %1982 = vmatprep.mubr.f32.mxu0 0.0
        %1983 = vmatmul.mubr.f32.gmra.mrb[0].mxu0 %v1799
        %v1984 = vpop.f32.mrb[0].mxu0
        %v1985 = vadd.f32 %v1664, %v1984
        %v1986 = vpop.f32.mrb[0].mxu0
        %1987 = vmatprep.mubr.f32.mxu0 0.0
        %1988 = vmatmul.mubr.f32.gmra.mrb[0].mxu0 %v1802
        %v1989 = vpop.f32.mrb[0].mxu0
        %v1990 = vadd.f32 %v1669, %v1989
        %v1991 = vpop.f32.mrb[0].mxu0
        %1992 = vmatprep.mubr.f32.mxu0 0.0
        %1993 = vmatmul.mubr.f32.gmra.mrb[0].mxu0 %v1805
        %v1994 = vpop.f32.mrb[0].mxu0
        %v1995 = vadd.f32 %v1674, %v1994
        %v1996 = vpop.f32.mrb[0].mxu0
        %1997 = vmatprep.mubr.f32.mxu0 0.0
        %1998 = vmatmul.mubr.f32.gmra.mrb[0].mxu0 %v1808
        %v1999 = vpop.f32.mrb[0].mxu0
        %v2000 = vadd.f32 %v1679, %v1999
        %v2001 = vpop.f32.mrb[0].mxu0
        %2002 = vmatprep.mubr.f32.mxu0 0.0
        %2003 = vmatmul.mubr.f32.gmra.mrb[0].mxu0 %v1811
        %v2004 = vpop.f32.mrb[0].mxu0
        %v2005 = vadd.f32 %v1684, %v2004
        %v2006 = vpop.f32.mrb[0].mxu0
        %2007 = vmatprep.mubr.f32.mxu0 0.0
        %2008 = vmatmul.mubr.f32.gmra.mrb[0].mxu0 %v1814
        %v2009 = vpop.f32.mrb[0].mxu0
        %v2010 = vadd.f32 %v1689, %v2009
        %v2011 = vpop.f32.mrb[0].mxu0
        %2012 = vmatprep.mubr.f32.mxu0 0.0
        %2013 = vmatmul.mubr.f32.gmra.mrb[0].mxu0 %v1817
        %v2014 = vpop.f32.mrb[0].mxu0
        %v2015 = vadd.f32 %v1694, %v2014
        %v2016 = vpop.f32.mrb[0].mxu0
        %2017 = vmatprep.mubr.f32.mxu0 0.0
        %2018 = vmatmul.mubr.f32.gmra.mrb[0].mxu0 %v1820
        %v2019 = vpop.f32.mrb[0].mxu0
        %v2020 = vadd.f32 %v1699, %v2019
        %v2021 = vpop.f32.mrb[0].mxu0
        %2022 = vmatprep.mubr.f32.mxu0 0.0
        %2023 = vmatmul.mubr.f32.gmra.mrb[0].mxu0 %v1823
        %v2024 = vpop.f32.mrb[0].mxu0
        %v2025 = vadd.f32 %v1704, %v2024
        %v2026 = vpop.f32.mrb[0].mxu0
        %2027 = vmatprep.mubr.f32.mxu0 0.0
        %2028 = vmatmul.mubr.f32.gmra.mrb[0].mxu0 %v1826
        %v2029 = vpop.f32.mrb[0].mxu0
        %v2030 = vadd.f32 %v1709, %v2029
        %v2031 = vpop.f32.mrb[0].mxu0
        %2032 = vmatprep.mubr.f32.mxu0 0.0
        %2033 = vmatmul.mubr.f32.gmra.mrb[0].mxu0 %v1829
        %v2034 = vpop.f32.mrb[0].mxu0
        %v2035 = vadd.f32 %v1714, %v2034
        %v2036 = vpop.f32.mrb[0].mxu0
        %2037 = vmatprep.mubr.f32.mxu0 0.0
        %2038 = vmatmul.mubr.f32.gmra.mrb[0].mxu0 %v1832
        %v2039 = vpop.f32.mrb[0].mxu0
        %v2040 = vadd.f32 %v1719, %v2039
        %v2041 = vpop.f32.mrb[0].mxu0
        %2042 = vmatprep.mubr.f32.mxu0 0.0
        %2043 = vmatmul.mubr.f32.gmra.mrb[0].mxu0 %v1835
        %v2044 = vpop.f32.mrb[0].mxu0
        %v2045 = vadd.f32 %v1724, %v2044
        %v2046 = vpop.f32.mrb[0].mxu0
        %2047 = vmatprep.mubr.f32.mxu0 0.0
        %2048 = vmatmul.mubr.f32.gmra.mrb[0].mxu0 %v1838
        %v2049 = vpop.f32.mrb[0].mxu0
        %v2050 = vadd.f32 %v1729, %v2049
        %v2051 = vpop.f32.mrb[0].mxu0
        %2052 = vmatprep.mubr.f32.mxu0 0.0
        %2053 = vmatmul.mubr.f32.gmra.mrb[0].mxu0 %v1841
        %v2054 = vpop.f32.mrb[0].mxu0
        %v2055 = vadd.f32 %v1734, %v2054
        %v2056 = vpop.f32.mrb[0].mxu0
        %2057 = vmatprep.mubr.f32.mxu0 0.0
        %2058 = vmatmul.mubr.f32.gmra.mrb[0].mxu0 %v1844
        %v2059 = vpop.f32.mrb[0].mxu0
        %v2060 = vadd.f32 %v1739, %v2059
        %v2061 = vpop.f32.mrb[0].mxu0
        %2062 = vmatprep.mubr.f32.mxu0 0.0
        %2063 = vmatmul.mubr.f32.gmra.mrb[0].mxu0 %v1847
        %v2064 = vpop.f32.mrb[0].mxu0
        %v2065 = vadd.f32 %v1744, %v2064
        %v2066 = vpop.f32.mrb[0].mxu0
        %2067 = vmatprep.mubr.f32.mxu0 0.0
        %2068 = vmatmul.mubr.f32.gmra.mrb[0].mxu0 %v1850
        %v2069 = vpop.f32.mrb[0].mxu0
        %v2070 = vadd.f32 %v1749, %v2069
        %v2071 = vpop.f32.mrb[0].mxu0
        %2072 = vmatprep.mubr.f32.mxu0 0.0
        %2073 = vmatmul.mubr.f32.gmra.mrb[0].mxu0 %v1853
        %v2074 = vpop.f32.mrb[0].mxu0
        %v2075 = vadd.f32 %v1754, %v2074
        %v2076 = vpop.f32.mrb[0].mxu0
        %2077 = vmatprep.mubr.f32.mxu0 0.0
        %2078 = vmatmul.mubr.f32.gmra.mrb[0].mxu0 %v1856
        %v2079 = vpop.f32.mrb[0].mxu0
        %v2080 = vadd.f32 %v1759, %v2079
        %v2081 = vpop.f32.mrb[0].mxu0
        %2082 = vdwg.mxu0
        %v2083 = vld [vmem:[%s1373 + $0x24] sm:$0xff]
        %v2084 = vld [vmem:[%s1373 + $0x2c] sm:$0xff]
        %v2085 = vld [vmem:[%s1373 + $0x64] sm:$0xff]
        %v2086 = vld [vmem:[%s1373 + $0x6c] sm:$0xff]
        %v2087 = vld [vmem:[%s1373 + $0xa4] sm:$0xff]
        %v2088 = vld [vmem:[%s1373 + $0xac] sm:$0xff]
        %v2089 = vld [vmem:[%s1373 + $0xe4] sm:$0xff]
        %v2090 = vld [vmem:[%s1373 + $0xec] sm:$0xff]
        %v2091 = vld [vmem:[%s1373 + $0x124] sm:$0xff]
        %v2092 = vld [vmem:[%s1373 + $0x12c] sm:$0xff]
        %v2093 = vld [vmem:[%s1373 + $0x164] sm:$0xff]
        %v2094 = vld [vmem:[%s1373 + $0x16c] sm:$0xff]
        %v2095 = vld [vmem:[%s1373 + $0x1a4] sm:$0xff]
        %v2096 = vld [vmem:[%s1373 + $0x1ac] sm:$0xff]
        %v2097 = vld [vmem:[%s1373 + $0x1e4] sm:$0xff]
        %v2098 = vld [vmem:[%s1373 + $0x1ec] sm:$0xff]
        %v2099 = vld [vmem:[%s1373 + $0x224] sm:$0xff]
        %v2100 = vld [vmem:[%s1373 + $0x22c] sm:$0xff]
        %v2101 = vld [vmem:[%s1373 + $0x264] sm:$0xff]
        %v2102 = vld [vmem:[%s1373 + $0x26c] sm:$0xff]
        %v2103 = vld [vmem:[%s1373 + $0x2a4] sm:$0xff]
        %v2104 = vld [vmem:[%s1373 + $0x2ac] sm:$0xff]
        %v2105 = vld [vmem:[%s1373 + $0x2e4] sm:$0xff]
        %v2106 = vld [vmem:[%s1373 + $0x2ec] sm:$0xff]
        %v2107 = vld [vmem:[%s1373 + $0x324] sm:$0xff]
        %v2108 = vld [vmem:[%s1373 + $0x32c] sm:$0xff]
        %v2109 = vld [vmem:[%s1373 + $0x364] sm:$0xff]
        %v2110 = vld [vmem:[%s1373 + $0x36c] sm:$0xff]
        %v2111 = vld [vmem:[%s1373 + $0x3a4] sm:$0xff]
        %v2112 = vld [vmem:[%s1373 + $0x3ac] sm:$0xff]
        %v2113 = vld [vmem:[%s1373 + $0x3e4] sm:$0xff]
        %v2114 = vld [vmem:[%s1373 + $0x3ec] sm:$0xff]
        %s2115 = scalar_lea.vmem %s2, 16
        %v2116 = vld [vmem:[%s2115] sm:$0xff]
        %v2118 = vsel %vm358, %v2083, 0
        %v2121 = vsel %vm358, %v2084, 0
        %v2124 = vsel %vm358, %v2085, 0
        %v2127 = vsel %vm358, %v2086, 0
        %v2130 = vsel %vm358, %v2087, 0
        %v2133 = vsel %vm358, %v2088, 0
        %v2136 = vsel %vm358, %v2089, 0
        %v2139 = vsel %vm358, %v2090, 0
        %v2142 = vsel %vm358, %v2091, 0
        %v2145 = vsel %vm358, %v2092, 0
        %v2148 = vsel %vm358, %v2093, 0
        %v2151 = vsel %vm358, %v2094, 0
        %v2154 = vsel %vm358, %v2095, 0
        %v2157 = vsel %vm358, %v2096, 0
        %v2160 = vsel %vm358, %v2097, 0
        %v2163 = vsel %vm358, %v2098, 0
        %v2166 = vsel %vm358, %v2099, 0
        %v2169 = vsel %vm358, %v2100, 0
        %v2172 = vsel %vm358, %v2101, 0
        %v2175 = vsel %vm358, %v2102, 0
        %v2178 = vsel %vm358, %v2103, 0
        %v2181 = vsel %vm358, %v2104, 0
        %v2184 = vsel %vm358, %v2105, 0
        %v2187 = vsel %vm358, %v2106, 0
        %v2190 = vsel %vm358, %v2107, 0
        %v2193 = vsel %vm358, %v2108, 0
        %v2196 = vsel %vm358, %v2109, 0
        %v2199 = vsel %vm358, %v2110, 0
        %v2202 = vsel %vm358, %v2111, 0
        %v2205 = vsel %vm358, %v2112, 0
        %v2208 = vsel %vm358, %v2113, 0
        %v2211 = vsel %vm358, %v2114, 0
        %2213 = vmatprep.subr.mxu0 0.0
        %2214 = vmatpush1.msra.mxu0 %v2116
        %2215 = vmatprep.subr.mxu0 0.0
        %2216 = vmatpush1.msra.mxu0 0.0
        %2217 = vmatprep.subr.mxu0 0.0
        %2218 = vmatpush1.msra.mxu0 0.0
        %2219 = vmatprep.subr.mxu0 0.0
        %2220 = vmatpush1.msra.mxu0 0.0
        %2221 = vmatprep.subr.mxu0 0.0
        %2222 = vmatpush1.msra.mxu0 0.0
        %2223 = vmatprep.subr.mxu0 0.0
        %2224 = vmatpush1.msra.mxu0 0.0
        %2225 = vmatprep.subr.mxu0 0.0
        %2226 = vmatpush1.msra.mxu0 0.0
        %2227 = vmatprep.subr.mxu0 0.0
        %2228 = vmatpush1.msra.mxu0 0.0
        %2229 = vmatprep.subr.mxu0 0.0
        %2230 = vmatpush1.msra.mxu0 0.0
        %2231 = vmatprep.subr.mxu0 0.0
        %2232 = vmatpush1.msra.mxu0 0.0
        %2233 = vmatprep.subr.mxu0 0.0
        %2234 = vmatpush1.msra.mxu0 0.0
        %2235 = vmatprep.subr.mxu0 0.0
        %2236 = vmatpush1.msra.mxu0 0.0
        %2237 = vmatprep.subr.mxu0 0.0
        %2238 = vmatpush1.msra.mxu0 0.0
        %2239 = vmatprep.subr.mxu0 0.0
        %2240 = vmatpush1.msra.mxu0 0.0
        %2241 = vmatprep.subr.mxu0 0.0
        %2242 = vmatpush1.msra.mxu0 0.0
        %2243 = vmatprep.subr.mxu0 0.0
        %2244 = vmatpush1.msra.mxu0 0.0
        %2245 = vmatprep.subr.mxu0 0.0
        %2246 = vmatpush1.msra.mxu0 0.0
        %2247 = vmatprep.subr.mxu0 0.0
        %2248 = vmatpush1.msra.mxu0 0.0
        %2249 = vmatprep.subr.mxu0 0.0
        %2250 = vmatpush1.msra.mxu0 0.0
        %2251 = vmatprep.subr.mxu0 0.0
        %2252 = vmatpush1.msra.mxu0 0.0
        %2253 = vmatprep.subr.mxu0 0.0
        %2254 = vmatpush1.msra.mxu0 0.0
        %2255 = vmatprep.subr.mxu0 0.0
        %2256 = vmatpush1.msra.mxu0 0.0
        %2257 = vmatprep.subr.mxu0 0.0
        %2258 = vmatpush1.msra.mxu0 0.0
        %2259 = vmatprep.subr.mxu0 0.0
        %2260 = vmatpush1.msra.mxu0 0.0
        %2261 = vmatprep.subr.mxu0 0.0
        %2262 = vmatpush1.msra.mxu0 0.0
        %2263 = vmatprep.subr.mxu0 0.0
        %2264 = vmatpush1.msra.mxu0 0.0
        %2265 = vmatprep.subr.mxu0 0.0
        %2266 = vmatpush1.msra.mxu0 0.0
        %2267 = vmatprep.subr.mxu0 0.0
        %2268 = vmatpush1.msra.mxu0 0.0
        %2269 = vmatprep.subr.mxu0 0.0
        %2270 = vmatpush1.msra.mxu0 0.0
        %2271 = vmatprep.subr.mxu0 0.0
        %2272 = vmatpush1.msra.mxu0 0.0
        %2273 = vmatprep.subr.mxu0 0.0
        %2274 = vmatpush1.msra.mxu0 0.0
        %2275 = vmatprep.subr.mxu0 0.0
        %2276 = vmatpush1.msra.mxu0 0.0
        %2277 = vmatprep.mubr.f32.mxu0 0.0
        %2278 = vmatmul.mubr.f32.gmra.mrb[0].mxu0 %v2118
        %v2279 = vpop.f32.mrb[0].mxu0
        %v2280 = vadd.f32 0.0, %v2279
        %v2281 = vpop.f32.mrb[0].mxu0
        %2282 = vmatprep.mubr.f32.mxu0 0.0
        %2283 = vmatmul.mubr.f32.gmra.mrb[0].mxu0 %v2121
        %v2284 = vpop.f32.mrb[0].mxu0
        %v2285 = vadd.f32 0.0, %v2284
        %v2286 = vpop.f32.mrb[0].mxu0
        %2287 = vmatprep.mubr.f32.mxu0 0.0
        %2288 = vmatmul.mubr.f32.gmra.mrb[0].mxu0 %v2124
        %v2289 = vpop.f32.mrb[0].mxu0
        %v2290 = vadd.f32 0.0, %v2289
        %v2291 = vpop.f32.mrb[0].mxu0
        %2292 = vmatprep.mubr.f32.mxu0 0.0
        %2293 = vmatmul.mubr.f32.gmra.mrb[0].mxu0 %v2127
        %v2294 = vpop.f32.mrb[0].mxu0
        %v2295 = vadd.f32 0.0, %v2294
        %v2296 = vpop.f32.mrb[0].mxu0
        %2297 = vmatprep.mubr.f32.mxu0 0.0
        %2298 = vmatmul.mubr.f32.gmra.mrb[0].mxu0 %v2130
        %v2299 = vpop.f32.mrb[0].mxu0
        %v2300 = vadd.f32 0.0, %v2299
        %v2301 = vpop.f32.mrb[0].mxu0
        %2302 = vmatprep.mubr.f32.mxu0 0.0
        %2303 = vmatmul.mubr.f32.gmra.mrb[0].mxu0 %v2133
        %v2304 = vpop.f32.mrb[0].mxu0
        %v2305 = vadd.f32 0.0, %v2304
        %v2306 = vpop.f32.mrb[0].mxu0
        %2307 = vmatprep.mubr.f32.mxu0 0.0
        %2308 = vmatmul.mubr.f32.gmra.mrb[0].mxu0 %v2136
        %v2309 = vpop.f32.mrb[0].mxu0
        %v2310 = vadd.f32 0.0, %v2309
        %v2311 = vpop.f32.mrb[0].mxu0
        %2312 = vmatprep.mubr.f32.mxu0 0.0
        %2313 = vmatmul.mubr.f32.gmra.mrb[0].mxu0 %v2139
        %v2314 = vpop.f32.mrb[0].mxu0
        %v2315 = vadd.f32 0.0, %v2314
        %v2316 = vpop.f32.mrb[0].mxu0
        %2317 = vmatprep.mubr.f32.mxu0 0.0
        %2318 = vmatmul.mubr.f32.gmra.mrb[0].mxu0 %v2142
        %v2319 = vpop.f32.mrb[0].mxu0
        %v2320 = vadd.f32 0.0, %v2319
        %v2321 = vpop.f32.mrb[0].mxu0
        %2322 = vmatprep.mubr.f32.mxu0 0.0
        %2323 = vmatmul.mubr.f32.gmra.mrb[0].mxu0 %v2145
        %v2324 = vpop.f32.mrb[0].mxu0
        %v2325 = vadd.f32 0.0, %v2324
        %v2326 = vpop.f32.mrb[0].mxu0
        %2327 = vmatprep.mubr.f32.mxu0 0.0
        %2328 = vmatmul.mubr.f32.gmra.mrb[0].mxu0 %v2148
        %v2329 = vpop.f32.mrb[0].mxu0
        %v2330 = vadd.f32 0.0, %v2329
        %v2331 = vpop.f32.mrb[0].mxu0
        %2332 = vmatprep.mubr.f32.mxu0 0.0
        %2333 = vmatmul.mubr.f32.gmra.mrb[0].mxu0 %v2151
        %v2334 = vpop.f32.mrb[0].mxu0
        %v2335 = vadd.f32 0.0, %v2334
        %v2336 = vpop.f32.mrb[0].mxu0
        %2337 = vmatprep.mubr.f32.mxu0 0.0
        %2338 = vmatmul.mubr.f32.gmra.mrb[0].mxu0 %v2154
        %v2339 = vpop.f32.mrb[0].mxu0
        %v2340 = vadd.f32 0.0, %v2339
        %v2341 = vpop.f32.mrb[0].mxu0
        %2342 = vmatprep.mubr.f32.mxu0 0.0
        %2343 = vmatmul.mubr.f32.gmra.mrb[0].mxu0 %v2157
        %v2344 = vpop.f32.mrb[0].mxu0
        %v2345 = vadd.f32 0.0, %v2344
        %v2346 = vpop.f32.mrb[0].mxu0
        %2347 = vmatprep.mubr.f32.mxu0 0.0
        %2348 = vmatmul.mubr.f32.gmra.mrb[0].mxu0 %v2160
        %v2349 = vpop.f32.mrb[0].mxu0
        %v2350 = vadd.f32 0.0, %v2349
        %v2351 = vpop.f32.mrb[0].mxu0
        %2352 = vmatprep.mubr.f32.mxu0 0.0
        %2353 = vmatmul.mubr.f32.gmra.mrb[0].mxu0 %v2163
        %v2354 = vpop.f32.mrb[0].mxu0
        %v2355 = vadd.f32 0.0, %v2354
        %v2356 = vpop.f32.mrb[0].mxu0
        %2357 = vmatprep.mubr.f32.mxu0 0.0
        %2358 = vmatmul.mubr.f32.gmra.mrb[0].mxu0 %v2166
        %v2359 = vpop.f32.mrb[0].mxu0
        %v2360 = vadd.f32 0.0, %v2359
        %v2361 = vpop.f32.mrb[0].mxu0
        %2362 = vmatprep.mubr.f32.mxu0 0.0
        %2363 = vmatmul.mubr.f32.gmra.mrb[0].mxu0 %v2169
        %v2364 = vpop.f32.mrb[0].mxu0
        %v2365 = vadd.f32 0.0, %v2364
        %v2366 = vpop.f32.mrb[0].mxu0
        %2367 = vmatprep.mubr.f32.mxu0 0.0
        %2368 = vmatmul.mubr.f32.gmra.mrb[0].mxu0 %v2172
        %v2369 = vpop.f32.mrb[0].mxu0
        %v2370 = vadd.f32 0.0, %v2369
        %v2371 = vpop.f32.mrb[0].mxu0
        %2372 = vmatprep.mubr.f32.mxu0 0.0
        %2373 = vmatmul.mubr.f32.gmra.mrb[0].mxu0 %v2175
        %v2374 = vpop.f32.mrb[0].mxu0
        %v2375 = vadd.f32 0.0, %v2374
        %v2376 = vpop.f32.mrb[0].mxu0
        %2377 = vmatprep.mubr.f32.mxu0 0.0
        %2378 = vmatmul.mubr.f32.gmra.mrb[0].mxu0 %v2178
        %v2379 = vpop.f32.mrb[0].mxu0
        %v2380 = vadd.f32 0.0, %v2379
        %v2381 = vpop.f32.mrb[0].mxu0
        %2382 = vmatprep.mubr.f32.mxu0 0.0
        %2383 = vmatmul.mubr.f32.gmra.mrb[0].mxu0 %v2181
        %v2384 = vpop.f32.mrb[0].mxu0
        %v2385 = vadd.f32 0.0, %v2384
        %v2386 = vpop.f32.mrb[0].mxu0
        %2387 = vmatprep.mubr.f32.mxu0 0.0
        %2388 = vmatmul.mubr.f32.gmra.mrb[0].mxu0 %v2184
        %v2389 = vpop.f32.mrb[0].mxu0
        %v2390 = vadd.f32 0.0, %v2389
        %v2391 = vpop.f32.mrb[0].mxu0
        %2392 = vmatprep.mubr.f32.mxu0 0.0
        %2393 = vmatmul.mubr.f32.gmra.mrb[0].mxu0 %v2187
        %v2394 = vpop.f32.mrb[0].mxu0
        %v2395 = vadd.f32 0.0, %v2394
        %v2396 = vpop.f32.mrb[0].mxu0
        %2397 = vmatprep.mubr.f32.mxu0 0.0
        %2398 = vmatmul.mubr.f32.gmra.mrb[0].mxu0 %v2190
        %v2399 = vpop.f32.mrb[0].mxu0
        %v2400 = vadd.f32 0.0, %v2399
        %v2401 = vpop.f32.mrb[0].mxu0
        %2402 = vmatprep.mubr.f32.mxu0 0.0
        %2403 = vmatmul.mubr.f32.gmra.mrb[0].mxu0 %v2193
        %v2404 = vpop.f32.mrb[0].mxu0
        %v2405 = vadd.f32 0.0, %v2404
        %v2406 = vpop.f32.mrb[0].mxu0
        %2407 = vmatprep.mubr.f32.mxu0 0.0
        %2408 = vmatmul.mubr.f32.gmra.mrb[0].mxu0 %v2196
        %v2409 = vpop.f32.mrb[0].mxu0
        %v2410 = vadd.f32 0.0, %v2409
        %v2411 = vpop.f32.mrb[0].mxu0
        %2412 = vmatprep.mubr.f32.mxu0 0.0
        %2413 = vmatmul.mubr.f32.gmra.mrb[0].mxu0 %v2199
        %v2414 = vpop.f32.mrb[0].mxu0
        %v2415 = vadd.f32 0.0, %v2414
        %v2416 = vpop.f32.mrb[0].mxu0
        %2417 = vmatprep.mubr.f32.mxu0 0.0
        %2418 = vmatmul.mubr.f32.gmra.mrb[0].mxu0 %v2202
        %v2419 = vpop.f32.mrb[0].mxu0
        %v2420 = vadd.f32 0.0, %v2419
        %v2421 = vpop.f32.mrb[0].mxu0
        %2422 = vmatprep.mubr.f32.mxu0 0.0
        %2423 = vmatmul.mubr.f32.gmra.mrb[0].mxu0 %v2205
        %v2424 = vpop.f32.mrb[0].mxu0
        %v2425 = vadd.f32 0.0, %v2424
        %v2426 = vpop.f32.mrb[0].mxu0
        %2427 = vmatprep.mubr.f32.mxu0 0.0
        %2428 = vmatmul.mubr.f32.gmra.mrb[0].mxu0 %v2208
        %v2429 = vpop.f32.mrb[0].mxu0
        %v2430 = vadd.f32 0.0, %v2429
        %v2431 = vpop.f32.mrb[0].mxu0
        %2432 = vmatprep.mubr.f32.mxu0 0.0
        %2433 = vmatmul.mubr.f32.gmra.mrb[0].mxu0 %v2211
        %v2434 = vpop.f32.mrb[0].mxu0
        %v2435 = vadd.f32 0.0, %v2434
        %v2436 = vpop.f32.mrb[0].mxu0
        %2437 = vdwg.mxu0
        %v2438 = vadd.f32 %v1925, %v2280
        %v2439 = vadd.f32 %v1930, %v2285
        %v2440 = vadd.f32 %v1935, %v2290
        %v2441 = vadd.f32 %v1940, %v2295
        %v2442 = vadd.f32 %v1945, %v2300
        %v2443 = vadd.f32 %v1950, %v2305
        %v2444 = vadd.f32 %v1955, %v2310
        %v2445 = vadd.f32 %v1960, %v2315
        %v2446 = vadd.f32 %v1965, %v2320
        %v2447 = vadd.f32 %v1970, %v2325
        %v2448 = vadd.f32 %v1975, %v2330
        %v2449 = vadd.f32 %v1980, %v2335
        %v2450 = vadd.f32 %v1985, %v2340
        %v2451 = vadd.f32 %v1990, %v2345
        %v2452 = vadd.f32 %v1995, %v2350
        %v2453 = vadd.f32 %v2000, %v2355
        %v2454 = vadd.f32 %v2005, %v2360
        %v2455 = vadd.f32 %v2010, %v2365
        %v2456 = vadd.f32 %v2015, %v2370
        %v2457 = vadd.f32 %v2020, %v2375
        %v2458 = vadd.f32 %v2025, %v2380
        %v2459 = vadd.f32 %v2030, %v2385
        %v2460 = vadd.f32 %v2035, %v2390
        %v2461 = vadd.f32 %v2040, %v2395
        %v2462 = vadd.f32 %v2045, %v2400
        %v2463 = vadd.f32 %v2050, %v2405
        %v2464 = vadd.f32 %v2055, %v2410
        %v2465 = vadd.f32 %v2060, %v2415
        %v2466 = vadd.f32 %v2065, %v2420
        %v2467 = vadd.f32 %v2070, %v2425
        %v2468 = vadd.f32 %v2075, %v2430
        %v2469 = vadd.f32 %v2080, %v2435
        %v2470 = vld [vmem:[%s1340 + $0xc] sm:$0xff]
        %v2471 = vld [vmem:[%s1340 + $0x14] sm:$0xff]
        %v2472 = vld [vmem:[%s1340 + $0x4c] sm:$0xff]
        %v2473 = vld [vmem:[%s1340 + $0x54] sm:$0xff]
        %v2474 = vld [vmem:[%s1340 + $0x8c] sm:$0xff]
        %v2475 = vld [vmem:[%s1340 + $0x94] sm:$0xff]
        %v2476 = vld [vmem:[%s1340 + $0xcc] sm:$0xff]
        %v2477 = vld [vmem:[%s1340 + $0xd4] sm:$0xff]
        %v2478 = vld [vmem:[%s1340 + $0x10c] sm:$0xff]
        %v2479 = vld [vmem:[%s1340 + $0x114] sm:$0xff]
        %v2480 = vld [vmem:[%s1340 + $0x14c] sm:$0xff]
        %v2481 = vld [vmem:[%s1340 + $0x154] sm:$0xff]
        %v2482 = vld [vmem:[%s1340 + $0x18c] sm:$0xff]
        %v2483 = vld [vmem:[%s1340 + $0x194] sm:$0xff]
        %v2484 = vld [vmem:[%s1340 + $0x1cc] sm:$0xff]
        %v2485 = vld [vmem:[%s1340 + $0x1d4] sm:$0xff]
        %v2486 = vld [vmem:[%s1340 + $0x20c] sm:$0xff]
        %v2487 = vld [vmem:[%s1340 + $0x214] sm:$0xff]
        %v2488 = vld [vmem:[%s1340 + $0x24c] sm:$0xff]
        %v2489 = vld [vmem:[%s1340 + $0x254] sm:$0xff]
        %v2490 = vld [vmem:[%s1340 + $0x28c] sm:$0xff]
        %v2491 = vld [vmem:[%s1340 + $0x294] sm:$0xff]
        %v2492 = vld [vmem:[%s1340 + $0x2cc] sm:$0xff]
        %v2493 = vld [vmem:[%s1340 + $0x2d4] sm:$0xff]
        %v2494 = vld [vmem:[%s1340 + $0x30c] sm:$0xff]
        %v2495 = vld [vmem:[%s1340 + $0x314] sm:$0xff]
        %v2496 = vld [vmem:[%s1340 + $0x34c] sm:$0xff]
        %v2497 = vld [vmem:[%s1340 + $0x354] sm:$0xff]
        %v2498 = vld [vmem:[%s1340 + $0x38c] sm:$0xff]
        %v2499 = vld [vmem:[%s1340 + $0x394] sm:$0xff]
        %v2500 = vld [vmem:[%s1340 + $0x3cc] sm:$0xff]
        %v2501 = vld [vmem:[%s1340 + $0x3d4] sm:$0xff]
        %s2502 = scalar_lea.vmem %s2, 24
        %v2503 = vld [vmem:[%s2502] sm:$0xff]
        %v2505 = vsel %vm358, %v2470, 0
        %v2508 = vsel %vm358, %v2471, 0
        %v2511 = vsel %vm358, %v2472, 0
        %v2514 = vsel %vm358, %v2473, 0
        %v2517 = vsel %vm358, %v2474, 0
        %v2520 = vsel %vm358, %v2475, 0
        %v2523 = vsel %vm358, %v2476, 0
        %v2526 = vsel %vm358, %v2477, 0
        %v2529 = vsel %vm358, %v2478, 0
        %v2532 = vsel %vm358, %v2479, 0
        %v2535 = vsel %vm358, %v2480, 0
        %v2538 = vsel %vm358, %v2481, 0
        %v2541 = vsel %vm358, %v2482, 0
        %v2544 = vsel %vm358, %v2483, 0
        %v2547 = vsel %vm358, %v2484, 0
        %v2550 = vsel %vm358, %v2485, 0
        %v2553 = vsel %vm358, %v2486, 0
        %v2556 = vsel %vm358, %v2487, 0
        %v2559 = vsel %vm358, %v2488, 0
        %v2562 = vsel %vm358, %v2489, 0
        %v2565 = vsel %vm358, %v2490, 0
        %v2568 = vsel %vm358, %v2491, 0
        %v2571 = vsel %vm358, %v2492, 0
        %v2574 = vsel %vm358, %v2493, 0
        %v2577 = vsel %vm358, %v2494, 0
        %v2580 = vsel %vm358, %v2495, 0
        %v2583 = vsel %vm358, %v2496, 0
        %v2586 = vsel %vm358, %v2497, 0
        %v2589 = vsel %vm358, %v2498, 0
        %v2592 = vsel %vm358, %v2499, 0
        %v2595 = vsel %vm358, %v2500, 0
        %v2598 = vsel %vm358, %v2501, 0
        %2600 = vmatprep.subr.mxu0 0.0
        %2601 = vmatpush1.msra.mxu0 %v2503
        %2602 = vmatprep.subr.mxu0 0.0
        %2603 = vmatpush1.msra.mxu0 0.0
        %2604 = vmatprep.subr.mxu0 0.0
        %2605 = vmatpush1.msra.mxu0 0.0
        %2606 = vmatprep.subr.mxu0 0.0
        %2607 = vmatpush1.msra.mxu0 0.0
        %2608 = vmatprep.subr.mxu0 0.0
        %2609 = vmatpush1.msra.mxu0 0.0
        %2610 = vmatprep.subr.mxu0 0.0
        %2611 = vmatpush1.msra.mxu0 0.0
        %2612 = vmatprep.subr.mxu0 0.0
        %2613 = vmatpush1.msra.mxu0 0.0
        %2614 = vmatprep.subr.mxu0 0.0
        %2615 = vmatpush1.msra.mxu0 0.0
        %2616 = vmatprep.subr.mxu0 0.0
        %2617 = vmatpush1.msra.mxu0 0.0
        %2618 = vmatprep.subr.mxu0 0.0
        %2619 = vmatpush1.msra.mxu0 0.0
        %2620 = vmatprep.subr.mxu0 0.0
        %2621 = vmatpush1.msra.mxu0 0.0
        %2622 = vmatprep.subr.mxu0 0.0
        %2623 = vmatpush1.msra.mxu0 0.0
        %2624 = vmatprep.subr.mxu0 0.0
        %2625 = vmatpush1.msra.mxu0 0.0
        %2626 = vmatprep.subr.mxu0 0.0
        %2627 = vmatpush1.msra.mxu0 0.0
        %2628 = vmatprep.subr.mxu0 0.0
        %2629 = vmatpush1.msra.mxu0 0.0
        %2630 = vmatprep.subr.mxu0 0.0
        %2631 = vmatpush1.msra.mxu0 0.0
        %2632 = vmatprep.subr.mxu0 0.0
        %2633 = vmatpush1.msra.mxu0 0.0
        %2634 = vmatprep.subr.mxu0 0.0
        %2635 = vmatpush1.msra.mxu0 0.0
        %2636 = vmatprep.subr.mxu0 0.0
        %2637 = vmatpush1.msra.mxu0 0.0
        %2638 = vmatprep.subr.mxu0 0.0
        %2639 = vmatpush1.msra.mxu0 0.0
        %2640 = vmatprep.subr.mxu0 0.0
        %2641 = vmatpush1.msra.mxu0 0.0
        %2642 = vmatprep.subr.mxu0 0.0
        %2643 = vmatpush1.msra.mxu0 0.0
        %2644 = vmatprep.subr.mxu0 0.0
        %2645 = vmatpush1.msra.mxu0 0.0
        %2646 = vmatprep.subr.mxu0 0.0
        %2647 = vmatpush1.msra.mxu0 0.0
        %2648 = vmatprep.subr.mxu0 0.0
        %2649 = vmatpush1.msra.mxu0 0.0
        %2650 = vmatprep.subr.mxu0 0.0
        %2651 = vmatpush1.msra.mxu0 0.0
        %2652 = vmatprep.subr.mxu0 0.0
        %2653 = vmatpush1.msra.mxu0 0.0
        %2654 = vmatprep.subr.mxu0 0.0
        %2655 = vmatpush1.msra.mxu0 0.0
        %2656 = vmatprep.subr.mxu0 0.0
        %2657 = vmatpush1.msra.mxu0 0.0
        %2658 = vmatprep.subr.mxu0 0.0
        %2659 = vmatpush1.msra.mxu0 0.0
        %2660 = vmatprep.subr.mxu0 0.0
        %2661 = vmatpush1.msra.mxu0 0.0
        %2662 = vmatprep.subr.mxu0 0.0
        %2663 = vmatpush1.msra.mxu0 0.0
        %2664 = vmatprep.mubr.f32.mxu0 0.0
        %2665 = vmatmul.mubr.f32.gmra.mrb[0].mxu0 %v2505
        %v2666 = vpop.f32.mrb[0].mxu0
        %v2667 = vadd.f32 0.0, %v2666
        %v2668 = vpop.f32.mrb[0].mxu0
        %2669 = vmatprep.mubr.f32.mxu0 0.0
        %2670 = vmatmul.mubr.f32.gmra.mrb[0].mxu0 %v2508
        %v2671 = vpop.f32.mrb[0].mxu0
        %v2672 = vadd.f32 0.0, %v2671
        %v2673 = vpop.f32.mrb[0].mxu0
        %2674 = vmatprep.mubr.f32.mxu0 0.0
        %2675 = vmatmul.mubr.f32.gmra.mrb[0].mxu0 %v2511
        %v2676 = vpop.f32.mrb[0].mxu0
        %v2677 = vadd.f32 0.0, %v2676
        %v2678 = vpop.f32.mrb[0].mxu0
        %2679 = vmatprep.mubr.f32.mxu0 0.0
        %2680 = vmatmul.mubr.f32.gmra.mrb[0].mxu0 %v2514
        %v2681 = vpop.f32.mrb[0].mxu0
        %v2682 = vadd.f32 0.0, %v2681
        %v2683 = vpop.f32.mrb[0].mxu0
        %2684 = vmatprep.mubr.f32.mxu0 0.0
        %2685 = vmatmul.mubr.f32.gmra.mrb[0].mxu0 %v2517
        %v2686 = vpop.f32.mrb[0].mxu0
        %v2687 = vadd.f32 0.0, %v2686
        %v2688 = vpop.f32.mrb[0].mxu0
        %2689 = vmatprep.mubr.f32.mxu0 0.0
        %2690 = vmatmul.mubr.f32.gmra.mrb[0].mxu0 %v2520
        %v2691 = vpop.f32.mrb[0].mxu0
        %v2692 = vadd.f32 0.0, %v2691
        %v2693 = vpop.f32.mrb[0].mxu0
        %2694 = vmatprep.mubr.f32.mxu0 0.0
        %2695 = vmatmul.mubr.f32.gmra.mrb[0].mxu0 %v2523
        %v2696 = vpop.f32.mrb[0].mxu0
        %v2697 = vadd.f32 0.0, %v2696
        %v2698 = vpop.f32.mrb[0].mxu0
        %2699 = vmatprep.mubr.f32.mxu0 0.0
        %2700 = vmatmul.mubr.f32.gmra.mrb[0].mxu0 %v2526
        %v2701 = vpop.f32.mrb[0].mxu0
        %v2702 = vadd.f32 0.0, %v2701
        %v2703 = vpop.f32.mrb[0].mxu0
        %2704 = vmatprep.mubr.f32.mxu0 0.0
        %2705 = vmatmul.mubr.f32.gmra.mrb[0].mxu0 %v2529
        %v2706 = vpop.f32.mrb[0].mxu0
        %v2707 = vadd.f32 0.0, %v2706
        %v2708 = vpop.f32.mrb[0].mxu0
        %2709 = vmatprep.mubr.f32.mxu0 0.0
        %2710 = vmatmul.mubr.f32.gmra.mrb[0].mxu0 %v2532
        %v2711 = vpop.f32.mrb[0].mxu0
        %v2712 = vadd.f32 0.0, %v2711
        %v2713 = vpop.f32.mrb[0].mxu0
        %2714 = vmatprep.mubr.f32.mxu0 0.0
        %2715 = vmatmul.mubr.f32.gmra.mrb[0].mxu0 %v2535
        %v2716 = vpop.f32.mrb[0].mxu0
        %v2717 = vadd.f32 0.0, %v2716
        %v2718 = vpop.f32.mrb[0].mxu0
        %2719 = vmatprep.mubr.f32.mxu0 0.0
        %2720 = vmatmul.mubr.f32.gmra.mrb[0].mxu0 %v2538
        %v2721 = vpop.f32.mrb[0].mxu0
        %v2722 = vadd.f32 0.0, %v2721
        %v2723 = vpop.f32.mrb[0].mxu0
        %2724 = vmatprep.mubr.f32.mxu0 0.0
        %2725 = vmatmul.mubr.f32.gmra.mrb[0].mxu0 %v2541
        %v2726 = vpop.f32.mrb[0].mxu0
        %v2727 = vadd.f32 0.0, %v2726
        %v2728 = vpop.f32.mrb[0].mxu0
        %2729 = vmatprep.mubr.f32.mxu0 0.0
        %2730 = vmatmul.mubr.f32.gmra.mrb[0].mxu0 %v2544
        %v2731 = vpop.f32.mrb[0].mxu0
        %v2732 = vadd.f32 0.0, %v2731
        %v2733 = vpop.f32.mrb[0].mxu0
        %2734 = vmatprep.mubr.f32.mxu0 0.0
        %2735 = vmatmul.mubr.f32.gmra.mrb[0].mxu0 %v2547
        %v2736 = vpop.f32.mrb[0].mxu0
        %v2737 = vadd.f32 0.0, %v2736
        %v2738 = vpop.f32.mrb[0].mxu0
        %2739 = vmatprep.mubr.f32.mxu0 0.0
        %2740 = vmatmul.mubr.f32.gmra.mrb[0].mxu0 %v2550
        %v2741 = vpop.f32.mrb[0].mxu0
        %v2742 = vadd.f32 0.0, %v2741
        %v2743 = vpop.f32.mrb[0].mxu0
        %2744 = vmatprep.mubr.f32.mxu0 0.0
        %2745 = vmatmul.mubr.f32.gmra.mrb[0].mxu0 %v2553
        %v2746 = vpop.f32.mrb[0].mxu0
        %v2747 = vadd.f32 0.0, %v2746
        %v2748 = vpop.f32.mrb[0].mxu0
        %2749 = vmatprep.mubr.f32.mxu0 0.0
        %2750 = vmatmul.mubr.f32.gmra.mrb[0].mxu0 %v2556
        %v2751 = vpop.f32.mrb[0].mxu0
        %v2752 = vadd.f32 0.0, %v2751
        %v2753 = vpop.f32.mrb[0].mxu0
        %2754 = vmatprep.mubr.f32.mxu0 0.0
        %2755 = vmatmul.mubr.f32.gmra.mrb[0].mxu0 %v2559
        %v2756 = vpop.f32.mrb[0].mxu0
        %v2757 = vadd.f32 0.0, %v2756
        %v2758 = vpop.f32.mrb[0].mxu0
        %2759 = vmatprep.mubr.f32.mxu0 0.0
        %2760 = vmatmul.mubr.f32.gmra.mrb[0].mxu0 %v2562
        %v2761 = vpop.f32.mrb[0].mxu0
        %v2762 = vadd.f32 0.0, %v2761
        %v2763 = vpop.f32.mrb[0].mxu0
        %2764 = vmatprep.mubr.f32.mxu0 0.0
        %2765 = vmatmul.mubr.f32.gmra.mrb[0].mxu0 %v2565
        %v2766 = vpop.f32.mrb[0].mxu0
        %v2767 = vadd.f32 0.0, %v2766
        %v2768 = vpop.f32.mrb[0].mxu0
        %2769 = vmatprep.mubr.f32.mxu0 0.0
        %2770 = vmatmul.mubr.f32.gmra.mrb[0].mxu0 %v2568
        %v2771 = vpop.f32.mrb[0].mxu0
        %v2772 = vadd.f32 0.0, %v2771
        %v2773 = vpop.f32.mrb[0].mxu0
        %2774 = vmatprep.mubr.f32.mxu0 0.0
        %2775 = vmatmul.mubr.f32.gmra.mrb[0].mxu0 %v2571
        %v2776 = vpop.f32.mrb[0].mxu0
        %v2777 = vadd.f32 0.0, %v2776
        %v2778 = vpop.f32.mrb[0].mxu0
        %2779 = vmatprep.mubr.f32.mxu0 0.0
        %2780 = vmatmul.mubr.f32.gmra.mrb[0].mxu0 %v2574
        %v2781 = vpop.f32.mrb[0].mxu0
        %v2782 = vadd.f32 0.0, %v2781
        %v2783 = vpop.f32.mrb[0].mxu0
        %2784 = vmatprep.mubr.f32.mxu0 0.0
        %2785 = vmatmul.mubr.f32.gmra.mrb[0].mxu0 %v2577
        %v2786 = vpop.f32.mrb[0].mxu0
        %v2787 = vadd.f32 0.0, %v2786
        %v2788 = vpop.f32.mrb[0].mxu0
        %2789 = vmatprep.mubr.f32.mxu0 0.0
        %2790 = vmatmul.mubr.f32.gmra.mrb[0].mxu0 %v2580
        %v2791 = vpop.f32.mrb[0].mxu0
        %v2792 = vadd.f32 0.0, %v2791
        %v2793 = vpop.f32.mrb[0].mxu0
        %2794 = vmatprep.mubr.f32.mxu0 0.0
        %2795 = vmatmul.mubr.f32.gmra.mrb[0].mxu0 %v2583
        %v2796 = vpop.f32.mrb[0].mxu0
        %v2797 = vadd.f32 0.0, %v2796
        %v2798 = vpop.f32.mrb[0].mxu0
        %2799 = vmatprep.mubr.f32.mxu0 0.0
        %2800 = vmatmul.mubr.f32.gmra.mrb[0].mxu0 %v2586
        %v2801 = vpop.f32.mrb[0].mxu0
        %v2802 = vadd.f32 0.0, %v2801
        %v2803 = vpop.f32.mrb[0].mxu0
        %2804 = vmatprep.mubr.f32.mxu0 0.0
        %2805 = vmatmul.mubr.f32.gmra.mrb[0].mxu0 %v2589
        %v2806 = vpop.f32.mrb[0].mxu0
        %v2807 = vadd.f32 0.0, %v2806
        %v2808 = vpop.f32.mrb[0].mxu0
        %2809 = vmatprep.mubr.f32.mxu0 0.0
        %2810 = vmatmul.mubr.f32.gmra.mrb[0].mxu0 %v2592
        %v2811 = vpop.f32.mrb[0].mxu0
        %v2812 = vadd.f32 0.0, %v2811
        %v2813 = vpop.f32.mrb[0].mxu0
        %2814 = vmatprep.mubr.f32.mxu0 0.0
        %2815 = vmatmul.mubr.f32.gmra.mrb[0].mxu0 %v2595
        %v2816 = vpop.f32.mrb[0].mxu0
        %v2817 = vadd.f32 0.0, %v2816
        %v2818 = vpop.f32.mrb[0].mxu0
        %2819 = vmatprep.mubr.f32.mxu0 0.0
        %2820 = vmatmul.mubr.f32.gmra.mrb[0].mxu0 %v2598
        %v2821 = vpop.f32.mrb[0].mxu0
        %v2822 = vadd.f32 0.0, %v2821
        %v2823 = vpop.f32.mrb[0].mxu0
        %2824 = vdwg.mxu0
        %v2825 = vadd.f32 %v2438, %v2667
        %v2826 = vadd.f32 %v2439, %v2672
        %v2827 = vadd.f32 %v2440, %v2677
        %v2828 = vadd.f32 %v2441, %v2682
        %v2829 = vadd.f32 %v2442, %v2687
        %v2830 = vadd.f32 %v2443, %v2692
        %v2831 = vadd.f32 %v2444, %v2697
        %v2832 = vadd.f32 %v2445, %v2702
        %v2833 = vadd.f32 %v2446, %v2707
        %v2834 = vadd.f32 %v2447, %v2712
        %v2835 = vadd.f32 %v2448, %v2717
        %v2836 = vadd.f32 %v2449, %v2722
        %v2837 = vadd.f32 %v2450, %v2727
        %v2838 = vadd.f32 %v2451, %v2732
        %v2839 = vadd.f32 %v2452, %v2737
        %v2840 = vadd.f32 %v2453, %v2742
        %v2841 = vadd.f32 %v2454, %v2747
        %v2842 = vadd.f32 %v2455, %v2752
        %v2843 = vadd.f32 %v2456, %v2757
        %v2844 = vadd.f32 %v2457, %v2762
        %v2845 = vadd.f32 %v2458, %v2767
        %v2846 = vadd.f32 %v2459, %v2772
        %v2847 = vadd.f32 %v2460, %v2777
        %v2848 = vadd.f32 %v2461, %v2782
        %v2849 = vadd.f32 %v2462, %v2787
        %v2850 = vadd.f32 %v2463, %v2792
        %v2851 = vadd.f32 %v2464, %v2797
        %v2852 = vadd.f32 %v2465, %v2802
        %v2853 = vadd.f32 %v2466, %v2807
        %v2854 = vadd.f32 %v2467, %v2812
        %v2855 = vadd.f32 %v2468, %v2817
        %v2856 = vadd.f32 %v2469, %v2822
        %v2857 = vld [vmem:[%s1340 + $0x18] sm:$0xff]
        %v2858 = vld [vmem:[%s1340 + $0x20] sm:$0xff]
        %v2859 = vld [vmem:[%s1340 + $0x58] sm:$0xff]
        %v2860 = vld [vmem:[%s1340 + $0x60] sm:$0xff]
        %v2861 = vld [vmem:[%s1340 + $0x98] sm:$0xff]
        %v2862 = vld [vmem:[%s1340 + $0xa0] sm:$0xff]
        %v2863 = vld [vmem:[%s1340 + $0xd8] sm:$0xff]
        %v2864 = vld [vmem:[%s1340 + $0xe0] sm:$0xff]
        %v2865 = vld [vmem:[%s1340 + $0x118] sm:$0xff]
        %v2866 = vld [vmem:[%s1340 + $0x120] sm:$0xff]
        %v2867 = vld [vmem:[%s1340 + $0x158] sm:$0xff]
        %v2868 = vld [vmem:[%s1340 + $0x160] sm:$0xff]
        %v2869 = vld [vmem:[%s1340 + $0x198] sm:$0xff]
        %v2870 = vld [vmem:[%s1340 + $0x1a0] sm:$0xff]
        %v2871 = vld [vmem:[%s1340 + $0x1d8] sm:$0xff]
        %v2872 = vld [vmem:[%s1340 + $0x1e0] sm:$0xff]
        %v2873 = vld [vmem:[%s1340 + $0x218] sm:$0xff]
        %v2874 = vld [vmem:[%s1340 + $0x220] sm:$0xff]
        %v2875 = vld [vmem:[%s1340 + $0x258] sm:$0xff]
        %v2876 = vld [vmem:[%s1340 + $0x260] sm:$0xff]
        %v2877 = vld [vmem:[%s1340 + $0x298] sm:$0xff]
        %v2878 = vld [vmem:[%s1340 + $0x2a0] sm:$0xff]
        %v2879 = vld [vmem:[%s1340 + $0x2d8] sm:$0xff]
        %v2880 = vld [vmem:[%s1340 + $0x2e0] sm:$0xff]
        %v2881 = vld [vmem:[%s1340 + $0x318] sm:$0xff]
        %v2882 = vld [vmem:[%s1340 + $0x320] sm:$0xff]
        %v2883 = vld [vmem:[%s1340 + $0x358] sm:$0xff]
        %v2884 = vld [vmem:[%s1340 + $0x360] sm:$0xff]
        %v2885 = vld [vmem:[%s1340 + $0x398] sm:$0xff]
        %v2886 = vld [vmem:[%s1340 + $0x3a0] sm:$0xff]
        %v2887 = vld [vmem:[%s1340 + $0x3d8] sm:$0xff]
        %v2888 = vld [vmem:[%s1340 + $0x3e0] sm:$0xff]
        %s2889 = scalar_lea.vmem %s2, 32
        %v2890 = vld [vmem:[%s2889] sm:$0xff]
        %v2892 = vsel %vm358, %v2857, 0
        %v2895 = vsel %vm358, %v2858, 0
        %v2898 = vsel %vm358, %v2859, 0
        %v2901 = vsel %vm358, %v2860, 0
        %v2904 = vsel %vm358, %v2861, 0
        %v2907 = vsel %vm358, %v2862, 0
        %v2910 = vsel %vm358, %v2863, 0
        %v2913 = vsel %vm358, %v2864, 0
        %v2916 = vsel %vm358, %v2865, 0
        %v2919 = vsel %vm358, %v2866, 0
        %v2922 = vsel %vm358, %v2867, 0
        %v2925 = vsel %vm358, %v2868, 0
        %v2928 = vsel %vm358, %v2869, 0
        %v2931 = vsel %vm358, %v2870, 0
        %v2934 = vsel %vm358, %v2871, 0
        %v2937 = vsel %vm358, %v2872, 0
        %v2940 = vsel %vm358, %v2873, 0
        %v2943 = vsel %vm358, %v2874, 0
        %v2946 = vsel %vm358, %v2875, 0
        %v2949 = vsel %vm358, %v2876, 0
        %v2952 = vsel %vm358, %v2877, 0
        %v2955 = vsel %vm358, %v2878, 0
        %v2958 = vsel %vm358, %v2879, 0
        %v2961 = vsel %vm358, %v2880, 0
        %v2964 = vsel %vm358, %v2881, 0
        %v2967 = vsel %vm358, %v2882, 0
        %v2970 = vsel %vm358, %v2883, 0
        %v2973 = vsel %vm358, %v2884, 0
        %v2976 = vsel %vm358, %v2885, 0
        %v2979 = vsel %vm358, %v2886, 0
        %v2982 = vsel %vm358, %v2887, 0
        %v2985 = vsel %vm358, %v2888, 0
        %2987 = vmatprep.subr.mxu0 0.0
        %2988 = vmatpush1.msra.mxu0 %v2890
        %2989 = vmatprep.subr.mxu0 0.0
        %2990 = vmatpush1.msra.mxu0 0.0
        %2991 = vmatprep.subr.mxu0 0.0
        %2992 = vmatpush1.msra.mxu0 0.0
        %2993 = vmatprep.subr.mxu0 0.0
        %2994 = vmatpush1.msra.mxu0 0.0
        %2995 = vmatprep.subr.mxu0 0.0
        %2996 = vmatpush1.msra.mxu0 0.0
        %2997 = vmatprep.subr.mxu0 0.0
        %2998 = vmatpush1.msra.mxu0 0.0
        %2999 = vmatprep.subr.mxu0 0.0
        %3000 = vmatpush1.msra.mxu0 0.0
        %3001 = vmatprep.subr.mxu0 0.0
        %3002 = vmatpush1.msra.mxu0 0.0
        %3003 = vmatprep.subr.mxu0 0.0
        %3004 = vmatpush1.msra.mxu0 0.0
        %3005 = vmatprep.subr.mxu0 0.0
        %3006 = vmatpush1.msra.mxu0 0.0
        %3007 = vmatprep.subr.mxu0 0.0
        %3008 = vmatpush1.msra.mxu0 0.0
        %3009 = vmatprep.subr.mxu0 0.0
        %3010 = vmatpush1.msra.mxu0 0.0
        %3011 = vmatprep.subr.mxu0 0.0
        %3012 = vmatpush1.msra.mxu0 0.0
        %3013 = vmatprep.subr.mxu0 0.0
        %3014 = vmatpush1.msra.mxu0 0.0
        %3015 = vmatprep.subr.mxu0 0.0
        %3016 = vmatpush1.msra.mxu0 0.0
        %3017 = vmatprep.subr.mxu0 0.0
        %3018 = vmatpush1.msra.mxu0 0.0
        %3019 = vmatprep.subr.mxu0 0.0
        %3020 = vmatpush1.msra.mxu0 0.0
        %3021 = vmatprep.subr.mxu0 0.0
        %3022 = vmatpush1.msra.mxu0 0.0
        %3023 = vmatprep.subr.mxu0 0.0
        %3024 = vmatpush1.msra.mxu0 0.0
        %3025 = vmatprep.subr.mxu0 0.0
        %3026 = vmatpush1.msra.mxu0 0.0
        %3027 = vmatprep.subr.mxu0 0.0
        %3028 = vmatpush1.msra.mxu0 0.0
        %3029 = vmatprep.subr.mxu0 0.0
        %3030 = vmatpush1.msra.mxu0 0.0
        %3031 = vmatprep.subr.mxu0 0.0
        %3032 = vmatpush1.msra.mxu0 0.0
        %3033 = vmatprep.subr.mxu0 0.0
        %3034 = vmatpush1.msra.mxu0 0.0
        %3035 = vmatprep.subr.mxu0 0.0
        %3036 = vmatpush1.msra.mxu0 0.0
        %3037 = vmatprep.subr.mxu0 0.0
        %3038 = vmatpush1.msra.mxu0 0.0
        %3039 = vmatprep.subr.mxu0 0.0
        %3040 = vmatpush1.msra.mxu0 0.0
        %3041 = vmatprep.subr.mxu0 0.0
        %3042 = vmatpush1.msra.mxu0 0.0
        %3043 = vmatprep.subr.mxu0 0.0
        %3044 = vmatpush1.msra.mxu0 0.0
        %3045 = vmatprep.subr.mxu0 0.0
        %3046 = vmatpush1.msra.mxu0 0.0
        %3047 = vmatprep.subr.mxu0 0.0
        %3048 = vmatpush1.msra.mxu0 0.0
        %3049 = vmatprep.subr.mxu0 0.0
        %3050 = vmatpush1.msra.mxu0 0.0
        %3051 = vmatprep.mubr.f32.mxu0 0.0
        %3052 = vmatmul.mubr.f32.gmra.mrb[0].mxu0 %v2892
        %v3053 = vpop.f32.mrb[0].mxu0
        %v3054 = vadd.f32 0.0, %v3053
        %v3055 = vpop.f32.mrb[0].mxu0
        %3056 = vmatprep.mubr.f32.mxu0 0.0
        %3057 = vmatmul.mubr.f32.gmra.mrb[0].mxu0 %v2895
        %v3058 = vpop.f32.mrb[0].mxu0
        %v3059 = vadd.f32 0.0, %v3058
        %v3060 = vpop.f32.mrb[0].mxu0
        %3061 = vmatprep.mubr.f32.mxu0 0.0
        %3062 = vmatmul.mubr.f32.gmra.mrb[0].mxu0 %v2898
        %v3063 = vpop.f32.mrb[0].mxu0
        %v3064 = vadd.f32 0.0, %v3063
        %v3065 = vpop.f32.mrb[0].mxu0
        %3066 = vmatprep.mubr.f32.mxu0 0.0
        %3067 = vmatmul.mubr.f32.gmra.mrb[0].mxu0 %v2901
        %v3068 = vpop.f32.mrb[0].mxu0
        %v3069 = vadd.f32 0.0, %v3068
        %v3070 = vpop.f32.mrb[0].mxu0
        %3071 = vmatprep.mubr.f32.mxu0 0.0
        %3072 = vmatmul.mubr.f32.gmra.mrb[0].mxu0 %v2904
        %v3073 = vpop.f32.mrb[0].mxu0
        %v3074 = vadd.f32 0.0, %v3073
        %v3075 = vpop.f32.mrb[0].mxu0
        %3076 = vmatprep.mubr.f32.mxu0 0.0
        %3077 = vmatmul.mubr.f32.gmra.mrb[0].mxu0 %v2907
        %v3078 = vpop.f32.mrb[0].mxu0
        %v3079 = vadd.f32 0.0, %v3078
        %v3080 = vpop.f32.mrb[0].mxu0
        %3081 = vmatprep.mubr.f32.mxu0 0.0
        %3082 = vmatmul.mubr.f32.gmra.mrb[0].mxu0 %v2910
        %v3083 = vpop.f32.mrb[0].mxu0
        %v3084 = vadd.f32 0.0, %v3083
        %v3085 = vpop.f32.mrb[0].mxu0
        %3086 = vmatprep.mubr.f32.mxu0 0.0
        %3087 = vmatmul.mubr.f32.gmra.mrb[0].mxu0 %v2913
        %v3088 = vpop.f32.mrb[0].mxu0
        %v3089 = vadd.f32 0.0, %v3088
        %v3090 = vpop.f32.mrb[0].mxu0
        %3091 = vmatprep.mubr.f32.mxu0 0.0
        %3092 = vmatmul.mubr.f32.gmra.mrb[0].mxu0 %v2916
        %v3093 = vpop.f32.mrb[0].mxu0
        %v3094 = vadd.f32 0.0, %v3093
        %v3095 = vpop.f32.mrb[0].mxu0
        %3096 = vmatprep.mubr.f32.mxu0 0.0
        %3097 = vmatmul.mubr.f32.gmra.mrb[0].mxu0 %v2919
        %v3098 = vpop.f32.mrb[0].mxu0
        %v3099 = vadd.f32 0.0, %v3098
        %v3100 = vpop.f32.mrb[0].mxu0
        %3101 = vmatprep.mubr.f32.mxu0 0.0
        %3102 = vmatmul.mubr.f32.gmra.mrb[0].mxu0 %v2922
        %v3103 = vpop.f32.mrb[0].mxu0
        %v3104 = vadd.f32 0.0, %v3103
        %v3105 = vpop.f32.mrb[0].mxu0
        %3106 = vmatprep.mubr.f32.mxu0 0.0
        %3107 = vmatmul.mubr.f32.gmra.mrb[0].mxu0 %v2925
        %v3108 = vpop.f32.mrb[0].mxu0
        %v3109 = vadd.f32 0.0, %v3108
        %v3110 = vpop.f32.mrb[0].mxu0
        %3111 = vmatprep.mubr.f32.mxu0 0.0
        %3112 = vmatmul.mubr.f32.gmra.mrb[0].mxu0 %v2928
        %v3113 = vpop.f32.mrb[0].mxu0
        %v3114 = vadd.f32 0.0, %v3113
        %v3115 = vpop.f32.mrb[0].mxu0
        %3116 = vmatprep.mubr.f32.mxu0 0.0
        %3117 = vmatmul.mubr.f32.gmra.mrb[0].mxu0 %v2931
        %v3118 = vpop.f32.mrb[0].mxu0
        %v3119 = vadd.f32 0.0, %v3118
        %v3120 = vpop.f32.mrb[0].mxu0
        %3121 = vmatprep.mubr.f32.mxu0 0.0
        %3122 = vmatmul.mubr.f32.gmra.mrb[0].mxu0 %v2934
        %v3123 = vpop.f32.mrb[0].mxu0
        %v3124 = vadd.f32 0.0, %v3123
        %v3125 = vpop.f32.mrb[0].mxu0
        %3126 = vmatprep.mubr.f32.mxu0 0.0
        %3127 = vmatmul.mubr.f32.gmra.mrb[0].mxu0 %v2937
        %v3128 = vpop.f32.mrb[0].mxu0
        %v3129 = vadd.f32 0.0, %v3128
        %v3130 = vpop.f32.mrb[0].mxu0
        %3131 = vmatprep.mubr.f32.mxu0 0.0
        %3132 = vmatmul.mubr.f32.gmra.mrb[0].mxu0 %v2940
        %v3133 = vpop.f32.mrb[0].mxu0
        %v3134 = vadd.f32 0.0, %v3133
        %v3135 = vpop.f32.mrb[0].mxu0
        %3136 = vmatprep.mubr.f32.mxu0 0.0
        %3137 = vmatmul.mubr.f32.gmra.mrb[0].mxu0 %v2943
        %v3138 = vpop.f32.mrb[0].mxu0
        %v3139 = vadd.f32 0.0, %v3138
        %v3140 = vpop.f32.mrb[0].mxu0
        %3141 = vmatprep.mubr.f32.mxu0 0.0
        %3142 = vmatmul.mubr.f32.gmra.mrb[0].mxu0 %v2946
        %v3143 = vpop.f32.mrb[0].mxu0
        %v3144 = vadd.f32 0.0, %v3143
        %v3145 = vpop.f32.mrb[0].mxu0
        %3146 = vmatprep.mubr.f32.mxu0 0.0
        %3147 = vmatmul.mubr.f32.gmra.mrb[0].mxu0 %v2949
        %v3148 = vpop.f32.mrb[0].mxu0
        %v3149 = vadd.f32 0.0, %v3148
        %v3150 = vpop.f32.mrb[0].mxu0
        %3151 = vmatprep.mubr.f32.mxu0 0.0
        %3152 = vmatmul.mubr.f32.gmra.mrb[0].mxu0 %v2952
        %v3153 = vpop.f32.mrb[0].mxu0
        %v3154 = vadd.f32 0.0, %v3153
        %v3155 = vpop.f32.mrb[0].mxu0
        %3156 = vmatprep.mubr.f32.mxu0 0.0
        %3157 = vmatmul.mubr.f32.gmra.mrb[0].mxu0 %v2955
        %v3158 = vpop.f32.mrb[0].mxu0
        %v3159 = vadd.f32 0.0, %v3158
        %v3160 = vpop.f32.mrb[0].mxu0
        %3161 = vmatprep.mubr.f32.mxu0 0.0
        %3162 = vmatmul.mubr.f32.gmra.mrb[0].mxu0 %v2958
        %v3163 = vpop.f32.mrb[0].mxu0
        %v3164 = vadd.f32 0.0, %v3163
        %v3165 = vpop.f32.mrb[0].mxu0
        %3166 = vmatprep.mubr.f32.mxu0 0.0
        %3167 = vmatmul.mubr.f32.gmra.mrb[0].mxu0 %v2961
        %v3168 = vpop.f32.mrb[0].mxu0
        %v3169 = vadd.f32 0.0, %v3168
        %v3170 = vpop.f32.mrb[0].mxu0
        %3171 = vmatprep.mubr.f32.mxu0 0.0
        %3172 = vmatmul.mubr.f32.gmra.mrb[0].mxu0 %v2964
        %v3173 = vpop.f32.mrb[0].mxu0
        %v3174 = vadd.f32 0.0, %v3173
        %v3175 = vpop.f32.mrb[0].mxu0
        %3176 = vmatprep.mubr.f32.mxu0 0.0
        %3177 = vmatmul.mubr.f32.gmra.mrb[0].mxu0 %v2967
        %v3178 = vpop.f32.mrb[0].mxu0
        %v3179 = vadd.f32 0.0, %v3178
        %v3180 = vpop.f32.mrb[0].mxu0
        %3181 = vmatprep.mubr.f32.mxu0 0.0
        %3182 = vmatmul.mubr.f32.gmra.mrb[0].mxu0 %v2970
        %v3183 = vpop.f32.mrb[0].mxu0
        %v3184 = vadd.f32 0.0, %v3183
        %v3185 = vpop.f32.mrb[0].mxu0
        %3186 = vmatprep.mubr.f32.mxu0 0.0
        %3187 = vmatmul.mubr.f32.gmra.mrb[0].mxu0 %v2973
        %v3188 = vpop.f32.mrb[0].mxu0
        %v3189 = vadd.f32 0.0, %v3188
        %v3190 = vpop.f32.mrb[0].mxu0
        %3191 = vmatprep.mubr.f32.mxu0 0.0
        %3192 = vmatmul.mubr.f32.gmra.mrb[0].mxu0 %v2976
        %v3193 = vpop.f32.mrb[0].mxu0
        %v3194 = vadd.f32 0.0, %v3193
        %v3195 = vpop.f32.mrb[0].mxu0
        %3196 = vmatprep.mubr.f32.mxu0 0.0
        %3197 = vmatmul.mubr.f32.gmra.mrb[0].mxu0 %v2979
        %v3198 = vpop.f32.mrb[0].mxu0
        %v3199 = vadd.f32 0.0, %v3198
        %v3200 = vpop.f32.mrb[0].mxu0
        %3201 = vmatprep.mubr.f32.mxu0 0.0
        %3202 = vmatmul.mubr.f32.gmra.mrb[0].mxu0 %v2982
        %v3203 = vpop.f32.mrb[0].mxu0
        %v3204 = vadd.f32 0.0, %v3203
        %v3205 = vpop.f32.mrb[0].mxu0
        %3206 = vmatprep.mubr.f32.mxu0 0.0
        %3207 = vmatmul.mubr.f32.gmra.mrb[0].mxu0 %v2985
        %v3208 = vpop.f32.mrb[0].mxu0
        %v3209 = vadd.f32 0.0, %v3208
        %v3210 = vpop.f32.mrb[0].mxu0
        %3211 = vdwg.mxu0
        %v3212 = vadd.f32 %v2825, %v3054
        %v3213 = vadd.f32 %v2826, %v3059
        %v3214 = vadd.f32 %v2827, %v3064
        %v3215 = vadd.f32 %v2828, %v3069
        %v3216 = vadd.f32 %v2829, %v3074
        %v3217 = vadd.f32 %v2830, %v3079
        %v3218 = vadd.f32 %v2831, %v3084
        %v3219 = vadd.f32 %v2832, %v3089
        %v3220 = vadd.f32 %v2833, %v3094
        %v3221 = vadd.f32 %v2834, %v3099
        %v3222 = vadd.f32 %v2835, %v3104
        %v3223 = vadd.f32 %v2836, %v3109
        %v3224 = vadd.f32 %v2837, %v3114
        %v3225 = vadd.f32 %v2838, %v3119
        %v3226 = vadd.f32 %v2839, %v3124
        %v3227 = vadd.f32 %v2840, %v3129
        %v3228 = vadd.f32 %v2841, %v3134
        %v3229 = vadd.f32 %v2842, %v3139
        %v3230 = vadd.f32 %v2843, %v3144
        %v3231 = vadd.f32 %v2844, %v3149
        %v3232 = vadd.f32 %v2845, %v3154
        %v3233 = vadd.f32 %v2846, %v3159
        %v3234 = vadd.f32 %v2847, %v3164
        %v3235 = vadd.f32 %v2848, %v3169
        %v3236 = vadd.f32 %v2849, %v3174
        %v3237 = vadd.f32 %v2850, %v3179
        %v3238 = vadd.f32 %v2851, %v3184
        %v3239 = vadd.f32 %v2852, %v3189
        %v3240 = vadd.f32 %v2853, %v3194
        %v3241 = vadd.f32 %v2854, %v3199
        %v3242 = vadd.f32 %v2855, %v3204
        %v3243 = vadd.f32 %v2856, %v3209
        %v3244 = vld [vmem:[%s1340 + $0x24] sm:$0xff]
        %v3245 = vld [vmem:[%s1340 + $0x2c] sm:$0xff]
        %v3246 = vld [vmem:[%s1340 + $0x64] sm:$0xff]
        %v3247 = vld [vmem:[%s1340 + $0x6c] sm:$0xff]
        %v3248 = vld [vmem:[%s1340 + $0xa4] sm:$0xff]
        %v3249 = vld [vmem:[%s1340 + $0xac] sm:$0xff]
        %v3250 = vld [vmem:[%s1340 + $0xe4] sm:$0xff]
        %v3251 = vld [vmem:[%s1340 + $0xec] sm:$0xff]
        %v3252 = vld [vmem:[%s1340 + $0x124] sm:$0xff]
        %v3253 = vld [vmem:[%s1340 + $0x12c] sm:$0xff]
        %v3254 = vld [vmem:[%s1340 + $0x164] sm:$0xff]
        %v3255 = vld [vmem:[%s1340 + $0x16c] sm:$0xff]
        %v3256 = vld [vmem:[%s1340 + $0x1a4] sm:$0xff]
        %v3257 = vld [vmem:[%s1340 + $0x1ac] sm:$0xff]
        %v3258 = vld [vmem:[%s1340 + $0x1e4] sm:$0xff]
        %v3259 = vld [vmem:[%s1340 + $0x1ec] sm:$0xff]
        %v3260 = vld [vmem:[%s1340 + $0x224] sm:$0xff]
        %v3261 = vld [vmem:[%s1340 + $0x22c] sm:$0xff]
        %v3262 = vld [vmem:[%s1340 + $0x264] sm:$0xff]
        %v3263 = vld [vmem:[%s1340 + $0x26c] sm:$0xff]
        %v3264 = vld [vmem:[%s1340 + $0x2a4] sm:$0xff]
        %v3265 = vld [vmem:[%s1340 + $0x2ac] sm:$0xff]
        %v3266 = vld [vmem:[%s1340 + $0x2e4] sm:$0xff]
        %v3267 = vld [vmem:[%s1340 + $0x2ec] sm:$0xff]
        %v3268 = vld [vmem:[%s1340 + $0x324] sm:$0xff]
        %v3269 = vld [vmem:[%s1340 + $0x32c] sm:$0xff]
        %v3270 = vld [vmem:[%s1340 + $0x364] sm:$0xff]
        %v3271 = vld [vmem:[%s1340 + $0x36c] sm:$0xff]
        %v3272 = vld [vmem:[%s1340 + $0x3a4] sm:$0xff]
        %v3273 = vld [vmem:[%s1340 + $0x3ac] sm:$0xff]
        %v3274 = vld [vmem:[%s1340 + $0x3e4] sm:$0xff]
        %v3275 = vld [vmem:[%s1340 + $0x3ec] sm:$0xff]
        %s3276 = scalar_lea.vmem %s2, 40
        %v3277 = vld [vmem:[%s3276] sm:$0xff]
        %v3279 = vsel %vm358, %v3244, 0
        %v3282 = vsel %vm358, %v3245, 0
        %v3285 = vsel %vm358, %v3246, 0
        %v3288 = vsel %vm358, %v3247, 0
        %v3291 = vsel %vm358, %v3248, 0
        %v3294 = vsel %vm358, %v3249, 0
        %v3297 = vsel %vm358, %v3250, 0
        %v3300 = vsel %vm358, %v3251, 0
        %v3303 = vsel %vm358, %v3252, 0
        %v3306 = vsel %vm358, %v3253, 0
        %v3309 = vsel %vm358, %v3254, 0
        %v3312 = vsel %vm358, %v3255, 0
        %v3315 = vsel %vm358, %v3256, 0
        %v3318 = vsel %vm358, %v3257, 0
        %v3321 = vsel %vm358, %v3258, 0
        %v3324 = vsel %vm358, %v3259, 0
        %v3327 = vsel %vm358, %v3260, 0
        %v3330 = vsel %vm358, %v3261, 0
        %v3333 = vsel %vm358, %v3262, 0
        %v3336 = vsel %vm358, %v3263, 0
        %v3339 = vsel %vm358, %v3264, 0
        %v3342 = vsel %vm358, %v3265, 0
        %v3345 = vsel %vm358, %v3266, 0
        %v3348 = vsel %vm358, %v3267, 0
        %v3351 = vsel %vm358, %v3268, 0
        %v3354 = vsel %vm358, %v3269, 0
        %v3357 = vsel %vm358, %v3270, 0
        %v3360 = vsel %vm358, %v3271, 0
        %v3363 = vsel %vm358, %v3272, 0
        %v3366 = vsel %vm358, %v3273, 0
        %v3369 = vsel %vm358, %v3274, 0
        %v3372 = vsel %vm358, %v3275, 0
        %3374 = vmatprep.subr.mxu0 0.0
        %3375 = vmatpush1.msra.mxu0 %v3277
        %3376 = vmatprep.subr.mxu0 0.0
        %3377 = vmatpush1.msra.mxu0 0.0
        %3378 = vmatprep.subr.mxu0 0.0
        %3379 = vmatpush1.msra.mxu0 0.0
        %3380 = vmatprep.subr.mxu0 0.0
        %3381 = vmatpush1.msra.mxu0 0.0
        %3382 = vmatprep.subr.mxu0 0.0
        %3383 = vmatpush1.msra.mxu0 0.0
        %3384 = vmatprep.subr.mxu0 0.0
        %3385 = vmatpush1.msra.mxu0 0.0
        %3386 = vmatprep.subr.mxu0 0.0
        %3387 = vmatpush1.msra.mxu0 0.0
        %3388 = vmatprep.subr.mxu0 0.0
        %3389 = vmatpush1.msra.mxu0 0.0
        %3390 = vmatprep.subr.mxu0 0.0
        %3391 = vmatpush1.msra.mxu0 0.0
        %3392 = vmatprep.subr.mxu0 0.0
        %3393 = vmatpush1.msra.mxu0 0.0
        %3394 = vmatprep.subr.mxu0 0.0
        %3395 = vmatpush1.msra.mxu0 0.0
        %3396 = vmatprep.subr.mxu0 0.0
        %3397 = vmatpush1.msra.mxu0 0.0
        %3398 = vmatprep.subr.mxu0 0.0
        %3399 = vmatpush1.msra.mxu0 0.0
        %3400 = vmatprep.subr.mxu0 0.0
        %3401 = vmatpush1.msra.mxu0 0.0
        %3402 = vmatprep.subr.mxu0 0.0
        %3403 = vmatpush1.msra.mxu0 0.0
        %3404 = vmatprep.subr.mxu0 0.0
        %3405 = vmatpush1.msra.mxu0 0.0
        %3406 = vmatprep.subr.mxu0 0.0
        %3407 = vmatpush1.msra.mxu0 0.0
        %3408 = vmatprep.subr.mxu0 0.0
        %3409 = vmatpush1.msra.mxu0 0.0
        %3410 = vmatprep.subr.mxu0 0.0
        %3411 = vmatpush1.msra.mxu0 0.0
        %3412 = vmatprep.subr.mxu0 0.0
        %3413 = vmatpush1.msra.mxu0 0.0
        %3414 = vmatprep.subr.mxu0 0.0
        %3415 = vmatpush1.msra.mxu0 0.0
        %3416 = vmatprep.subr.mxu0 0.0
        %3417 = vmatpush1.msra.mxu0 0.0
        %3418 = vmatprep.subr.mxu0 0.0
        %3419 = vmatpush1.msra.mxu0 0.0
        %3420 = vmatprep.subr.mxu0 0.0
        %3421 = vmatpush1.msra.mxu0 0.0
        %3422 = vmatprep.subr.mxu0 0.0
        %3423 = vmatpush1.msra.mxu0 0.0
        %3424 = vmatprep.subr.mxu0 0.0
        %3425 = vmatpush1.msra.mxu0 0.0
        %3426 = vmatprep.subr.mxu0 0.0
        %3427 = vmatpush1.msra.mxu0 0.0
        %3428 = vmatprep.subr.mxu0 0.0
        %3429 = vmatpush1.msra.mxu0 0.0
        %3430 = vmatprep.subr.mxu0 0.0
        %3431 = vmatpush1.msra.mxu0 0.0
        %3432 = vmatprep.subr.mxu0 0.0
        %3433 = vmatpush1.msra.mxu0 0.0
        %3434 = vmatprep.subr.mxu0 0.0
        %3435 = vmatpush1.msra.mxu0 0.0
        %3436 = vmatprep.subr.mxu0 0.0
        %3437 = vmatpush1.msra.mxu0 0.0
        %3438 = vmatprep.mubr.f32.mxu0 0.0
        %3439 = vmatmul.mubr.f32.gmra.mrb[0].mxu0 %v3279
        %v3440 = vpop.f32.mrb[0].mxu0
        %v3441 = vadd.f32 0.0, %v3440
        %v3442 = vpop.f32.mrb[0].mxu0
        %3443 = vmatprep.mubr.f32.mxu0 0.0
        %3444 = vmatmul.mubr.f32.gmra.mrb[0].mxu0 %v3282
        %v3445 = vpop.f32.mrb[0].mxu0
        %v3446 = vadd.f32 0.0, %v3445
        %v3447 = vpop.f32.mrb[0].mxu0
        %3448 = vmatprep.mubr.f32.mxu0 0.0
        %3449 = vmatmul.mubr.f32.gmra.mrb[0].mxu0 %v3285
        %v3450 = vpop.f32.mrb[0].mxu0
        %v3451 = vadd.f32 0.0, %v3450
        %v3452 = vpop.f32.mrb[0].mxu0
        %3453 = vmatprep.mubr.f32.mxu0 0.0
        %3454 = vmatmul.mubr.f32.gmra.mrb[0].mxu0 %v3288
        %v3455 = vpop.f32.mrb[0].mxu0
        %v3456 = vadd.f32 0.0, %v3455
        %v3457 = vpop.f32.mrb[0].mxu0
        %3458 = vmatprep.mubr.f32.mxu0 0.0
        %3459 = vmatmul.mubr.f32.gmra.mrb[0].mxu0 %v3291
        %v3460 = vpop.f32.mrb[0].mxu0
        %v3461 = vadd.f32 0.0, %v3460
        %v3462 = vpop.f32.mrb[0].mxu0
        %3463 = vmatprep.mubr.f32.mxu0 0.0
        %3464 = vmatmul.mubr.f32.gmra.mrb[0].mxu0 %v3294
        %v3465 = vpop.f32.mrb[0].mxu0
        %v3466 = vadd.f32 0.0, %v3465
        %v3467 = vpop.f32.mrb[0].mxu0
        %3468 = vmatprep.mubr.f32.mxu0 0.0
        %3469 = vmatmul.mubr.f32.gmra.mrb[0].mxu0 %v3297
        %v3470 = vpop.f32.mrb[0].mxu0
        %v3471 = vadd.f32 0.0, %v3470
        %v3472 = vpop.f32.mrb[0].mxu0
        %3473 = vmatprep.mubr.f32.mxu0 0.0
        %3474 = vmatmul.mubr.f32.gmra.mrb[0].mxu0 %v3300
        %v3475 = vpop.f32.mrb[0].mxu0
        %v3476 = vadd.f32 0.0, %v3475
        %v3477 = vpop.f32.mrb[0].mxu0
        %3478 = vmatprep.mubr.f32.mxu0 0.0
        %3479 = vmatmul.mubr.f32.gmra.mrb[0].mxu0 %v3303
        %v3480 = vpop.f32.mrb[0].mxu0
        %v3481 = vadd.f32 0.0, %v3480
        %v3482 = vpop.f32.mrb[0].mxu0
        %3483 = vmatprep.mubr.f32.mxu0 0.0
        %3484 = vmatmul.mubr.f32.gmra.mrb[0].mxu0 %v3306
        %v3485 = vpop.f32.mrb[0].mxu0
        %v3486 = vadd.f32 0.0, %v3485
        %v3487 = vpop.f32.mrb[0].mxu0
        %3488 = vmatprep.mubr.f32.mxu0 0.0
        %3489 = vmatmul.mubr.f32.gmra.mrb[0].mxu0 %v3309
        %v3490 = vpop.f32.mrb[0].mxu0
        %v3491 = vadd.f32 0.0, %v3490
        %v3492 = vpop.f32.mrb[0].mxu0
        %3493 = vmatprep.mubr.f32.mxu0 0.0
        %3494 = vmatmul.mubr.f32.gmra.mrb[0].mxu0 %v3312
        %v3495 = vpop.f32.mrb[0].mxu0
        %v3496 = vadd.f32 0.0, %v3495
        %v3497 = vpop.f32.mrb[0].mxu0
        %3498 = vmatprep.mubr.f32.mxu0 0.0
        %3499 = vmatmul.mubr.f32.gmra.mrb[0].mxu0 %v3315
        %v3500 = vpop.f32.mrb[0].mxu0
        %v3501 = vadd.f32 0.0, %v3500
        %v3502 = vpop.f32.mrb[0].mxu0
        %3503 = vmatprep.mubr.f32.mxu0 0.0
        %3504 = vmatmul.mubr.f32.gmra.mrb[0].mxu0 %v3318
        %v3505 = vpop.f32.mrb[0].mxu0
        %v3506 = vadd.f32 0.0, %v3505
        %v3507 = vpop.f32.mrb[0].mxu0
        %3508 = vmatprep.mubr.f32.mxu0 0.0
        %3509 = vmatmul.mubr.f32.gmra.mrb[0].mxu0 %v3321
        %v3510 = vpop.f32.mrb[0].mxu0
        %v3511 = vadd.f32 0.0, %v3510
        %v3512 = vpop.f32.mrb[0].mxu0
        %3513 = vmatprep.mubr.f32.mxu0 0.0
        %3514 = vmatmul.mubr.f32.gmra.mrb[0].mxu0 %v3324
        %v3515 = vpop.f32.mrb[0].mxu0
        %v3516 = vadd.f32 0.0, %v3515
        %v3517 = vpop.f32.mrb[0].mxu0
        %3518 = vmatprep.mubr.f32.mxu0 0.0
        %3519 = vmatmul.mubr.f32.gmra.mrb[0].mxu0 %v3327
        %v3520 = vpop.f32.mrb[0].mxu0
        %v3521 = vadd.f32 0.0, %v3520
        %v3522 = vpop.f32.mrb[0].mxu0
        %3523 = vmatprep.mubr.f32.mxu0 0.0
        %3524 = vmatmul.mubr.f32.gmra.mrb[0].mxu0 %v3330
        %v3525 = vpop.f32.mrb[0].mxu0
        %v3526 = vadd.f32 0.0, %v3525
        %v3527 = vpop.f32.mrb[0].mxu0
        %3528 = vmatprep.mubr.f32.mxu0 0.0
        %3529 = vmatmul.mubr.f32.gmra.mrb[0].mxu0 %v3333
        %v3530 = vpop.f32.mrb[0].mxu0
        %v3531 = vadd.f32 0.0, %v3530
        %v3532 = vpop.f32.mrb[0].mxu0
        %3533 = vmatprep.mubr.f32.mxu0 0.0
        %3534 = vmatmul.mubr.f32.gmra.mrb[0].mxu0 %v3336
        %v3535 = vpop.f32.mrb[0].mxu0
        %v3536 = vadd.f32 0.0, %v3535
        %v3537 = vpop.f32.mrb[0].mxu0
        %3538 = vmatprep.mubr.f32.mxu0 0.0
        %3539 = vmatmul.mubr.f32.gmra.mrb[0].mxu0 %v3339
        %v3540 = vpop.f32.mrb[0].mxu0
        %v3541 = vadd.f32 0.0, %v3540
        %v3542 = vpop.f32.mrb[0].mxu0
        %3543 = vmatprep.mubr.f32.mxu0 0.0
        %3544 = vmatmul.mubr.f32.gmra.mrb[0].mxu0 %v3342
        %v3545 = vpop.f32.mrb[0].mxu0
        %v3546 = vadd.f32 0.0, %v3545
        %v3547 = vpop.f32.mrb[0].mxu0
        %3548 = vmatprep.mubr.f32.mxu0 0.0
        %3549 = vmatmul.mubr.f32.gmra.mrb[0].mxu0 %v3345
        %v3550 = vpop.f32.mrb[0].mxu0
        %v3551 = vadd.f32 0.0, %v3550
        %v3552 = vpop.f32.mrb[0].mxu0
        %3553 = vmatprep.mubr.f32.mxu0 0.0
        %3554 = vmatmul.mubr.f32.gmra.mrb[0].mxu0 %v3348
        %v3555 = vpop.f32.mrb[0].mxu0
        %v3556 = vadd.f32 0.0, %v3555
        %v3557 = vpop.f32.mrb[0].mxu0
        %3558 = vmatprep.mubr.f32.mxu0 0.0
        %3559 = vmatmul.mubr.f32.gmra.mrb[0].mxu0 %v3351
        %v3560 = vpop.f32.mrb[0].mxu0
        %v3561 = vadd.f32 0.0, %v3560
        %v3562 = vpop.f32.mrb[0].mxu0
        %3563 = vmatprep.mubr.f32.mxu0 0.0
        %3564 = vmatmul.mubr.f32.gmra.mrb[0].mxu0 %v3354
        %v3565 = vpop.f32.mrb[0].mxu0
        %v3566 = vadd.f32 0.0, %v3565
        %v3567 = vpop.f32.mrb[0].mxu0
        %3568 = vmatprep.mubr.f32.mxu0 0.0
        %3569 = vmatmul.mubr.f32.gmra.mrb[0].mxu0 %v3357
        %v3570 = vpop.f32.mrb[0].mxu0
        %v3571 = vadd.f32 0.0, %v3570
        %v3572 = vpop.f32.mrb[0].mxu0
        %3573 = vmatprep.mubr.f32.mxu0 0.0
        %3574 = vmatmul.mubr.f32.gmra.mrb[0].mxu0 %v3360
        %v3575 = vpop.f32.mrb[0].mxu0
        %v3576 = vadd.f32 0.0, %v3575
        %v3577 = vpop.f32.mrb[0].mxu0
        %3578 = vmatprep.mubr.f32.mxu0 0.0
        %3579 = vmatmul.mubr.f32.gmra.mrb[0].mxu0 %v3363
        %v3580 = vpop.f32.mrb[0].mxu0
        %v3581 = vadd.f32 0.0, %v3580
        %v3582 = vpop.f32.mrb[0].mxu0
        %3583 = vmatprep.mubr.f32.mxu0 0.0
        %3584 = vmatmul.mubr.f32.gmra.mrb[0].mxu0 %v3366
        %v3585 = vpop.f32.mrb[0].mxu0
        %v3586 = vadd.f32 0.0, %v3585
        %v3587 = vpop.f32.mrb[0].mxu0
        %3588 = vmatprep.mubr.f32.mxu0 0.0
        %3589 = vmatmul.mubr.f32.gmra.mrb[0].mxu0 %v3369
        %v3590 = vpop.f32.mrb[0].mxu0
        %v3591 = vadd.f32 0.0, %v3590
        %v3592 = vpop.f32.mrb[0].mxu0
        %3593 = vmatprep.mubr.f32.mxu0 0.0
        %3594 = vmatmul.mubr.f32.gmra.mrb[0].mxu0 %v3372
        %v3595 = vpop.f32.mrb[0].mxu0
        %v3596 = vadd.f32 0.0, %v3595
        %v3597 = vpop.f32.mrb[0].mxu0
        %3598 = vdwg.mxu0
        %v3599 = vadd.f32 %v3212, %v3441
        %v3600 = vadd.f32 %v3213, %v3446
        %v3601 = vadd.f32 %v3214, %v3451
        %v3602 = vadd.f32 %v3215, %v3456
        %v3603 = vadd.f32 %v3216, %v3461
        %v3604 = vadd.f32 %v3217, %v3466
        %v3605 = vadd.f32 %v3218, %v3471
        %v3606 = vadd.f32 %v3219, %v3476
        %v3607 = vadd.f32 %v3220, %v3481
        %v3608 = vadd.f32 %v3221, %v3486
        %v3609 = vadd.f32 %v3222, %v3491
        %v3610 = vadd.f32 %v3223, %v3496
        %v3611 = vadd.f32 %v3224, %v3501
        %v3612 = vadd.f32 %v3225, %v3506
        %v3613 = vadd.f32 %v3226, %v3511
        %v3614 = vadd.f32 %v3227, %v3516
        %v3615 = vadd.f32 %v3228, %v3521
        %v3616 = vadd.f32 %v3229, %v3526
        %v3617 = vadd.f32 %v3230, %v3531
        %v3618 = vadd.f32 %v3231, %v3536
        %v3619 = vadd.f32 %v3232, %v3541
        %v3620 = vadd.f32 %v3233, %v3546
        %v3621 = vadd.f32 %v3234, %v3551
        %v3622 = vadd.f32 %v3235, %v3556
        %v3623 = vadd.f32 %v3236, %v3561
        %v3624 = vadd.f32 %v3237, %v3566
        %v3625 = vadd.f32 %v3238, %v3571
        %v3626 = vadd.f32 %v3239, %v3576
        %v3627 = vadd.f32 %v3240, %v3581
        %v3628 = vadd.f32 %v3241, %v3586
        %v3629 = vadd.f32 %v3242, %v3591
        %v3630 = vadd.f32 %v3243, %v3596
        %s3631 = scalar_lea.vmem [#allocation2], 2304
        %v3632 = vld [vmem:[%s3631 + $0xc] sm:$0xff]
        %v3633 = vld [vmem:[%s3631 + $0x14] sm:$0xff]
        %v3634 = vld [vmem:[%s3631 + $0x4c] sm:$0xff]
        %v3635 = vld [vmem:[%s3631 + $0x54] sm:$0xff]
        %v3636 = vld [vmem:[%s3631 + $0x8c] sm:$0xff]
        %v3637 = vld [vmem:[%s3631 + $0x94] sm:$0xff]
        %v3638 = vld [vmem:[%s3631 + $0xcc] sm:$0xff]
        %v3639 = vld [vmem:[%s3631 + $0xd4] sm:$0xff]
        %v3640 = vld [vmem:[%s3631 + $0x10c] sm:$0xff]
        %v3641 = vld [vmem:[%s3631 + $0x114] sm:$0xff]
        %v3642 = vld [vmem:[%s3631 + $0x14c] sm:$0xff]
        %v3643 = vld [vmem:[%s3631 + $0x154] sm:$0xff]
        %v3644 = vld [vmem:[%s3631 + $0x18c] sm:$0xff]
        %v3645 = vld [vmem:[%s3631 + $0x194] sm:$0xff]
        %v3646 = vld [vmem:[%s3631 + $0x1cc] sm:$0xff]
        %v3647 = vld [vmem:[%s3631 + $0x1d4] sm:$0xff]
        %v3648 = vld [vmem:[%s3631 + $0x20c] sm:$0xff]
        %v3649 = vld [vmem:[%s3631 + $0x214] sm:$0xff]
        %v3650 = vld [vmem:[%s3631 + $0x24c] sm:$0xff]
        %v3651 = vld [vmem:[%s3631 + $0x254] sm:$0xff]
        %v3652 = vld [vmem:[%s3631 + $0x28c] sm:$0xff]
        %v3653 = vld [vmem:[%s3631 + $0x294] sm:$0xff]
        %v3654 = vld [vmem:[%s3631 + $0x2cc] sm:$0xff]
        %v3655 = vld [vmem:[%s3631 + $0x2d4] sm:$0xff]
        %v3656 = vld [vmem:[%s3631 + $0x30c] sm:$0xff]
        %v3657 = vld [vmem:[%s3631 + $0x314] sm:$0xff]
        %v3658 = vld [vmem:[%s3631 + $0x34c] sm:$0xff]
        %v3659 = vld [vmem:[%s3631 + $0x354] sm:$0xff]
        %v3660 = vld [vmem:[%s3631 + $0x38c] sm:$0xff]
        %v3661 = vld [vmem:[%s3631 + $0x394] sm:$0xff]
        %v3662 = vld [vmem:[%s3631 + $0x3cc] sm:$0xff]
        %v3663 = vld [vmem:[%s3631 + $0x3d4] sm:$0xff]
        %s3664 = scalar_lea.vmem %s2, 48
        %v3665 = vld [vmem:[%s3664] sm:$0xff]
        %v3667 = vsel %vm358, %v3632, 0
        %v3670 = vsel %vm358, %v3633, 0
        %v3673 = vsel %vm358, %v3634, 0
        %v3676 = vsel %vm358, %v3635, 0
        %v3679 = vsel %vm358, %v3636, 0
        %v3682 = vsel %vm358, %v3637, 0
        %v3685 = vsel %vm358, %v3638, 0
        %v3688 = vsel %vm358, %v3639, 0
        %v3691 = vsel %vm358, %v3640, 0
        %v3694 = vsel %vm358, %v3641, 0
        %v3697 = vsel %vm358, %v3642, 0
        %v3700 = vsel %vm358, %v3643, 0
        %v3703 = vsel %vm358, %v3644, 0
        %v3706 = vsel %vm358, %v3645, 0
        %v3709 = vsel %vm358, %v3646, 0
        %v3712 = vsel %vm358, %v3647, 0
        %v3715 = vsel %vm358, %v3648, 0
        %v3718 = vsel %vm358, %v3649, 0
        %v3721 = vsel %vm358, %v3650, 0
        %v3724 = vsel %vm358, %v3651, 0
        %v3727 = vsel %vm358, %v3652, 0
        %v3730 = vsel %vm358, %v3653, 0
        %v3733 = vsel %vm358, %v3654, 0
        %v3736 = vsel %vm358, %v3655, 0
        %v3739 = vsel %vm358, %v3656, 0
        %v3742 = vsel %vm358, %v3657, 0
        %v3745 = vsel %vm358, %v3658, 0
        %v3748 = vsel %vm358, %v3659, 0
        %v3751 = vsel %vm358, %v3660, 0
        %v3754 = vsel %vm358, %v3661, 0
        %v3757 = vsel %vm358, %v3662, 0
        %v3760 = vsel %vm358, %v3663, 0
        %3762 = vmatprep.subr.mxu0 0.0
        %3763 = vmatpush1.msra.mxu0 %v3665
        %3764 = vmatprep.subr.mxu0 0.0
        %3765 = vmatpush1.msra.mxu0 0.0
        %3766 = vmatprep.subr.mxu0 0.0
        %3767 = vmatpush1.msra.mxu0 0.0
        %3768 = vmatprep.subr.mxu0 0.0
        %3769 = vmatpush1.msra.mxu0 0.0
        %3770 = vmatprep.subr.mxu0 0.0
        %3771 = vmatpush1.msra.mxu0 0.0
        %3772 = vmatprep.subr.mxu0 0.0
        %3773 = vmatpush1.msra.mxu0 0.0
        %3774 = vmatprep.subr.mxu0 0.0
        %3775 = vmatpush1.msra.mxu0 0.0
        %3776 = vmatprep.subr.mxu0 0.0
        %3777 = vmatpush1.msra.mxu0 0.0
        %3778 = vmatprep.subr.mxu0 0.0
        %3779 = vmatpush1.msra.mxu0 0.0
        %3780 = vmatprep.subr.mxu0 0.0
        %3781 = vmatpush1.msra.mxu0 0.0
        %3782 = vmatprep.subr.mxu0 0.0
        %3783 = vmatpush1.msra.mxu0 0.0
        %3784 = vmatprep.subr.mxu0 0.0
        %3785 = vmatpush1.msra.mxu0 0.0
        %3786 = vmatprep.subr.mxu0 0.0
        %3787 = vmatpush1.msra.mxu0 0.0
        %3788 = vmatprep.subr.mxu0 0.0
        %3789 = vmatpush1.msra.mxu0 0.0
        %3790 = vmatprep.subr.mxu0 0.0
        %3791 = vmatpush1.msra.mxu0 0.0
        %3792 = vmatprep.subr.mxu0 0.0
        %3793 = vmatpush1.msra.mxu0 0.0
        %3794 = vmatprep.subr.mxu0 0.0
        %3795 = vmatpush1.msra.mxu0 0.0
        %3796 = vmatprep.subr.mxu0 0.0
        %3797 = vmatpush1.msra.mxu0 0.0
        %3798 = vmatprep.subr.mxu0 0.0
        %3799 = vmatpush1.msra.mxu0 0.0
        %3800 = vmatprep.subr.mxu0 0.0
        %3801 = vmatpush1.msra.mxu0 0.0
        %3802 = vmatprep.subr.mxu0 0.0
        %3803 = vmatpush1.msra.mxu0 0.0
        %3804 = vmatprep.subr.mxu0 0.0
        %3805 = vmatpush1.msra.mxu0 0.0
        %3806 = vmatprep.subr.mxu0 0.0
        %3807 = vmatpush1.msra.mxu0 0.0
        %3808 = vmatprep.subr.mxu0 0.0
        %3809 = vmatpush1.msra.mxu0 0.0
        %3810 = vmatprep.subr.mxu0 0.0
        %3811 = vmatpush1.msra.mxu0 0.0
        %3812 = vmatprep.subr.mxu0 0.0
        %3813 = vmatpush1.msra.mxu0 0.0
        %3814 = vmatprep.subr.mxu0 0.0
        %3815 = vmatpush1.msra.mxu0 0.0
        %3816 = vmatprep.subr.mxu0 0.0
        %3817 = vmatpush1.msra.mxu0 0.0
        %3818 = vmatprep.subr.mxu0 0.0
        %3819 = vmatpush1.msra.mxu0 0.0
        %3820 = vmatprep.subr.mxu0 0.0
        %3821 = vmatpush1.msra.mxu0 0.0
        %3822 = vmatprep.subr.mxu0 0.0
        %3823 = vmatpush1.msra.mxu0 0.0
        %3824 = vmatprep.subr.mxu0 0.0
        %3825 = vmatpush1.msra.mxu0 0.0
        %3826 = vmatprep.mubr.f32.mxu0 0.0
        %3827 = vmatmul.mubr.f32.gmra.mrb[0].mxu0 %v3667
        %v3828 = vpop.f32.mrb[0].mxu0
        %v3829 = vadd.f32 0.0, %v3828
        %v3830 = vpop.f32.mrb[0].mxu0
        %3831 = vmatprep.mubr.f32.mxu0 0.0
        %3832 = vmatmul.mubr.f32.gmra.mrb[0].mxu0 %v3670
        %v3833 = vpop.f32.mrb[0].mxu0
        %v3834 = vadd.f32 0.0, %v3833
        %v3835 = vpop.f32.mrb[0].mxu0
        %3836 = vmatprep.mubr.f32.mxu0 0.0
        %3837 = vmatmul.mubr.f32.gmra.mrb[0].mxu0 %v3673
        %v3838 = vpop.f32.mrb[0].mxu0
        %v3839 = vadd.f32 0.0, %v3838
        %v3840 = vpop.f32.mrb[0].mxu0
        %3841 = vmatprep.mubr.f32.mxu0 0.0
        %3842 = vmatmul.mubr.f32.gmra.mrb[0].mxu0 %v3676
        %v3843 = vpop.f32.mrb[0].mxu0
        %v3844 = vadd.f32 0.0, %v3843
        %v3845 = vpop.f32.mrb[0].mxu0
        %3846 = vmatprep.mubr.f32.mxu0 0.0
        %3847 = vmatmul.mubr.f32.gmra.mrb[0].mxu0 %v3679
        %v3848 = vpop.f32.mrb[0].mxu0
        %v3849 = vadd.f32 0.0, %v3848
        %v3850 = vpop.f32.mrb[0].mxu0
        %3851 = vmatprep.mubr.f32.mxu0 0.0
        %3852 = vmatmul.mubr.f32.gmra.mrb[0].mxu0 %v3682
        %v3853 = vpop.f32.mrb[0].mxu0
        %v3854 = vadd.f32 0.0, %v3853
        %v3855 = vpop.f32.mrb[0].mxu0
        %3856 = vmatprep.mubr.f32.mxu0 0.0
        %3857 = vmatmul.mubr.f32.gmra.mrb[0].mxu0 %v3685
        %v3858 = vpop.f32.mrb[0].mxu0
        %v3859 = vadd.f32 0.0, %v3858
        %v3860 = vpop.f32.mrb[0].mxu0
        %3861 = vmatprep.mubr.f32.mxu0 0.0
        %3862 = vmatmul.mubr.f32.gmra.mrb[0].mxu0 %v3688
        %v3863 = vpop.f32.mrb[0].mxu0
        %v3864 = vadd.f32 0.0, %v3863
        %v3865 = vpop.f32.mrb[0].mxu0
        %3866 = vmatprep.mubr.f32.mxu0 0.0
        %3867 = vmatmul.mubr.f32.gmra.mrb[0].mxu0 %v3691
        %v3868 = vpop.f32.mrb[0].mxu0
        %v3869 = vadd.f32 0.0, %v3868
        %v3870 = vpop.f32.mrb[0].mxu0
        %3871 = vmatprep.mubr.f32.mxu0 0.0
        %3872 = vmatmul.mubr.f32.gmra.mrb[0].mxu0 %v3694
        %v3873 = vpop.f32.mrb[0].mxu0
        %v3874 = vadd.f32 0.0, %v3873
        %v3875 = vpop.f32.mrb[0].mxu0
        %3876 = vmatprep.mubr.f32.mxu0 0.0
        %3877 = vmatmul.mubr.f32.gmra.mrb[0].mxu0 %v3697
        %v3878 = vpop.f32.mrb[0].mxu0
        %v3879 = vadd.f32 0.0, %v3878
        %v3880 = vpop.f32.mrb[0].mxu0
        %3881 = vmatprep.mubr.f32.mxu0 0.0
        %3882 = vmatmul.mubr.f32.gmra.mrb[0].mxu0 %v3700
        %v3883 = vpop.f32.mrb[0].mxu0
        %v3884 = vadd.f32 0.0, %v3883
        %v3885 = vpop.f32.mrb[0].mxu0
        %3886 = vmatprep.mubr.f32.mxu0 0.0
        %3887 = vmatmul.mubr.f32.gmra.mrb[0].mxu0 %v3703
        %v3888 = vpop.f32.mrb[0].mxu0
        %v3889 = vadd.f32 0.0, %v3888
        %v3890 = vpop.f32.mrb[0].mxu0
        %3891 = vmatprep.mubr.f32.mxu0 0.0
        %3892 = vmatmul.mubr.f32.gmra.mrb[0].mxu0 %v3706
        %v3893 = vpop.f32.mrb[0].mxu0
        %v3894 = vadd.f32 0.0, %v3893
        %v3895 = vpop.f32.mrb[0].mxu0
        %3896 = vmatprep.mubr.f32.mxu0 0.0
        %3897 = vmatmul.mubr.f32.gmra.mrb[0].mxu0 %v3709
        %v3898 = vpop.f32.mrb[0].mxu0
        %v3899 = vadd.f32 0.0, %v3898
        %v3900 = vpop.f32.mrb[0].mxu0
        %3901 = vmatprep.mubr.f32.mxu0 0.0
        %3902 = vmatmul.mubr.f32.gmra.mrb[0].mxu0 %v3712
        %v3903 = vpop.f32.mrb[0].mxu0
        %v3904 = vadd.f32 0.0, %v3903
        %v3905 = vpop.f32.mrb[0].mxu0
        %3906 = vmatprep.mubr.f32.mxu0 0.0
        %3907 = vmatmul.mubr.f32.gmra.mrb[0].mxu0 %v3715
        %v3908 = vpop.f32.mrb[0].mxu0
        %v3909 = vadd.f32 0.0, %v3908
        %v3910 = vpop.f32.mrb[0].mxu0
        %3911 = vmatprep.mubr.f32.mxu0 0.0
        %3912 = vmatmul.mubr.f32.gmra.mrb[0].mxu0 %v3718
        %v3913 = vpop.f32.mrb[0].mxu0
        %v3914 = vadd.f32 0.0, %v3913
        %v3915 = vpop.f32.mrb[0].mxu0
        %3916 = vmatprep.mubr.f32.mxu0 0.0
        %3917 = vmatmul.mubr.f32.gmra.mrb[0].mxu0 %v3721
        %v3918 = vpop.f32.mrb[0].mxu0
        %v3919 = vadd.f32 0.0, %v3918
        %v3920 = vpop.f32.mrb[0].mxu0
        %3921 = vmatprep.mubr.f32.mxu0 0.0
        %3922 = vmatmul.mubr.f32.gmra.mrb[0].mxu0 %v3724
        %v3923 = vpop.f32.mrb[0].mxu0
        %v3924 = vadd.f32 0.0, %v3923
        %v3925 = vpop.f32.mrb[0].mxu0
        %3926 = vmatprep.mubr.f32.mxu0 0.0
        %3927 = vmatmul.mubr.f32.gmra.mrb[0].mxu0 %v3727
        %v3928 = vpop.f32.mrb[0].mxu0
        %v3929 = vadd.f32 0.0, %v3928
        %v3930 = vpop.f32.mrb[0].mxu0
        %3931 = vmatprep.mubr.f32.mxu0 0.0
        %3932 = vmatmul.mubr.f32.gmra.mrb[0].mxu0 %v3730
        %v3933 = vpop.f32.mrb[0].mxu0
        %v3934 = vadd.f32 0.0, %v3933
        %v3935 = vpop.f32.mrb[0].mxu0
        %3936 = vmatprep.mubr.f32.mxu0 0.0
        %3937 = vmatmul.mubr.f32.gmra.mrb[0].mxu0 %v3733
        %v3938 = vpop.f32.mrb[0].mxu0
        %v3939 = vadd.f32 0.0, %v3938
        %v3940 = vpop.f32.mrb[0].mxu0
        %3941 = vmatprep.mubr.f32.mxu0 0.0
        %3942 = vmatmul.mubr.f32.gmra.mrb[0].mxu0 %v3736
        %v3943 = vpop.f32.mrb[0].mxu0
        %v3944 = vadd.f32 0.0, %v3943
        %v3945 = vpop.f32.mrb[0].mxu0
        %3946 = vmatprep.mubr.f32.mxu0 0.0
        %3947 = vmatmul.mubr.f32.gmra.mrb[0].mxu0 %v3739
        %v3948 = vpop.f32.mrb[0].mxu0
        %v3949 = vadd.f32 0.0, %v3948
        %v3950 = vpop.f32.mrb[0].mxu0
        %3951 = vmatprep.mubr.f32.mxu0 0.0
        %3952 = vmatmul.mubr.f32.gmra.mrb[0].mxu0 %v3742
        %v3953 = vpop.f32.mrb[0].mxu0
        %v3954 = vadd.f32 0.0, %v3953
        %v3955 = vpop.f32.mrb[0].mxu0
        %3956 = vmatprep.mubr.f32.mxu0 0.0
        %3957 = vmatmul.mubr.f32.gmra.mrb[0].mxu0 %v3745
        %v3958 = vpop.f32.mrb[0].mxu0
        %v3959 = vadd.f32 0.0, %v3958
        %v3960 = vpop.f32.mrb[0].mxu0
        %3961 = vmatprep.mubr.f32.mxu0 0.0
        %3962 = vmatmul.mubr.f32.gmra.mrb[0].mxu0 %v3748
        %v3963 = vpop.f32.mrb[0].mxu0
        %v3964 = vadd.f32 0.0, %v3963
        %v3965 = vpop.f32.mrb[0].mxu0
        %3966 = vmatprep.mubr.f32.mxu0 0.0
        %3967 = vmatmul.mubr.f32.gmra.mrb[0].mxu0 %v3751
        %v3968 = vpop.f32.mrb[0].mxu0
        %v3969 = vadd.f32 0.0, %v3968
        %v3970 = vpop.f32.mrb[0].mxu0
        %3971 = vmatprep.mubr.f32.mxu0 0.0
        %3972 = vmatmul.mubr.f32.gmra.mrb[0].mxu0 %v3754
        %v3973 = vpop.f32.mrb[0].mxu0
        %v3974 = vadd.f32 0.0, %v3973
        %v3975 = vpop.f32.mrb[0].mxu0
        %3976 = vmatprep.mubr.f32.mxu0 0.0
        %3977 = vmatmul.mubr.f32.gmra.mrb[0].mxu0 %v3757
        %v3978 = vpop.f32.mrb[0].mxu0
        %v3979 = vadd.f32 0.0, %v3978
        %v3980 = vpop.f32.mrb[0].mxu0
        %3981 = vmatprep.mubr.f32.mxu0 0.0
        %3982 = vmatmul.mubr.f32.gmra.mrb[0].mxu0 %v3760
        %v3983 = vpop.f32.mrb[0].mxu0
        %v3984 = vadd.f32 0.0, %v3983
        %v3985 = vpop.f32.mrb[0].mxu0
        %3986 = vdwg.mxu0
        %v3987 = vadd.f32 %v3599, %v3829
        %v3988 = vadd.f32 %v3600, %v3834
        %v3989 = vadd.f32 %v3601, %v3839
        %v3990 = vadd.f32 %v3602, %v3844
        %v3991 = vadd.f32 %v3603, %v3849
        %v3992 = vadd.f32 %v3604, %v3854
        %v3993 = vadd.f32 %v3605, %v3859
        %v3994 = vadd.f32 %v3606, %v3864
        %v3995 = vadd.f32 %v3607, %v3869
        %v3996 = vadd.f32 %v3608, %v3874
        %v3997 = vadd.f32 %v3609, %v3879
        %v3998 = vadd.f32 %v3610, %v3884
        %v3999 = vadd.f32 %v3611, %v3889
        %v4000 = vadd.f32 %v3612, %v3894
        %v4001 = vadd.f32 %v3613, %v3899
        %v4002 = vadd.f32 %v3614, %v3904
        %v4003 = vadd.f32 %v3615, %v3909
        %v4004 = vadd.f32 %v3616, %v3914
        %v4005 = vadd.f32 %v3617, %v3919
        %v4006 = vadd.f32 %v3618, %v3924
        %v4007 = vadd.f32 %v3619, %v3929
        %v4008 = vadd.f32 %v3620, %v3934
        %v4009 = vadd.f32 %v3621, %v3939
        %v4010 = vadd.f32 %v3622, %v3944
        %v4011 = vadd.f32 %v3623, %v3949
        %v4012 = vadd.f32 %v3624, %v3954
        %v4013 = vadd.f32 %v3625, %v3959
        %v4014 = vadd.f32 %v3626, %v3964
        %v4015 = vadd.f32 %v3627, %v3969
        %v4016 = vadd.f32 %v3628, %v3974
        %v4017 = vadd.f32 %v3629, %v3979
        %v4018 = vadd.f32 %v3630, %v3984
        %v4019 = vld [vmem:[%s3631 + $0x18] sm:$0xff]
        %v4020 = vld [vmem:[%s3631 + $0x20] sm:$0xff]
        %v4021 = vld [vmem:[%s3631 + $0x58] sm:$0xff]
        %v4022 = vld [vmem:[%s3631 + $0x60] sm:$0xff]
        %v4023 = vld [vmem:[%s3631 + $0x98] sm:$0xff]
        %v4024 = vld [vmem:[%s3631 + $0xa0] sm:$0xff]
        %v4025 = vld [vmem:[%s3631 + $0xd8] sm:$0xff]
        %v4026 = vld [vmem:[%s3631 + $0xe0] sm:$0xff]
        %v4027 = vld [vmem:[%s3631 + $0x118] sm:$0xff]
        %v4028 = vld [vmem:[%s3631 + $0x120] sm:$0xff]
        %v4029 = vld [vmem:[%s3631 + $0x158] sm:$0xff]
        %v4030 = vld [vmem:[%s3631 + $0x160] sm:$0xff]
        %v4031 = vld [vmem:[%s3631 + $0x198] sm:$0xff]
        %v4032 = vld [vmem:[%s3631 + $0x1a0] sm:$0xff]
        %v4033 = vld [vmem:[%s3631 + $0x1d8] sm:$0xff]
        %v4034 = vld [vmem:[%s3631 + $0x1e0] sm:$0xff]
        %v4035 = vld [vmem:[%s3631 + $0x218] sm:$0xff]
        %v4036 = vld [vmem:[%s3631 + $0x220] sm:$0xff]
        %v4037 = vld [vmem:[%s3631 + $0x258] sm:$0xff]
        %v4038 = vld [vmem:[%s3631 + $0x260] sm:$0xff]
        %v4039 = vld [vmem:[%s3631 + $0x298] sm:$0xff]
        %v4040 = vld [vmem:[%s3631 + $0x2a0] sm:$0xff]
        %v4041 = vld [vmem:[%s3631 + $0x2d8] sm:$0xff]
        %v4042 = vld [vmem:[%s3631 + $0x2e0] sm:$0xff]
        %v4043 = vld [vmem:[%s3631 + $0x318] sm:$0xff]
        %v4044 = vld [vmem:[%s3631 + $0x320] sm:$0xff]
        %v4045 = vld [vmem:[%s3631 + $0x358] sm:$0xff]
        %v4046 = vld [vmem:[%s3631 + $0x360] sm:$0xff]
        %v4047 = vld [vmem:[%s3631 + $0x398] sm:$0xff]
        %v4048 = vld [vmem:[%s3631 + $0x3a0] sm:$0xff]
        %v4049 = vld [vmem:[%s3631 + $0x3d8] sm:$0xff]
        %v4050 = vld [vmem:[%s3631 + $0x3e0] sm:$0xff]
        %s4051 = scalar_lea.vmem %s2, 56
        %v4052 = vld [vmem:[%s4051] sm:$0xff]
        %v4054 = vsel %vm358, %v4019, 0
        %v4057 = vsel %vm358, %v4020, 0
        %v4060 = vsel %vm358, %v4021, 0
        %v4063 = vsel %vm358, %v4022, 0
        %v4066 = vsel %vm358, %v4023, 0
        %v4069 = vsel %vm358, %v4024, 0
        %v4072 = vsel %vm358, %v4025, 0
        %v4075 = vsel %vm358, %v4026, 0
        %v4078 = vsel %vm358, %v4027, 0
        %v4081 = vsel %vm358, %v4028, 0
        %v4084 = vsel %vm358, %v4029, 0
        %v4087 = vsel %vm358, %v4030, 0
        %v4090 = vsel %vm358, %v4031, 0
        %v4093 = vsel %vm358, %v4032, 0
        %v4096 = vsel %vm358, %v4033, 0
        %v4099 = vsel %vm358, %v4034, 0
        %v4102 = vsel %vm358, %v4035, 0
        %v4105 = vsel %vm358, %v4036, 0
        %v4108 = vsel %vm358, %v4037, 0
        %v4111 = vsel %vm358, %v4038, 0
        %v4114 = vsel %vm358, %v4039, 0
        %v4117 = vsel %vm358, %v4040, 0
        %v4120 = vsel %vm358, %v4041, 0
        %v4123 = vsel %vm358, %v4042, 0
        %v4126 = vsel %vm358, %v4043, 0
        %v4129 = vsel %vm358, %v4044, 0
        %v4132 = vsel %vm358, %v4045, 0
        %v4135 = vsel %vm358, %v4046, 0
        %v4138 = vsel %vm358, %v4047, 0
        %v4141 = vsel %vm358, %v4048, 0
        %v4144 = vsel %vm358, %v4049, 0
        %v4147 = vsel %vm358, %v4050, 0
        %4149 = vmatprep.subr.mxu0 0.0
        %4150 = vmatpush1.msra.mxu0 %v4052
        %4151 = vmatprep.subr.mxu0 0.0
        %4152 = vmatpush1.msra.mxu0 0.0
        %4153 = vmatprep.subr.mxu0 0.0
        %4154 = vmatpush1.msra.mxu0 0.0
        %4155 = vmatprep.subr.mxu0 0.0
        %4156 = vmatpush1.msra.mxu0 0.0
        %4157 = vmatprep.subr.mxu0 0.0
        %4158 = vmatpush1.msra.mxu0 0.0
        %4159 = vmatprep.subr.mxu0 0.0
        %4160 = vmatpush1.msra.mxu0 0.0
        %4161 = vmatprep.subr.mxu0 0.0
        %4162 = vmatpush1.msra.mxu0 0.0
        %4163 = vmatprep.subr.mxu0 0.0
        %4164 = vmatpush1.msra.mxu0 0.0
        %4165 = vmatprep.subr.mxu0 0.0
        %4166 = vmatpush1.msra.mxu0 0.0
        %4167 = vmatprep.subr.mxu0 0.0
        %4168 = vmatpush1.msra.mxu0 0.0
        %4169 = vmatprep.subr.mxu0 0.0
        %4170 = vmatpush1.msra.mxu0 0.0
        %4171 = vmatprep.subr.mxu0 0.0
        %4172 = vmatpush1.msra.mxu0 0.0
        %4173 = vmatprep.subr.mxu0 0.0
        %4174 = vmatpush1.msra.mxu0 0.0
        %4175 = vmatprep.subr.mxu0 0.0
        %4176 = vmatpush1.msra.mxu0 0.0
        %4177 = vmatprep.subr.mxu0 0.0
        %4178 = vmatpush1.msra.mxu0 0.0
        %4179 = vmatprep.subr.mxu0 0.0
        %4180 = vmatpush1.msra.mxu0 0.0
        %4181 = vmatprep.subr.mxu0 0.0
        %4182 = vmatpush1.msra.mxu0 0.0
        %4183 = vmatprep.subr.mxu0 0.0
        %4184 = vmatpush1.msra.mxu0 0.0
        %4185 = vmatprep.subr.mxu0 0.0
        %4186 = vmatpush1.msra.mxu0 0.0
        %4187 = vmatprep.subr.mxu0 0.0
        %4188 = vmatpush1.msra.mxu0 0.0
        %4189 = vmatprep.subr.mxu0 0.0
        %4190 = vmatpush1.msra.mxu0 0.0
        %4191 = vmatprep.subr.mxu0 0.0
        %4192 = vmatpush1.msra.mxu0 0.0
        %4193 = vmatprep.subr.mxu0 0.0
        %4194 = vmatpush1.msra.mxu0 0.0
        %4195 = vmatprep.subr.mxu0 0.0
        %4196 = vmatpush1.msra.mxu0 0.0
        %4197 = vmatprep.subr.mxu0 0.0
        %4198 = vmatpush1.msra.mxu0 0.0
        %4199 = vmatprep.subr.mxu0 0.0
        %4200 = vmatpush1.msra.mxu0 0.0
        %4201 = vmatprep.subr.mxu0 0.0
        %4202 = vmatpush1.msra.mxu0 0.0
        %4203 = vmatprep.subr.mxu0 0.0
        %4204 = vmatpush1.msra.mxu0 0.0
        %4205 = vmatprep.subr.mxu0 0.0
        %4206 = vmatpush1.msra.mxu0 0.0
        %4207 = vmatprep.subr.mxu0 0.0
        %4208 = vmatpush1.msra.mxu0 0.0
        %4209 = vmatprep.subr.mxu0 0.0
        %4210 = vmatpush1.msra.mxu0 0.0
        %4211 = vmatprep.subr.mxu0 0.0
        %4212 = vmatpush1.msra.mxu0 0.0
        %4213 = vmatprep.mubr.f32.mxu0 0.0
        %4214 = vmatmul.mubr.f32.gmra.mrb[0].mxu0 %v4054
        %v4215 = vpop.f32.mrb[0].mxu0
        %v4216 = vadd.f32 0.0, %v4215
        %v4217 = vpop.f32.mrb[0].mxu0
        %4218 = vmatprep.mubr.f32.mxu0 0.0
        %4219 = vmatmul.mubr.f32.gmra.mrb[0].mxu0 %v4057
        %v4220 = vpop.f32.mrb[0].mxu0
        %v4221 = vadd.f32 0.0, %v4220
        %v4222 = vpop.f32.mrb[0].mxu0
        %4223 = vmatprep.mubr.f32.mxu0 0.0
        %4224 = vmatmul.mubr.f32.gmra.mrb[0].mxu0 %v4060
        %v4225 = vpop.f32.mrb[0].mxu0
        %v4226 = vadd.f32 0.0, %v4225
        %v4227 = vpop.f32.mrb[0].mxu0
        %4228 = vmatprep.mubr.f32.mxu0 0.0
        %4229 = vmatmul.mubr.f32.gmra.mrb[0].mxu0 %v4063
        %v4230 = vpop.f32.mrb[0].mxu0
        %v4231 = vadd.f32 0.0, %v4230
        %v4232 = vpop.f32.mrb[0].mxu0
        %4233 = vmatprep.mubr.f32.mxu0 0.0
        %4234 = vmatmul.mubr.f32.gmra.mrb[0].mxu0 %v4066
        %v4235 = vpop.f32.mrb[0].mxu0
        %v4236 = vadd.f32 0.0, %v4235
        %v4237 = vpop.f32.mrb[0].mxu0
        %4238 = vmatprep.mubr.f32.mxu0 0.0
        %4239 = vmatmul.mubr.f32.gmra.mrb[0].mxu0 %v4069
        %v4240 = vpop.f32.mrb[0].mxu0
        %v4241 = vadd.f32 0.0, %v4240
        %v4242 = vpop.f32.mrb[0].mxu0
        %4243 = vmatprep.mubr.f32.mxu0 0.0
        %4244 = vmatmul.mubr.f32.gmra.mrb[0].mxu0 %v4072
        %v4245 = vpop.f32.mrb[0].mxu0
        %v4246 = vadd.f32 0.0, %v4245
        %v4247 = vpop.f32.mrb[0].mxu0
        %4248 = vmatprep.mubr.f32.mxu0 0.0
        %4249 = vmatmul.mubr.f32.gmra.mrb[0].mxu0 %v4075
        %v4250 = vpop.f32.mrb[0].mxu0
        %v4251 = vadd.f32 0.0, %v4250
        %v4252 = vpop.f32.mrb[0].mxu0
        %4253 = vmatprep.mubr.f32.mxu0 0.0
        %4254 = vmatmul.mubr.f32.gmra.mrb[0].mxu0 %v4078
        %v4255 = vpop.f32.mrb[0].mxu0
        %v4256 = vadd.f32 0.0, %v4255
        %v4257 = vpop.f32.mrb[0].mxu0
        %4258 = vmatprep.mubr.f32.mxu0 0.0
        %4259 = vmatmul.mubr.f32.gmra.mrb[0].mxu0 %v4081
        %v4260 = vpop.f32.mrb[0].mxu0
        %v4261 = vadd.f32 0.0, %v4260
        %v4262 = vpop.f32.mrb[0].mxu0
        %4263 = vmatprep.mubr.f32.mxu0 0.0
        %4264 = vmatmul.mubr.f32.gmra.mrb[0].mxu0 %v4084
        %v4265 = vpop.f32.mrb[0].mxu0
        %v4266 = vadd.f32 0.0, %v4265
        %v4267 = vpop.f32.mrb[0].mxu0
        %4268 = vmatprep.mubr.f32.mxu0 0.0
        %4269 = vmatmul.mubr.f32.gmra.mrb[0].mxu0 %v4087
        %v4270 = vpop.f32.mrb[0].mxu0
        %v4271 = vadd.f32 0.0, %v4270
        %v4272 = vpop.f32.mrb[0].mxu0
        %4273 = vmatprep.mubr.f32.mxu0 0.0
        %4274 = vmatmul.mubr.f32.gmra.mrb[0].mxu0 %v4090
        %v4275 = vpop.f32.mrb[0].mxu0
        %v4276 = vadd.f32 0.0, %v4275
        %v4277 = vpop.f32.mrb[0].mxu0
        %4278 = vmatprep.mubr.f32.mxu0 0.0
        %4279 = vmatmul.mubr.f32.gmra.mrb[0].mxu0 %v4093
        %v4280 = vpop.f32.mrb[0].mxu0
        %v4281 = vadd.f32 0.0, %v4280
        %v4282 = vpop.f32.mrb[0].mxu0
        %4283 = vmatprep.mubr.f32.mxu0 0.0
        %4284 = vmatmul.mubr.f32.gmra.mrb[0].mxu0 %v4096
        %v4285 = vpop.f32.mrb[0].mxu0
        %v4286 = vadd.f32 0.0, %v4285
        %v4287 = vpop.f32.mrb[0].mxu0
        %4288 = vmatprep.mubr.f32.mxu0 0.0
        %4289 = vmatmul.mubr.f32.gmra.mrb[0].mxu0 %v4099
        %v4290 = vpop.f32.mrb[0].mxu0
        %v4291 = vadd.f32 0.0, %v4290
        %v4292 = vpop.f32.mrb[0].mxu0
        %4293 = vmatprep.mubr.f32.mxu0 0.0
        %4294 = vmatmul.mubr.f32.gmra.mrb[0].mxu0 %v4102
        %v4295 = vpop.f32.mrb[0].mxu0
        %v4296 = vadd.f32 0.0, %v4295
        %v4297 = vpop.f32.mrb[0].mxu0
        %4298 = vmatprep.mubr.f32.mxu0 0.0
        %4299 = vmatmul.mubr.f32.gmra.mrb[0].mxu0 %v4105
        %v4300 = vpop.f32.mrb[0].mxu0
        %v4301 = vadd.f32 0.0, %v4300
        %v4302 = vpop.f32.mrb[0].mxu0
        %4303 = vmatprep.mubr.f32.mxu0 0.0
        %4304 = vmatmul.mubr.f32.gmra.mrb[0].mxu0 %v4108
        %v4305 = vpop.f32.mrb[0].mxu0
        %v4306 = vadd.f32 0.0, %v4305
        %v4307 = vpop.f32.mrb[0].mxu0
        %4308 = vmatprep.mubr.f32.mxu0 0.0
        %4309 = vmatmul.mubr.f32.gmra.mrb[0].mxu0 %v4111
        %v4310 = vpop.f32.mrb[0].mxu0
        %v4311 = vadd.f32 0.0, %v4310
        %v4312 = vpop.f32.mrb[0].mxu0
        %4313 = vmatprep.mubr.f32.mxu0 0.0
        %4314 = vmatmul.mubr.f32.gmra.mrb[0].mxu0 %v4114
        %v4315 = vpop.f32.mrb[0].mxu0
        %v4316 = vadd.f32 0.0, %v4315
        %v4317 = vpop.f32.mrb[0].mxu0
        %4318 = vmatprep.mubr.f32.mxu0 0.0
        %4319 = vmatmul.mubr.f32.gmra.mrb[0].mxu0 %v4117
        %v4320 = vpop.f32.mrb[0].mxu0
        %v4321 = vadd.f32 0.0, %v4320
        %v4322 = vpop.f32.mrb[0].mxu0
        %4323 = vmatprep.mubr.f32.mxu0 0.0
        %4324 = vmatmul.mubr.f32.gmra.mrb[0].mxu0 %v4120
        %v4325 = vpop.f32.mrb[0].mxu0
        %v4326 = vadd.f32 0.0, %v4325
        %v4327 = vpop.f32.mrb[0].mxu0
        %4328 = vmatprep.mubr.f32.mxu0 0.0
        %4329 = vmatmul.mubr.f32.gmra.mrb[0].mxu0 %v4123
        %v4330 = vpop.f32.mrb[0].mxu0
        %v4331 = vadd.f32 0.0, %v4330
        %v4332 = vpop.f32.mrb[0].mxu0
        %4333 = vmatprep.mubr.f32.mxu0 0.0
        %4334 = vmatmul.mubr.f32.gmra.mrb[0].mxu0 %v4126
        %v4335 = vpop.f32.mrb[0].mxu0
        %v4336 = vadd.f32 0.0, %v4335
        %v4337 = vpop.f32.mrb[0].mxu0
        %4338 = vmatprep.mubr.f32.mxu0 0.0
        %4339 = vmatmul.mubr.f32.gmra.mrb[0].mxu0 %v4129
        %v4340 = vpop.f32.mrb[0].mxu0
        %v4341 = vadd.f32 0.0, %v4340
        %v4342 = vpop.f32.mrb[0].mxu0
        %4343 = vmatprep.mubr.f32.mxu0 0.0
        %4344 = vmatmul.mubr.f32.gmra.mrb[0].mxu0 %v4132
        %v4345 = vpop.f32.mrb[0].mxu0
        %v4346 = vadd.f32 0.0, %v4345
        %v4347 = vpop.f32.mrb[0].mxu0
        %4348 = vmatprep.mubr.f32.mxu0 0.0
        %4349 = vmatmul.mubr.f32.gmra.mrb[0].mxu0 %v4135
        %v4350 = vpop.f32.mrb[0].mxu0
        %v4351 = vadd.f32 0.0, %v4350
        %v4352 = vpop.f32.mrb[0].mxu0
        %4353 = vmatprep.mubr.f32.mxu0 0.0
        %4354 = vmatmul.mubr.f32.gmra.mrb[0].mxu0 %v4138
        %v4355 = vpop.f32.mrb[0].mxu0
        %v4356 = vadd.f32 0.0, %v4355
        %v4357 = vpop.f32.mrb[0].mxu0
        %4358 = vmatprep.mubr.f32.mxu0 0.0
        %4359 = vmatmul.mubr.f32.gmra.mrb[0].mxu0 %v4141
        %v4360 = vpop.f32.mrb[0].mxu0
        %v4361 = vadd.f32 0.0, %v4360
        %v4362 = vpop.f32.mrb[0].mxu0
        %4363 = vmatprep.mubr.f32.mxu0 0.0
        %4364 = vmatmul.mubr.f32.gmra.mrb[0].mxu0 %v4144
        %v4365 = vpop.f32.mrb[0].mxu0
        %v4366 = vadd.f32 0.0, %v4365
        %v4367 = vpop.f32.mrb[0].mxu0
        %4368 = vmatprep.mubr.f32.mxu0 0.0
        %4369 = vmatmul.mubr.f32.gmra.mrb[0].mxu0 %v4147
        %v4370 = vpop.f32.mrb[0].mxu0
        %v4371 = vadd.f32 0.0, %v4370
        %v4372 = vpop.f32.mrb[0].mxu0
        %4373 = vdwg.mxu0
        %v4374 = vadd.f32 %v3987, %v4216
        %v4375 = vadd.f32 %v3988, %v4221
        %v4376 = vadd.f32 %v3989, %v4226
        %v4377 = vadd.f32 %v3990, %v4231
        %v4378 = vadd.f32 %v3991, %v4236
        %v4379 = vadd.f32 %v3992, %v4241
        %v4380 = vadd.f32 %v3993, %v4246
        %v4381 = vadd.f32 %v3994, %v4251
        %v4382 = vadd.f32 %v3995, %v4256
        %v4383 = vadd.f32 %v3996, %v4261
        %v4384 = vadd.f32 %v3997, %v4266
        %v4385 = vadd.f32 %v3998, %v4271
        %v4386 = vadd.f32 %v3999, %v4276
        %v4387 = vadd.f32 %v4000, %v4281
        %v4388 = vadd.f32 %v4001, %v4286
        %v4389 = vadd.f32 %v4002, %v4291
        %v4390 = vadd.f32 %v4003, %v4296
        %v4391 = vadd.f32 %v4004, %v4301
        %v4392 = vadd.f32 %v4005, %v4306
        %v4393 = vadd.f32 %v4006, %v4311
        %v4394 = vadd.f32 %v4007, %v4316
        %v4395 = vadd.f32 %v4008, %v4321
        %v4396 = vadd.f32 %v4009, %v4326
        %v4397 = vadd.f32 %v4010, %v4331
        %v4398 = vadd.f32 %v4011, %v4336
        %v4399 = vadd.f32 %v4012, %v4341
        %v4400 = vadd.f32 %v4013, %v4346
        %v4401 = vadd.f32 %v4014, %v4351
        %v4402 = vadd.f32 %v4015, %v4356
        %v4403 = vadd.f32 %v4016, %v4361
        %v4404 = vadd.f32 %v4017, %v4366
        %v4405 = vadd.f32 %v4018, %v4371
        %v4406 = vld [vmem:[%s3631 + $0x24] sm:$0xff]
        %v4407 = vld [vmem:[%s3631 + $0x2c] sm:$0xff]
        %v4408 = vld [vmem:[%s3631 + $0x64] sm:$0xff]
        %v4409 = vld [vmem:[%s3631 + $0x6c] sm:$0xff]
        %v4410 = vld [vmem:[%s3631 + $0xa4] sm:$0xff]
        %v4411 = vld [vmem:[%s3631 + $0xac] sm:$0xff]
        %v4412 = vld [vmem:[%s3631 + $0xe4] sm:$0xff]
        %v4413 = vld [vmem:[%s3631 + $0xec] sm:$0xff]
        %v4414 = vld [vmem:[%s3631 + $0x124] sm:$0xff]
        %v4415 = vld [vmem:[%s3631 + $0x12c] sm:$0xff]
        %v4416 = vld [vmem:[%s3631 + $0x164] sm:$0xff]
        %v4417 = vld [vmem:[%s3631 + $0x16c] sm:$0xff]
        %v4418 = vld [vmem:[%s3631 + $0x1a4] sm:$0xff]
        %v4419 = vld [vmem:[%s3631 + $0x1ac] sm:$0xff]
        %v4420 = vld [vmem:[%s3631 + $0x1e4] sm:$0xff]
        %v4421 = vld [vmem:[%s3631 + $0x1ec] sm:$0xff]
        %v4422 = vld [vmem:[%s3631 + $0x224] sm:$0xff]
        %v4423 = vld [vmem:[%s3631 + $0x22c] sm:$0xff]
        %v4424 = vld [vmem:[%s3631 + $0x264] sm:$0xff]
        %v4425 = vld [vmem:[%s3631 + $0x26c] sm:$0xff]
        %v4426 = vld [vmem:[%s3631 + $0x2a4] sm:$0xff]
        %v4427 = vld [vmem:[%s3631 + $0x2ac] sm:$0xff]
        %v4428 = vld [vmem:[%s3631 + $0x2e4] sm:$0xff]
        %v4429 = vld [vmem:[%s3631 + $0x2ec] sm:$0xff]
        %v4430 = vld [vmem:[%s3631 + $0x324] sm:$0xff]
        %v4431 = vld [vmem:[%s3631 + $0x32c] sm:$0xff]
        %v4432 = vld [vmem:[%s3631 + $0x364] sm:$0xff]
        %v4433 = vld [vmem:[%s3631 + $0x36c] sm:$0xff]
        %v4434 = vld [vmem:[%s3631 + $0x3a4] sm:$0xff]
        %v4435 = vld [vmem:[%s3631 + $0x3ac] sm:$0xff]
        %v4436 = vld [vmem:[%s3631 + $0x3e4] sm:$0xff]
        %v4437 = vld [vmem:[%s3631 + $0x3ec] sm:$0xff]
        %s4438 = scalar_lea.vmem %s2, 64
        %v4439 = vld [vmem:[%s4438] sm:$0xff]
        %v4441 = vsel %vm358, %v4406, 0
        %v4444 = vsel %vm358, %v4407, 0
        %v4447 = vsel %vm358, %v4408, 0
        %v4450 = vsel %vm358, %v4409, 0
        %v4453 = vsel %vm358, %v4410, 0
        %v4456 = vsel %vm358, %v4411, 0
        %v4459 = vsel %vm358, %v4412, 0
        %v4462 = vsel %vm358, %v4413, 0
        %v4465 = vsel %vm358, %v4414, 0
        %v4468 = vsel %vm358, %v4415, 0
        %v4471 = vsel %vm358, %v4416, 0
        %v4474 = vsel %vm358, %v4417, 0
        %v4477 = vsel %vm358, %v4418, 0
        %v4480 = vsel %vm358, %v4419, 0
        %v4483 = vsel %vm358, %v4420, 0
        %v4486 = vsel %vm358, %v4421, 0
        %v4489 = vsel %vm358, %v4422, 0
        %v4492 = vsel %vm358, %v4423, 0
        %v4495 = vsel %vm358, %v4424, 0
        %v4498 = vsel %vm358, %v4425, 0
        %v4501 = vsel %vm358, %v4426, 0
        %v4504 = vsel %vm358, %v4427, 0
        %v4507 = vsel %vm358, %v4428, 0
        %v4510 = vsel %vm358, %v4429, 0
        %v4513 = vsel %vm358, %v4430, 0
        %v4516 = vsel %vm358, %v4431, 0
        %v4519 = vsel %vm358, %v4432, 0
        %v4522 = vsel %vm358, %v4433, 0
        %v4525 = vsel %vm358, %v4434, 0
        %v4528 = vsel %vm358, %v4435, 0
        %v4531 = vsel %vm358, %v4436, 0
        %v4534 = vsel %vm358, %v4437, 0
        %4536 = vmatprep.subr.mxu0 0.0
        %4537 = vmatpush1.msra.mxu0 %v4439
        %4538 = vmatprep.subr.mxu0 0.0
        %4539 = vmatpush1.msra.mxu0 0.0
        %4540 = vmatprep.subr.mxu0 0.0
        %4541 = vmatpush1.msra.mxu0 0.0
        %4542 = vmatprep.subr.mxu0 0.0
        %4543 = vmatpush1.msra.mxu0 0.0
        %4544 = vmatprep.subr.mxu0 0.0
        %4545 = vmatpush1.msra.mxu0 0.0
        %4546 = vmatprep.subr.mxu0 0.0
        %4547 = vmatpush1.msra.mxu0 0.0
        %4548 = vmatprep.subr.mxu0 0.0
        %4549 = vmatpush1.msra.mxu0 0.0
        %4550 = vmatprep.subr.mxu0 0.0
        %4551 = vmatpush1.msra.mxu0 0.0
        %4552 = vmatprep.subr.mxu0 0.0
        %4553 = vmatpush1.msra.mxu0 0.0
        %4554 = vmatprep.subr.mxu0 0.0
        %4555 = vmatpush1.msra.mxu0 0.0
        %4556 = vmatprep.subr.mxu0 0.0
        %4557 = vmatpush1.msra.mxu0 0.0
        %4558 = vmatprep.subr.mxu0 0.0
        %4559 = vmatpush1.msra.mxu0 0.0
        %4560 = vmatprep.subr.mxu0 0.0
        %4561 = vmatpush1.msra.mxu0 0.0
        %4562 = vmatprep.subr.mxu0 0.0
        %4563 = vmatpush1.msra.mxu0 0.0
        %4564 = vmatprep.subr.mxu0 0.0
        %4565 = vmatpush1.msra.mxu0 0.0
        %4566 = vmatprep.subr.mxu0 0.0
        %4567 = vmatpush1.msra.mxu0 0.0
        %4568 = vmatprep.subr.mxu0 0.0
        %4569 = vmatpush1.msra.mxu0 0.0
        %4570 = vmatprep.subr.mxu0 0.0
        %4571 = vmatpush1.msra.mxu0 0.0
        %4572 = vmatprep.subr.mxu0 0.0
        %4573 = vmatpush1.msra.mxu0 0.0
        %4574 = vmatprep.subr.mxu0 0.0
        %4575 = vmatpush1.msra.mxu0 0.0
        %4576 = vmatprep.subr.mxu0 0.0
        %4577 = vmatpush1.msra.mxu0 0.0
        %4578 = vmatprep.subr.mxu0 0.0
        %4579 = vmatpush1.msra.mxu0 0.0
        %4580 = vmatprep.subr.mxu0 0.0
        %4581 = vmatpush1.msra.mxu0 0.0
        %4582 = vmatprep.subr.mxu0 0.0
        %4583 = vmatpush1.msra.mxu0 0.0
        %4584 = vmatprep.subr.mxu0 0.0
        %4585 = vmatpush1.msra.mxu0 0.0
        %4586 = vmatprep.subr.mxu0 0.0
        %4587 = vmatpush1.msra.mxu0 0.0
        %4588 = vmatprep.subr.mxu0 0.0
        %4589 = vmatpush1.msra.mxu0 0.0
        %4590 = vmatprep.subr.mxu0 0.0
        %4591 = vmatpush1.msra.mxu0 0.0
        %4592 = vmatprep.subr.mxu0 0.0
        %4593 = vmatpush1.msra.mxu0 0.0
        %4594 = vmatprep.subr.mxu0 0.0
        %4595 = vmatpush1.msra.mxu0 0.0
        %4596 = vmatprep.subr.mxu0 0.0
        %4597 = vmatpush1.msra.mxu0 0.0
        %4598 = vmatprep.subr.mxu0 0.0
        %4599 = vmatpush1.msra.mxu0 0.0
        %4600 = vmatprep.mubr.f32.mxu0 0.0
        %4601 = vmatmul.mubr.f32.gmra.mrb[0].mxu0 %v4441
        %v4602 = vpop.f32.mrb[0].mxu0
        %v4603 = vadd.f32 0.0, %v4602
        %v4604 = vpop.f32.mrb[0].mxu0
        %4605 = vmatprep.mubr.f32.mxu0 0.0
        %4606 = vmatmul.mubr.f32.gmra.mrb[0].mxu0 %v4444
        %v4607 = vpop.f32.mrb[0].mxu0
        %v4608 = vadd.f32 0.0, %v4607
        %v4609 = vpop.f32.mrb[0].mxu0
        %4610 = vmatprep.mubr.f32.mxu0 0.0
        %4611 = vmatmul.mubr.f32.gmra.mrb[0].mxu0 %v4447
        %v4612 = vpop.f32.mrb[0].mxu0
        %v4613 = vadd.f32 0.0, %v4612
        %v4614 = vpop.f32.mrb[0].mxu0
        %4615 = vmatprep.mubr.f32.mxu0 0.0
        %4616 = vmatmul.mubr.f32.gmra.mrb[0].mxu0 %v4450
        %v4617 = vpop.f32.mrb[0].mxu0
        %v4618 = vadd.f32 0.0, %v4617
        %v4619 = vpop.f32.mrb[0].mxu0
        %4620 = vmatprep.mubr.f32.mxu0 0.0
        %4621 = vmatmul.mubr.f32.gmra.mrb[0].mxu0 %v4453
        %v4622 = vpop.f32.mrb[0].mxu0
        %v4623 = vadd.f32 0.0, %v4622
        %v4624 = vpop.f32.mrb[0].mxu0
        %4625 = vmatprep.mubr.f32.mxu0 0.0
        %4626 = vmatmul.mubr.f32.gmra.mrb[0].mxu0 %v4456
        %v4627 = vpop.f32.mrb[0].mxu0
        %v4628 = vadd.f32 0.0, %v4627
        %v4629 = vpop.f32.mrb[0].mxu0
        %4630 = vmatprep.mubr.f32.mxu0 0.0
        %4631 = vmatmul.mubr.f32.gmra.mrb[0].mxu0 %v4459
        %v4632 = vpop.f32.mrb[0].mxu0
        %v4633 = vadd.f32 0.0, %v4632
        %v4634 = vpop.f32.mrb[0].mxu0
        %4635 = vmatprep.mubr.f32.mxu0 0.0
        %4636 = vmatmul.mubr.f32.gmra.mrb[0].mxu0 %v4462
        %v4637 = vpop.f32.mrb[0].mxu0
        %v4638 = vadd.f32 0.0, %v4637
        %v4639 = vpop.f32.mrb[0].mxu0
        %4640 = vmatprep.mubr.f32.mxu0 0.0
        %4641 = vmatmul.mubr.f32.gmra.mrb[0].mxu0 %v4465
        %v4642 = vpop.f32.mrb[0].mxu0
        %v4643 = vadd.f32 0.0, %v4642
        %v4644 = vpop.f32.mrb[0].mxu0
        %4645 = vmatprep.mubr.f32.mxu0 0.0
        %4646 = vmatmul.mubr.f32.gmra.mrb[0].mxu0 %v4468
        %v4647 = vpop.f32.mrb[0].mxu0
        %v4648 = vadd.f32 0.0, %v4647
        %v4649 = vpop.f32.mrb[0].mxu0
        %4650 = vmatprep.mubr.f32.mxu0 0.0
        %4651 = vmatmul.mubr.f32.gmra.mrb[0].mxu0 %v4471
        %v4652 = vpop.f32.mrb[0].mxu0
        %v4653 = vadd.f32 0.0, %v4652
        %v4654 = vpop.f32.mrb[0].mxu0
        %4655 = vmatprep.mubr.f32.mxu0 0.0
        %4656 = vmatmul.mubr.f32.gmra.mrb[0].mxu0 %v4474
        %v4657 = vpop.f32.mrb[0].mxu0
        %v4658 = vadd.f32 0.0, %v4657
        %v4659 = vpop.f32.mrb[0].mxu0
        %4660 = vmatprep.mubr.f32.mxu0 0.0
        %4661 = vmatmul.mubr.f32.gmra.mrb[0].mxu0 %v4477
        %v4662 = vpop.f32.mrb[0].mxu0
        %v4663 = vadd.f32 0.0, %v4662
        %v4664 = vpop.f32.mrb[0].mxu0
        %4665 = vmatprep.mubr.f32.mxu0 0.0
        %4666 = vmatmul.mubr.f32.gmra.mrb[0].mxu0 %v4480
        %v4667 = vpop.f32.mrb[0].mxu0
        %v4668 = vadd.f32 0.0, %v4667
        %v4669 = vpop.f32.mrb[0].mxu0
        %4670 = vmatprep.mubr.f32.mxu0 0.0
        %4671 = vmatmul.mubr.f32.gmra.mrb[0].mxu0 %v4483
        %v4672 = vpop.f32.mrb[0].mxu0
        %v4673 = vadd.f32 0.0, %v4672
        %v4674 = vpop.f32.mrb[0].mxu0
        %4675 = vmatprep.mubr.f32.mxu0 0.0
        %4676 = vmatmul.mubr.f32.gmra.mrb[0].mxu0 %v4486
        %v4677 = vpop.f32.mrb[0].mxu0
        %v4678 = vadd.f32 0.0, %v4677
        %v4679 = vpop.f32.mrb[0].mxu0
        %4680 = vmatprep.mubr.f32.mxu0 0.0
        %4681 = vmatmul.mubr.f32.gmra.mrb[0].mxu0 %v4489
        %v4682 = vpop.f32.mrb[0].mxu0
        %v4683 = vadd.f32 0.0, %v4682
        %v4684 = vpop.f32.mrb[0].mxu0
        %4685 = vmatprep.mubr.f32.mxu0 0.0
        %4686 = vmatmul.mubr.f32.gmra.mrb[0].mxu0 %v4492
        %v4687 = vpop.f32.mrb[0].mxu0
        %v4688 = vadd.f32 0.0, %v4687
        %v4689 = vpop.f32.mrb[0].mxu0
        %4690 = vmatprep.mubr.f32.mxu0 0.0
        %4691 = vmatmul.mubr.f32.gmra.mrb[0].mxu0 %v4495
        %v4692 = vpop.f32.mrb[0].mxu0
        %v4693 = vadd.f32 0.0, %v4692
        %v4694 = vpop.f32.mrb[0].mxu0
        %4695 = vmatprep.mubr.f32.mxu0 0.0
        %4696 = vmatmul.mubr.f32.gmra.mrb[0].mxu0 %v4498
        %v4697 = vpop.f32.mrb[0].mxu0
        %v4698 = vadd.f32 0.0, %v4697
        %v4699 = vpop.f32.mrb[0].mxu0
        %4700 = vmatprep.mubr.f32.mxu0 0.0
        %4701 = vmatmul.mubr.f32.gmra.mrb[0].mxu0 %v4501
        %v4702 = vpop.f32.mrb[0].mxu0
        %v4703 = vadd.f32 0.0, %v4702
        %v4704 = vpop.f32.mrb[0].mxu0
        %4705 = vmatprep.mubr.f32.mxu0 0.0
        %4706 = vmatmul.mubr.f32.gmra.mrb[0].mxu0 %v4504
        %v4707 = vpop.f32.mrb[0].mxu0
        %v4708 = vadd.f32 0.0, %v4707
        %v4709 = vpop.f32.mrb[0].mxu0
        %4710 = vmatprep.mubr.f32.mxu0 0.0
        %4711 = vmatmul.mubr.f32.gmra.mrb[0].mxu0 %v4507
        %v4712 = vpop.f32.mrb[0].mxu0
        %v4713 = vadd.f32 0.0, %v4712
        %v4714 = vpop.f32.mrb[0].mxu0
        %4715 = vmatprep.mubr.f32.mxu0 0.0
        %4716 = vmatmul.mubr.f32.gmra.mrb[0].mxu0 %v4510
        %v4717 = vpop.f32.mrb[0].mxu0
        %v4718 = vadd.f32 0.0, %v4717
        %v4719 = vpop.f32.mrb[0].mxu0
        %4720 = vmatprep.mubr.f32.mxu0 0.0
        %4721 = vmatmul.mubr.f32.gmra.mrb[0].mxu0 %v4513
        %v4722 = vpop.f32.mrb[0].mxu0
        %v4723 = vadd.f32 0.0, %v4722
        %v4724 = vpop.f32.mrb[0].mxu0
        %4725 = vmatprep.mubr.f32.mxu0 0.0
        %4726 = vmatmul.mubr.f32.gmra.mrb[0].mxu0 %v4516
        %v4727 = vpop.f32.mrb[0].mxu0
        %v4728 = vadd.f32 0.0, %v4727
        %v4729 = vpop.f32.mrb[0].mxu0
        %4730 = vmatprep.mubr.f32.mxu0 0.0
        %4731 = vmatmul.mubr.f32.gmra.mrb[0].mxu0 %v4519
        %v4732 = vpop.f32.mrb[0].mxu0
        %v4733 = vadd.f32 0.0, %v4732
        %v4734 = vpop.f32.mrb[0].mxu0
        %4735 = vmatprep.mubr.f32.mxu0 0.0
        %4736 = vmatmul.mubr.f32.gmra.mrb[0].mxu0 %v4522
        %v4737 = vpop.f32.mrb[0].mxu0
        %v4738 = vadd.f32 0.0, %v4737
        %v4739 = vpop.f32.mrb[0].mxu0
        %4740 = vmatprep.mubr.f32.mxu0 0.0
        %4741 = vmatmul.mubr.f32.gmra.mrb[0].mxu0 %v4525
        %v4742 = vpop.f32.mrb[0].mxu0
        %v4743 = vadd.f32 0.0, %v4742
        %v4744 = vpop.f32.mrb[0].mxu0
        %4745 = vmatprep.mubr.f32.mxu0 0.0
        %4746 = vmatmul.mubr.f32.gmra.mrb[0].mxu0 %v4528
        %v4747 = vpop.f32.mrb[0].mxu0
        %v4748 = vadd.f32 0.0, %v4747
        %v4749 = vpop.f32.mrb[0].mxu0
        %4750 = vmatprep.mubr.f32.mxu0 0.0
        %4751 = vmatmul.mubr.f32.gmra.mrb[0].mxu0 %v4531
        %v4752 = vpop.f32.mrb[0].mxu0
        %v4753 = vadd.f32 0.0, %v4752
        %v4754 = vpop.f32.mrb[0].mxu0
        %4755 = vmatprep.mubr.f32.mxu0 0.0
        %4756 = vmatmul.mubr.f32.gmra.mrb[0].mxu0 %v4534
        %v4757 = vpop.f32.mrb[0].mxu0
        %v4758 = vadd.f32 0.0, %v4757
        %v4759 = vpop.f32.mrb[0].mxu0
        %4760 = vdwg.mxu0
        %v4761 = vadd.f32 %v4374, %v4603
        %v4762 = vadd.f32 %v4375, %v4608
        %v4763 = vadd.f32 %v4376, %v4613
        %v4764 = vadd.f32 %v4377, %v4618
        %v4765 = vadd.f32 %v4378, %v4623
        %v4766 = vadd.f32 %v4379, %v4628
        %v4767 = vadd.f32 %v4380, %v4633
        %v4768 = vadd.f32 %v4381, %v4638
        %v4769 = vadd.f32 %v4382, %v4643
        %v4770 = vadd.f32 %v4383, %v4648
        %v4771 = vadd.f32 %v4384, %v4653
        %v4772 = vadd.f32 %v4385, %v4658
        %v4773 = vadd.f32 %v4386, %v4663
        %v4774 = vadd.f32 %v4387, %v4668
        %v4775 = vadd.f32 %v4388, %v4673
        %v4776 = vadd.f32 %v4389, %v4678
        %v4777 = vadd.f32 %v4390, %v4683
        %v4778 = vadd.f32 %v4391, %v4688
        %v4779 = vadd.f32 %v4392, %v4693
        %v4780 = vadd.f32 %v4393, %v4698
        %v4781 = vadd.f32 %v4394, %v4703
        %v4782 = vadd.f32 %v4395, %v4708
        %v4783 = vadd.f32 %v4396, %v4713
        %v4784 = vadd.f32 %v4397, %v4718
        %v4785 = vadd.f32 %v4398, %v4723
        %v4786 = vadd.f32 %v4399, %v4728
        %v4787 = vadd.f32 %v4400, %v4733
        %v4788 = vadd.f32 %v4401, %v4738
        %v4789 = vadd.f32 %v4402, %v4743
        %v4790 = vadd.f32 %v4403, %v4748
        %v4791 = vadd.f32 %v4404, %v4753
        %v4792 = vadd.f32 %v4405, %v4758
        %v4793 = vmul.f32 %v4761, %v1236
        %v4794 = vmul.f32 %v4762, %v1236
        %v4795 = vmul.f32 %v4763, %v1236
        %v4796 = vmul.f32 %v4764, %v1236
        %v4797 = vmul.f32 %v4765, %v1236
        %v4798 = vmul.f32 %v4766, %v1236
        %v4799 = vmul.f32 %v4767, %v1236
        %v4800 = vmul.f32 %v4768, %v1236
        %v4801 = vmul.f32 %v4769, %v1236
        %v4802 = vmul.f32 %v4770, %v1236
        %v4803 = vmul.f32 %v4771, %v1236
        %v4804 = vmul.f32 %v4772, %v1236
        %v4805 = vmul.f32 %v4773, %v1236
        %v4806 = vmul.f32 %v4774, %v1236
        %v4807 = vmul.f32 %v4775, %v1236
        %v4808 = vmul.f32 %v4776, %v1236
        %v4809 = vmul.f32 %v4777, %v1236
        %v4810 = vmul.f32 %v4778, %v1236
        %v4811 = vmul.f32 %v4779, %v1236
        %v4812 = vmul.f32 %v4780, %v1236
        %v4813 = vmul.f32 %v4781, %v1236
        %v4814 = vmul.f32 %v4782, %v1236
        %v4815 = vmul.f32 %v4783, %v1236
        %v4816 = vmul.f32 %v4784, %v1236
        %v4817 = vmul.f32 %v4785, %v1236
        %v4818 = vmul.f32 %v4786, %v1236
        %v4819 = vmul.f32 %v4787, %v1236
        %v4820 = vmul.f32 %v4788, %v1236
        %v4821 = vmul.f32 %v4789, %v1236
        %v4822 = vmul.f32 %v4790, %v1236
        %v4823 = vmul.f32 %v4791, %v1236
        %v4824 = vmul.f32 %v4792, %v1236
        %v4825 = vadd.f32 %v4793, %v1274
        %v4826 = vadd.f32 %v4794, %v1274
        %v4827 = vadd.f32 %v4795, %v1274
        %v4828 = vadd.f32 %v4796, %v1274
        %v4829 = vadd.f32 %v4797, %v1274
        %v4830 = vadd.f32 %v4798, %v1274
        %v4831 = vadd.f32 %v4799, %v1274
        %v4832 = vadd.f32 %v4800, %v1274
        %v4833 = vadd.f32 %v4801, %v1274
        %v4834 = vadd.f32 %v4802, %v1274
        %v4835 = vadd.f32 %v4803, %v1274
        %v4836 = vadd.f32 %v4804, %v1274
        %v4837 = vadd.f32 %v4805, %v1274
        %v4838 = vadd.f32 %v4806, %v1274
        %v4839 = vadd.f32 %v4807, %v1274
        %v4840 = vadd.f32 %v4808, %v1274
        %v4841 = vadd.f32 %v4809, %v1274
        %v4842 = vadd.f32 %v4810, %v1274
        %v4843 = vadd.f32 %v4811, %v1274
        %v4844 = vadd.f32 %v4812, %v1274
        %v4845 = vadd.f32 %v4813, %v1274
        %v4846 = vadd.f32 %v4814, %v1274
        %v4847 = vadd.f32 %v4815, %v1274
        %v4848 = vadd.f32 %v4816, %v1274
        %v4849 = vadd.f32 %v4817, %v1274
        %v4850 = vadd.f32 %v4818, %v1274
        %v4851 = vadd.f32 %v4819, %v1274
        %v4852 = vadd.f32 %v4820, %v1274
        %v4853 = vadd.f32 %v4821, %v1274
        %v4854 = vadd.f32 %v4822, %v1274
        %v4855 = vadd.f32 %v4823, %v1274
        %v4856 = vadd.f32 %v4824, %v1274
        %v4857 = vmax.f32 %v4825, 0.0
        %v4858 = vmax.f32 %v4826, 0.0
        %v4859 = vmax.f32 %v4827, 0.0
        %v4860 = vmax.f32 %v4828, 0.0
        %v4861 = vmax.f32 %v4829, 0.0
        %v4862 = vmax.f32 %v4830, 0.0
        %v4863 = vmax.f32 %v4831, 0.0
        %v4864 = vmax.f32 %v4832, 0.0
        %v4865 = vmax.f32 %v4833, 0.0
        %v4866 = vmax.f32 %v4834, 0.0
        %v4867 = vmax.f32 %v4835, 0.0
        %v4868 = vmax.f32 %v4836, 0.0
        %v4869 = vmax.f32 %v4837, 0.0
        %v4870 = vmax.f32 %v4838, 0.0
        %v4871 = vmax.f32 %v4839, 0.0
        %v4872 = vmax.f32 %v4840, 0.0
        %v4873 = vmax.f32 %v4841, 0.0
        %v4874 = vmax.f32 %v4842, 0.0
        %v4875 = vmax.f32 %v4843, 0.0
        %v4876 = vmax.f32 %v4844, 0.0
        %v4877 = vmax.f32 %v4845, 0.0
        %v4878 = vmax.f32 %v4846, 0.0
        %v4879 = vmax.f32 %v4847, 0.0
        %v4880 = vmax.f32 %v4848, 0.0
        %v4881 = vmax.f32 %v4849, 0.0
        %v4882 = vmax.f32 %v4850, 0.0
        %v4883 = vmax.f32 %v4851, 0.0
        %v4884 = vmax.f32 %v4852, 0.0
        %v4885 = vmax.f32 %v4853, 0.0
        %v4886 = vmax.f32 %v4854, 0.0
        %v4887 = vmax.f32 %v4855, 0.0
        %v4888 = vmax.f32 %v4856, 0.0
        %4889 = vst.msk [vmem:[%s1340 + $0x18] sm:$0xff] %vm358, %v4857
        %4890 = vst.msk [vmem:[%s1340 + $0x20] sm:$0xff] %vm358, %v4858
        %4891 = vst.msk [vmem:[%s1340 + $0x58] sm:$0xff] %vm358, %v4859
        %4892 = vst.msk [vmem:[%s1340 + $0x60] sm:$0xff] %vm358, %v4860
        %4893 = vst.msk [vmem:[%s1340 + $0x98] sm:$0xff] %vm358, %v4861
        %4894 = vst.msk [vmem:[%s1340 + $0xa0] sm:$0xff] %vm358, %v4862
        %4895 = vst.msk [vmem:[%s1340 + $0xd8] sm:$0xff] %vm358, %v4863
        %4896 = vst.msk [vmem:[%s1340 + $0xe0] sm:$0xff] %vm358, %v4864
        %4897 = vst.msk [vmem:[%s1340 + $0x118] sm:$0xff] %vm358, %v4865
        %4898 = vst.msk [vmem:[%s1340 + $0x120] sm:$0xff] %vm358, %v4866
        %4899 = vst.msk [vmem:[%s1340 + $0x158] sm:$0xff] %vm358, %v4867
        %4900 = vst.msk [vmem:[%s1340 + $0x160] sm:$0xff] %vm358, %v4868
        %4901 = vst.msk [vmem:[%s1340 + $0x198] sm:$0xff] %vm358, %v4869
        %4902 = vst.msk [vmem:[%s1340 + $0x1a0] sm:$0xff] %vm358, %v4870
        %4903 = vst.msk [vmem:[%s1340 + $0x1d8] sm:$0xff] %vm358, %v4871
        %4904 = vst.msk [vmem:[%s1340 + $0x1e0] sm:$0xff] %vm358, %v4872
        %4905 = vst.msk [vmem:[%s1340 + $0x218] sm:$0xff] %vm358, %v4873
        %4906 = vst.msk [vmem:[%s1340 + $0x220] sm:$0xff] %vm358, %v4874
        %4907 = vst.msk [vmem:[%s1340 + $0x258] sm:$0xff] %vm358, %v4875
        %4908 = vst.msk [vmem:[%s1340 + $0x260] sm:$0xff] %vm358, %v4876
        %4909 = vst.msk [vmem:[%s1340 + $0x298] sm:$0xff] %vm358, %v4877
        %4910 = vst.msk [vmem:[%s1340 + $0x2a0] sm:$0xff] %vm358, %v4878
        %4911 = vst.msk [vmem:[%s1340 + $0x2d8] sm:$0xff] %vm358, %v4879
        %4912 = vst.msk [vmem:[%s1340 + $0x2e0] sm:$0xff] %vm358, %v4880
        %4913 = vst.msk [vmem:[%s1340 + $0x318] sm:$0xff] %vm358, %v4881
        %4914 = vst.msk [vmem:[%s1340 + $0x320] sm:$0xff] %vm358, %v4882
        %4915 = vst.msk [vmem:[%s1340 + $0x358] sm:$0xff] %vm358, %v4883
        %4916 = vst.msk [vmem:[%s1340 + $0x360] sm:$0xff] %vm358, %v4884
        %4917 = vst.msk [vmem:[%s1340 + $0x398] sm:$0xff] %vm358, %v4885
        %4918 = vst.msk [vmem:[%s1340 + $0x3a0] sm:$0xff] %vm358, %v4886
        %4919 = vst.msk [vmem:[%s1340 + $0x3d8] sm:$0xff] %vm358, %v4887
        %4920 = vst.msk [vmem:[%s1340 + $0x3e0] sm:$0xff] %vm358, %v4888
        %v4921 = vld [vmem:[%s1340 + $0x18] sm:$0xff]
        %v4922 = vld [vmem:[%s1340 + $0x20] sm:$0xff]
        %v4923 = vld [vmem:[%s1340 + $0x58] sm:$0xff]
        %v4924 = vld [vmem:[%s1340 + $0x60] sm:$0xff]
        %v4925 = vld [vmem:[%s1340 + $0x98] sm:$0xff]
        %v4926 = vld [vmem:[%s1340 + $0xa0] sm:$0xff]
        %v4927 = vld [vmem:[%s1340 + $0xd8] sm:$0xff]
        %v4928 = vld [vmem:[%s1340 + $0xe0] sm:$0xff]
        %v4929 = vld [vmem:[%s1340 + $0x118] sm:$0xff]
        %v4930 = vld [vmem:[%s1340 + $0x120] sm:$0xff]
        %v4931 = vld [vmem:[%s1340 + $0x158] sm:$0xff]
        %v4932 = vld [vmem:[%s1340 + $0x160] sm:$0xff]
        %v4933 = vld [vmem:[%s1340 + $0x198] sm:$0xff]
        %v4934 = vld [vmem:[%s1340 + $0x1a0] sm:$0xff]
        %v4935 = vld [vmem:[%s1340 + $0x1d8] sm:$0xff]
        %v4936 = vld [vmem:[%s1340 + $0x1e0] sm:$0xff]
        %v4937 = vld [vmem:[%s1340 + $0x218] sm:$0xff]
        %v4938 = vld [vmem:[%s1340 + $0x220] sm:$0xff]
        %v4939 = vld [vmem:[%s1340 + $0x258] sm:$0xff]
        %v4940 = vld [vmem:[%s1340 + $0x260] sm:$0xff]
        %v4941 = vld [vmem:[%s1340 + $0x298] sm:$0xff]
        %v4942 = vld [vmem:[%s1340 + $0x2a0] sm:$0xff]
        %v4943 = vld [vmem:[%s1340 + $0x2d8] sm:$0xff]
        %v4944 = vld [vmem:[%s1340 + $0x2e0] sm:$0xff]
        %v4945 = vld [vmem:[%s1340 + $0x318] sm:$0xff]
        %v4946 = vld [vmem:[%s1340 + $0x320] sm:$0xff]
        %v4947 = vld [vmem:[%s1340 + $0x358] sm:$0xff]
        %v4948 = vld [vmem:[%s1340 + $0x360] sm:$0xff]
        %v4949 = vld [vmem:[%s1340 + $0x398] sm:$0xff]
        %v4950 = vld [vmem:[%s1340 + $0x3a0] sm:$0xff]
        %v4951 = vld [vmem:[%s1340 + $0x3d8] sm:$0xff]
        %v4952 = vld [vmem:[%s1340 + $0x3e0] sm:$0xff]
        %s4953 = scalar_lea.vmem %s3, 32
        %v4954 = vld [vmem:[%s4953] sm:$0xff]
        %v4956 = vsel %vm358, %v4921, 0
        %v4959 = vsel %vm358, %v4922, 0
        %v4962 = vsel %vm358, %v4923, 0
        %v4965 = vsel %vm358, %v4924, 0
        %v4968 = vsel %vm358, %v4925, 0
        %v4971 = vsel %vm358, %v4926, 0
        %v4974 = vsel %vm358, %v4927, 0
        %v4977 = vsel %vm358, %v4928, 0
        %v4980 = vsel %vm358, %v4929, 0
        %v4983 = vsel %vm358, %v4930, 0
        %v4986 = vsel %vm358, %v4931, 0
        %v4989 = vsel %vm358, %v4932, 0
        %v4992 = vsel %vm358, %v4933, 0
        %v4995 = vsel %vm358, %v4934, 0
        %v4998 = vsel %vm358, %v4935, 0
        %v5001 = vsel %vm358, %v4936, 0
        %v5004 = vsel %vm358, %v4937, 0
        %v5007 = vsel %vm358, %v4938, 0
        %v5010 = vsel %vm358, %v4939, 0
        %v5013 = vsel %vm358, %v4940, 0
        %v5016 = vsel %vm358, %v4941, 0
        %v5019 = vsel %vm358, %v4942, 0
        %v5022 = vsel %vm358, %v4943, 0
        %v5025 = vsel %vm358, %v4944, 0
        %v5028 = vsel %vm358, %v4945, 0
        %v5031 = vsel %vm358, %v4946, 0
        %v5034 = vsel %vm358, %v4947, 0
        %v5037 = vsel %vm358, %v4948, 0
        %v5040 = vsel %vm358, %v4949, 0
        %v5043 = vsel %vm358, %v4950, 0
        %v5046 = vsel %vm358, %v4951, 0
        %v5049 = vsel %vm358, %v4952, 0
        %5051 = vmatprep.subr.mxu0 0.0
        %5052 = vmatpush1.msra.mxu0 %v4954
        %5053 = vmatprep.subr.mxu0 0.0
        %5054 = vmatpush1.msra.mxu0 0.0
        %5055 = vmatprep.subr.mxu0 0.0
        %5056 = vmatpush1.msra.mxu0 0.0
        %5057 = vmatprep.subr.mxu0 0.0
        %5058 = vmatpush1.msra.mxu0 0.0
        %5059 = vmatprep.subr.mxu0 0.0
        %5060 = vmatpush1.msra.mxu0 0.0
        %5061 = vmatprep.subr.mxu0 0.0
        %5062 = vmatpush1.msra.mxu0 0.0
        %5063 = vmatprep.subr.mxu0 0.0
        %5064 = vmatpush1.msra.mxu0 0.0
        %5065 = vmatprep.subr.mxu0 0.0
        %5066 = vmatpush1.msra.mxu0 0.0
        %5067 = vmatprep.subr.mxu0 0.0
        %5068 = vmatpush1.msra.mxu0 0.0
        %5069 = vmatprep.subr.mxu0 0.0
        %5070 = vmatpush1.msra.mxu0 0.0
        %5071 = vmatprep.subr.mxu0 0.0
        %5072 = vmatpush1.msra.mxu0 0.0
        %5073 = vmatprep.subr.mxu0 0.0
        %5074 = vmatpush1.msra.mxu0 0.0
        %5075 = vmatprep.subr.mxu0 0.0
        %5076 = vmatpush1.msra.mxu0 0.0
        %5077 = vmatprep.subr.mxu0 0.0
        %5078 = vmatpush1.msra.mxu0 0.0
        %5079 = vmatprep.subr.mxu0 0.0
        %5080 = vmatpush1.msra.mxu0 0.0
        %5081 = vmatprep.subr.mxu0 0.0
        %5082 = vmatpush1.msra.mxu0 0.0
        %5083 = vmatprep.subr.mxu0 0.0
        %5084 = vmatpush1.msra.mxu0 0.0
        %5085 = vmatprep.subr.mxu0 0.0
        %5086 = vmatpush1.msra.mxu0 0.0
        %5087 = vmatprep.subr.mxu0 0.0
        %5088 = vmatpush1.msra.mxu0 0.0
        %5089 = vmatprep.subr.mxu0 0.0
        %5090 = vmatpush1.msra.mxu0 0.0
        %5091 = vmatprep.subr.mxu0 0.0
        %5092 = vmatpush1.msra.mxu0 0.0
        %5093 = vmatprep.subr.mxu0 0.0
        %5094 = vmatpush1.msra.mxu0 0.0
        %5095 = vmatprep.subr.mxu0 0.0
        %5096 = vmatpush1.msra.mxu0 0.0
        %5097 = vmatprep.subr.mxu0 0.0
        %5098 = vmatpush1.msra.mxu0 0.0
        %5099 = vmatprep.subr.mxu0 0.0
        %5100 = vmatpush1.msra.mxu0 0.0
        %5101 = vmatprep.subr.mxu0 0.0
        %5102 = vmatpush1.msra.mxu0 0.0
        %5103 = vmatprep.subr.mxu0 0.0
        %5104 = vmatpush1.msra.mxu0 0.0
        %5105 = vmatprep.subr.mxu0 0.0
        %5106 = vmatpush1.msra.mxu0 0.0
        %5107 = vmatprep.subr.mxu0 0.0
        %5108 = vmatpush1.msra.mxu0 0.0
        %5109 = vmatprep.subr.mxu0 0.0
        %5110 = vmatpush1.msra.mxu0 0.0
        %5111 = vmatprep.subr.mxu0 0.0
        %5112 = vmatpush1.msra.mxu0 0.0
        %5113 = vmatprep.subr.mxu0 0.0
        %5114 = vmatpush1.msra.mxu0 0.0
        %5115 = vmatprep.mubr.f32.mxu0 0.0
        %5116 = vmatmul.mubr.f32.gmra.mrb[0].mxu0 %v4956
        %v5117 = vpop.f32.mrb[0].mxu0
        %v5118 = vadd.f32 0.0, %v5117
        %v5119 = vpop.f32.mrb[0].mxu0
        %5120 = vmatprep.mubr.f32.mxu0 0.0
        %5121 = vmatmul.mubr.f32.gmra.mrb[0].mxu0 %v4959
        %v5122 = vpop.f32.mrb[0].mxu0
        %v5123 = vadd.f32 0.0, %v5122
        %v5124 = vpop.f32.mrb[0].mxu0
        %5125 = vmatprep.mubr.f32.mxu0 0.0
        %5126 = vmatmul.mubr.f32.gmra.mrb[0].mxu0 %v4962
        %v5127 = vpop.f32.mrb[0].mxu0
        %v5128 = vadd.f32 0.0, %v5127
        %v5129 = vpop.f32.mrb[0].mxu0
        %5130 = vmatprep.mubr.f32.mxu0 0.0
        %5131 = vmatmul.mubr.f32.gmra.mrb[0].mxu0 %v4965
        %v5132 = vpop.f32.mrb[0].mxu0
        %v5133 = vadd.f32 0.0, %v5132
        %v5134 = vpop.f32.mrb[0].mxu0
        %5135 = vmatprep.mubr.f32.mxu0 0.0
        %5136 = vmatmul.mubr.f32.gmra.mrb[0].mxu0 %v4968
        %v5137 = vpop.f32.mrb[0].mxu0
        %v5138 = vadd.f32 0.0, %v5137
        %v5139 = vpop.f32.mrb[0].mxu0
        %5140 = vmatprep.mubr.f32.mxu0 0.0
        %5141 = vmatmul.mubr.f32.gmra.mrb[0].mxu0 %v4971
        %v5142 = vpop.f32.mrb[0].mxu0
        %v5143 = vadd.f32 0.0, %v5142
        %v5144 = vpop.f32.mrb[0].mxu0
        %5145 = vmatprep.mubr.f32.mxu0 0.0
        %5146 = vmatmul.mubr.f32.gmra.mrb[0].mxu0 %v4974
        %v5147 = vpop.f32.mrb[0].mxu0
        %v5148 = vadd.f32 0.0, %v5147
        %v5149 = vpop.f32.mrb[0].mxu0
        %5150 = vmatprep.mubr.f32.mxu0 0.0
        %5151 = vmatmul.mubr.f32.gmra.mrb[0].mxu0 %v4977
        %v5152 = vpop.f32.mrb[0].mxu0
        %v5153 = vadd.f32 0.0, %v5152
        %v5154 = vpop.f32.mrb[0].mxu0
        %5155 = vmatprep.mubr.f32.mxu0 0.0
        %5156 = vmatmul.mubr.f32.gmra.mrb[0].mxu0 %v4980
        %v5157 = vpop.f32.mrb[0].mxu0
        %v5158 = vadd.f32 0.0, %v5157
        %v5159 = vpop.f32.mrb[0].mxu0
        %5160 = vmatprep.mubr.f32.mxu0 0.0
        %5161 = vmatmul.mubr.f32.gmra.mrb[0].mxu0 %v4983
        %v5162 = vpop.f32.mrb[0].mxu0
        %v5163 = vadd.f32 0.0, %v5162
        %v5164 = vpop.f32.mrb[0].mxu0
        %5165 = vmatprep.mubr.f32.mxu0 0.0
        %5166 = vmatmul.mubr.f32.gmra.mrb[0].mxu0 %v4986
        %v5167 = vpop.f32.mrb[0].mxu0
        %v5168 = vadd.f32 0.0, %v5167
        %v5169 = vpop.f32.mrb[0].mxu0
        %5170 = vmatprep.mubr.f32.mxu0 0.0
        %5171 = vmatmul.mubr.f32.gmra.mrb[0].mxu0 %v4989
        %v5172 = vpop.f32.mrb[0].mxu0
        %v5173 = vadd.f32 0.0, %v5172
        %v5174 = vpop.f32.mrb[0].mxu0
        %5175 = vmatprep.mubr.f32.mxu0 0.0
        %5176 = vmatmul.mubr.f32.gmra.mrb[0].mxu0 %v4992
        %v5177 = vpop.f32.mrb[0].mxu0
        %v5178 = vadd.f32 0.0, %v5177
        %v5179 = vpop.f32.mrb[0].mxu0
        %5180 = vmatprep.mubr.f32.mxu0 0.0
        %5181 = vmatmul.mubr.f32.gmra.mrb[0].mxu0 %v4995
        %v5182 = vpop.f32.mrb[0].mxu0
        %v5183 = vadd.f32 0.0, %v5182
        %v5184 = vpop.f32.mrb[0].mxu0
        %5185 = vmatprep.mubr.f32.mxu0 0.0
        %5186 = vmatmul.mubr.f32.gmra.mrb[0].mxu0 %v4998
        %v5187 = vpop.f32.mrb[0].mxu0
        %v5188 = vadd.f32 0.0, %v5187
        %v5189 = vpop.f32.mrb[0].mxu0
        %5190 = vmatprep.mubr.f32.mxu0 0.0
        %5191 = vmatmul.mubr.f32.gmra.mrb[0].mxu0 %v5001
        %v5192 = vpop.f32.mrb[0].mxu0
        %v5193 = vadd.f32 0.0, %v5192
        %v5194 = vpop.f32.mrb[0].mxu0
        %5195 = vmatprep.mubr.f32.mxu0 0.0
        %5196 = vmatmul.mubr.f32.gmra.mrb[0].mxu0 %v5004
        %v5197 = vpop.f32.mrb[0].mxu0
        %v5198 = vadd.f32 0.0, %v5197
        %v5199 = vpop.f32.mrb[0].mxu0
        %5200 = vmatprep.mubr.f32.mxu0 0.0
        %5201 = vmatmul.mubr.f32.gmra.mrb[0].mxu0 %v5007
        %v5202 = vpop.f32.mrb[0].mxu0
        %v5203 = vadd.f32 0.0, %v5202
        %v5204 = vpop.f32.mrb[0].mxu0
        %5205 = vmatprep.mubr.f32.mxu0 0.0
        %5206 = vmatmul.mubr.f32.gmra.mrb[0].mxu0 %v5010
        %v5207 = vpop.f32.mrb[0].mxu0
        %v5208 = vadd.f32 0.0, %v5207
        %v5209 = vpop.f32.mrb[0].mxu0
        %5210 = vmatprep.mubr.f32.mxu0 0.0
        %5211 = vmatmul.mubr.f32.gmra.mrb[0].mxu0 %v5013
        %v5212 = vpop.f32.mrb[0].mxu0
        %v5213 = vadd.f32 0.0, %v5212
        %v5214 = vpop.f32.mrb[0].mxu0
        %5215 = vmatprep.mubr.f32.mxu0 0.0
        %5216 = vmatmul.mubr.f32.gmra.mrb[0].mxu0 %v5016
        %v5217 = vpop.f32.mrb[0].mxu0
        %v5218 = vadd.f32 0.0, %v5217
        %v5219 = vpop.f32.mrb[0].mxu0
        %5220 = vmatprep.mubr.f32.mxu0 0.0
        %5221 = vmatmul.mubr.f32.gmra.mrb[0].mxu0 %v5019
        %v5222 = vpop.f32.mrb[0].mxu0
        %v5223 = vadd.f32 0.0, %v5222
        %v5224 = vpop.f32.mrb[0].mxu0
        %5225 = vmatprep.mubr.f32.mxu0 0.0
        %5226 = vmatmul.mubr.f32.gmra.mrb[0].mxu0 %v5022
        %v5227 = vpop.f32.mrb[0].mxu0
        %v5228 = vadd.f32 0.0, %v5227
        %v5229 = vpop.f32.mrb[0].mxu0
        %5230 = vmatprep.mubr.f32.mxu0 0.0
        %5231 = vmatmul.mubr.f32.gmra.mrb[0].mxu0 %v5025
        %v5232 = vpop.f32.mrb[0].mxu0
        %v5233 = vadd.f32 0.0, %v5232
        %v5234 = vpop.f32.mrb[0].mxu0
        %5235 = vmatprep.mubr.f32.mxu0 0.0
        %5236 = vmatmul.mubr.f32.gmra.mrb[0].mxu0 %v5028
        %v5237 = vpop.f32.mrb[0].mxu0
        %v5238 = vadd.f32 0.0, %v5237
        %v5239 = vpop.f32.mrb[0].mxu0
        %5240 = vmatprep.mubr.f32.mxu0 0.0
        %5241 = vmatmul.mubr.f32.gmra.mrb[0].mxu0 %v5031
        %v5242 = vpop.f32.mrb[0].mxu0
        %v5243 = vadd.f32 0.0, %v5242
        %v5244 = vpop.f32.mrb[0].mxu0
        %5245 = vmatprep.mubr.f32.mxu0 0.0
        %5246 = vmatmul.mubr.f32.gmra.mrb[0].mxu0 %v5034
        %v5247 = vpop.f32.mrb[0].mxu0
        %v5248 = vadd.f32 0.0, %v5247
        %v5249 = vpop.f32.mrb[0].mxu0
        %5250 = vmatprep.mubr.f32.mxu0 0.0
        %5251 = vmatmul.mubr.f32.gmra.mrb[0].mxu0 %v5037
        %v5252 = vpop.f32.mrb[0].mxu0
        %v5253 = vadd.f32 0.0, %v5252
        %v5254 = vpop.f32.mrb[0].mxu0
        %5255 = vmatprep.mubr.f32.mxu0 0.0
        %5256 = vmatmul.mubr.f32.gmra.mrb[0].mxu0 %v5040
        %v5257 = vpop.f32.mrb[0].mxu0
        %v5258 = vadd.f32 0.0, %v5257
        %v5259 = vpop.f32.mrb[0].mxu0
        %5260 = vmatprep.mubr.f32.mxu0 0.0
        %5261 = vmatmul.mubr.f32.gmra.mrb[0].mxu0 %v5043
        %v5262 = vpop.f32.mrb[0].mxu0
        %v5263 = vadd.f32 0.0, %v5262
        %v5264 = vpop.f32.mrb[0].mxu0
        %5265 = vmatprep.mubr.f32.mxu0 0.0
        %5266 = vmatmul.mubr.f32.gmra.mrb[0].mxu0 %v5046
        %v5267 = vpop.f32.mrb[0].mxu0
        %v5268 = vadd.f32 0.0, %v5267
        %v5269 = vpop.f32.mrb[0].mxu0
        %5270 = vmatprep.mubr.f32.mxu0 0.0
        %5271 = vmatmul.mubr.f32.gmra.mrb[0].mxu0 %v5049
        %v5272 = vpop.f32.mrb[0].mxu0
        %v5273 = vadd.f32 0.0, %v5272
        %v5274 = vpop.f32.mrb[0].mxu0
        %5275 = vdwg.mxu0
        %v5276 = vmul.f32 %v5118, %v1236
        %v5277 = vmul.f32 %v5123, %v1236
        %v5278 = vmul.f32 %v5128, %v1236
        %v5279 = vmul.f32 %v5133, %v1236
        %v5280 = vmul.f32 %v5138, %v1236
        %v5281 = vmul.f32 %v5143, %v1236
        %v5282 = vmul.f32 %v5148, %v1236
        %v5283 = vmul.f32 %v5153, %v1236
        %v5284 = vmul.f32 %v5158, %v1236
        %v5285 = vmul.f32 %v5163, %v1236
        %v5286 = vmul.f32 %v5168, %v1236
        %v5287 = vmul.f32 %v5173, %v1236
        %v5288 = vmul.f32 %v5178, %v1236
        %v5289 = vmul.f32 %v5183, %v1236
        %v5290 = vmul.f32 %v5188, %v1236
        %v5291 = vmul.f32 %v5193, %v1236
        %v5292 = vmul.f32 %v5198, %v1236
        %v5293 = vmul.f32 %v5203, %v1236
        %v5294 = vmul.f32 %v5208, %v1236
        %v5295 = vmul.f32 %v5213, %v1236
        %v5296 = vmul.f32 %v5218, %v1236
        %v5297 = vmul.f32 %v5223, %v1236
        %v5298 = vmul.f32 %v5228, %v1236
        %v5299 = vmul.f32 %v5233, %v1236
        %v5300 = vmul.f32 %v5238, %v1236
        %v5301 = vmul.f32 %v5243, %v1236
        %v5302 = vmul.f32 %v5248, %v1236
        %v5303 = vmul.f32 %v5253, %v1236
        %v5304 = vmul.f32 %v5258, %v1236
        %v5305 = vmul.f32 %v5263, %v1236
        %v5306 = vmul.f32 %v5268, %v1236
        %v5307 = vmul.f32 %v5273, %v1236
        %v5308 = vadd.f32 %v5276, %v1274
        %v5309 = vadd.f32 %v5277, %v1274
        %v5310 = vadd.f32 %v5278, %v1274
        %v5311 = vadd.f32 %v5279, %v1274
        %v5312 = vadd.f32 %v5280, %v1274
        %v5313 = vadd.f32 %v5281, %v1274
        %v5314 = vadd.f32 %v5282, %v1274
        %v5315 = vadd.f32 %v5283, %v1274
        %v5316 = vadd.f32 %v5284, %v1274
        %v5317 = vadd.f32 %v5285, %v1274
        %v5318 = vadd.f32 %v5286, %v1274
        %v5319 = vadd.f32 %v5287, %v1274
        %v5320 = vadd.f32 %v5288, %v1274
        %v5321 = vadd.f32 %v5289, %v1274
        %v5322 = vadd.f32 %v5290, %v1274
        %v5323 = vadd.f32 %v5291, %v1274
        %v5324 = vadd.f32 %v5292, %v1274
        %v5325 = vadd.f32 %v5293, %v1274
        %v5326 = vadd.f32 %v5294, %v1274
        %v5327 = vadd.f32 %v5295, %v1274
        %v5328 = vadd.f32 %v5296, %v1274
        %v5329 = vadd.f32 %v5297, %v1274
        %v5330 = vadd.f32 %v5298, %v1274
        %v5331 = vadd.f32 %v5299, %v1274
        %v5332 = vadd.f32 %v5300, %v1274
        %v5333 = vadd.f32 %v5301, %v1274
        %v5334 = vadd.f32 %v5302, %v1274
        %v5335 = vadd.f32 %v5303, %v1274
        %v5336 = vadd.f32 %v5304, %v1274
        %v5337 = vadd.f32 %v5305, %v1274
        %v5338 = vadd.f32 %v5306, %v1274
        %v5339 = vadd.f32 %v5307, %v1274
        %v5340 = vmax.f32 %v5308, 0.0
        %v5341 = vmax.f32 %v5309, 0.0
        %v5342 = vmax.f32 %v5310, 0.0
        %v5343 = vmax.f32 %v5311, 0.0
        %v5344 = vmax.f32 %v5312, 0.0
        %v5345 = vmax.f32 %v5313, 0.0
        %v5346 = vmax.f32 %v5314, 0.0
        %v5347 = vmax.f32 %v5315, 0.0
        %v5348 = vmax.f32 %v5316, 0.0
        %v5349 = vmax.f32 %v5317, 0.0
        %v5350 = vmax.f32 %v5318, 0.0
        %v5351 = vmax.f32 %v5319, 0.0
        %v5352 = vmax.f32 %v5320, 0.0
        %v5353 = vmax.f32 %v5321, 0.0
        %v5354 = vmax.f32 %v5322, 0.0
        %v5355 = vmax.f32 %v5323, 0.0
        %v5356 = vmax.f32 %v5324, 0.0
        %v5357 = vmax.f32 %v5325, 0.0
        %v5358 = vmax.f32 %v5326, 0.0
        %v5359 = vmax.f32 %v5327, 0.0
        %v5360 = vmax.f32 %v5328, 0.0
        %v5361 = vmax.f32 %v5329, 0.0
        %v5362 = vmax.f32 %v5330, 0.0
        %v5363 = vmax.f32 %v5331, 0.0
        %v5364 = vmax.f32 %v5332, 0.0
        %v5365 = vmax.f32 %v5333, 0.0
        %v5366 = vmax.f32 %v5334, 0.0
        %v5367 = vmax.f32 %v5335, 0.0
        %v5368 = vmax.f32 %v5336, 0.0
        %v5369 = vmax.f32 %v5337, 0.0
        %v5370 = vmax.f32 %v5338, 0.0
        %v5371 = vmax.f32 %v5339, 0.0
        %5372 = vst.msk [vmem:[%s1340 + $0x18] sm:$0xff] %vm358, %v5340
        %5373 = vst.msk [vmem:[%s1340 + $0x20] sm:$0xff] %vm358, %v5341
        %5374 = vst.msk [vmem:[%s1340 + $0x58] sm:$0xff] %vm358, %v5342
        %5375 = vst.msk [vmem:[%s1340 + $0x60] sm:$0xff] %vm358, %v5343
        %5376 = vst.msk [vmem:[%s1340 + $0x98] sm:$0xff] %vm358, %v5344
        %5377 = vst.msk [vmem:[%s1340 + $0xa0] sm:$0xff] %vm358, %v5345
        %5378 = vst.msk [vmem:[%s1340 + $0xd8] sm:$0xff] %vm358, %v5346
        %5379 = vst.msk [vmem:[%s1340 + $0xe0] sm:$0xff] %vm358, %v5347
        %5380 = vst.msk [vmem:[%s1340 + $0x118] sm:$0xff] %vm358, %v5348
        %5381 = vst.msk [vmem:[%s1340 + $0x120] sm:$0xff] %vm358, %v5349
        %5382 = vst.msk [vmem:[%s1340 + $0x158] sm:$0xff] %vm358, %v5350
        %5383 = vst.msk [vmem:[%s1340 + $0x160] sm:$0xff] %vm358, %v5351
        %5384 = vst.msk [vmem:[%s1340 + $0x198] sm:$0xff] %vm358, %v5352
        %5385 = vst.msk [vmem:[%s1340 + $0x1a0] sm:$0xff] %vm358, %v5353
        %5386 = vst.msk [vmem:[%s1340 + $0x1d8] sm:$0xff] %vm358, %v5354
        %5387 = vst.msk [vmem:[%s1340 + $0x1e0] sm:$0xff] %vm358, %v5355
        %5388 = vst.msk [vmem:[%s1340 + $0x218] sm:$0xff] %vm358, %v5356
        %5389 = vst.msk [vmem:[%s1340 + $0x220] sm:$0xff] %vm358, %v5357
        %5390 = vst.msk [vmem:[%s1340 + $0x258] sm:$0xff] %vm358, %v5358
        %5391 = vst.msk [vmem:[%s1340 + $0x260] sm:$0xff] %vm358, %v5359
        %5392 = vst.msk [vmem:[%s1340 + $0x298] sm:$0xff] %vm358, %v5360
        %5393 = vst.msk [vmem:[%s1340 + $0x2a0] sm:$0xff] %vm358, %v5361
        %5394 = vst.msk [vmem:[%s1340 + $0x2d8] sm:$0xff] %vm358, %v5362
        %5395 = vst.msk [vmem:[%s1340 + $0x2e0] sm:$0xff] %vm358, %v5363
        %5396 = vst.msk [vmem:[%s1340 + $0x318] sm:$0xff] %vm358, %v5364
        %5397 = vst.msk [vmem:[%s1340 + $0x320] sm:$0xff] %vm358, %v5365
        %5398 = vst.msk [vmem:[%s1340 + $0x358] sm:$0xff] %vm358, %v5366
        %5399 = vst.msk [vmem:[%s1340 + $0x360] sm:$0xff] %vm358, %v5367
        %5400 = vst.msk [vmem:[%s1340 + $0x398] sm:$0xff] %vm358, %v5368
        %5401 = vst.msk [vmem:[%s1340 + $0x3a0] sm:$0xff] %vm358, %v5369
        %5402 = vst.msk [vmem:[%s1340 + $0x3d8] sm:$0xff] %vm358, %v5370
        %5403 = vst.msk [vmem:[%s1340 + $0x3e0] sm:$0xff] %vm358, %v5371
        %v5404 = vld [vmem:[%s1340 + $0x18] sm:$0xff]
        %v5405 = vld [vmem:[%s1340 + $0x20] sm:$0xff]
        %v5406 = vld [vmem:[%s1340 + $0x58] sm:$0xff]
        %v5407 = vld [vmem:[%s1340 + $0x60] sm:$0xff]
        %v5408 = vld [vmem:[%s1340 + $0x98] sm:$0xff]
        %v5409 = vld [vmem:[%s1340 + $0xa0] sm:$0xff]
        %v5410 = vld [vmem:[%s1340 + $0xd8] sm:$0xff]
        %v5411 = vld [vmem:[%s1340 + $0xe0] sm:$0xff]
        %v5412 = vld [vmem:[%s1340 + $0x118] sm:$0xff]
        %v5413 = vld [vmem:[%s1340 + $0x120] sm:$0xff]
        %v5414 = vld [vmem:[%s1340 + $0x158] sm:$0xff]
        %v5415 = vld [vmem:[%s1340 + $0x160] sm:$0xff]
        %v5416 = vld [vmem:[%s1340 + $0x198] sm:$0xff]
        %v5417 = vld [vmem:[%s1340 + $0x1a0] sm:$0xff]
        %v5418 = vld [vmem:[%s1340 + $0x1d8] sm:$0xff]
        %v5419 = vld [vmem:[%s1340 + $0x1e0] sm:$0xff]
        %v5420 = vld [vmem:[%s1340 + $0x218] sm:$0xff]
        %v5421 = vld [vmem:[%s1340 + $0x220] sm:$0xff]
        %v5422 = vld [vmem:[%s1340 + $0x258] sm:$0xff]
        %v5423 = vld [vmem:[%s1340 + $0x260] sm:$0xff]
        %v5424 = vld [vmem:[%s1340 + $0x298] sm:$0xff]
        %v5425 = vld [vmem:[%s1340 + $0x2a0] sm:$0xff]
        %v5426 = vld [vmem:[%s1340 + $0x2d8] sm:$0xff]
        %v5427 = vld [vmem:[%s1340 + $0x2e0] sm:$0xff]
        %v5428 = vld [vmem:[%s1340 + $0x318] sm:$0xff]
        %v5429 = vld [vmem:[%s1340 + $0x320] sm:$0xff]
        %v5430 = vld [vmem:[%s1340 + $0x358] sm:$0xff]
        %v5431 = vld [vmem:[%s1340 + $0x360] sm:$0xff]
        %v5432 = vld [vmem:[%s1340 + $0x398] sm:$0xff]
        %v5433 = vld [vmem:[%s1340 + $0x3a0] sm:$0xff]
        %v5434 = vld [vmem:[%s1340 + $0x3d8] sm:$0xff]
        %v5435 = vld [vmem:[%s1340 + $0x3e0] sm:$0xff]
        %s5436 = scalar_lea.vmem %s4, 32
        %v5437 = vld [vmem:[%s5436] sm:$0xff]
        %v5439 = vsel %vm358, %v5404, 0
        %v5442 = vsel %vm358, %v5405, 0
        %v5445 = vsel %vm358, %v5406, 0
        %v5448 = vsel %vm358, %v5407, 0
        %v5451 = vsel %vm358, %v5408, 0
        %v5454 = vsel %vm358, %v5409, 0
        %v5457 = vsel %vm358, %v5410, 0
        %v5460 = vsel %vm358, %v5411, 0
        %v5463 = vsel %vm358, %v5412, 0
        %v5466 = vsel %vm358, %v5413, 0
        %v5469 = vsel %vm358, %v5414, 0
        %v5472 = vsel %vm358, %v5415, 0
        %v5475 = vsel %vm358, %v5416, 0
        %v5478 = vsel %vm358, %v5417, 0
        %v5481 = vsel %vm358, %v5418, 0
        %v5484 = vsel %vm358, %v5419, 0
        %v5487 = vsel %vm358, %v5420, 0
        %v5490 = vsel %vm358, %v5421, 0
        %v5493 = vsel %vm358, %v5422, 0
        %v5496 = vsel %vm358, %v5423, 0
        %v5499 = vsel %vm358, %v5424, 0
        %v5502 = vsel %vm358, %v5425, 0
        %v5505 = vsel %vm358, %v5426, 0
        %v5508 = vsel %vm358, %v5427, 0
        %v5511 = vsel %vm358, %v5428, 0
        %v5514 = vsel %vm358, %v5429, 0
        %v5517 = vsel %vm358, %v5430, 0
        %v5520 = vsel %vm358, %v5431, 0
        %v5523 = vsel %vm358, %v5432, 0
        %v5526 = vsel %vm358, %v5433, 0
        %v5529 = vsel %vm358, %v5434, 0
        %v5532 = vsel %vm358, %v5435, 0
        %5534 = vmatprep.subr.mxu0 0.0
        %5535 = vmatpush1.msra.mxu0 %v5437
        %5536 = vmatprep.subr.mxu0 0.0
        %5537 = vmatpush1.msra.mxu0 0.0
        %5538 = vmatprep.subr.mxu0 0.0
        %5539 = vmatpush1.msra.mxu0 0.0
        %5540 = vmatprep.subr.mxu0 0.0
        %5541 = vmatpush1.msra.mxu0 0.0
        %5542 = vmatprep.subr.mxu0 0.0
        %5543 = vmatpush1.msra.mxu0 0.0
        %5544 = vmatprep.subr.mxu0 0.0
        %5545 = vmatpush1.msra.mxu0 0.0
        %5546 = vmatprep.subr.mxu0 0.0
        %5547 = vmatpush1.msra.mxu0 0.0
        %5548 = vmatprep.subr.mxu0 0.0
        %5549 = vmatpush1.msra.mxu0 0.0
        %5550 = vmatprep.subr.mxu0 0.0
        %5551 = vmatpush1.msra.mxu0 0.0
        %5552 = vmatprep.subr.mxu0 0.0
        %5553 = vmatpush1.msra.mxu0 0.0
        %5554 = vmatprep.subr.mxu0 0.0
        %5555 = vmatpush1.msra.mxu0 0.0
        %5556 = vmatprep.subr.mxu0 0.0
        %5557 = vmatpush1.msra.mxu0 0.0
        %5558 = vmatprep.subr.mxu0 0.0
        %5559 = vmatpush1.msra.mxu0 0.0
        %5560 = vmatprep.subr.mxu0 0.0
        %5561 = vmatpush1.msra.mxu0 0.0
        %5562 = vmatprep.subr.mxu0 0.0
        %5563 = vmatpush1.msra.mxu0 0.0
        %5564 = vmatprep.subr.mxu0 0.0
        %5565 = vmatpush1.msra.mxu0 0.0
        %5566 = vmatprep.subr.mxu0 0.0
        %5567 = vmatpush1.msra.mxu0 0.0
        %5568 = vmatprep.subr.mxu0 0.0
        %5569 = vmatpush1.msra.mxu0 0.0
        %5570 = vmatprep.subr.mxu0 0.0
        %5571 = vmatpush1.msra.mxu0 0.0
        %5572 = vmatprep.subr.mxu0 0.0
        %5573 = vmatpush1.msra.mxu0 0.0
        %5574 = vmatprep.subr.mxu0 0.0
        %5575 = vmatpush1.msra.mxu0 0.0
        %5576 = vmatprep.subr.mxu0 0.0
        %5577 = vmatpush1.msra.mxu0 0.0
        %5578 = vmatprep.subr.mxu0 0.0
        %5579 = vmatpush1.msra.mxu0 0.0
        %5580 = vmatprep.subr.mxu0 0.0
        %5581 = vmatpush1.msra.mxu0 0.0
        %5582 = vmatprep.subr.mxu0 0.0
        %5583 = vmatpush1.msra.mxu0 0.0
        %5584 = vmatprep.subr.mxu0 0.0
        %5585 = vmatpush1.msra.mxu0 0.0
        %5586 = vmatprep.subr.mxu0 0.0
        %5587 = vmatpush1.msra.mxu0 0.0
        %5588 = vmatprep.subr.mxu0 0.0
        %5589 = vmatpush1.msra.mxu0 0.0
        %5590 = vmatprep.subr.mxu0 0.0
        %5591 = vmatpush1.msra.mxu0 0.0
        %5592 = vmatprep.subr.mxu0 0.0
        %5593 = vmatpush1.msra.mxu0 0.0
        %5594 = vmatprep.subr.mxu0 0.0
        %5595 = vmatpush1.msra.mxu0 0.0
        %5596 = vmatprep.subr.mxu0 0.0
        %5597 = vmatpush1.msra.mxu0 0.0
        %5598 = vmatprep.mubr.f32.mxu0 0.0
        %5599 = vmatmul.mubr.f32.gmra.mrb[0].mxu0 %v5439
        %v5600 = vpop.f32.mrb[0].mxu0
        %v5601 = vadd.f32 0.0, %v5600
        %v5602 = vpop.f32.mrb[0].mxu0
        %5603 = vmatprep.mubr.f32.mxu0 0.0
        %5604 = vmatmul.mubr.f32.gmra.mrb[0].mxu0 %v5442
        %v5605 = vpop.f32.mrb[0].mxu0
        %v5606 = vadd.f32 0.0, %v5605
        %v5607 = vpop.f32.mrb[0].mxu0
        %5608 = vmatprep.mubr.f32.mxu0 0.0
        %5609 = vmatmul.mubr.f32.gmra.mrb[0].mxu0 %v5445
        %v5610 = vpop.f32.mrb[0].mxu0
        %v5611 = vadd.f32 0.0, %v5610
        %v5612 = vpop.f32.mrb[0].mxu0
        %5613 = vmatprep.mubr.f32.mxu0 0.0
        %5614 = vmatmul.mubr.f32.gmra.mrb[0].mxu0 %v5448
        %v5615 = vpop.f32.mrb[0].mxu0
        %v5616 = vadd.f32 0.0, %v5615
        %v5617 = vpop.f32.mrb[0].mxu0
        %5618 = vmatprep.mubr.f32.mxu0 0.0
        %5619 = vmatmul.mubr.f32.gmra.mrb[0].mxu0 %v5451
        %v5620 = vpop.f32.mrb[0].mxu0
        %v5621 = vadd.f32 0.0, %v5620
        %v5622 = vpop.f32.mrb[0].mxu0
        %5623 = vmatprep.mubr.f32.mxu0 0.0
        %5624 = vmatmul.mubr.f32.gmra.mrb[0].mxu0 %v5454
        %v5625 = vpop.f32.mrb[0].mxu0
        %v5626 = vadd.f32 0.0, %v5625
        %v5627 = vpop.f32.mrb[0].mxu0
        %5628 = vmatprep.mubr.f32.mxu0 0.0
        %5629 = vmatmul.mubr.f32.gmra.mrb[0].mxu0 %v5457
        %v5630 = vpop.f32.mrb[0].mxu0
        %v5631 = vadd.f32 0.0, %v5630
        %v5632 = vpop.f32.mrb[0].mxu0
        %5633 = vmatprep.mubr.f32.mxu0 0.0
        %5634 = vmatmul.mubr.f32.gmra.mrb[0].mxu0 %v5460
        %v5635 = vpop.f32.mrb[0].mxu0
        %v5636 = vadd.f32 0.0, %v5635
        %v5637 = vpop.f32.mrb[0].mxu0
        %5638 = vmatprep.mubr.f32.mxu0 0.0
        %5639 = vmatmul.mubr.f32.gmra.mrb[0].mxu0 %v5463
        %v5640 = vpop.f32.mrb[0].mxu0
        %v5641 = vadd.f32 0.0, %v5640
        %v5642 = vpop.f32.mrb[0].mxu0
        %5643 = vmatprep.mubr.f32.mxu0 0.0
        %5644 = vmatmul.mubr.f32.gmra.mrb[0].mxu0 %v5466
        %v5645 = vpop.f32.mrb[0].mxu0
        %v5646 = vadd.f32 0.0, %v5645
        %v5647 = vpop.f32.mrb[0].mxu0
        %5648 = vmatprep.mubr.f32.mxu0 0.0
        %5649 = vmatmul.mubr.f32.gmra.mrb[0].mxu0 %v5469
        %v5650 = vpop.f32.mrb[0].mxu0
        %v5651 = vadd.f32 0.0, %v5650
        %v5652 = vpop.f32.mrb[0].mxu0
        %5653 = vmatprep.mubr.f32.mxu0 0.0
        %5654 = vmatmul.mubr.f32.gmra.mrb[0].mxu0 %v5472
        %v5655 = vpop.f32.mrb[0].mxu0
        %v5656 = vadd.f32 0.0, %v5655
        %v5657 = vpop.f32.mrb[0].mxu0
        %5658 = vmatprep.mubr.f32.mxu0 0.0
        %5659 = vmatmul.mubr.f32.gmra.mrb[0].mxu0 %v5475
        %v5660 = vpop.f32.mrb[0].mxu0
        %v5661 = vadd.f32 0.0, %v5660
        %v5662 = vpop.f32.mrb[0].mxu0
        %5663 = vmatprep.mubr.f32.mxu0 0.0
        %5664 = vmatmul.mubr.f32.gmra.mrb[0].mxu0 %v5478
        %v5665 = vpop.f32.mrb[0].mxu0
        %v5666 = vadd.f32 0.0, %v5665
        %v5667 = vpop.f32.mrb[0].mxu0
        %5668 = vmatprep.mubr.f32.mxu0 0.0
        %5669 = vmatmul.mubr.f32.gmra.mrb[0].mxu0 %v5481
        %v5670 = vpop.f32.mrb[0].mxu0
        %v5671 = vadd.f32 0.0, %v5670
        %v5672 = vpop.f32.mrb[0].mxu0
        %5673 = vmatprep.mubr.f32.mxu0 0.0
        %5674 = vmatmul.mubr.f32.gmra.mrb[0].mxu0 %v5484
        %v5675 = vpop.f32.mrb[0].mxu0
        %v5676 = vadd.f32 0.0, %v5675
        %v5677 = vpop.f32.mrb[0].mxu0
        %5678 = vmatprep.mubr.f32.mxu0 0.0
        %5679 = vmatmul.mubr.f32.gmra.mrb[0].mxu0 %v5487
        %v5680 = vpop.f32.mrb[0].mxu0
        %v5681 = vadd.f32 0.0, %v5680
        %v5682 = vpop.f32.mrb[0].mxu0
        %5683 = vmatprep.mubr.f32.mxu0 0.0
        %5684 = vmatmul.mubr.f32.gmra.mrb[0].mxu0 %v5490
        %v5685 = vpop.f32.mrb[0].mxu0
        %v5686 = vadd.f32 0.0, %v5685
        %v5687 = vpop.f32.mrb[0].mxu0
        %5688 = vmatprep.mubr.f32.mxu0 0.0
        %5689 = vmatmul.mubr.f32.gmra.mrb[0].mxu0 %v5493
        %v5690 = vpop.f32.mrb[0].mxu0
        %v5691 = vadd.f32 0.0, %v5690
        %v5692 = vpop.f32.mrb[0].mxu0
        %5693 = vmatprep.mubr.f32.mxu0 0.0
        %5694 = vmatmul.mubr.f32.gmra.mrb[0].mxu0 %v5496
        %v5695 = vpop.f32.mrb[0].mxu0
        %v5696 = vadd.f32 0.0, %v5695
        %v5697 = vpop.f32.mrb[0].mxu0
        %5698 = vmatprep.mubr.f32.mxu0 0.0
        %5699 = vmatmul.mubr.f32.gmra.mrb[0].mxu0 %v5499
        %v5700 = vpop.f32.mrb[0].mxu0
        %v5701 = vadd.f32 0.0, %v5700
        %v5702 = vpop.f32.mrb[0].mxu0
        %5703 = vmatprep.mubr.f32.mxu0 0.0
        %5704 = vmatmul.mubr.f32.gmra.mrb[0].mxu0 %v5502
        %v5705 = vpop.f32.mrb[0].mxu0
        %v5706 = vadd.f32 0.0, %v5705
        %v5707 = vpop.f32.mrb[0].mxu0
        %5708 = vmatprep.mubr.f32.mxu0 0.0
        %5709 = vmatmul.mubr.f32.gmra.mrb[0].mxu0 %v5505
        %v5710 = vpop.f32.mrb[0].mxu0
        %v5711 = vadd.f32 0.0, %v5710
        %v5712 = vpop.f32.mrb[0].mxu0
        %5713 = vmatprep.mubr.f32.mxu0 0.0
        %5714 = vmatmul.mubr.f32.gmra.mrb[0].mxu0 %v5508
        %v5715 = vpop.f32.mrb[0].mxu0
        %v5716 = vadd.f32 0.0, %v5715
        %v5717 = vpop.f32.mrb[0].mxu0
        %5718 = vmatprep.mubr.f32.mxu0 0.0
        %5719 = vmatmul.mubr.f32.gmra.mrb[0].mxu0 %v5511
        %v5720 = vpop.f32.mrb[0].mxu0
        %v5721 = vadd.f32 0.0, %v5720
        %v5722 = vpop.f32.mrb[0].mxu0
        %5723 = vmatprep.mubr.f32.mxu0 0.0
        %5724 = vmatmul.mubr.f32.gmra.mrb[0].mxu0 %v5514
        %v5725 = vpop.f32.mrb[0].mxu0
        %v5726 = vadd.f32 0.0, %v5725
        %v5727 = vpop.f32.mrb[0].mxu0
        %5728 = vmatprep.mubr.f32.mxu0 0.0
        %5729 = vmatmul.mubr.f32.gmra.mrb[0].mxu0 %v5517
        %v5730 = vpop.f32.mrb[0].mxu0
        %v5731 = vadd.f32 0.0, %v5730
        %v5732 = vpop.f32.mrb[0].mxu0
        %5733 = vmatprep.mubr.f32.mxu0 0.0
        %5734 = vmatmul.mubr.f32.gmra.mrb[0].mxu0 %v5520
        %v5735 = vpop.f32.mrb[0].mxu0
        %v5736 = vadd.f32 0.0, %v5735
        %v5737 = vpop.f32.mrb[0].mxu0
        %5738 = vmatprep.mubr.f32.mxu0 0.0
        %5739 = vmatmul.mubr.f32.gmra.mrb[0].mxu0 %v5523
        %v5740 = vpop.f32.mrb[0].mxu0
        %v5741 = vadd.f32 0.0, %v5740
        %v5742 = vpop.f32.mrb[0].mxu0
        %5743 = vmatprep.mubr.f32.mxu0 0.0
        %5744 = vmatmul.mubr.f32.gmra.mrb[0].mxu0 %v5526
        %v5745 = vpop.f32.mrb[0].mxu0
        %v5746 = vadd.f32 0.0, %v5745
        %v5747 = vpop.f32.mrb[0].mxu0
        %5748 = vmatprep.mubr.f32.mxu0 0.0
        %5749 = vmatmul.mubr.f32.gmra.mrb[0].mxu0 %v5529
        %v5750 = vpop.f32.mrb[0].mxu0
        %v5751 = vadd.f32 0.0, %v5750
        %v5752 = vpop.f32.mrb[0].mxu0
        %5753 = vmatprep.mubr.f32.mxu0 0.0
        %5754 = vmatmul.mubr.f32.gmra.mrb[0].mxu0 %v5532
        %v5755 = vpop.f32.mrb[0].mxu0
        %v5756 = vadd.f32 0.0, %v5755
        %v5757 = vpop.f32.mrb[0].mxu0
        %5758 = vdwg.mxu0
        %v5759 = vmul.f32 %v5601, %v1236
        %v5760 = vmul.f32 %v5606, %v1236
        %v5761 = vmul.f32 %v5611, %v1236
        %v5762 = vmul.f32 %v5616, %v1236
        %v5763 = vmul.f32 %v5621, %v1236
        %v5764 = vmul.f32 %v5626, %v1236
        %v5765 = vmul.f32 %v5631, %v1236
        %v5766 = vmul.f32 %v5636, %v1236
        %v5767 = vmul.f32 %v5641, %v1236
        %v5768 = vmul.f32 %v5646, %v1236
        %v5769 = vmul.f32 %v5651, %v1236
        %v5770 = vmul.f32 %v5656, %v1236
        %v5771 = vmul.f32 %v5661, %v1236
        %v5772 = vmul.f32 %v5666, %v1236
        %v5773 = vmul.f32 %v5671, %v1236
        %v5774 = vmul.f32 %v5676, %v1236
        %v5775 = vmul.f32 %v5681, %v1236
        %v5776 = vmul.f32 %v5686, %v1236
        %v5777 = vmul.f32 %v5691, %v1236
        %v5778 = vmul.f32 %v5696, %v1236
        %v5779 = vmul.f32 %v5701, %v1236
        %v5780 = vmul.f32 %v5706, %v1236
        %v5781 = vmul.f32 %v5711, %v1236
        %v5782 = vmul.f32 %v5716, %v1236
        %v5783 = vmul.f32 %v5721, %v1236
        %v5784 = vmul.f32 %v5726, %v1236
        %v5785 = vmul.f32 %v5731, %v1236
        %v5786 = vmul.f32 %v5736, %v1236
        %v5787 = vmul.f32 %v5741, %v1236
        %v5788 = vmul.f32 %v5746, %v1236
        %v5789 = vmul.f32 %v5751, %v1236
        %v5790 = vmul.f32 %v5756, %v1236
        %v5791 = vadd.f32 %v5759, %v1274
        %v5792 = vadd.f32 %v5760, %v1274
        %v5793 = vadd.f32 %v5761, %v1274
        %v5794 = vadd.f32 %v5762, %v1274
        %v5795 = vadd.f32 %v5763, %v1274
        %v5796 = vadd.f32 %v5764, %v1274
        %v5797 = vadd.f32 %v5765, %v1274
        %v5798 = vadd.f32 %v5766, %v1274
        %v5799 = vadd.f32 %v5767, %v1274
        %v5800 = vadd.f32 %v5768, %v1274
        %v5801 = vadd.f32 %v5769, %v1274
        %v5802 = vadd.f32 %v5770, %v1274
        %v5803 = vadd.f32 %v5771, %v1274
        %v5804 = vadd.f32 %v5772, %v1274
        %v5805 = vadd.f32 %v5773, %v1274
        %v5806 = vadd.f32 %v5774, %v1274
        %v5807 = vadd.f32 %v5775, %v1274
        %v5808 = vadd.f32 %v5776, %v1274
        %v5809 = vadd.f32 %v5777, %v1274
        %v5810 = vadd.f32 %v5778, %v1274
        %v5811 = vadd.f32 %v5779, %v1274
        %v5812 = vadd.f32 %v5780, %v1274
        %v5813 = vadd.f32 %v5781, %v1274
        %v5814 = vadd.f32 %v5782, %v1274
        %v5815 = vadd.f32 %v5783, %v1274
        %v5816 = vadd.f32 %v5784, %v1274
        %v5817 = vadd.f32 %v5785, %v1274
        %v5818 = vadd.f32 %v5786, %v1274
        %v5819 = vadd.f32 %v5787, %v1274
        %v5820 = vadd.f32 %v5788, %v1274
        %v5821 = vadd.f32 %v5789, %v1274
        %v5822 = vadd.f32 %v5790, %v1274
        %v5823 = vmax.f32 %v5791, 0.0
        %v5824 = vmax.f32 %v5792, 0.0
        %v5825 = vmax.f32 %v5793, 0.0
        %v5826 = vmax.f32 %v5794, 0.0
        %v5827 = vmax.f32 %v5795, 0.0
        %v5828 = vmax.f32 %v5796, 0.0
        %v5829 = vmax.f32 %v5797, 0.0
        %v5830 = vmax.f32 %v5798, 0.0
        %v5831 = vmax.f32 %v5799, 0.0
        %v5832 = vmax.f32 %v5800, 0.0
        %v5833 = vmax.f32 %v5801, 0.0
        %v5834 = vmax.f32 %v5802, 0.0
        %v5835 = vmax.f32 %v5803, 0.0
        %v5836 = vmax.f32 %v5804, 0.0
        %v5837 = vmax.f32 %v5805, 0.0
        %v5838 = vmax.f32 %v5806, 0.0
        %v5839 = vmax.f32 %v5807, 0.0
        %v5840 = vmax.f32 %v5808, 0.0
        %v5841 = vmax.f32 %v5809, 0.0
        %v5842 = vmax.f32 %v5810, 0.0
        %v5843 = vmax.f32 %v5811, 0.0
        %v5844 = vmax.f32 %v5812, 0.0
        %v5845 = vmax.f32 %v5813, 0.0
        %v5846 = vmax.f32 %v5814, 0.0
        %v5847 = vmax.f32 %v5815, 0.0
        %v5848 = vmax.f32 %v5816, 0.0
        %v5849 = vmax.f32 %v5817, 0.0
        %v5850 = vmax.f32 %v5818, 0.0
        %v5851 = vmax.f32 %v5819, 0.0
        %v5852 = vmax.f32 %v5820, 0.0
        %v5853 = vmax.f32 %v5821, 0.0
        %v5854 = vmax.f32 %v5822, 0.0
        %v5855 = vsel %vm906, %v873, 0.0
        %v5856 = vsel %vm906, %v874, 0.0
        %v5857 = vadd.f32 %v5855, %v5856
        %v5858 = vsel %vm906, %v875, 0.0
        %v5859 = vadd.f32 %v5857, %v5858
        %v5860 = vsel %vm906, %v876, 0.0
        %v5861 = vadd.f32 %v5859, %v5860
        %v5862 = vsel %vm906, %v877, 0.0
        %v5863 = vadd.f32 %v5861, %v5862
        %v5864 = vsel %vm906, %v878, 0.0
        %v5865 = vadd.f32 %v5863, %v5864
        %v5866 = vsel %vm906, %v879, 0.0
        %v5867 = vadd.f32 %v5865, %v5866
        %v5868 = vsel %vm906, %v880, 0.0
        %v5869 = vadd.f32 %v5867, %v5868
        %v5870 = vsel %vm906, %v881, 0.0
        %v5871 = vadd.f32 %v5869, %v5870
        %v5872 = vsel %vm906, %v882, 0.0
        %v5873 = vadd.f32 %v5871, %v5872
        %v5874 = vsel %vm906, %v883, 0.0
        %v5875 = vadd.f32 %v5873, %v5874
        %v5876 = vsel %vm906, %v884, 0.0
        %v5877 = vadd.f32 %v5875, %v5876
        %v5878 = vsel %vm906, %v885, 0.0
        %v5879 = vadd.f32 %v5877, %v5878
        %v5880 = vsel %vm906, %v886, 0.0
        %v5881 = vadd.f32 %v5879, %v5880
        %v5882 = vsel %vm906, %v887, 0.0
        %v5883 = vadd.f32 %v5881, %v5882
        %v5884 = vsel %vm906, %v888, 0.0
        %v5885 = vadd.f32 %v5883, %v5884
        %v5886 = vsel %vm906, %v889, 0.0
        %v5887 = vadd.f32 %v5885, %v5886
        %v5888 = vsel %vm906, %v890, 0.0
        %v5889 = vadd.f32 %v5887, %v5888
        %v5890 = vsel %vm906, %v891, 0.0
        %v5891 = vadd.f32 %v5889, %v5890
        %v5892 = vsel %vm906, %v892, 0.0
        %v5893 = vadd.f32 %v5891, %v5892
        %v5894 = vsel %vm906, %v893, 0.0
        %v5895 = vadd.f32 %v5893, %v5894
        %v5896 = vsel %vm906, %v894, 0.0
        %v5897 = vadd.f32 %v5895, %v5896
        %v5898 = vsel %vm906, %v895, 0.0
        %v5899 = vadd.f32 %v5897, %v5898
        %v5900 = vsel %vm906, %v896, 0.0
        %v5901 = vadd.f32 %v5899, %v5900
        %v5902 = vsel %vm906, %v897, 0.0
        %v5903 = vadd.f32 %v5901, %v5902
        %v5904 = vsel %vm906, %v898, 0.0
        %v5905 = vadd.f32 %v5903, %v5904
        %v5906 = vsel %vm906, %v899, 0.0
        %v5907 = vadd.f32 %v5905, %v5906
        %v5908 = vsel %vm906, %v900, 0.0
        %v5909 = vadd.f32 %v5907, %v5908
        %v5910 = vsel %vm906, %v901, 0.0
        %v5911 = vadd.f32 %v5909, %v5910
        %v5912 = vsel %vm906, %v902, 0.0
        %v5913 = vadd.f32 %v5911, %v5912
        %v5914 = vsel %vm906, %v903, 0.0
        %v5915 = vadd.f32 %v5913, %v5914
        %v5916 = vsel %vm906, %v904, 0.0
        %v5917 = vadd.f32 %v5915, %v5916
        %v5918 = vrot.slane %v5917, 4
        %v5919 = vadd.f32 %v5917, %v5918
        %v5920 = vrot.slane %v5919, 2
        %v5921 = vadd.f32 %v5919, %v5920
        %v5922 = vrot.slane %v5921, 1
        %v5923 = vadd.f32 %v5921, %v5922
        %v5924 = vrcp.pop 256.0
        %v5925 = vmul.f32 %v5923, %v5924
        %v5926 = vld [vmem:[%s5] sm:$0xf]
        %v5928 = vsel %vm906, %v5925, 0
        %v5931 = vsel %vm1003, %v5926, 0
        %5933 = vmatprep.subr.mxu0 0.0
        %5934 = vmatpush1.msra.mxu0 %v5931
        %5935 = vmatprep.subr.mxu0 0.0
        %5936 = vmatpush1.msra.mxu0 0.0
        %5937 = vmatprep.subr.mxu0 0.0
        %5938 = vmatpush1.msra.mxu0 0.0
        %5939 = vmatprep.subr.mxu0 0.0
        %5940 = vmatpush1.msra.mxu0 0.0
        %5941 = vmatprep.subr.mxu0 0.0
        %5942 = vmatpush1.msra.mxu0 0.0
        %5943 = vmatprep.subr.mxu0 0.0
        %5944 = vmatpush1.msra.mxu0 0.0
        %5945 = vmatprep.subr.mxu0 0.0
        %5946 = vmatpush1.msra.mxu0 0.0
        %5947 = vmatprep.subr.mxu0 0.0
        %5948 = vmatpush1.msra.mxu0 0.0
        %5949 = vmatprep.subr.mxu0 0.0
        %5950 = vmatpush1.msra.mxu0 0.0
        %5951 = vmatprep.subr.mxu0 0.0
        %5952 = vmatpush1.msra.mxu0 0.0
        %5953 = vmatprep.subr.mxu0 0.0
        %5954 = vmatpush1.msra.mxu0 0.0
        %5955 = vmatprep.subr.mxu0 0.0
        %5956 = vmatpush1.msra.mxu0 0.0
        %5957 = vmatprep.subr.mxu0 0.0
        %5958 = vmatpush1.msra.mxu0 0.0
        %5959 = vmatprep.subr.mxu0 0.0
        %5960 = vmatpush1.msra.mxu0 0.0
        %5961 = vmatprep.subr.mxu0 0.0
        %5962 = vmatpush1.msra.mxu0 0.0
        %5963 = vmatprep.subr.mxu0 0.0
        %5964 = vmatpush1.msra.mxu0 0.0
        %5965 = vmatprep.subr.mxu0 0.0
        %5966 = vmatpush1.msra.mxu0 0.0
        %5967 = vmatprep.subr.mxu0 0.0
        %5968 = vmatpush1.msra.mxu0 0.0
        %5969 = vmatprep.subr.mxu0 0.0
        %5970 = vmatpush1.msra.mxu0 0.0
        %5971 = vmatprep.subr.mxu0 0.0
        %5972 = vmatpush1.msra.mxu0 0.0
        %5973 = vmatprep.subr.mxu0 0.0
        %5974 = vmatpush1.msra.mxu0 0.0
        %5975 = vmatprep.subr.mxu0 0.0
        %5976 = vmatpush1.msra.mxu0 0.0
        %5977 = vmatprep.subr.mxu0 0.0
        %5978 = vmatpush1.msra.mxu0 0.0
        %5979 = vmatprep.subr.mxu0 0.0
        %5980 = vmatpush1.msra.mxu0 0.0
        %5981 = vmatprep.subr.mxu0 0.0
        %5982 = vmatpush1.msra.mxu0 0.0
        %5983 = vmatprep.subr.mxu0 0.0
        %5984 = vmatpush1.msra.mxu0 0.0
        %5985 = vmatprep.subr.mxu0 0.0
        %5986 = vmatpush1.msra.mxu0 0.0
        %5987 = vmatprep.subr.mxu0 0.0
        %5988 = vmatpush1.msra.mxu0 0.0
        %5989 = vmatprep.subr.mxu0 0.0
        %5990 = vmatpush1.msra.mxu0 0.0
        %5991 = vmatprep.subr.mxu0 0.0
        %5992 = vmatpush1.msra.mxu0 0.0
        %5993 = vmatprep.subr.mxu0 0.0
        %5994 = vmatpush1.msra.mxu0 0.0
        %5995 = vmatprep.subr.mxu0 0.0
        %5996 = vmatpush1.msra.mxu0 0.0
        %5997 = vmatprep.mubr.f32.mxu0 0.0
        %5998 = vmatmul.mubr.f32.gmra.mrb[0].mxu0 %v5928
        %v5999 = vpop.f32.mrb[0].mxu0
        %v6000 = vadd.f32 0.0, %v5999
        %v6001 = vpop.f32.mrb[0].mxu0
        %6002 = vdwg.mxu0
        %v6003 = vmul.f32 %v6000, %v871
        %v6004 = vadd.f32 %v6003, %v872
        %v6005 = vmax.f32 %v6004, 0.0
        %v6006 = vld [vmem:[%s7] sm:$0xff]
        %v6008 = vsel %vm358, %v6005, 0
        %6010 = vmatprep.subr.mxu0 0.0
        %6011 = vmatpush1.msra.mxu0 %v6006
        %6012 = vmatprep.subr.mxu0 0.0
        %6013 = vmatpush1.msra.mxu0 0.0
        %6014 = vmatprep.subr.mxu0 0.0
        %6015 = vmatpush1.msra.mxu0 0.0
        %6016 = vmatprep.subr.mxu0 0.0
        %6017 = vmatpush1.msra.mxu0 0.0
        %6018 = vmatprep.subr.mxu0 0.0
        %6019 = vmatpush1.msra.mxu0 0.0
        %6020 = vmatprep.subr.mxu0 0.0
        %6021 = vmatpush1.msra.mxu0 0.0
        %6022 = vmatprep.subr.mxu0 0.0
        %6023 = vmatpush1.msra.mxu0 0.0
        %6024 = vmatprep.subr.mxu0 0.0
        %6025 = vmatpush1.msra.mxu0 0.0
        %6026 = vmatprep.subr.mxu0 0.0
        %6027 = vmatpush1.msra.mxu0 0.0
        %6028 = vmatprep.subr.mxu0 0.0
        %6029 = vmatpush1.msra.mxu0 0.0
        %6030 = vmatprep.subr.mxu0 0.0
        %6031 = vmatpush1.msra.mxu0 0.0
        %6032 = vmatprep.subr.mxu0 0.0
        %6033 = vmatpush1.msra.mxu0 0.0
        %6034 = vmatprep.subr.mxu0 0.0
        %6035 = vmatpush1.msra.mxu0 0.0
        %6036 = vmatprep.subr.mxu0 0.0
        %6037 = vmatpush1.msra.mxu0 0.0
        %6038 = vmatprep.subr.mxu0 0.0
        %6039 = vmatpush1.msra.mxu0 0.0
        %6040 = vmatprep.subr.mxu0 0.0
        %6041 = vmatpush1.msra.mxu0 0.0
        %6042 = vmatprep.subr.mxu0 0.0
        %6043 = vmatpush1.msra.mxu0 0.0
        %6044 = vmatprep.subr.mxu0 0.0
        %6045 = vmatpush1.msra.mxu0 0.0
        %6046 = vmatprep.subr.mxu0 0.0
        %6047 = vmatpush1.msra.mxu0 0.0
        %6048 = vmatprep.subr.mxu0 0.0
        %6049 = vmatpush1.msra.mxu0 0.0
        %6050 = vmatprep.subr.mxu0 0.0
        %6051 = vmatpush1.msra.mxu0 0.0
        %6052 = vmatprep.subr.mxu0 0.0
        %6053 = vmatpush1.msra.mxu0 0.0
        %6054 = vmatprep.subr.mxu0 0.0
        %6055 = vmatpush1.msra.mxu0 0.0
        %6056 = vmatprep.subr.mxu0 0.0
        %6057 = vmatpush1.msra.mxu0 0.0
        %6058 = vmatprep.subr.mxu0 0.0
        %6059 = vmatpush1.msra.mxu0 0.0
        %6060 = vmatprep.subr.mxu0 0.0
        %6061 = vmatpush1.msra.mxu0 0.0
        %6062 = vmatprep.subr.mxu0 0.0
        %6063 = vmatpush1.msra.mxu0 0.0
        %6064 = vmatprep.subr.mxu0 0.0
        %6065 = vmatpush1.msra.mxu0 0.0
        %6066 = vmatprep.subr.mxu0 0.0
        %6067 = vmatpush1.msra.mxu0 0.0
        %6068 = vmatprep.subr.mxu0 0.0
        %6069 = vmatpush1.msra.mxu0 0.0
        %6070 = vmatprep.subr.mxu0 0.0
        %6071 = vmatpush1.msra.mxu0 0.0
        %6072 = vmatprep.subr.mxu0 0.0
        %6073 = vmatpush1.msra.mxu0 0.0
        %6074 = vmatprep.mubr.f32.mxu0 0.0
        %6075 = vmatmul.mubr.f32.gmra.mrb[0].mxu0 %v6008
        %v6076 = vpop.f32.mrb[0].mxu0
        %v6077 = vadd.f32 0.0, %v6076
        %v6078 = vpop.f32.mrb[0].mxu0
        %6079 = vdwg.mxu0
        %v6080 = vld [vmem:[%s6] sm:$0xff]
        %v6081 = vld [vmem:[%s6 + $0x8] sm:$0xff]
        %v6083 = vsel %vm358, %v4857, 0
        %v6086 = vsel %vm358, %v4858, 0
        %v6089 = vsel %vm358, %v4859, 0
        %v6092 = vsel %vm358, %v4860, 0
        %v6095 = vsel %vm358, %v4861, 0
        %v6098 = vsel %vm358, %v4862, 0
        %v6101 = vsel %vm358, %v4863, 0
        %v6104 = vsel %vm358, %v4864, 0
        %v6107 = vsel %vm358, %v4865, 0
        %v6110 = vsel %vm358, %v4866, 0
        %v6113 = vsel %vm358, %v4867, 0
        %v6116 = vsel %vm358, %v4868, 0
        %v6119 = vsel %vm358, %v4869, 0
        %v6122 = vsel %vm358, %v4870, 0
        %v6125 = vsel %vm358, %v4871, 0
        %v6128 = vsel %vm358, %v4872, 0
        %v6131 = vsel %vm358, %v4873, 0
        %v6134 = vsel %vm358, %v4874, 0
        %v6137 = vsel %vm358, %v4875, 0
        %v6140 = vsel %vm358, %v4876, 0
        %v6143 = vsel %vm358, %v4877, 0
        %v6146 = vsel %vm358, %v4878, 0
        %v6149 = vsel %vm358, %v4879, 0
        %v6152 = vsel %vm358, %v4880, 0
        %v6155 = vsel %vm358, %v4881, 0
        %v6158 = vsel %vm358, %v4882, 0
        %v6161 = vsel %vm358, %v4883, 0
        %v6164 = vsel %vm358, %v4884, 0
        %v6167 = vsel %vm358, %v4885, 0
        %v6170 = vsel %vm358, %v4886, 0
        %v6173 = vsel %vm358, %v4887, 0
        %v6176 = vsel %vm358, %v4888, 0
        %6178 = vmatprep.subr.mxu0 0.0
        %6179 = vmatpush1.msra.mxu0 %v6081
        %6180 = vmatprep.subr.mxu0 0.0
        %6181 = vmatpush1.msra.mxu0 0.0
        %6182 = vmatprep.subr.mxu0 0.0
        %6183 = vmatpush1.msra.mxu0 0.0
        %6184 = vmatprep.subr.mxu0 0.0
        %6185 = vmatpush1.msra.mxu0 0.0
        %6186 = vmatprep.subr.mxu0 0.0
        %6187 = vmatpush1.msra.mxu0 0.0
        %6188 = vmatprep.subr.mxu0 0.0
        %6189 = vmatpush1.msra.mxu0 0.0
        %6190 = vmatprep.subr.mxu0 0.0
        %6191 = vmatpush1.msra.mxu0 0.0
        %6192 = vmatprep.subr.mxu0 0.0
        %6193 = vmatpush1.msra.mxu0 0.0
        %6194 = vmatprep.subr.mxu0 0.0
        %6195 = vmatpush1.msra.mxu0 0.0
        %6196 = vmatprep.subr.mxu0 0.0
        %6197 = vmatpush1.msra.mxu0 0.0
        %6198 = vmatprep.subr.mxu0 0.0
        %6199 = vmatpush1.msra.mxu0 0.0
        %6200 = vmatprep.subr.mxu0 0.0
        %6201 = vmatpush1.msra.mxu0 0.0
        %6202 = vmatprep.subr.mxu0 0.0
        %6203 = vmatpush1.msra.mxu0 0.0
        %6204 = vmatprep.subr.mxu0 0.0
        %6205 = vmatpush1.msra.mxu0 0.0
        %6206 = vmatprep.subr.mxu0 0.0
        %6207 = vmatpush1.msra.mxu0 0.0
        %6208 = vmatprep.subr.mxu0 0.0
        %6209 = vmatpush1.msra.mxu0 0.0
        %6210 = vmatprep.subr.mxu0 0.0
        %6211 = vmatpush1.msra.mxu0 0.0
        %6212 = vmatprep.subr.mxu0 0.0
        %6213 = vmatpush1.msra.mxu0 0.0
        %6214 = vmatprep.subr.mxu0 0.0
        %6215 = vmatpush1.msra.mxu0 0.0
        %6216 = vmatprep.subr.mxu0 0.0
        %6217 = vmatpush1.msra.mxu0 0.0
        %6218 = vmatprep.subr.mxu0 0.0
        %6219 = vmatpush1.msra.mxu0 0.0
        %6220 = vmatprep.subr.mxu0 0.0
        %6221 = vmatpush1.msra.mxu0 0.0
        %6222 = vmatprep.subr.mxu0 0.0
        %6223 = vmatpush1.msra.mxu0 0.0
        %6224 = vmatprep.subr.mxu0 0.0
        %6225 = vmatpush1.msra.mxu0 0.0
        %6226 = vmatprep.subr.mxu0 0.0
        %6227 = vmatpush1.msra.mxu0 0.0
        %6228 = vmatprep.subr.mxu0 0.0
        %6229 = vmatpush1.msra.mxu0 0.0
        %6230 = vmatprep.subr.mxu0 0.0
        %6231 = vmatpush1.msra.mxu0 0.0
        %6232 = vmatprep.subr.mxu0 0.0
        %6233 = vmatpush1.msra.mxu0 0.0
        %6234 = vmatprep.subr.mxu0 0.0
        %6235 = vmatpush1.msra.mxu0 0.0
        %6236 = vmatprep.subr.mxu0 0.0
        %6237 = vmatpush1.msra.mxu0 0.0
        %6238 = vmatprep.subr.mxu0 0.0
        %6239 = vmatpush1.msra.mxu0 0.0
        %6240 = vmatprep.subr.mxu0 0.0
        %6241 = vmatpush1.msra.mxu0 0.0
        %6242 = vmatprep.mubr.f32.mxu0 0.0
        %6243 = vmatmul.mubr.f32.gmra.mrb[0].mxu0 %v6083
        %v6244 = vpop.f32.mrb[0].mxu0
        %v6245 = vadd.f32 0.0, %v6244
        %v6246 = vpop.f32.mrb[0].mxu0
        %6247 = vmatprep.mubr.f32.mxu0 0.0
        %6248 = vmatmul.mubr.f32.gmra.mrb[0].mxu0 %v6086
        %v6249 = vpop.f32.mrb[0].mxu0
        %v6250 = vadd.f32 0.0, %v6249
        %v6251 = vpop.f32.mrb[0].mxu0
        %6252 = vmatprep.mubr.f32.mxu0 0.0
        %6253 = vmatmul.mubr.f32.gmra.mrb[0].mxu0 %v6089
        %v6254 = vpop.f32.mrb[0].mxu0
        %v6255 = vadd.f32 0.0, %v6254
        %v6256 = vpop.f32.mrb[0].mxu0
        %6257 = vmatprep.mubr.f32.mxu0 0.0
        %6258 = vmatmul.mubr.f32.gmra.mrb[0].mxu0 %v6092
        %v6259 = vpop.f32.mrb[0].mxu0
        %v6260 = vadd.f32 0.0, %v6259
        %v6261 = vpop.f32.mrb[0].mxu0
        %6262 = vmatprep.mubr.f32.mxu0 0.0
        %6263 = vmatmul.mubr.f32.gmra.mrb[0].mxu0 %v6095
        %v6264 = vpop.f32.mrb[0].mxu0
        %v6265 = vadd.f32 0.0, %v6264
        %v6266 = vpop.f32.mrb[0].mxu0
        %6267 = vmatprep.mubr.f32.mxu0 0.0
        %6268 = vmatmul.mubr.f32.gmra.mrb[0].mxu0 %v6098
        %v6269 = vpop.f32.mrb[0].mxu0
        %v6270 = vadd.f32 0.0, %v6269
        %v6271 = vpop.f32.mrb[0].mxu0
        %6272 = vmatprep.mubr.f32.mxu0 0.0
        %6273 = vmatmul.mubr.f32.gmra.mrb[0].mxu0 %v6101
        %v6274 = vpop.f32.mrb[0].mxu0
        %v6275 = vadd.f32 0.0, %v6274
        %v6276 = vpop.f32.mrb[0].mxu0
        %6277 = vmatprep.mubr.f32.mxu0 0.0
        %6278 = vmatmul.mubr.f32.gmra.mrb[0].mxu0 %v6104
        %v6279 = vpop.f32.mrb[0].mxu0
        %v6280 = vadd.f32 0.0, %v6279
        %v6281 = vpop.f32.mrb[0].mxu0
        %6282 = vmatprep.mubr.f32.mxu0 0.0
        %6283 = vmatmul.mubr.f32.gmra.mrb[0].mxu0 %v6107
        %v6284 = vpop.f32.mrb[0].mxu0
        %v6285 = vadd.f32 0.0, %v6284
        %v6286 = vpop.f32.mrb[0].mxu0
        %6287 = vmatprep.mubr.f32.mxu0 0.0
        %6288 = vmatmul.mubr.f32.gmra.mrb[0].mxu0 %v6110
        %v6289 = vpop.f32.mrb[0].mxu0
        %v6290 = vadd.f32 0.0, %v6289
        %v6291 = vpop.f32.mrb[0].mxu0
        %6292 = vmatprep.mubr.f32.mxu0 0.0
        %6293 = vmatmul.mubr.f32.gmra.mrb[0].mxu0 %v6113
        %v6294 = vpop.f32.mrb[0].mxu0
        %v6295 = vadd.f32 0.0, %v6294
        %v6296 = vpop.f32.mrb[0].mxu0
        %6297 = vmatprep.mubr.f32.mxu0 0.0
        %6298 = vmatmul.mubr.f32.gmra.mrb[0].mxu0 %v6116
        %v6299 = vpop.f32.mrb[0].mxu0
        %v6300 = vadd.f32 0.0, %v6299
        %v6301 = vpop.f32.mrb[0].mxu0
        %6302 = vmatprep.mubr.f32.mxu0 0.0
        %6303 = vmatmul.mubr.f32.gmra.mrb[0].mxu0 %v6119
        %v6304 = vpop.f32.mrb[0].mxu0
        %v6305 = vadd.f32 0.0, %v6304
        %v6306 = vpop.f32.mrb[0].mxu0
        %6307 = vmatprep.mubr.f32.mxu0 0.0
        %6308 = vmatmul.mubr.f32.gmra.mrb[0].mxu0 %v6122
        %v6309 = vpop.f32.mrb[0].mxu0
        %v6310 = vadd.f32 0.0, %v6309
        %v6311 = vpop.f32.mrb[0].mxu0
        %6312 = vmatprep.mubr.f32.mxu0 0.0
        %6313 = vmatmul.mubr.f32.gmra.mrb[0].mxu0 %v6125
        %v6314 = vpop.f32.mrb[0].mxu0
        %v6315 = vadd.f32 0.0, %v6314
        %v6316 = vpop.f32.mrb[0].mxu0
        %6317 = vmatprep.mubr.f32.mxu0 0.0
        %6318 = vmatmul.mubr.f32.gmra.mrb[0].mxu0 %v6128
        %v6319 = vpop.f32.mrb[0].mxu0
        %v6320 = vadd.f32 0.0, %v6319
        %v6321 = vpop.f32.mrb[0].mxu0
        %6322 = vmatprep.mubr.f32.mxu0 0.0
        %6323 = vmatmul.mubr.f32.gmra.mrb[0].mxu0 %v6131
        %v6324 = vpop.f32.mrb[0].mxu0
        %v6325 = vadd.f32 0.0, %v6324
        %v6326 = vpop.f32.mrb[0].mxu0
        %6327 = vmatprep.mubr.f32.mxu0 0.0
        %6328 = vmatmul.mubr.f32.gmra.mrb[0].mxu0 %v6134
        %v6329 = vpop.f32.mrb[0].mxu0
        %v6330 = vadd.f32 0.0, %v6329
        %v6331 = vpop.f32.mrb[0].mxu0
        %6332 = vmatprep.mubr.f32.mxu0 0.0
        %6333 = vmatmul.mubr.f32.gmra.mrb[0].mxu0 %v6137
        %v6334 = vpop.f32.mrb[0].mxu0
        %v6335 = vadd.f32 0.0, %v6334
        %v6336 = vpop.f32.mrb[0].mxu0
        %6337 = vmatprep.mubr.f32.mxu0 0.0
        %6338 = vmatmul.mubr.f32.gmra.mrb[0].mxu0 %v6140
        %v6339 = vpop.f32.mrb[0].mxu0
        %v6340 = vadd.f32 0.0, %v6339
        %v6341 = vpop.f32.mrb[0].mxu0
        %6342 = vmatprep.mubr.f32.mxu0 0.0
        %6343 = vmatmul.mubr.f32.gmra.mrb[0].mxu0 %v6143
        %v6344 = vpop.f32.mrb[0].mxu0
        %v6345 = vadd.f32 0.0, %v6344
        %v6346 = vpop.f32.mrb[0].mxu0
        %6347 = vmatprep.mubr.f32.mxu0 0.0
        %6348 = vmatmul.mubr.f32.gmra.mrb[0].mxu0 %v6146
        %v6349 = vpop.f32.mrb[0].mxu0
        %v6350 = vadd.f32 0.0, %v6349
        %v6351 = vpop.f32.mrb[0].mxu0
        %6352 = vmatprep.mubr.f32.mxu0 0.0
        %6353 = vmatmul.mubr.f32.gmra.mrb[0].mxu0 %v6149
        %v6354 = vpop.f32.mrb[0].mxu0
        %v6355 = vadd.f32 0.0, %v6354
        %v6356 = vpop.f32.mrb[0].mxu0
        %6357 = vmatprep.mubr.f32.mxu0 0.0
        %6358 = vmatmul.mubr.f32.gmra.mrb[0].mxu0 %v6152
        %v6359 = vpop.f32.mrb[0].mxu0
        %v6360 = vadd.f32 0.0, %v6359
        %v6361 = vpop.f32.mrb[0].mxu0
        %6362 = vmatprep.mubr.f32.mxu0 0.0
        %6363 = vmatmul.mubr.f32.gmra.mrb[0].mxu0 %v6155
        %v6364 = vpop.f32.mrb[0].mxu0
        %v6365 = vadd.f32 0.0, %v6364
        %v6366 = vpop.f32.mrb[0].mxu0
        %6367 = vmatprep.mubr.f32.mxu0 0.0
        %6368 = vmatmul.mubr.f32.gmra.mrb[0].mxu0 %v6158
        %v6369 = vpop.f32.mrb[0].mxu0
        %v6370 = vadd.f32 0.0, %v6369
        %v6371 = vpop.f32.mrb[0].mxu0
        %6372 = vmatprep.mubr.f32.mxu0 0.0
        %6373 = vmatmul.mubr.f32.gmra.mrb[0].mxu0 %v6161
        %v6374 = vpop.f32.mrb[0].mxu0
        %v6375 = vadd.f32 0.0, %v6374
        %v6376 = vpop.f32.mrb[0].mxu0
        %6377 = vmatprep.mubr.f32.mxu0 0.0
        %6378 = vmatmul.mubr.f32.gmra.mrb[0].mxu0 %v6164
        %v6379 = vpop.f32.mrb[0].mxu0
        %v6380 = vadd.f32 0.0, %v6379
        %v6381 = vpop.f32.mrb[0].mxu0
        %6382 = vmatprep.mubr.f32.mxu0 0.0
        %6383 = vmatmul.mubr.f32.gmra.mrb[0].mxu0 %v6167
        %v6384 = vpop.f32.mrb[0].mxu0
        %v6385 = vadd.f32 0.0, %v6384
        %v6386 = vpop.f32.mrb[0].mxu0
        %6387 = vmatprep.mubr.f32.mxu0 0.0
        %6388 = vmatmul.mubr.f32.gmra.mrb[0].mxu0 %v6170
        %v6389 = vpop.f32.mrb[0].mxu0
        %v6390 = vadd.f32 0.0, %v6389
        %v6391 = vpop.f32.mrb[0].mxu0
        %6392 = vmatprep.mubr.f32.mxu0 0.0
        %6393 = vmatmul.mubr.f32.gmra.mrb[0].mxu0 %v6173
        %v6394 = vpop.f32.mrb[0].mxu0
        %v6395 = vadd.f32 0.0, %v6394
        %v6396 = vpop.f32.mrb[0].mxu0
        %6397 = vmatprep.mubr.f32.mxu0 0.0
        %6398 = vmatmul.mubr.f32.gmra.mrb[0].mxu0 %v6176
        %v6399 = vpop.f32.mrb[0].mxu0
        %v6400 = vadd.f32 0.0, %v6399
        %v6401 = vpop.f32.mrb[0].mxu0
        %6402 = vdwg.mxu0
        %v6404 = vsel %vm358, %v1308, 0
        %v6407 = vsel %vm358, %v1309, 0
        %v6410 = vsel %vm358, %v1310, 0
        %v6413 = vsel %vm358, %v1311, 0
        %v6416 = vsel %vm358, %v1312, 0
        %v6419 = vsel %vm358, %v1313, 0
        %v6422 = vsel %vm358, %v1314, 0
        %v6425 = vsel %vm358, %v1315, 0
        %v6428 = vsel %vm358, %v1316, 0
        %v6431 = vsel %vm358, %v1317, 0
        %v6434 = vsel %vm358, %v1318, 0
        %v6437 = vsel %vm358, %v1319, 0
        %v6440 = vsel %vm358, %v1320, 0
        %v6443 = vsel %vm358, %v1321, 0
        %v6446 = vsel %vm358, %v1322, 0
        %v6449 = vsel %vm358, %v1323, 0
        %v6452 = vsel %vm358, %v1324, 0
        %v6455 = vsel %vm358, %v1325, 0
        %v6458 = vsel %vm358, %v1326, 0
        %v6461 = vsel %vm358, %v1327, 0
        %v6464 = vsel %vm358, %v1328, 0
        %v6467 = vsel %vm358, %v1329, 0
        %v6470 = vsel %vm358, %v1330, 0
        %v6473 = vsel %vm358, %v1331, 0
        %v6476 = vsel %vm358, %v1332, 0
        %v6479 = vsel %vm358, %v1333, 0
        %v6482 = vsel %vm358, %v1334, 0
        %v6485 = vsel %vm358, %v1335, 0
        %v6488 = vsel %vm358, %v1336, 0
        %v6491 = vsel %vm358, %v1337, 0
        %v6494 = vsel %vm358, %v1338, 0
        %v6497 = vsel %vm358, %v1339, 0
        %6499 = vmatprep.subr.mxu0 0.0
        %6500 = vmatpush1.msra.mxu0 %v6080
        %6501 = vmatprep.subr.mxu0 0.0
        %6502 = vmatpush1.msra.mxu0 0.0
        %6503 = vmatprep.subr.mxu0 0.0
        %6504 = vmatpush1.msra.mxu0 0.0
        %6505 = vmatprep.subr.mxu0 0.0
        %6506 = vmatpush1.msra.mxu0 0.0
        %6507 = vmatprep.subr.mxu0 0.0
        %6508 = vmatpush1.msra.mxu0 0.0
        %6509 = vmatprep.subr.mxu0 0.0
        %6510 = vmatpush1.msra.mxu0 0.0
        %6511 = vmatprep.subr.mxu0 0.0
        %6512 = vmatpush1.msra.mxu0 0.0
        %6513 = vmatprep.subr.mxu0 0.0
        %6514 = vmatpush1.msra.mxu0 0.0
        %6515 = vmatprep.subr.mxu0 0.0
        %6516 = vmatpush1.msra.mxu0 0.0
        %6517 = vmatprep.subr.mxu0 0.0
        %6518 = vmatpush1.msra.mxu0 0.0
        %6519 = vmatprep.subr.mxu0 0.0
        %6520 = vmatpush1.msra.mxu0 0.0
        %6521 = vmatprep.subr.mxu0 0.0
        %6522 = vmatpush1.msra.mxu0 0.0
        %6523 = vmatprep.subr.mxu0 0.0
        %6524 = vmatpush1.msra.mxu0 0.0
        %6525 = vmatprep.subr.mxu0 0.0
        %6526 = vmatpush1.msra.mxu0 0.0
        %6527 = vmatprep.subr.mxu0 0.0
        %6528 = vmatpush1.msra.mxu0 0.0
        %6529 = vmatprep.subr.mxu0 0.0
        %6530 = vmatpush1.msra.mxu0 0.0
        %6531 = vmatprep.subr.mxu0 0.0
        %6532 = vmatpush1.msra.mxu0 0.0
        %6533 = vmatprep.subr.mxu0 0.0
        %6534 = vmatpush1.msra.mxu0 0.0
        %6535 = vmatprep.subr.mxu0 0.0
        %6536 = vmatpush1.msra.mxu0 0.0
        %6537 = vmatprep.subr.mxu0 0.0
        %6538 = vmatpush1.msra.mxu0 0.0
        %6539 = vmatprep.subr.mxu0 0.0
        %6540 = vmatpush1.msra.mxu0 0.0
        %6541 = vmatprep.subr.mxu0 0.0
        %6542 = vmatpush1.msra.mxu0 0.0
        %6543 = vmatprep.subr.mxu0 0.0
        %6544 = vmatpush1.msra.mxu0 0.0
        %6545 = vmatprep.subr.mxu0 0.0
        %6546 = vmatpush1.msra.mxu0 0.0
        %6547 = vmatprep.subr.mxu0 0.0
        %6548 = vmatpush1.msra.mxu0 0.0
        %6549 = vmatprep.subr.mxu0 0.0
        %6550 = vmatpush1.msra.mxu0 0.0
        %6551 = vmatprep.subr.mxu0 0.0
        %6552 = vmatpush1.msra.mxu0 0.0
        %6553 = vmatprep.subr.mxu0 0.0
        %6554 = vmatpush1.msra.mxu0 0.0
        %6555 = vmatprep.subr.mxu0 0.0
        %6556 = vmatpush1.msra.mxu0 0.0
        %6557 = vmatprep.subr.mxu0 0.0
        %6558 = vmatpush1.msra.mxu0 0.0
        %6559 = vmatprep.subr.mxu0 0.0
        %6560 = vmatpush1.msra.mxu0 0.0
        %6561 = vmatprep.subr.mxu0 0.0
        %6562 = vmatpush1.msra.mxu0 0.0
        %6563 = vmatprep.mubr.f32.mxu0 0.0
        %6564 = vmatmul.mubr.f32.gmra.mrb[0].mxu0 %v6404
        %v6565 = vpop.f32.mrb[0].mxu0
        %v6566 = vadd.f32 %v6245, %v6565
        %v6567 = vpop.f32.mrb[0].mxu0
        %6568 = vmatprep.mubr.f32.mxu0 0.0
        %6569 = vmatmul.mubr.f32.gmra.mrb[0].mxu0 %v6407
        %v6570 = vpop.f32.mrb[0].mxu0
        %v6571 = vadd.f32 %v6250, %v6570
        %v6572 = vpop.f32.mrb[0].mxu0
        %6573 = vmatprep.mubr.f32.mxu0 0.0
        %6574 = vmatmul.mubr.f32.gmra.mrb[0].mxu0 %v6410
        %v6575 = vpop.f32.mrb[0].mxu0
        %v6576 = vadd.f32 %v6255, %v6575
        %v6577 = vpop.f32.mrb[0].mxu0
        %6578 = vmatprep.mubr.f32.mxu0 0.0
        %6579 = vmatmul.mubr.f32.gmra.mrb[0].mxu0 %v6413
        %v6580 = vpop.f32.mrb[0].mxu0
        %v6581 = vadd.f32 %v6260, %v6580
        %v6582 = vpop.f32.mrb[0].mxu0
        %6583 = vmatprep.mubr.f32.mxu0 0.0
        %6584 = vmatmul.mubr.f32.gmra.mrb[0].mxu0 %v6416
        %v6585 = vpop.f32.mrb[0].mxu0
        %v6586 = vadd.f32 %v6265, %v6585
        %v6587 = vpop.f32.mrb[0].mxu0
        %6588 = vmatprep.mubr.f32.mxu0 0.0
        %6589 = vmatmul.mubr.f32.gmra.mrb[0].mxu0 %v6419
        %v6590 = vpop.f32.mrb[0].mxu0
        %v6591 = vadd.f32 %v6270, %v6590
        %v6592 = vpop.f32.mrb[0].mxu0
        %6593 = vmatprep.mubr.f32.mxu0 0.0
        %6594 = vmatmul.mubr.f32.gmra.mrb[0].mxu0 %v6422
        %v6595 = vpop.f32.mrb[0].mxu0
        %v6596 = vadd.f32 %v6275, %v6595
        %v6597 = vpop.f32.mrb[0].mxu0
        %6598 = vmatprep.mubr.f32.mxu0 0.0
        %6599 = vmatmul.mubr.f32.gmra.mrb[0].mxu0 %v6425
        %v6600 = vpop.f32.mrb[0].mxu0
        %v6601 = vadd.f32 %v6280, %v6600
        %v6602 = vpop.f32.mrb[0].mxu0
        %6603 = vmatprep.mubr.f32.mxu0 0.0
        %6604 = vmatmul.mubr.f32.gmra.mrb[0].mxu0 %v6428
        %v6605 = vpop.f32.mrb[0].mxu0
        %v6606 = vadd.f32 %v6285, %v6605
        %v6607 = vpop.f32.mrb[0].mxu0
        %6608 = vmatprep.mubr.f32.mxu0 0.0
        %6609 = vmatmul.mubr.f32.gmra.mrb[0].mxu0 %v6431
        %v6610 = vpop.f32.mrb[0].mxu0
        %v6611 = vadd.f32 %v6290, %v6610
        %v6612 = vpop.f32.mrb[0].mxu0
        %6613 = vmatprep.mubr.f32.mxu0 0.0
        %6614 = vmatmul.mubr.f32.gmra.mrb[0].mxu0 %v6434
        %v6615 = vpop.f32.mrb[0].mxu0
        %v6616 = vadd.f32 %v6295, %v6615
        %v6617 = vpop.f32.mrb[0].mxu0
        %6618 = vmatprep.mubr.f32.mxu0 0.0
        %6619 = vmatmul.mubr.f32.gmra.mrb[0].mxu0 %v6437
        %v6620 = vpop.f32.mrb[0].mxu0
        %v6621 = vadd.f32 %v6300, %v6620
        %v6622 = vpop.f32.mrb[0].mxu0
        %6623 = vmatprep.mubr.f32.mxu0 0.0
        %6624 = vmatmul.mubr.f32.gmra.mrb[0].mxu0 %v6440
        %v6625 = vpop.f32.mrb[0].mxu0
        %v6626 = vadd.f32 %v6305, %v6625
        %v6627 = vpop.f32.mrb[0].mxu0
        %6628 = vmatprep.mubr.f32.mxu0 0.0
        %6629 = vmatmul.mubr.f32.gmra.mrb[0].mxu0 %v6443
        %v6630 = vpop.f32.mrb[0].mxu0
        %v6631 = vadd.f32 %v6310, %v6630
        %v6632 = vpop.f32.mrb[0].mxu0
        %6633 = vmatprep.mubr.f32.mxu0 0.0
        %6634 = vmatmul.mubr.f32.gmra.mrb[0].mxu0 %v6446
        %v6635 = vpop.f32.mrb[0].mxu0
        %v6636 = vadd.f32 %v6315, %v6635
        %v6637 = vpop.f32.mrb[0].mxu0
        %6638 = vmatprep.mubr.f32.mxu0 0.0
        %6639 = vmatmul.mubr.f32.gmra.mrb[0].mxu0 %v6449
        %v6640 = vpop.f32.mrb[0].mxu0
        %v6641 = vadd.f32 %v6320, %v6640
        %v6642 = vpop.f32.mrb[0].mxu0
        %6643 = vmatprep.mubr.f32.mxu0 0.0
        %6644 = vmatmul.mubr.f32.gmra.mrb[0].mxu0 %v6452
        %v6645 = vpop.f32.mrb[0].mxu0
        %v6646 = vadd.f32 %v6325, %v6645
        %v6647 = vpop.f32.mrb[0].mxu0
        %6648 = vmatprep.mubr.f32.mxu0 0.0
        %6649 = vmatmul.mubr.f32.gmra.mrb[0].mxu0 %v6455
        %v6650 = vpop.f32.mrb[0].mxu0
        %v6651 = vadd.f32 %v6330, %v6650
        %v6652 = vpop.f32.mrb[0].mxu0
        %6653 = vmatprep.mubr.f32.mxu0 0.0
        %6654 = vmatmul.mubr.f32.gmra.mrb[0].mxu0 %v6458
        %v6655 = vpop.f32.mrb[0].mxu0
        %v6656 = vadd.f32 %v6335, %v6655
        %v6657 = vpop.f32.mrb[0].mxu0
        %6658 = vmatprep.mubr.f32.mxu0 0.0
        %6659 = vmatmul.mubr.f32.gmra.mrb[0].mxu0 %v6461
        %v6660 = vpop.f32.mrb[0].mxu0
        %v6661 = vadd.f32 %v6340, %v6660
        %v6662 = vpop.f32.mrb[0].mxu0
        %6663 = vmatprep.mubr.f32.mxu0 0.0
        %6664 = vmatmul.mubr.f32.gmra.mrb[0].mxu0 %v6464
        %v6665 = vpop.f32.mrb[0].mxu0
        %v6666 = vadd.f32 %v6345, %v6665
        %v6667 = vpop.f32.mrb[0].mxu0
        %6668 = vmatprep.mubr.f32.mxu0 0.0
        %6669 = vmatmul.mubr.f32.gmra.mrb[0].mxu0 %v6467
        %v6670 = vpop.f32.mrb[0].mxu0
        %v6671 = vadd.f32 %v6350, %v6670
        %v6672 = vpop.f32.mrb[0].mxu0
        %6673 = vmatprep.mubr.f32.mxu0 0.0
        %6674 = vmatmul.mubr.f32.gmra.mrb[0].mxu0 %v6470
        %v6675 = vpop.f32.mrb[0].mxu0
        %v6676 = vadd.f32 %v6355, %v6675
        %v6677 = vpop.f32.mrb[0].mxu0
        %6678 = vmatprep.mubr.f32.mxu0 0.0
        %6679 = vmatmul.mubr.f32.gmra.mrb[0].mxu0 %v6473
        %v6680 = vpop.f32.mrb[0].mxu0
        %v6681 = vadd.f32 %v6360, %v6680
        %v6682 = vpop.f32.mrb[0].mxu0
        %6683 = vmatprep.mubr.f32.mxu0 0.0
        %6684 = vmatmul.mubr.f32.gmra.mrb[0].mxu0 %v6476
        %v6685 = vpop.f32.mrb[0].mxu0
        %v6686 = vadd.f32 %v6365, %v6685
        %v6687 = vpop.f32.mrb[0].mxu0
        %6688 = vmatprep.mubr.f32.mxu0 0.0
        %6689 = vmatmul.mubr.f32.gmra.mrb[0].mxu0 %v6479
        %v6690 = vpop.f32.mrb[0].mxu0
        %v6691 = vadd.f32 %v6370, %v6690
        %v6692 = vpop.f32.mrb[0].mxu0
        %6693 = vmatprep.mubr.f32.mxu0 0.0
        %6694 = vmatmul.mubr.f32.gmra.mrb[0].mxu0 %v6482
        %v6695 = vpop.f32.mrb[0].mxu0
        %v6696 = vadd.f32 %v6375, %v6695
        %v6697 = vpop.f32.mrb[0].mxu0
        %6698 = vmatprep.mubr.f32.mxu0 0.0
        %6699 = vmatmul.mubr.f32.gmra.mrb[0].mxu0 %v6485
        %v6700 = vpop.f32.mrb[0].mxu0
        %v6701 = vadd.f32 %v6380, %v6700
        %v6702 = vpop.f32.mrb[0].mxu0
        %6703 = vmatprep.mubr.f32.mxu0 0.0
        %6704 = vmatmul.mubr.f32.gmra.mrb[0].mxu0 %v6488
        %v6705 = vpop.f32.mrb[0].mxu0
        %v6706 = vadd.f32 %v6385, %v6705
        %v6707 = vpop.f32.mrb[0].mxu0
        %6708 = vmatprep.mubr.f32.mxu0 0.0
        %6709 = vmatmul.mubr.f32.gmra.mrb[0].mxu0 %v6491
        %v6710 = vpop.f32.mrb[0].mxu0
        %v6711 = vadd.f32 %v6390, %v6710
        %v6712 = vpop.f32.mrb[0].mxu0
        %6713 = vmatprep.mubr.f32.mxu0 0.0
        %6714 = vmatmul.mubr.f32.gmra.mrb[0].mxu0 %v6494
        %v6715 = vpop.f32.mrb[0].mxu0
        %v6716 = vadd.f32 %v6395, %v6715
        %v6717 = vpop.f32.mrb[0].mxu0
        %6718 = vmatprep.mubr.f32.mxu0 0.0
        %6719 = vmatmul.mubr.f32.gmra.mrb[0].mxu0 %v6497
        %v6720 = vpop.f32.mrb[0].mxu0
        %v6721 = vadd.f32 %v6400, %v6720
        %v6722 = vpop.f32.mrb[0].mxu0
        %6723 = vdwg.mxu0
        %v6724 = vld [vmem:[%s6 + $0x10] sm:$0xff]
        %v6726 = vsel %vm358, %v5340, 0
        %v6729 = vsel %vm358, %v5341, 0
        %v6732 = vsel %vm358, %v5342, 0
        %v6735 = vsel %vm358, %v5343, 0
        %v6738 = vsel %vm358, %v5344, 0
        %v6741 = vsel %vm358, %v5345, 0
        %v6744 = vsel %vm358, %v5346, 0
        %v6747 = vsel %vm358, %v5347, 0
        %v6750 = vsel %vm358, %v5348, 0
        %v6753 = vsel %vm358, %v5349, 0
        %v6756 = vsel %vm358, %v5350, 0
        %v6759 = vsel %vm358, %v5351, 0
        %v6762 = vsel %vm358, %v5352, 0
        %v6765 = vsel %vm358, %v5353, 0
        %v6768 = vsel %vm358, %v5354, 0
        %v6771 = vsel %vm358, %v5355, 0
        %v6774 = vsel %vm358, %v5356, 0
        %v6777 = vsel %vm358, %v5357, 0
        %v6780 = vsel %vm358, %v5358, 0
        %v6783 = vsel %vm358, %v5359, 0
        %v6786 = vsel %vm358, %v5360, 0
        %v6789 = vsel %vm358, %v5361, 0
        %v6792 = vsel %vm358, %v5362, 0
        %v6795 = vsel %vm358, %v5363, 0
        %v6798 = vsel %vm358, %v5364, 0
        %v6801 = vsel %vm358, %v5365, 0
        %v6804 = vsel %vm358, %v5366, 0
        %v6807 = vsel %vm358, %v5367, 0
        %v6810 = vsel %vm358, %v5368, 0
        %v6813 = vsel %vm358, %v5369, 0
        %v6816 = vsel %vm358, %v5370, 0
        %v6819 = vsel %vm358, %v5371, 0
        %6821 = vmatprep.subr.mxu0 0.0
        %6822 = vmatpush1.msra.mxu0 %v6724
        %6823 = vmatprep.subr.mxu0 0.0
        %6824 = vmatpush1.msra.mxu0 0.0
        %6825 = vmatprep.subr.mxu0 0.0
        %6826 = vmatpush1.msra.mxu0 0.0
        %6827 = vmatprep.subr.mxu0 0.0
        %6828 = vmatpush1.msra.mxu0 0.0
        %6829 = vmatprep.subr.mxu0 0.0
        %6830 = vmatpush1.msra.mxu0 0.0
        %6831 = vmatprep.subr.mxu0 0.0
        %6832 = vmatpush1.msra.mxu0 0.0
        %6833 = vmatprep.subr.mxu0 0.0
        %6834 = vmatpush1.msra.mxu0 0.0
        %6835 = vmatprep.subr.mxu0 0.0
        %6836 = vmatpush1.msra.mxu0 0.0
        %6837 = vmatprep.subr.mxu0 0.0
        %6838 = vmatpush1.msra.mxu0 0.0
        %6839 = vmatprep.subr.mxu0 0.0
        %6840 = vmatpush1.msra.mxu0 0.0
        %6841 = vmatprep.subr.mxu0 0.0
        %6842 = vmatpush1.msra.mxu0 0.0
        %6843 = vmatprep.subr.mxu0 0.0
        %6844 = vmatpush1.msra.mxu0 0.0
        %6845 = vmatprep.subr.mxu0 0.0
        %6846 = vmatpush1.msra.mxu0 0.0
        %6847 = vmatprep.subr.mxu0 0.0
        %6848 = vmatpush1.msra.mxu0 0.0
        %6849 = vmatprep.subr.mxu0 0.0
        %6850 = vmatpush1.msra.mxu0 0.0
        %6851 = vmatprep.subr.mxu0 0.0
        %6852 = vmatpush1.msra.mxu0 0.0
        %6853 = vmatprep.subr.mxu0 0.0
        %6854 = vmatpush1.msra.mxu0 0.0
        %6855 = vmatprep.subr.mxu0 0.0
        %6856 = vmatpush1.msra.mxu0 0.0
        %6857 = vmatprep.subr.mxu0 0.0
        %6858 = vmatpush1.msra.mxu0 0.0
        %6859 = vmatprep.subr.mxu0 0.0
        %6860 = vmatpush1.msra.mxu0 0.0
        %6861 = vmatprep.subr.mxu0 0.0
        %6862 = vmatpush1.msra.mxu0 0.0
        %6863 = vmatprep.subr.mxu0 0.0
        %6864 = vmatpush1.msra.mxu0 0.0
        %6865 = vmatprep.subr.mxu0 0.0
        %6866 = vmatpush1.msra.mxu0 0.0
        %6867 = vmatprep.subr.mxu0 0.0
        %6868 = vmatpush1.msra.mxu0 0.0
        %6869 = vmatprep.subr.mxu0 0.0
        %6870 = vmatpush1.msra.mxu0 0.0
        %6871 = vmatprep.subr.mxu0 0.0
        %6872 = vmatpush1.msra.mxu0 0.0
        %6873 = vmatprep.subr.mxu0 0.0
        %6874 = vmatpush1.msra.mxu0 0.0
        %6875 = vmatprep.subr.mxu0 0.0
        %6876 = vmatpush1.msra.mxu0 0.0
        %6877 = vmatprep.subr.mxu0 0.0
        %6878 = vmatpush1.msra.mxu0 0.0
        %6879 = vmatprep.subr.mxu0 0.0
        %6880 = vmatpush1.msra.mxu0 0.0
        %6881 = vmatprep.subr.mxu0 0.0
        %6882 = vmatpush1.msra.mxu0 0.0
        %6883 = vmatprep.subr.mxu0 0.0
        %6884 = vmatpush1.msra.mxu0 0.0
        %6885 = vmatprep.mubr.f32.mxu0 0.0
        %6886 = vmatmul.mubr.f32.gmra.mrb[0].mxu0 %v6726
        %v6887 = vpop.f32.mrb[0].mxu0
        %v6888 = vadd.f32 0.0, %v6887
        %v6889 = vpop.f32.mrb[0].mxu0
        %6890 = vmatprep.mubr.f32.mxu0 0.0
        %6891 = vmatmul.mubr.f32.gmra.mrb[0].mxu0 %v6729
        %v6892 = vpop.f32.mrb[0].mxu0
        %v6893 = vadd.f32 0.0, %v6892
        %v6894 = vpop.f32.mrb[0].mxu0
        %6895 = vmatprep.mubr.f32.mxu0 0.0
        %6896 = vmatmul.mubr.f32.gmra.mrb[0].mxu0 %v6732
        %v6897 = vpop.f32.mrb[0].mxu0
        %v6898 = vadd.f32 0.0, %v6897
        %v6899 = vpop.f32.mrb[0].mxu0
        %6900 = vmatprep.mubr.f32.mxu0 0.0
        %6901 = vmatmul.mubr.f32.gmra.mrb[0].mxu0 %v6735
        %v6902 = vpop.f32.mrb[0].mxu0
        %v6903 = vadd.f32 0.0, %v6902
        %v6904 = vpop.f32.mrb[0].mxu0
        %6905 = vmatprep.mubr.f32.mxu0 0.0
        %6906 = vmatmul.mubr.f32.gmra.mrb[0].mxu0 %v6738
        %v6907 = vpop.f32.mrb[0].mxu0
        %v6908 = vadd.f32 0.0, %v6907
        %v6909 = vpop.f32.mrb[0].mxu0
        %6910 = vmatprep.mubr.f32.mxu0 0.0
        %6911 = vmatmul.mubr.f32.gmra.mrb[0].mxu0 %v6741
        %v6912 = vpop.f32.mrb[0].mxu0
        %v6913 = vadd.f32 0.0, %v6912
        %v6914 = vpop.f32.mrb[0].mxu0
        %6915 = vmatprep.mubr.f32.mxu0 0.0
        %6916 = vmatmul.mubr.f32.gmra.mrb[0].mxu0 %v6744
        %v6917 = vpop.f32.mrb[0].mxu0
        %v6918 = vadd.f32 0.0, %v6917
        %v6919 = vpop.f32.mrb[0].mxu0
        %6920 = vmatprep.mubr.f32.mxu0 0.0
        %6921 = vmatmul.mubr.f32.gmra.mrb[0].mxu0 %v6747
        %v6922 = vpop.f32.mrb[0].mxu0
        %v6923 = vadd.f32 0.0, %v6922
        %v6924 = vpop.f32.mrb[0].mxu0
        %6925 = vmatprep.mubr.f32.mxu0 0.0
        %6926 = vmatmul.mubr.f32.gmra.mrb[0].mxu0 %v6750
        %v6927 = vpop.f32.mrb[0].mxu0
        %v6928 = vadd.f32 0.0, %v6927
        %v6929 = vpop.f32.mrb[0].mxu0
        %6930 = vmatprep.mubr.f32.mxu0 0.0
        %6931 = vmatmul.mubr.f32.gmra.mrb[0].mxu0 %v6753
        %v6932 = vpop.f32.mrb[0].mxu0
        %v6933 = vadd.f32 0.0, %v6932
        %v6934 = vpop.f32.mrb[0].mxu0
        %6935 = vmatprep.mubr.f32.mxu0 0.0
        %6936 = vmatmul.mubr.f32.gmra.mrb[0].mxu0 %v6756
        %v6937 = vpop.f32.mrb[0].mxu0
        %v6938 = vadd.f32 0.0, %v6937
        %v6939 = vpop.f32.mrb[0].mxu0
        %6940 = vmatprep.mubr.f32.mxu0 0.0
        %6941 = vmatmul.mubr.f32.gmra.mrb[0].mxu0 %v6759
        %v6942 = vpop.f32.mrb[0].mxu0
        %v6943 = vadd.f32 0.0, %v6942
        %v6944 = vpop.f32.mrb[0].mxu0
        %6945 = vmatprep.mubr.f32.mxu0 0.0
        %6946 = vmatmul.mubr.f32.gmra.mrb[0].mxu0 %v6762
        %v6947 = vpop.f32.mrb[0].mxu0
        %v6948 = vadd.f32 0.0, %v6947
        %v6949 = vpop.f32.mrb[0].mxu0
        %6950 = vmatprep.mubr.f32.mxu0 0.0
        %6951 = vmatmul.mubr.f32.gmra.mrb[0].mxu0 %v6765
        %v6952 = vpop.f32.mrb[0].mxu0
        %v6953 = vadd.f32 0.0, %v6952
        %v6954 = vpop.f32.mrb[0].mxu0
        %6955 = vmatprep.mubr.f32.mxu0 0.0
        %6956 = vmatmul.mubr.f32.gmra.mrb[0].mxu0 %v6768
        %v6957 = vpop.f32.mrb[0].mxu0
        %v6958 = vadd.f32 0.0, %v6957
        %v6959 = vpop.f32.mrb[0].mxu0
        %6960 = vmatprep.mubr.f32.mxu0 0.0
        %6961 = vmatmul.mubr.f32.gmra.mrb[0].mxu0 %v6771
        %v6962 = vpop.f32.mrb[0].mxu0
        %v6963 = vadd.f32 0.0, %v6962
        %v6964 = vpop.f32.mrb[0].mxu0
        %6965 = vmatprep.mubr.f32.mxu0 0.0
        %6966 = vmatmul.mubr.f32.gmra.mrb[0].mxu0 %v6774
        %v6967 = vpop.f32.mrb[0].mxu0
        %v6968 = vadd.f32 0.0, %v6967
        %v6969 = vpop.f32.mrb[0].mxu0
        %6970 = vmatprep.mubr.f32.mxu0 0.0
        %6971 = vmatmul.mubr.f32.gmra.mrb[0].mxu0 %v6777
        %v6972 = vpop.f32.mrb[0].mxu0
        %v6973 = vadd.f32 0.0, %v6972
        %v6974 = vpop.f32.mrb[0].mxu0
        %6975 = vmatprep.mubr.f32.mxu0 0.0
        %6976 = vmatmul.mubr.f32.gmra.mrb[0].mxu0 %v6780
        %v6977 = vpop.f32.mrb[0].mxu0
        %v6978 = vadd.f32 0.0, %v6977
        %v6979 = vpop.f32.mrb[0].mxu0
        %6980 = vmatprep.mubr.f32.mxu0 0.0
        %6981 = vmatmul.mubr.f32.gmra.mrb[0].mxu0 %v6783
        %v6982 = vpop.f32.mrb[0].mxu0
        %v6983 = vadd.f32 0.0, %v6982
        %v6984 = vpop.f32.mrb[0].mxu0
        %6985 = vmatprep.mubr.f32.mxu0 0.0
        %6986 = vmatmul.mubr.f32.gmra.mrb[0].mxu0 %v6786
        %v6987 = vpop.f32.mrb[0].mxu0
        %v6988 = vadd.f32 0.0, %v6987
        %v6989 = vpop.f32.mrb[0].mxu0
        %6990 = vmatprep.mubr.f32.mxu0 0.0
        %6991 = vmatmul.mubr.f32.gmra.mrb[0].mxu0 %v6789
        %v6992 = vpop.f32.mrb[0].mxu0
        %v6993 = vadd.f32 0.0, %v6992
        %v6994 = vpop.f32.mrb[0].mxu0
        %6995 = vmatprep.mubr.f32.mxu0 0.0
        %6996 = vmatmul.mubr.f32.gmra.mrb[0].mxu0 %v6792
        %v6997 = vpop.f32.mrb[0].mxu0
        %v6998 = vadd.f32 0.0, %v6997
        %v6999 = vpop.f32.mrb[0].mxu0
        %7000 = vmatprep.mubr.f32.mxu0 0.0
        %7001 = vmatmul.mubr.f32.gmra.mrb[0].mxu0 %v6795
        %v7002 = vpop.f32.mrb[0].mxu0
        %v7003 = vadd.f32 0.0, %v7002
        %v7004 = vpop.f32.mrb[0].mxu0
        %7005 = vmatprep.mubr.f32.mxu0 0.0
        %7006 = vmatmul.mubr.f32.gmra.mrb[0].mxu0 %v6798
        %v7007 = vpop.f32.mrb[0].mxu0
        %v7008 = vadd.f32 0.0, %v7007
        %v7009 = vpop.f32.mrb[0].mxu0
        %7010 = vmatprep.mubr.f32.mxu0 0.0
        %7011 = vmatmul.mubr.f32.gmra.mrb[0].mxu0 %v6801
        %v7012 = vpop.f32.mrb[0].mxu0
        %v7013 = vadd.f32 0.0, %v7012
        %v7014 = vpop.f32.mrb[0].mxu0
        %7015 = vmatprep.mubr.f32.mxu0 0.0
        %7016 = vmatmul.mubr.f32.gmra.mrb[0].mxu0 %v6804
        %v7017 = vpop.f32.mrb[0].mxu0
        %v7018 = vadd.f32 0.0, %v7017
        %v7019 = vpop.f32.mrb[0].mxu0
        %7020 = vmatprep.mubr.f32.mxu0 0.0
        %7021 = vmatmul.mubr.f32.gmra.mrb[0].mxu0 %v6807
        %v7022 = vpop.f32.mrb[0].mxu0
        %v7023 = vadd.f32 0.0, %v7022
        %v7024 = vpop.f32.mrb[0].mxu0
        %7025 = vmatprep.mubr.f32.mxu0 0.0
        %7026 = vmatmul.mubr.f32.gmra.mrb[0].mxu0 %v6810
        %v7027 = vpop.f32.mrb[0].mxu0
        %v7028 = vadd.f32 0.0, %v7027
        %v7029 = vpop.f32.mrb[0].mxu0
        %7030 = vmatprep.mubr.f32.mxu0 0.0
        %7031 = vmatmul.mubr.f32.gmra.mrb[0].mxu0 %v6813
        %v7032 = vpop.f32.mrb[0].mxu0
        %v7033 = vadd.f32 0.0, %v7032
        %v7034 = vpop.f32.mrb[0].mxu0
        %7035 = vmatprep.mubr.f32.mxu0 0.0
        %7036 = vmatmul.mubr.f32.gmra.mrb[0].mxu0 %v6816
        %v7037 = vpop.f32.mrb[0].mxu0
        %v7038 = vadd.f32 0.0, %v7037
        %v7039 = vpop.f32.mrb[0].mxu0
        %7040 = vmatprep.mubr.f32.mxu0 0.0
        %7041 = vmatmul.mubr.f32.gmra.mrb[0].mxu0 %v6819
        %v7042 = vpop.f32.mrb[0].mxu0
        %v7043 = vadd.f32 0.0, %v7042
        %v7044 = vpop.f32.mrb[0].mxu0
        %7045 = vdwg.mxu0
        %v7046 = vadd.f32 %v6566, %v6888
        %v7047 = vadd.f32 %v6571, %v6893
        %v7048 = vadd.f32 %v6576, %v6898
        %v7049 = vadd.f32 %v6581, %v6903
        %v7050 = vadd.f32 %v6586, %v6908
        %v7051 = vadd.f32 %v6591, %v6913
        %v7052 = vadd.f32 %v6596, %v6918
        %v7053 = vadd.f32 %v6601, %v6923
        %v7054 = vadd.f32 %v6606, %v6928
        %v7055 = vadd.f32 %v6611, %v6933
        %v7056 = vadd.f32 %v6616, %v6938
        %v7057 = vadd.f32 %v6621, %v6943
        %v7058 = vadd.f32 %v6626, %v6948
        %v7059 = vadd.f32 %v6631, %v6953
        %v7060 = vadd.f32 %v6636, %v6958
        %v7061 = vadd.f32 %v6641, %v6963
        %v7062 = vadd.f32 %v6646, %v6968
        %v7063 = vadd.f32 %v6651, %v6973
        %v7064 = vadd.f32 %v6656, %v6978
        %v7065 = vadd.f32 %v6661, %v6983
        %v7066 = vadd.f32 %v6666, %v6988
        %v7067 = vadd.f32 %v6671, %v6993
        %v7068 = vadd.f32 %v6676, %v6998
        %v7069 = vadd.f32 %v6681, %v7003
        %v7070 = vadd.f32 %v6686, %v7008
        %v7071 = vadd.f32 %v6691, %v7013
        %v7072 = vadd.f32 %v6696, %v7018
        %v7073 = vadd.f32 %v6701, %v7023
        %v7074 = vadd.f32 %v6706, %v7028
        %v7075 = vadd.f32 %v6711, %v7033
        %v7076 = vadd.f32 %v6716, %v7038
        %v7077 = vadd.f32 %v6721, %v7043
        %v7078 = vld [vmem:[%s6 + $0x18] sm:$0xff]
        %v7080 = vsel %vm358, %v5823, 0
        %v7083 = vsel %vm358, %v5824, 0
        %v7086 = vsel %vm358, %v5825, 0
        %v7089 = vsel %vm358, %v5826, 0
        %v7092 = vsel %vm358, %v5827, 0
        %v7095 = vsel %vm358, %v5828, 0
        %v7098 = vsel %vm358, %v5829, 0
        %v7101 = vsel %vm358, %v5830, 0
        %v7104 = vsel %vm358, %v5831, 0
        %v7107 = vsel %vm358, %v5832, 0
        %v7110 = vsel %vm358, %v5833, 0
        %v7113 = vsel %vm358, %v5834, 0
        %v7116 = vsel %vm358, %v5835, 0
        %v7119 = vsel %vm358, %v5836, 0
        %v7122 = vsel %vm358, %v5837, 0
        %v7125 = vsel %vm358, %v5838, 0
        %v7128 = vsel %vm358, %v5839, 0
        %v7131 = vsel %vm358, %v5840, 0
        %v7134 = vsel %vm358, %v5841, 0
        %v7137 = vsel %vm358, %v5842, 0
        %v7140 = vsel %vm358, %v5843, 0
        %v7143 = vsel %vm358, %v5844, 0
        %v7146 = vsel %vm358, %v5845, 0
        %v7149 = vsel %vm358, %v5846, 0
        %v7152 = vsel %vm358, %v5847, 0
        %v7155 = vsel %vm358, %v5848, 0
        %v7158 = vsel %vm358, %v5849, 0
        %v7161 = vsel %vm358, %v5850, 0
        %v7164 = vsel %vm358, %v5851, 0
        %v7167 = vsel %vm358, %v5852, 0
        %v7170 = vsel %vm358, %v5853, 0
        %v7173 = vsel %vm358, %v5854, 0
        %7175 = vmatprep.subr.mxu0 0.0
        %7176 = vmatpush1.msra.mxu0 %v7078
        %7177 = vmatprep.subr.mxu0 0.0
        %7178 = vmatpush1.msra.mxu0 0.0
        %7179 = vmatprep.subr.mxu0 0.0
        %7180 = vmatpush1.msra.mxu0 0.0
        %7181 = vmatprep.subr.mxu0 0.0
        %7182 = vmatpush1.msra.mxu0 0.0
        %7183 = vmatprep.subr.mxu0 0.0
        %7184 = vmatpush1.msra.mxu0 0.0
        %7185 = vmatprep.subr.mxu0 0.0
        %7186 = vmatpush1.msra.mxu0 0.0
        %7187 = vmatprep.subr.mxu0 0.0
        %7188 = vmatpush1.msra.mxu0 0.0
        %7189 = vmatprep.subr.mxu0 0.0
        %7190 = vmatpush1.msra.mxu0 0.0
        %7191 = vmatprep.subr.mxu0 0.0
        %7192 = vmatpush1.msra.mxu0 0.0
        %7193 = vmatprep.subr.mxu0 0.0
        %7194 = vmatpush1.msra.mxu0 0.0
        %7195 = vmatprep.subr.mxu0 0.0
        %7196 = vmatpush1.msra.mxu0 0.0
        %7197 = vmatprep.subr.mxu0 0.0
        %7198 = vmatpush1.msra.mxu0 0.0
        %7199 = vmatprep.subr.mxu0 0.0
        %7200 = vmatpush1.msra.mxu0 0.0
        %7201 = vmatprep.subr.mxu0 0.0
        %7202 = vmatpush1.msra.mxu0 0.0
        %7203 = vmatprep.subr.mxu0 0.0
        %7204 = vmatpush1.msra.mxu0 0.0
        %7205 = vmatprep.subr.mxu0 0.0
        %7206 = vmatpush1.msra.mxu0 0.0
        %7207 = vmatprep.subr.mxu0 0.0
        %7208 = vmatpush1.msra.mxu0 0.0
        %7209 = vmatprep.subr.mxu0 0.0
        %7210 = vmatpush1.msra.mxu0 0.0
        %7211 = vmatprep.subr.mxu0 0.0
        %7212 = vmatpush1.msra.mxu0 0.0
        %7213 = vmatprep.subr.mxu0 0.0
        %7214 = vmatpush1.msra.mxu0 0.0
        %7215 = vmatprep.subr.mxu0 0.0
        %7216 = vmatpush1.msra.mxu0 0.0
        %7217 = vmatprep.subr.mxu0 0.0
        %7218 = vmatpush1.msra.mxu0 0.0
        %7219 = vmatprep.subr.mxu0 0.0
        %7220 = vmatpush1.msra.mxu0 0.0
        %7221 = vmatprep.subr.mxu0 0.0
        %7222 = vmatpush1.msra.mxu0 0.0
        %7223 = vmatprep.subr.mxu0 0.0
        %7224 = vmatpush1.msra.mxu0 0.0
        %7225 = vmatprep.subr.mxu0 0.0
        %7226 = vmatpush1.msra.mxu0 0.0
        %7227 = vmatprep.subr.mxu0 0.0
        %7228 = vmatpush1.msra.mxu0 0.0
        %7229 = vmatprep.subr.mxu0 0.0
        %7230 = vmatpush1.msra.mxu0 0.0
        %7231 = vmatprep.subr.mxu0 0.0
        %7232 = vmatpush1.msra.mxu0 0.0
        %7233 = vmatprep.subr.mxu0 0.0
        %7234 = vmatpush1.msra.mxu0 0.0
        %7235 = vmatprep.subr.mxu0 0.0
        %7236 = vmatpush1.msra.mxu0 0.0
        %7237 = vmatprep.subr.mxu0 0.0
        %7238 = vmatpush1.msra.mxu0 0.0
        %7239 = vmatprep.mubr.f32.mxu0 0.0
        %7240 = vmatmul.mubr.f32.gmra.mrb[0].mxu0 %v7080
        %v7241 = vpop.f32.mrb[0].mxu0
        %v7242 = vadd.f32 0.0, %v7241
        %v7243 = vpop.f32.mrb[0].mxu0
        %7244 = vmatprep.mubr.f32.mxu0 0.0
        %7245 = vmatmul.mubr.f32.gmra.mrb[0].mxu0 %v7083
        %v7246 = vpop.f32.mrb[0].mxu0
        %v7247 = vadd.f32 0.0, %v7246
        %v7248 = vpop.f32.mrb[0].mxu0
        %7249 = vmatprep.mubr.f32.mxu0 0.0
        %7250 = vmatmul.mubr.f32.gmra.mrb[0].mxu0 %v7086
        %v7251 = vpop.f32.mrb[0].mxu0
        %v7252 = vadd.f32 0.0, %v7251
        %v7253 = vpop.f32.mrb[0].mxu0
        %7254 = vmatprep.mubr.f32.mxu0 0.0
        %7255 = vmatmul.mubr.f32.gmra.mrb[0].mxu0 %v7089
        %v7256 = vpop.f32.mrb[0].mxu0
        %v7257 = vadd.f32 0.0, %v7256
        %v7258 = vpop.f32.mrb[0].mxu0
        %7259 = vmatprep.mubr.f32.mxu0 0.0
        %7260 = vmatmul.mubr.f32.gmra.mrb[0].mxu0 %v7092
        %v7261 = vpop.f32.mrb[0].mxu0
        %v7262 = vadd.f32 0.0, %v7261
        %v7263 = vpop.f32.mrb[0].mxu0
        %7264 = vmatprep.mubr.f32.mxu0 0.0
        %7265 = vmatmul.mubr.f32.gmra.mrb[0].mxu0 %v7095
        %v7266 = vpop.f32.mrb[0].mxu0
        %v7267 = vadd.f32 0.0, %v7266
        %v7268 = vpop.f32.mrb[0].mxu0
        %7269 = vmatprep.mubr.f32.mxu0 0.0
        %7270 = vmatmul.mubr.f32.gmra.mrb[0].mxu0 %v7098
        %v7271 = vpop.f32.mrb[0].mxu0
        %v7272 = vadd.f32 0.0, %v7271
        %v7273 = vpop.f32.mrb[0].mxu0
        %7274 = vmatprep.mubr.f32.mxu0 0.0
        %7275 = vmatmul.mubr.f32.gmra.mrb[0].mxu0 %v7101
        %v7276 = vpop.f32.mrb[0].mxu0
        %v7277 = vadd.f32 0.0, %v7276
        %v7278 = vpop.f32.mrb[0].mxu0
        %7279 = vmatprep.mubr.f32.mxu0 0.0
        %7280 = vmatmul.mubr.f32.gmra.mrb[0].mxu0 %v7104
        %v7281 = vpop.f32.mrb[0].mxu0
        %v7282 = vadd.f32 0.0, %v7281
        %v7283 = vpop.f32.mrb[0].mxu0
        %7284 = vmatprep.mubr.f32.mxu0 0.0
        %7285 = vmatmul.mubr.f32.gmra.mrb[0].mxu0 %v7107
        %v7286 = vpop.f32.mrb[0].mxu0
        %v7287 = vadd.f32 0.0, %v7286
        %v7288 = vpop.f32.mrb[0].mxu0
        %7289 = vmatprep.mubr.f32.mxu0 0.0
        %7290 = vmatmul.mubr.f32.gmra.mrb[0].mxu0 %v7110
        %v7291 = vpop.f32.mrb[0].mxu0
        %v7292 = vadd.f32 0.0, %v7291
        %v7293 = vpop.f32.mrb[0].mxu0
        %7294 = vmatprep.mubr.f32.mxu0 0.0
        %7295 = vmatmul.mubr.f32.gmra.mrb[0].mxu0 %v7113
        %v7296 = vpop.f32.mrb[0].mxu0
        %v7297 = vadd.f32 0.0, %v7296
        %v7298 = vpop.f32.mrb[0].mxu0
        %7299 = vmatprep.mubr.f32.mxu0 0.0
        %7300 = vmatmul.mubr.f32.gmra.mrb[0].mxu0 %v7116
        %v7301 = vpop.f32.mrb[0].mxu0
        %v7302 = vadd.f32 0.0, %v7301
        %v7303 = vpop.f32.mrb[0].mxu0
        %7304 = vmatprep.mubr.f32.mxu0 0.0
        %7305 = vmatmul.mubr.f32.gmra.mrb[0].mxu0 %v7119
        %v7306 = vpop.f32.mrb[0].mxu0
        %v7307 = vadd.f32 0.0, %v7306
        %v7308 = vpop.f32.mrb[0].mxu0
        %7309 = vmatprep.mubr.f32.mxu0 0.0
        %7310 = vmatmul.mubr.f32.gmra.mrb[0].mxu0 %v7122
        %v7311 = vpop.f32.mrb[0].mxu0
        %v7312 = vadd.f32 0.0, %v7311
        %v7313 = vpop.f32.mrb[0].mxu0
        %7314 = vmatprep.mubr.f32.mxu0 0.0
        %7315 = vmatmul.mubr.f32.gmra.mrb[0].mxu0 %v7125
        %v7316 = vpop.f32.mrb[0].mxu0
        %v7317 = vadd.f32 0.0, %v7316
        %v7318 = vpop.f32.mrb[0].mxu0
        %7319 = vmatprep.mubr.f32.mxu0 0.0
        %7320 = vmatmul.mubr.f32.gmra.mrb[0].mxu0 %v7128
        %v7321 = vpop.f32.mrb[0].mxu0
        %v7322 = vadd.f32 0.0, %v7321
        %v7323 = vpop.f32.mrb[0].mxu0
        %7324 = vmatprep.mubr.f32.mxu0 0.0
        %7325 = vmatmul.mubr.f32.gmra.mrb[0].mxu0 %v7131
        %v7326 = vpop.f32.mrb[0].mxu0
        %v7327 = vadd.f32 0.0, %v7326
        %v7328 = vpop.f32.mrb[0].mxu0
        %7329 = vmatprep.mubr.f32.mxu0 0.0
        %7330 = vmatmul.mubr.f32.gmra.mrb[0].mxu0 %v7134
        %v7331 = vpop.f32.mrb[0].mxu0
        %v7332 = vadd.f32 0.0, %v7331
        %v7333 = vpop.f32.mrb[0].mxu0
        %7334 = vmatprep.mubr.f32.mxu0 0.0
        %7335 = vmatmul.mubr.f32.gmra.mrb[0].mxu0 %v7137
        %v7336 = vpop.f32.mrb[0].mxu0
        %v7337 = vadd.f32 0.0, %v7336
        %v7338 = vpop.f32.mrb[0].mxu0
        %7339 = vmatprep.mubr.f32.mxu0 0.0
        %7340 = vmatmul.mubr.f32.gmra.mrb[0].mxu0 %v7140
        %v7341 = vpop.f32.mrb[0].mxu0
        %v7342 = vadd.f32 0.0, %v7341
        %v7343 = vpop.f32.mrb[0].mxu0
        %7344 = vmatprep.mubr.f32.mxu0 0.0
        %7345 = vmatmul.mubr.f32.gmra.mrb[0].mxu0 %v7143
        %v7346 = vpop.f32.mrb[0].mxu0
        %v7347 = vadd.f32 0.0, %v7346
        %v7348 = vpop.f32.mrb[0].mxu0
        %7349 = vmatprep.mubr.f32.mxu0 0.0
        %7350 = vmatmul.mubr.f32.gmra.mrb[0].mxu0 %v7146
        %v7351 = vpop.f32.mrb[0].mxu0
        %v7352 = vadd.f32 0.0, %v7351
        %v7353 = vpop.f32.mrb[0].mxu0
        %7354 = vmatprep.mubr.f32.mxu0 0.0
        %7355 = vmatmul.mubr.f32.gmra.mrb[0].mxu0 %v7149
        %v7356 = vpop.f32.mrb[0].mxu0
        %v7357 = vadd.f32 0.0, %v7356
        %v7358 = vpop.f32.mrb[0].mxu0
        %7359 = vmatprep.mubr.f32.mxu0 0.0
        %7360 = vmatmul.mubr.f32.gmra.mrb[0].mxu0 %v7152
        %v7361 = vpop.f32.mrb[0].mxu0
        %v7362 = vadd.f32 0.0, %v7361
        %v7363 = vpop.f32.mrb[0].mxu0
        %7364 = vmatprep.mubr.f32.mxu0 0.0
        %7365 = vmatmul.mubr.f32.gmra.mrb[0].mxu0 %v7155
        %v7366 = vpop.f32.mrb[0].mxu0
        %v7367 = vadd.f32 0.0, %v7366
        %v7368 = vpop.f32.mrb[0].mxu0
        %7369 = vmatprep.mubr.f32.mxu0 0.0
        %7370 = vmatmul.mubr.f32.gmra.mrb[0].mxu0 %v7158
        %v7371 = vpop.f32.mrb[0].mxu0
        %v7372 = vadd.f32 0.0, %v7371
        %v7373 = vpop.f32.mrb[0].mxu0
        %7374 = vmatprep.mubr.f32.mxu0 0.0
        %7375 = vmatmul.mubr.f32.gmra.mrb[0].mxu0 %v7161
        %v7376 = vpop.f32.mrb[0].mxu0
        %v7377 = vadd.f32 0.0, %v7376
        %v7378 = vpop.f32.mrb[0].mxu0
        %7379 = vmatprep.mubr.f32.mxu0 0.0
        %7380 = vmatmul.mubr.f32.gmra.mrb[0].mxu0 %v7164
        %v7381 = vpop.f32.mrb[0].mxu0
        %v7382 = vadd.f32 0.0, %v7381
        %v7383 = vpop.f32.mrb[0].mxu0
        %7384 = vmatprep.mubr.f32.mxu0 0.0
        %7385 = vmatmul.mubr.f32.gmra.mrb[0].mxu0 %v7167
        %v7386 = vpop.f32.mrb[0].mxu0
        %v7387 = vadd.f32 0.0, %v7386
        %v7388 = vpop.f32.mrb[0].mxu0
        %7389 = vmatprep.mubr.f32.mxu0 0.0
        %7390 = vmatmul.mubr.f32.gmra.mrb[0].mxu0 %v7170
        %v7391 = vpop.f32.mrb[0].mxu0
        %v7392 = vadd.f32 0.0, %v7391
        %v7393 = vpop.f32.mrb[0].mxu0
        %7394 = vmatprep.mubr.f32.mxu0 0.0
        %7395 = vmatmul.mubr.f32.gmra.mrb[0].mxu0 %v7173
        %v7396 = vpop.f32.mrb[0].mxu0
        %v7397 = vadd.f32 0.0, %v7396
        %v7398 = vpop.f32.mrb[0].mxu0
        %7399 = vdwg.mxu0
        %v7400 = vadd.f32 %v7046, %v7242
        %v7401 = vadd.f32 %v7047, %v7247
        %v7402 = vadd.f32 %v7048, %v7252
        %v7403 = vadd.f32 %v7049, %v7257
        %v7404 = vadd.f32 %v7050, %v7262
        %v7405 = vadd.f32 %v7051, %v7267
        %v7406 = vadd.f32 %v7052, %v7272
        %v7407 = vadd.f32 %v7053, %v7277
        %v7408 = vadd.f32 %v7054, %v7282
        %v7409 = vadd.f32 %v7055, %v7287
        %v7410 = vadd.f32 %v7056, %v7292
        %v7411 = vadd.f32 %v7057, %v7297
        %v7412 = vadd.f32 %v7058, %v7302
        %v7413 = vadd.f32 %v7059, %v7307
        %v7414 = vadd.f32 %v7060, %v7312
        %v7415 = vadd.f32 %v7061, %v7317
        %v7416 = vadd.f32 %v7062, %v7322
        %v7417 = vadd.f32 %v7063, %v7327
        %v7418 = vadd.f32 %v7064, %v7332
        %v7419 = vadd.f32 %v7065, %v7337
        %v7420 = vadd.f32 %v7066, %v7342
        %v7421 = vadd.f32 %v7067, %v7347
        %v7422 = vadd.f32 %v7068, %v7352
        %v7423 = vadd.f32 %v7069, %v7357
        %v7424 = vadd.f32 %v7070, %v7362
        %v7425 = vadd.f32 %v7071, %v7367
        %v7426 = vadd.f32 %v7072, %v7372
        %v7427 = vadd.f32 %v7073, %v7377
        %v7428 = vadd.f32 %v7074, %v7382
        %v7429 = vadd.f32 %v7075, %v7387
        %v7430 = vadd.f32 %v7076, %v7392
        %v7431 = vadd.f32 %v7077, %v7397
        %v7432 = vlaneseq
        %v7433 = vshrl.u32 %v7432, 7
        %v7434 = vsub.s32 0, %v7433
        %v7435 = vrot.slane %v6077, %v7434
        %v7436 = vadd.f32 %v7400, %v7435
        %v7437 = vadd.f32 %v7401, %v7435
        %v7438 = vadd.f32 %v7402, %v7435
        %v7439 = vadd.f32 %v7403, %v7435
        %v7440 = vadd.f32 %v7404, %v7435
        %v7441 = vadd.f32 %v7405, %v7435
        %v7442 = vadd.f32 %v7406, %v7435
        %v7443 = vadd.f32 %v7407, %v7435
        %v7444 = vadd.f32 %v7408, %v7435
        %v7445 = vadd.f32 %v7409, %v7435
        %v7446 = vadd.f32 %v7410, %v7435
        %v7447 = vadd.f32 %v7411, %v7435
        %v7448 = vadd.f32 %v7412, %v7435
        %v7449 = vadd.f32 %v7413, %v7435
        %v7450 = vadd.f32 %v7414, %v7435
        %v7451 = vadd.f32 %v7415, %v7435
        %v7452 = vadd.f32 %v7416, %v7435
        %v7453 = vadd.f32 %v7417, %v7435
        %v7454 = vadd.f32 %v7418, %v7435
        %v7455 = vadd.f32 %v7419, %v7435
        %v7456 = vadd.f32 %v7420, %v7435
        %v7457 = vadd.f32 %v7421, %v7435
        %v7458 = vadd.f32 %v7422, %v7435
        %v7459 = vadd.f32 %v7423, %v7435
        %v7460 = vadd.f32 %v7424, %v7435
        %v7461 = vadd.f32 %v7425, %v7435
        %v7462 = vadd.f32 %v7426, %v7435
        %v7463 = vadd.f32 %v7427, %v7435
        %v7464 = vadd.f32 %v7428, %v7435
        %v7465 = vadd.f32 %v7429, %v7435
        %v7466 = vadd.f32 %v7430, %v7435
        %v7467 = vadd.f32 %v7431, %v7435
        %v7468 = vmul.f32 %v7436, %v1236
        %v7469 = vmul.f32 %v7437, %v1236
        %v7470 = vmul.f32 %v7438, %v1236
        %v7471 = vmul.f32 %v7439, %v1236
        %v7472 = vmul.f32 %v7440, %v1236
        %v7473 = vmul.f32 %v7441, %v1236
        %v7474 = vmul.f32 %v7442, %v1236
        %v7475 = vmul.f32 %v7443, %v1236
        %v7476 = vmul.f32 %v7444, %v1236
        %v7477 = vmul.f32 %v7445, %v1236
        %v7478 = vmul.f32 %v7446, %v1236
        %v7479 = vmul.f32 %v7447, %v1236
        %v7480 = vmul.f32 %v7448, %v1236
        %v7481 = vmul.f32 %v7449, %v1236
        %v7482 = vmul.f32 %v7450, %v1236
        %v7483 = vmul.f32 %v7451, %v1236
        %v7484 = vmul.f32 %v7452, %v1236
        %v7485 = vmul.f32 %v7453, %v1236
        %v7486 = vmul.f32 %v7454, %v1236
        %v7487 = vmul.f32 %v7455, %v1236
        %v7488 = vmul.f32 %v7456, %v1236
        %v7489 = vmul.f32 %v7457, %v1236
        %v7490 = vmul.f32 %v7458, %v1236
        %v7491 = vmul.f32 %v7459, %v1236
        %v7492 = vmul.f32 %v7460, %v1236
        %v7493 = vmul.f32 %v7461, %v1236
        %v7494 = vmul.f32 %v7462, %v1236
        %v7495 = vmul.f32 %v7463, %v1236
        %v7496 = vmul.f32 %v7464, %v1236
        %v7497 = vmul.f32 %v7465, %v1236
        %v7498 = vmul.f32 %v7466, %v1236
        %v7499 = vmul.f32 %v7467, %v1236
        %v7500 = vadd.f32 %v7468, %v1274
        %v7501 = vadd.f32 %v7469, %v1274
        %v7502 = vadd.f32 %v7470, %v1274
        %v7503 = vadd.f32 %v7471, %v1274
        %v7504 = vadd.f32 %v7472, %v1274
        %v7505 = vadd.f32 %v7473, %v1274
        %v7506 = vadd.f32 %v7474, %v1274
        %v7507 = vadd.f32 %v7475, %v1274
        %v7508 = vadd.f32 %v7476, %v1274
        %v7509 = vadd.f32 %v7477, %v1274
        %v7510 = vadd.f32 %v7478, %v1274
        %v7511 = vadd.f32 %v7479, %v1274
        %v7512 = vadd.f32 %v7480, %v1274
        %v7513 = vadd.f32 %v7481, %v1274
        %v7514 = vadd.f32 %v7482, %v1274
        %v7515 = vadd.f32 %v7483, %v1274
        %v7516 = vadd.f32 %v7484, %v1274
        %v7517 = vadd.f32 %v7485, %v1274
        %v7518 = vadd.f32 %v7486, %v1274
        %v7519 = vadd.f32 %v7487, %v1274
        %v7520 = vadd.f32 %v7488, %v1274
        %v7521 = vadd.f32 %v7489, %v1274
        %v7522 = vadd.f32 %v7490, %v1274
        %v7523 = vadd.f32 %v7491, %v1274
        %v7524 = vadd.f32 %v7492, %v1274
        %v7525 = vadd.f32 %v7493, %v1274
        %v7526 = vadd.f32 %v7494, %v1274
        %v7527 = vadd.f32 %v7495, %v1274
        %v7528 = vadd.f32 %v7496, %v1274
        %v7529 = vadd.f32 %v7497, %v1274
        %v7530 = vadd.f32 %v7498, %v1274
        %v7531 = vadd.f32 %v7499, %v1274
        %v7532 = vmax.f32 %v7500, 0.0
        %v7533 = vmax.f32 %v7501, 0.0
        %v7534 = vmax.f32 %v7502, 0.0
        %v7535 = vmax.f32 %v7503, 0.0
        %v7536 = vmax.f32 %v7504, 0.0
        %v7537 = vmax.f32 %v7505, 0.0
        %v7538 = vmax.f32 %v7506, 0.0
        %v7539 = vmax.f32 %v7507, 0.0
        %v7540 = vmax.f32 %v7508, 0.0
        %v7541 = vmax.f32 %v7509, 0.0
        %v7542 = vmax.f32 %v7510, 0.0
        %v7543 = vmax.f32 %v7511, 0.0
        %v7544 = vmax.f32 %v7512, 0.0
        %v7545 = vmax.f32 %v7513, 0.0
        %v7546 = vmax.f32 %v7514, 0.0
        %v7547 = vmax.f32 %v7515, 0.0
        %v7548 = vmax.f32 %v7516, 0.0
        %v7549 = vmax.f32 %v7517, 0.0
        %v7550 = vmax.f32 %v7518, 0.0
        %v7551 = vmax.f32 %v7519, 0.0
        %v7552 = vmax.f32 %v7520, 0.0
        %v7553 = vmax.f32 %v7521, 0.0
        %v7554 = vmax.f32 %v7522, 0.0
        %v7555 = vmax.f32 %v7523, 0.0
        %v7556 = vmax.f32 %v7524, 0.0
        %v7557 = vmax.f32 %v7525, 0.0
        %v7558 = vmax.f32 %v7526, 0.0
        %v7559 = vmax.f32 %v7527, 0.0
        %v7560 = vmax.f32 %v7528, 0.0
        %v7561 = vmax.f32 %v7529, 0.0
        %v7562 = vmax.f32 %v7530, 0.0
        %v7563 = vmax.f32 %v7531, 0.0
        %7564 = vxpose.xlu0.b32.start [1/16] %v7532, 128
        %7565 = vxpose.xlu0.b32.cont [2/16] %v7533, 128
        %7566 = vxpose.xlu0.b32.cont [3/16] %v7534, 128
        %7567 = vxpose.xlu0.b32.cont [4/16] %v7535, 128
        %7568 = vxpose.xlu0.b32.cont [5/16] %v7536, 128
        %7569 = vxpose.xlu0.b32.cont [6/16] %v7537, 128
        %7570 = vxpose.xlu0.b32.cont [7/16] %v7538, 128
        %7571 = vxpose.xlu0.b32.cont [8/16] %v7539, 128
        %7572 = vxpose.xlu0.b32.cont [9/16] %v7540, 128
        %7573 = vxpose.xlu0.b32.cont [10/16] %v7541, 128
        %7574 = vxpose.xlu0.b32.cont [11/16] %v7542, 128
        %7575 = vxpose.xlu0.b32.cont [12/16] %v7543, 128
        %7576 = vxpose.xlu0.b32.cont [13/16] %v7544, 128
        %7577 = vxpose.xlu0.b32.cont [14/16] %v7545, 128
        %7578 = vxpose.xlu0.b32.cont [15/16] %v7546, 128
        %7579 = vxpose.xlu0.b32.end [16/16] %v7547, 128
        %v7580 = vpop.trf.xlu0
        %v7581 = vpop.trf.xlu0
        %v7582 = vpop.trf.xlu0
        %v7583 = vpop.trf.xlu0
        %v7584 = vpop.trf.xlu0
        %v7585 = vpop.trf.xlu0
        %v7586 = vpop.trf.xlu0
        %v7587 = vpop.trf.xlu0
        %v7588 = vpop.trf.xlu0
        %v7589 = vpop.trf.xlu0
        %v7590 = vpop.trf.xlu0
        %v7591 = vpop.trf.xlu0
        %v7592 = vpop.trf.xlu0
        %v7593 = vpop.trf.xlu0
        %v7594 = vpop.trf.xlu0
        %v7595 = vpop.trf.xlu0
        %7596 = vxpose.xlu0.b32.start [1/16] %v7548, 128
        %7597 = vxpose.xlu0.b32.cont [2/16] %v7549, 128
        %7598 = vxpose.xlu0.b32.cont [3/16] %v7550, 128
        %7599 = vxpose.xlu0.b32.cont [4/16] %v7551, 128
        %7600 = vxpose.xlu0.b32.cont [5/16] %v7552, 128
        %7601 = vxpose.xlu0.b32.cont [6/16] %v7553, 128
        %7602 = vxpose.xlu0.b32.cont [7/16] %v7554, 128
        %7603 = vxpose.xlu0.b32.cont [8/16] %v7555, 128
        %7604 = vxpose.xlu0.b32.cont [9/16] %v7556, 128
        %7605 = vxpose.xlu0.b32.cont [10/16] %v7557, 128
        %7606 = vxpose.xlu0.b32.cont [11/16] %v7558, 128
        %7607 = vxpose.xlu0.b32.cont [12/16] %v7559, 128
        %7608 = vxpose.xlu0.b32.cont [13/16] %v7560, 128
        %7609 = vxpose.xlu0.b32.cont [14/16] %v7561, 128
        %7610 = vxpose.xlu0.b32.cont [15/16] %v7562, 128
        %7611 = vxpose.xlu0.b32.end [16/16] %v7563, 128
        %v7612 = vpop.trf.xlu0
        %v7613 = vpop.trf.xlu0
        %v7614 = vpop.trf.xlu0
        %v7615 = vpop.trf.xlu0
        %v7616 = vpop.trf.xlu0
        %v7617 = vpop.trf.xlu0
        %v7618 = vpop.trf.xlu0
        %v7619 = vpop.trf.xlu0
        %v7620 = vpop.trf.xlu0
        %v7621 = vpop.trf.xlu0
        %v7622 = vpop.trf.xlu0
        %v7623 = vpop.trf.xlu0
        %v7624 = vpop.trf.xlu0
        %v7625 = vpop.trf.xlu0
        %v7626 = vpop.trf.xlu0
        %v7627 = vpop.trf.xlu0
        %7628 = vst [vmem:[%s352] sm:$0xff] %v7580
        %7629 = vst [vmem:[%s352 + $0x8] sm:$0xff] %v7612
        %s7630 = sand.u32 %s247, 1
        %s7631 = scalar_lea.sflag [#allocation4], %s7630
        %s7632 = sand.u32 %s247, 1
        %s7633 = smul.addr %s7632, 16
        %s7634 = scalar_lea.vmem [#allocation3], %s7633
        // Predicated region
        $region61: #{tpu_custom_call.1} parent=59 // pred_check
          %p7635 = pneg %p257
        $region62: #{tpu_custom_call.1} parent=59 // pred_check_branch
          %7637 = sbr.rel (%p7635) target = $region64
        $region63: #{tpu_custom_call.1} parent=59 // pred_region
          %s7639 = ssub.s32 256, 256
          %7640 = vsyncadd %s7631, %s7639
          %s7641 = smul.addr %s24, 2
          %s7642 = smul.addr %s7641, 128
          %s7643 = scalar_lea.hbm %s10, %s7642
          %s7645 = sshll.u32 %s7634, 4
          %s7646 = int_to_ptr.vmem [resolvable:$true] %s7645
          %7648 = dma.vmem_to_hbm [thread:$0]  %s7646, 256, %s7643, %s7631
        $region64: #{tpu_custom_call.1} parent=59 // pred_fallthru
          _
      $region60: #{tpu_custom_call.1} parent=5 // pred_fallthru
        _
      %p7649 = scmp.le.s32.totalorder 2, %s19
      // Predicated region
      $region65: #{tpu_custom_call.1} parent=5 // pred_check
        %p7650 = pneg %p7649
      $region66: #{tpu_custom_call.1} parent=5 // pred_check_branch
        %7652 = sbr.rel (%p7650) target = $region68
      $region67: #{tpu_custom_call.1} parent=5 // pred_region
        %s7653 = ssub.s32 %s19, 2
        // Predicated region
        $region69: #{tpu_custom_call.1} parent=67 // pred_check
          %p7654 = pneg %p263
        $region70: #{tpu_custom_call.1} parent=67 // pred_check_branch
          %7656 = sbr.rel (%p7654) target = $region72
        $region71: #{tpu_custom_call.1} parent=67 // pred_region
          %s7657 = sand.u32 %s248, 1
          %s7658 = scalar_lea.sflag [#allocation4], %s7657
          %s7659 = sand.u32 %s248, 1
          %s7660 = smul.addr %s7659, 16
          %s7661 = scalar_lea.vmem [#allocation3], %s7660
          %7662 = dma.done %s7658, 256
        $region72: #{tpu_custom_call.1} parent=67 // pred_fallthru
          _
      $region68: #{tpu_custom_call.1} parent=5 // pred_fallthru
        _
    $region6: #{tpu_custom_call.1} parent=1 // loop_footer
      %s23 = sadd.s32 1, %s19
    $region7: #{tpu_custom_call.1} parent=1 // loop_footer_branch
      %18 = sbr.rel target = $region3
    $region8: #{tpu_custom_call.1} parent=1 // loop_exit
      _
    %7663 = vsyncpa [#allocation4], 1
    %s7664 = scalar_lea.sflag [#allocation4], 1
    %7665 = vsyncpa %s7664, 1

</llo_original>
